<compile_context>
chip_gen: v7x
topology: tpu7x:2x2x1
jax: 0.10.0
libtpu: 0.0.40
codegen_flags: <defaults>
</compile_context>

<pallas_src>
import functools

import numpy as np
import jax
import jax.numpy as jnp
from jax.experimental import pallas as pl
from jax.experimental.pallas import tpu as pltpu

# Hard-coded joint groups from HGA.__init__ (max index 49 -> V must be >= 50).
HGA_LAYERS = [
    [1, 0, 20, 26, 25, 45],
    [0, 20, 12, 16, 2, 4, 8, 25, 45, 37, 41, 27, 29, 33],
    [12, 16, 2, 4, 8, 13, 17, 3, 5, 9, 3, 28, 37, 41, 27, 29, 33, 38, 42, 28, 30, 34],
    [13, 17, 3, 5, 9, 14, 18, 6, 10, 3, 28, 38, 42, 28, 30, 34, 39, 43, 31, 35],
    [14, 18, 6, 10, 15, 19, 7, 11, 39, 43, 31, 35, 40, 44, 32, 36],
    [15, 19, 7, 11, 21, 22, 23, 24, 40, 44, 32, 36, 46, 47, 48, 49],
]

BN_EPS = 1e-5
BN_INV = float(1.0 / np.sqrt(1.0 + BN_EPS))   # eval-mode BN with mean=0, var=1


def _tpu_kind():
    try:
        return jax.devices()[0].device_kind.lower()
    except Exception:
        return ""


# ----------------------------------------------------------------------------
# Pallas kernel 1: MSGC — one (subset, batch element) per grid step
# ----------------------------------------------------------------------------
def _msgc_kernel(xf_ref, xm_ref, at_ref, w1_ref, w2_ref, w3_ref, w4_ref, b4_ref,
                 y_ref, ymax_ref, *, bf16_tanh):
    """MSGC forward for grid cell (subset i, batch element n):

        x1 = tanh(conv1(x).mean(T)[..., :, None] - conv2(x).mean(T)[..., None, :])
        a1 = conv4(x1) * alpha + A[i]
        y  = einsum('cuv,ctv->ctu', a1, conv3(x))

    All 1x1 convs run on the MXU.  conv1..3 biases ride the augmented ones
    channel of x; alpha and the conv4 bias are pre-scaled in the wrapper.
    d / a1 are built directly in the transposed (v, u) layout so the final
    contraction is MXU-native (contracting dim minor on LHS / major on RHS).
    Also emits max_T(y) for the HGA attention branch.
    """
    xf = xf_ref[0]            # (Ca, T*V)   lane-dense activations
    xm = xm_ref[0]            # (Ca, V)     T-mean (mean(conv) == conv(mean) for 1x1)
    A_T = at_ref[0]           # (V, V)      pre-transposed adjacency: A_T[v,u] = A[u,v]
    w1 = w1_ref[0]            # (rel, Ca)
    w2 = w2_ref[0]            # (rel, Ca)
    w3 = w3_ref[0]            # (C_out, Ca)
    w4 = w4_ref[0]            # (C_out, rel)  already scaled by alpha
    b4 = b4_ref[0]            # (C_out, 1)    alpha * conv4 bias

    v = A_T.shape[0]
    tv = xf.shape[1]
    t = tv // v
    rel = w1.shape[0]
    c_out = w3.shape[0]

    # conv1/conv2 on the T-mean, conv3 on the full lane-dense slab (MXU matmuls).
    h1 = jnp.dot(w1, xm, preferred_element_type=jnp.float32)      # (rel, V)
    h2 = jnp.dot(w2, xm, preferred_element_type=jnp.float32)      # (rel, V)
    x3 = jnp.dot(w3, xf, preferred_element_type=jnp.float32)      # (C_out, T*V)
    x3 = x3.reshape(c_out, t, v)
    # TODO(synk): verify via pl.lower_as_mlir that the V=64 split/merge reshapes
    # here and at the store don't emit relayout copies; if they do, pad V to 128
    # on the y path.

    # Pairwise tanh difference, built directly transposed: d[r, v, u].
    diff = h1[:, None, :] - h2[:, :, None]                         # (rel, V, V)
    if bf16_tanh:
        # bf16 EUP throughput on v6e/v7x (~2x); disabled on v5e by the wrapper.
        d = jnp.tanh(diff.astype(jnp.bfloat16)).astype(jnp.float32)
    else:
        d = jnp.tanh(diff)

    # conv4 (already alpha-scaled) on the MXU; bias + adjacency as broadcast adds.
    a1 = jnp.dot(w4, d.reshape(rel, v * v),
                 preferred_element_type=jnp.float32)               # (C_out, V*V)
    a1 = a1.reshape(c_out, v, v) + A_T[None] + b4[:, :, None]      # (C_out, V_v, V_u)

    # y[c,t,u] = sum_v x3[c,t,v] * a1[c,v,u]  -- MXU-native batched matmul.
    y = jnp.einsum('ctv,cvu->ctu', x3, a1,
                   preferred_element_type=jnp.float32)             # (C_out, T, V)

    ymax_ref[0, 0] = jnp.max(y, axis=1)                            # (C_out, V) -> HGA
    y_ref[0, 0] = y.reshape(c_out, tv).astype(y_ref.dtype)         # bf16, lane-dense


# ----------------------------------------------------------------------------
# Pallas kernel 2: attention-weighted fusion + BN + residual + ReLU
# ----------------------------------------------------------------------------
def _fuse_kernel(y_ref, g_ref, x_ref, wd_ref, o_ref):
    """out = relu( sum_i gate[i] * y[i]  +  down(x) )  for one (n, T-tile).

    y arrives in bf16 (upcast on read; the sum accumulates in f32).  The main
    eval-mode BatchNorm is pre-folded into the gates (scale) and the residual
    bias column (shift); the residual 1x1 conv runs on the MXU.
    """
    num_subset = y_ref.shape[0]
    g = g_ref[0]                                   # (C_out, S) = sigmoid(att)*bn_scale
    acc = y_ref[0, 0].astype(jnp.float32) * g[:, 0:1]
    for i in range(1, num_subset):                 # S scaled adds on full-width vregs
        acc = acc + y_ref[i, 0].astype(jnp.float32) * g[:, i:i + 1]
    # residual 1x1 conv + BN + bn shift (bias folded into the ones channel).
    res = jnp.dot(wd_ref[...], x_ref[0], preferred_element_type=jnp.float32)
    o_ref[0] = jnp.maximum(acc + res, 0.0)


# ----------------------------------------------------------------------------
# HGA attention branch (tiny tensors: L=6 nodes, k=3) — plain JAX glue
# ----------------------------------------------------------------------------
def hga_attention(hp, x_t):
    """x_t: (N, C, L, V) = y.max(dim=T).  Returns attention logits (N, C, L)."""
    # TODO(synk): top-k KNN + data-dependent gather of EdgeConv kept in plain JAX
    # (data-dependent gather over 6 nodes has no useful Pallas hot path).
    N = x_t.shape[0]
    # conv_down: 1x1 conv + BN(eval, fresh-init stats) + ReLU
    h = jnp.einsum('oc,nclv->nolv', hp['wd1'], x_t) + hp['bd1'][None, :, None, None]
    h = jnp.maximum(h * BN_INV, 0.0)                        # (N, inter, L, V)

    samples = []
    for i, grp in enumerate(HGA_LAYERS):
        idx = jnp.asarray(grp, dtype=jnp.int32)
        samples.append(h[:, :, i, :][:, :, idx].mean(axis=-1, keepdims=True))
    xs = jnp.concatenate(samples, axis=2)                   # (N, inter, 6)

    # EdgeConv (k = 3)
    k = 3
    inner = -2.0 * jnp.einsum('ncl,ncm->nlm', xs, xs)
    xx = jnp.sum(xs * xs, axis=1, keepdims=True)            # (N, 1, 6)
    pw = -xx - inner - jnp.swapaxes(xx, 1, 2)                # (N, 6, 6)
    _, knn_idx = jax.lax.top_k(pw, k)                        # (N, 6, 3)
    x_r = jnp.swapaxes(xs, 1, 2)                             # (N, 6, inter)
    feat = x_r[jnp.arange(N)[:, None, None], knn_idx]        # (N, 6, 3, inter)
    x_rep = jnp.broadcast_to(x_r[:, :, None, :], feat.shape)
    feature = jnp.concatenate([feat - x_rep, x_rep], axis=3)      # (N, 6, 3, 2*inter)
    feature = jnp.transpose(feature, (0, 3, 1, 2))                # (N, 2*inter, 6, 3)
    e = jnp.einsum('oc,ncvk->novk', hp['we'], feature) * BN_INV   # conv(no bias)+BN(eval)
    e = jnp.where(e > 0, e, 0.2 * e)                              # LeakyReLU(0.2)
    e = e.max(axis=-1)                                            # (N, inter, 6)

    # aggregate: Conv1d(inter -> C)
    att = jnp.einsum('oc,ncl->nol', hp['wa'], e) + hp['ba'][None, :, None]
    return att                                                    # (N, C, 6)


# ----------------------------------------------------------------------------
# T-tile picker for the fuse kernel (generation-aware VMEM budget)
# ----------------------------------------------------------------------------
def _pick_t_tile(t, v, c_out, s, ca, budget_bytes):
    """Largest divisor TT of t whose fuse-step working set fits the budget while
    keeping the flattened lane axis 128-aligned.  Falls back to the smallest
    aligned divisor (never crashes; may exceed the budget for awkward T/V)."""
    def footprint(tt):
        y_b = s * c_out * tt * v * 2            # bf16 y block
        x_b = ca * tt * v * 4
        o_b = c_out * tt * v * 4
        return 2 * (y_b + x_b + o_b)            # double-buffered
    aligned = [tt for tt in range(1, t + 1)
               if t % tt == 0 and (tt == t or (tt * v) % 128 == 0)]
    fitting = [tt for tt in aligned if footprint(tt) <= budget_bytes]
    if fitting:
        return max(fitting)
    # TODO(synk): support masked partial tiles instead of exceeding the budget.
    return min(aligned)


# ----------------------------------------------------------------------------
# Wrapper: full unit_gcn forward with Pallas kernels on the hot paths
# ----------------------------------------------------------------------------
def unit_gcn_pallas(x, params):
    N, c_in, T, V = x.shape
    PA = params['PA']
    S = PA.shape[0]
    msgc = params['msgc']
    rel = msgc[0]['w1'].shape[0]
    c_out = msgc[0]['w3'].shape[0]
    Ca = c_in + 1
    TV = T * V

    # Generation-aware knobs: v7x has 64 MiB VMEM, v5e/v6e have 128 MiB;
    # v5e's EUP has no bf16 path.  Unknown chips fall back to the small-VMEM case.
    kind = _tpu_kind()
    small_vmem = ('v7' in kind) or (not kind)
    vmem_limit = (48 << 20) if small_vmem else (96 << 20)
    fuse_budget = (4 << 20) if small_vmem else (14 << 20)
    use_bf16_tanh = 'v5' not in kind

    # Pre-transposed adjacency so the kernel's contraction is MXU-native.
    A_T = jnp.swapaxes(PA.sum(axis=1), 1, 2)                      # (S, V, V)

    # Augmented activations: an all-ones channel folds every conv1..3 / down-conv
    # bias, and the lane-dense (T*V) layout keeps loads/stores full-width.
    x_aug = jnp.concatenate([x, jnp.ones((N, 1, T, V), x.dtype)], axis=1)
    x_flat = x_aug.reshape(N, Ca, TV)                             # (N, C_in+1, T*V)
    xm_aug = jnp.mean(x_aug, axis=2)                              # (N, C_in+1, V)

    # Per-subset weights; conv1..3 biases folded as a trailing column, the scalar
    # alpha folded into the conv4 weight and bias.
    w1a = jnp.stack([jnp.concatenate([p['w1'], p['b1'][:, None]], axis=1) for p in msgc])
    w2a = jnp.stack([jnp.concatenate([p['w2'], p['b2'][:, None]], axis=1) for p in msgc])
    w3a = jnp.stack([jnp.concatenate([p['w3'], p['b3'][:, None]], axis=1) for p in msgc])
    w4s = jnp.stack([p['w4'] for p in msgc]) * params['alpha']              # (S, C_out, rel)
    b4s = jnp.stack([p['b4'] for p in msgc])[:, :, None] * params['alpha']  # (S, C_out, 1)

    # Grid (S, N): N varies fastest, so per-subset weights/adjacency keep the same
    # block index across the inner n-loop (DMA'd once per subset); x re-streams
    # per (i, n) but hides under the per-step MXU work.
    # TODO(synk): for very large production batches fold a small N-tile into the
    # matmul lane dim to amortize the ~0.35us per-step dispatch cost.
    y_flat, ymax = pl.pallas_call(
        functools.partial(_msgc_kernel, bf16_tanh=use_bf16_tanh),
        out_shape=(jax.ShapeDtypeStruct((S, N, c_out, TV), jnp.bfloat16),
                   jax.ShapeDtypeStruct((S, N, c_out, V), jnp.float32)),
        grid=(S, N),
        in_specs=[
            pl.BlockSpec((1, Ca, TV), lambda i, n: (n, 0, 0)),           # x
            pl.BlockSpec((1, Ca, V), lambda i, n: (n, 0, 0)),            # T-mean of x
            pl.BlockSpec((1, V, V), lambda i, n: (i, 0, 0)),             # A.sum(1)^T
            pl.BlockSpec((1, rel, Ca), lambda i, n: (i, 0, 0)),          # conv1 [w|b]
            pl.BlockSpec((1, rel, Ca), lambda i, n: (i, 0, 0)),          # conv2 [w|b]
            pl.BlockSpec((1, c_out, Ca), lambda i, n: (i, 0, 0)),        # conv3 [w|b]
            pl.BlockSpec((1, c_out, rel), lambda i, n: (i, 0, 0)),       # alpha*conv4 w
            pl.BlockSpec((1, c_out, 1), lambda i, n: (i, 0, 0)),         # alpha*conv4 b
        ],
        out_specs=(pl.BlockSpec((1, 1, c_out, TV), lambda i, n: (i, n, 0, 0)),
                   pl.BlockSpec((1, 1, c_out, V), lambda i, n: (i, n, 0, 0))),
        compiler_params=pltpu.CompilerParams(
            dimension_semantics=("parallel", "arbitrary"),
            vmem_limit_bytes=vmem_limit),
    )(x_flat, xm_aug, A_T, w1a, w2a, w3a, w4s, b4s)

    # HGA attention branch (6 nodes, k=3): tiny + data-dependent gather — plain JAX.
    x_t = jnp.transpose(ymax, (1, 2, 0, 3))                       # (N, C_out, S, V)
    att = hga_attention(params['hga'], x_t)                       # (N, C_out, S)

    # Fold the (parametrized) eval-mode main BN into the gates (scale) and the
    # residual bias column (shift).
    bn_scale = params['bn_gamma'] * jax.lax.rsqrt(params['bn_var'] + BN_EPS)
    bn_shift = params['bn_beta'] - params['bn_mean'] * bn_scale
    gates = jax.nn.sigmoid(att) * bn_scale[None, :, None]         # (N, C_out, S)
    wd_aug = jnp.concatenate(
        [params['down']['w'] * BN_INV,
         (params['down']['b'] * BN_INV + bn_shift)[:, None]],
        axis=1)                                                   # (C_out, C_in+1)

    TT = _pick_t_tile(T, V, c_out, S, Ca, budget_bytes=fuse_budget)
    n_t = T // TT
    out_flat = pl.pallas_call(
        _fuse_kernel,
        out_shape=jax.ShapeDtypeStruct((N, c_out, TV), jnp.float32),
        grid=(N, n_t),
        in_specs=[
            pl.BlockSpec((S, 1, c_out, TT * V), lambda n, t: (0, n, 0, t)),
            pl.BlockSpec((1, c_out, S), lambda n, t: (n, 0, 0)),
            pl.BlockSpec((1, Ca, TT * V), lambda n, t: (n, 0, t)),
            pl.BlockSpec((c_out, Ca), lambda n, t: (0, 0)),
        ],
        out_specs=pl.BlockSpec((1, c_out, TT * V), lambda n, t: (n, 0, t)),
        compiler_params=pltpu.CompilerParams(
            dimension_semantics=("parallel", "parallel"),
            vmem_limit_bytes=vmem_limit),
    )(y_flat, gates, x_flat, wd_aug)

    out = out_flat.reshape(N, c_out, T, V)
    y_all = y_flat.reshape(S, N, c_out, T, V)
    return out, y_all


# ----------------------------------------------------------------------------
# Pure-JAX reference (follows the PyTorch op order) for correctness checking
# ----------------------------------------------------------------------------
def _msgc_ref(x, p, Ai, alpha):
    x1 = (jnp.einsum('rc,nctv->nrtv', p['w1'], x) + p['b1'][None, :, None, None]).mean(axis=-2)
    x2 = (jnp.einsum('rc,nctv->nrtv', p['w2'], x) + p['b2'][None, :, None, None]).mean(axis=-2)
    x3 = jnp.einsum('oc,nctv->notv', p['w3'], x) + p['b3'][None, :, None, None]
    d = jnp.tanh(x1[..., :, None] - x2[..., None, :])                        # (N, rel, V, V)
    a1 = jnp.einsum('or,nruv->nouv', p['w4'], d) + p['b4'][None, :, None, None]
    a1 = a1 * alpha + Ai[None, None]
    return jnp.einsum('ncuv,nctv->nctu', a1, x3)


def unit_gcn_reference(x, params):
    A = params['PA'].sum(axis=1)
    S = A.shape[0]
    ys = [_msgc_ref(x, params['msgc'][i], A[i], params['alpha']) for i in range(S)]
    y = jnp.stack(ys, axis=2)                           # (N, C, S, T, V)
    x_t = y.max(axis=3)                                 # (N, C, S, V)
    att = hga_attention(params['hga'], x_t)             # (N, C, S)
    out = (y * jax.nn.sigmoid(att)[:, :, :, None, None]).sum(axis=2)
    bn_scale = params['bn_gamma'] * jax.lax.rsqrt(params['bn_var'] + BN_EPS)
    bn_shift = params['bn_beta'] - params['bn_mean'] * bn_scale
    out = out * bn_scale[None, :, None, None] + bn_shift[None, :, None, None]
    res = jnp.einsum('oc,nctv->notv', params['down']['w'], x) \
        + params['down']['b'][None, :, None, None]
    out = out + res * BN_INV
    return jnp.maximum(out, 0.0), y


# ----------------------------------------------------------------------------
# Deterministic parameter construction (shapes follow the module's __init__)
# ----------------------------------------------------------------------------
def init_params(key, *, c_in, c_out, v, s, k_a):
    rel = 8 if c_in in (3, 9) else c_in // 8          # MSGC rel_channels
    inter = c_out // 4                                # HGA inter channels
    keys = iter(jax.random.split(key, 40))

    def kaiming(k, shape, fan_out):                   # kaiming_normal_, mode='fan_out', 1x1 conv
        return jax.random.normal(k, shape, jnp.float32) * np.float32(np.sqrt(2.0 / fan_out))

    msgc = []
    for _ in range(s):
        msgc.append(dict(
            w1=kaiming(next(keys), (rel, c_in), rel), b1=jnp.zeros((rel,), jnp.float32),
            w2=kaiming(next(keys), (rel, c_in), rel), b2=jnp.zeros((rel,), jnp.float32),
            w3=kaiming(next(keys), (c_out, c_in), c_out), b3=jnp.zeros((c_out,), jnp.float32),
            w4=kaiming(next(keys), (c_out, rel), c_out), b4=jnp.zeros((c_out,), jnp.float32)))
    hga = dict(
        wd1=kaiming(next(keys), (inter, c_out), inter), bd1=jnp.zeros((inter,), jnp.float32),
        we=kaiming(next(keys), (inter, 2 * inter), inter),
        wa=jax.random.normal(next(keys), (c_out, inter), jnp.float32) * 0.3,  # Conv1d (default init)
        ba=jax.random.normal(next(keys), (c_out,), jnp.float32) * 0.05)
    down = dict(w=kaiming(next(keys), (c_out, c_in), c_out),
                b=jnp.zeros((c_out,), jnp.float32))
    return dict(
        PA=jax.random.uniform(next(keys), (s, k_a, v, v), jnp.float32, 0.0, 0.2),
        # NOTE: the module initialises alpha to 0; a nonzero value is used here so
        # the conv4 branch is numerically exercised by the test (test-only value).
        alpha=jnp.full((1,), 0.5, jnp.float32),
        msgc=msgc, hga=hga, down=down,
        bn_gamma=jnp.full((c_out,), 1e-6, jnp.float32),   # bn_init(self.bn, 1e-6)
        bn_beta=jnp.zeros((c_out,), jnp.float32),
        bn_mean=jnp.zeros((c_out,), jnp.float32),         # BN running stats (eval mode)
        bn_var=jnp.ones((c_out,), jnp.float32))


if __name__ == "__main__":
    # V must be >= 50 because of HGA's hard-coded joint groups; 64 keeps it
    # sublane-aligned.  num_subset must be >= 6 (HGA indexes 6 layers).
    N, C_IN, T, V = 2, 3, 8, 64
    C_OUT, S, K_A = 16, 6, 3

    key = jax.random.PRNGKey(0)
    k_param, k_x = jax.random.split(key)
    params = init_params(k_param, c_in=C_IN, c_out=C_OUT, v=V, s=S, k_a=K_A)
    x = jax.random.normal(k_x, (N, C_IN, T, V), dtype=jnp.float32)

    fwd = jax.jit(unit_gcn_pallas)
    out, y_all = fwd(x, params)
    out = jax.block_until_ready(out)

    # Check against the pure-JAX reference (PyTorch op order).  Tolerances cover
    # the default-precision (bf16) matmuls plus the bf16 storage of y.
    ref_out, ref_y = unit_gcn_reference(x, params)
    y_from_kernel = jnp.transpose(y_all.astype(jnp.float32), (1, 2, 0, 3, 4))  # (N,C,S,T,V)
    assert out.shape == (N, C_OUT, T, V)
    np.testing.assert_allclose(np.asarray(y_from_kernel), np.asarray(ref_y),
                               rtol=2e-2, atol=1e-1)
    np.testing.assert_allclose(np.asarray(out), np.asarray(ref_out),
                               rtol=2e-2, atol=1e-1)
    print("KERNEL_OK")
</pallas_src>

<mosaic_0001>
module attributes {stable_mosaic.version = 11 : i64} {
  func.func @_msgc_kernel(%arg0: i32, %arg1: i32, %arg2: memref<1x4x512xf32, #tpu.memory_space<vmem>>, %arg3: memref<1x4x64xf32, #tpu.memory_space<vmem>>, %arg4: memref<1x64x64xf32, #tpu.memory_space<vmem>>, %arg5: memref<1x8x4xf32, #tpu.memory_space<vmem>>, %arg6: memref<1x8x4xf32, #tpu.memory_space<vmem>>, %arg7: memref<1x16x4xf32, #tpu.memory_space<vmem>>, %arg8: memref<1x16x8xf32, #tpu.memory_space<vmem>>, %arg9: memref<1x16x1xf32, #tpu.memory_space<vmem>>, %arg10: memref<1x1x16x512xbf16, #tpu.memory_space<vmem>>, %arg11: memref<1x1x16x64xf32, #tpu.memory_space<vmem>>) attributes {dimension_semantics = [#tpu.dimension_semantics<parallel>, #tpu.dimension_semantics<arbitrary>], iteration_bounds = array<i64: 6, 2>, scalar_prefetch = 0 : i64, scratch_operands = 0 : i64, tpu.core_type = #tpu.core_type<tc>, window_params = [{transform_indices = @transform_0, window_bounds = array<i64: 1, 4, 512>}, {transform_indices = @transform_1, window_bounds = array<i64: 1, 4, 64>}, {transform_indices = @transform_2, window_bounds = array<i64: 1, 64, 64>}, {transform_indices = @transform_3, window_bounds = array<i64: 1, 8, 4>}, {transform_indices = @transform_4, window_bounds = array<i64: 1, 8, 4>}, {transform_indices = @transform_5, window_bounds = array<i64: 1, 16, 4>}, {transform_indices = @transform_6, window_bounds = array<i64: 1, 16, 8>}, {transform_indices = @transform_7, window_bounds = array<i64: 1, 16, 1>}, {transform_indices = @transform_8, window_bounds = array<i64: 1, 1, 16, 512>}, {transform_indices = @transform_9, window_bounds = array<i64: 1, 1, 16, 64>}]} {
    %c0 = arith.constant 0 : index
    %c0_0 = arith.constant 0 : index
    %c0_1 = arith.constant 0 : index
    %0 = vector.load %arg2[%c0, %c0_0, %c0_1] : memref<1x4x512xf32, #tpu.memory_space<vmem>>, vector<1x4x512xf32>
    %1 = vector.shape_cast %0 : vector<1x4x512xf32> to vector<4x512xf32>
    %c0_2 = arith.constant 0 : index
    %c0_3 = arith.constant 0 : index
    %c0_4 = arith.constant 0 : index
    %2 = vector.load %arg3[%c0_2, %c0_3, %c0_4] : memref<1x4x64xf32, #tpu.memory_space<vmem>>, vector<1x4x64xf32>
    %3 = vector.shape_cast %2 : vector<1x4x64xf32> to vector<4x64xf32>
    %c0_5 = arith.constant 0 : index
    %c0_6 = arith.constant 0 : index
    %c0_7 = arith.constant 0 : index
    %4 = vector.load %arg4[%c0_5, %c0_6, %c0_7] : memref<1x64x64xf32, #tpu.memory_space<vmem>>, vector<1x64x64xf32>
    %5 = vector.shape_cast %4 : vector<1x64x64xf32> to vector<64x64xf32>
    %c0_8 = arith.constant 0 : index
    %c0_9 = arith.constant 0 : index
    %c0_10 = arith.constant 0 : index
    %6 = vector.load %arg5[%c0_8, %c0_9, %c0_10] : memref<1x8x4xf32, #tpu.memory_space<vmem>>, vector<1x8x4xf32>
    %7 = vector.shape_cast %6 : vector<1x8x4xf32> to vector<8x4xf32>
    %c0_11 = arith.constant 0 : index
    %c0_12 = arith.constant 0 : index
    %c0_13 = arith.constant 0 : index
    %8 = vector.load %arg6[%c0_11, %c0_12, %c0_13] : memref<1x8x4xf32, #tpu.memory_space<vmem>>, vector<1x8x4xf32>
    %9 = vector.shape_cast %8 : vector<1x8x4xf32> to vector<8x4xf32>
    %c0_14 = arith.constant 0 : index
    %c0_15 = arith.constant 0 : index
    %c0_16 = arith.constant 0 : index
    %10 = vector.load %arg7[%c0_14, %c0_15, %c0_16] : memref<1x16x4xf32, #tpu.memory_space<vmem>>, vector<1x16x4xf32>
    %11 = vector.shape_cast %10 : vector<1x16x4xf32> to vector<16x4xf32>
    %c0_17 = arith.constant 0 : index
    %c0_18 = arith.constant 0 : index
    %c0_19 = arith.constant 0 : index
    %12 = vector.load %arg8[%c0_17, %c0_18, %c0_19] : memref<1x16x8xf32, #tpu.memory_space<vmem>>, vector<1x16x8xf32>
    %13 = vector.shape_cast %12 : vector<1x16x8xf32> to vector<16x8xf32>
    %c0_20 = arith.constant 0 : index
    %c0_21 = arith.constant 0 : index
    %c0_22 = arith.constant 0 : index
    %14 = vector.load %arg9[%c0_20, %c0_21, %c0_22] : memref<1x16x1xf32, #tpu.memory_space<vmem>>, vector<1x16x1xf32>
    %15 = vector.shape_cast %14 : vector<1x16x1xf32> to vector<16x1xf32>
    %cst = arith.constant dense<0.000000e+00> : vector<8x64xf32>
    %16 = tpu.matmul %7, %3, %cst {dimension_numbers = #tpu.dot_dimension_numbers<[1], [0], [0], [1], [0, 0, 1, 1], [], []>} : vector<8x4xf32>, vector<4x64xf32>, vector<8x64xf32> -> vector<8x64xf32>
    %cst_23 = arith.constant dense<0.000000e+00> : vector<8x64xf32>
    %17 = tpu.matmul %9, %3, %cst_23 {dimension_numbers = #tpu.dot_dimension_numbers<[1], [0], [0], [1], [0, 0, 1, 1], [], []>} : vector<8x4xf32>, vector<4x64xf32>, vector<8x64xf32> -> vector<8x64xf32>
    %cst_24 = arith.constant dense<0.000000e+00> : vector<16x512xf32>
    %18 = tpu.matmul %11, %1, %cst_24 {dimension_numbers = #tpu.dot_dimension_numbers<[1], [0], [0], [1], [0, 0, 1, 1], [], []>} : vector<16x4xf32>, vector<4x512xf32>, vector<16x512xf32> -> vector<16x512xf32>
    %19 = vector.shape_cast %18 : vector<16x512xf32> to vector<16x8x64xf32>
    %20 = vector.shape_cast %16 : vector<8x64xf32> to vector<8x1x64xf32>
    %21 = vector.shape_cast %17 : vector<8x64xf32> to vector<8x64x1xf32>
    %22 = vector.broadcast %20 : vector<8x1x64xf32> to vector<8x64x64xf32>
    %23 = vector.broadcast %21 : vector<8x64x1xf32> to vector<8x64x64xf32>
    %24 = arith.subf %22, %23 : vector<8x64x64xf32>
    %25 = arith.truncf %24 : vector<8x64x64xf32> to vector<8x64x64xbf16>
    %26 = math.tanh %25 : vector<8x64x64xbf16>
    %27 = arith.extf %26 : vector<8x64x64xbf16> to vector<8x64x64xf32>
    %28 = vector.shape_cast %27 : vector<8x64x64xf32> to vector<8x4096xf32>
    %cst_25 = arith.constant dense<0.000000e+00> : vector<16x4096xf32>
    %29 = tpu.matmul %13, %28, %cst_25 {dimension_numbers = #tpu.dot_dimension_numbers<[1], [0], [0], [1], [0, 0, 1, 1], [], []>} : vector<16x8xf32>, vector<8x4096xf32>, vector<16x4096xf32> -> vector<16x4096xf32>
    %30 = vector.shape_cast %29 : vector<16x4096xf32> to vector<16x64x64xf32>
    %31 = vector.shape_cast %5 : vector<64x64xf32> to vector<1x64x64xf32>
    %32 = vector.broadcast %31 : vector<1x64x64xf32> to vector<16x64x64xf32>
    %33 = arith.addf %30, %32 : vector<16x64x64xf32>
    %34 = vector.shape_cast %15 : vector<16x1xf32> to vector<16x1x1xf32>
    %35 = vector.broadcast %34 : vector<16x1x1xf32> to vector<16x64x64xf32>
    %36 = arith.addf %33, %35 : vector<16x64x64xf32>
    "tpu.trace_start"() <{level = 10 : i32, message = "ctv,cvu->ctu"}> : () -> ()
    %cst_26 = arith.constant dense<0.000000e+00> : vector<16x8x64xf32>
    %37 = tpu.matmul %19, %36, %cst_26 {dimension_numbers = #tpu.dot_dimension_numbers<[2], [1], [1], [2], [0, 0, 0, 1, 1, 2], [0], [0]>} : vector<16x8x64xf32>, vector<16x64x64xf32>, vector<16x8x64xf32> -> vector<16x8x64xf32>
    "tpu.trace_stop"() : () -> ()
    %cst_27 = arith.constant dense<0xFF800000> : vector<16x64xf32>
    %38 = vector.multi_reduction <maximumf>, %37, %cst_27 [1] : vector<16x8x64xf32> to vector<16x64xf32>
    %c0_28 = arith.constant 0 : index
    %c0_29 = arith.constant 0 : index
    %c0_30 = arith.constant 0 : index
    %c0_31 = arith.constant 0 : index
    %39 = vector.load %arg11[%c0_28, %c0_29, %c0_30, %c0_31] : memref<1x1x16x64xf32, #tpu.memory_space<vmem>>, vector<1x1x16x64xf32>
    %40 = vector.shape_cast %39 : vector<1x1x16x64xf32> to vector<16x64xf32>
    %41 = vector.shape_cast %38 : vector<16x64xf32> to vector<1x1x16x64xf32>
    tpu.vector_store %arg11[%c0_28, %c0_29, %c0_30, %c0_31], %41 {strides = array<i32>} : memref<1x1x16x64xf32, #tpu.memory_space<vmem>>, vector<1x1x16x64xf32>,
    %42 = vector.shape_cast %37 : vector<16x8x64xf32> to vector<16x512xf32>
    %43 = arith.truncf %42 : vector<16x512xf32> to vector<16x512xbf16>
    %c0_32 = arith.constant 0 : index
    %c0_33 = arith.constant 0 : index
    %c0_34 = arith.constant 0 : index
    %c0_35 = arith.constant 0 : index
    %44 = vector.load %arg10[%c0_32, %c0_33, %c0_34, %c0_35] : memref<1x1x16x512xbf16, #tpu.memory_space<vmem>>, vector<1x1x16x512xbf16>
    %45 = vector.shape_cast %44 : vector<1x1x16x512xbf16> to vector<16x512xbf16>
    %46 = vector.shape_cast %43 : vector<16x512xbf16> to vector<1x1x16x512xbf16>
    tpu.vector_store %arg10[%c0_32, %c0_33, %c0_34, %c0_35], %46 {strides = array<i32>} : memref<1x1x16x512xbf16, #tpu.memory_space<vmem>>, vector<1x1x16x512xbf16>,
    return
  }
  func.func @transform_0(%arg0: i32, %arg1: i32) -> (i32, i32, i32) {
    %c0_i32 = arith.constant 0 : i32
    %c0_i32_0 = arith.constant 0 : i32
    %c0_i32_1 = arith.constant 0 : i32
    return %arg1, %c0_i32, %c0_i32_0 : i32, i32, i32
  }
  func.func @transform_1(%arg0: i32, %arg1: i32) -> (i32, i32, i32) {
    %c0_i32 = arith.constant 0 : i32
    %c0_i32_0 = arith.constant 0 : i32
    %c0_i32_1 = arith.constant 0 : i32
    return %arg1, %c0_i32, %c0_i32_0 : i32, i32, i32
  }
  func.func @transform_2(%arg0: i32, %arg1: i32) -> (i32, i32, i32) {
    %c0_i32 = arith.constant 0 : i32
    %c0_i32_0 = arith.constant 0 : i32
    %c0_i32_1 = arith.constant 0 : i32
    return %arg0, %c0_i32, %c0_i32_0 : i32, i32, i32
  }
  func.func @transform_3(%arg0: i32, %arg1: i32) -> (i32, i32, i32) {
    %c0_i32 = arith.constant 0 : i32
    %c0_i32_0 = arith.constant 0 : i32
    %c0_i32_1 = arith.constant 0 : i32
    return %arg0, %c0_i32, %c0_i32_0 : i32, i32, i32
  }
  func.func @transform_4(%arg0: i32, %arg1: i32) -> (i32, i32, i32) {
    %c0_i32 = arith.constant 0 : i32
    %c0_i32_0 = arith.constant 0 : i32
    %c0_i32_1 = arith.constant 0 : i32
    return %arg0, %c0_i32, %c0_i32_0 : i32, i32, i32
  }
  func.func @transform_5(%arg0: i32, %arg1: i32) -> (i32, i32, i32) {
    %c0_i32 = arith.constant 0 : i32
    %c0_i32_0 = arith.constant 0 : i32
    %c0_i32_1 = arith.constant 0 : i32
    return %arg0, %c0_i32, %c0_i32_0 : i32, i32, i32
  }
  func.func @transform_6(%arg0: i32, %arg1: i32) -> (i32, i32, i32) {
    %c0_i32 = arith.constant 0 : i32
    %c0_i32_0 = arith.constant 0 : i32
    %c0_i32_1 = arith.constant 0 : i32
    return %arg0, %c0_i32, %c0_i32_0 : i32, i32, i32
  }
  func.func @transform_7(%arg0: i32, %arg1: i32) -> (i32, i32, i32) {
    %c0_i32 = arith.constant 0 : i32
    %c0_i32_0 = arith.constant 0 : i32
    %c0_i32_1 = arith.constant 0 : i32
    return %arg0, %c0_i32, %c0_i32_0 : i32, i32, i32
  }
  func.func @transform_8(%arg0: i32, %arg1: i32) -> (i32, i32, i32, i32) {
    %c0_i32 = arith.constant 0 : i32
    %c0_i32_0 = arith.constant 0 : i32
    %c0_i32_1 = arith.constant 0 : i32
    return %arg0, %arg1, %c0_i32, %c0_i32_0 : i32, i32, i32, i32
  }
  func.func @transform_9(%arg0: i32, %arg1: i32) -> (i32, i32, i32, i32) {
    %c0_i32 = arith.constant 0 : i32
    %c0_i32_0 = arith.constant 0 : i32
    %c0_i32_1 = arith.constant 0 : i32
    return %arg0, %arg1, %c0_i32, %c0_i32_0 : i32, i32, i32, i32
  }
}

module attributes {stable_mosaic.version = 11 : i64} {
  func.func @_fuse_kernel(%arg0: i32, %arg1: i32, %arg2: memref<6x1x16x512xbf16, #tpu.memory_space<vmem>>, %arg3: memref<1x16x6xf32, #tpu.memory_space<vmem>>, %arg4: memref<1x4x512xf32, #tpu.memory_space<vmem>>, %arg5: memref<16x4xf32, #tpu.memory_space<vmem>>, %arg6: memref<1x16x512xf32, #tpu.memory_space<vmem>>) attributes {dimension_semantics = [#tpu.dimension_semantics<parallel>, #tpu.dimension_semantics<parallel>], iteration_bounds = array<i64: 2, 1>, scalar_prefetch = 0 : i64, scratch_operands = 0 : i64, tpu.core_type = #tpu.core_type<tc>, window_params = [{transform_indices = @transform_0, window_bounds = array<i64: 6, 1, 16, 512>}, {transform_indices = @transform_1, window_bounds = array<i64: 1, 16, 6>}, {transform_indices = @transform_2, window_bounds = array<i64: 1, 4, 512>}, {pipeline_mode = #tpu.pipeline_mode<synchronous>, transform_indices = @transform_3, window_bounds = array<i64: 16, 4>}, {transform_indices = @transform_4, window_bounds = array<i64: 1, 16, 512>}]} {
    %c0 = arith.constant 0 : index
    %c0_0 = arith.constant 0 : index
    %c0_1 = arith.constant 0 : index
    %0 = vector.load %arg3[%c0, %c0_0, %c0_1] : memref<1x16x6xf32, #tpu.memory_space<vmem>>, vector<1x16x6xf32>
    %1 = vector.shape_cast %0 : vector<1x16x6xf32> to vector<16x6xf32>
    %c0_2 = arith.constant 0 : index
    %c0_3 = arith.constant 0 : index
    %c0_4 = arith.constant 0 : index
    %c0_5 = arith.constant 0 : index
    %2 = vector.load %arg2[%c0_2, %c0_3, %c0_4, %c0_5] : memref<6x1x16x512xbf16, #tpu.memory_space<vmem>>, vector<1x1x16x512xbf16>
    %3 = vector.shape_cast %2 : vector<1x1x16x512xbf16> to vector<16x512xbf16>
    %4 = arith.extf %3 : vector<16x512xbf16> to vector<16x512xf32>
    %5 = vector.extract_strided_slice %1 {offsets = [0, 0], sizes = [16, 1], strides = [1, 1]} : vector<16x6xf32> to vector<16x1xf32>
    %6 = vector.broadcast %5 : vector<16x1xf32> to vector<16x512xf32>
    %7 = arith.mulf %4, %6 : vector<16x512xf32>
    %c1 = arith.constant 1 : index
    %c0_6 = arith.constant 0 : index
    %c0_7 = arith.constant 0 : index
    %c0_8 = arith.constant 0 : index
    %8 = vector.load %arg2[%c1, %c0_6, %c0_7, %c0_8] : memref<6x1x16x512xbf16, #tpu.memory_space<vmem>>, vector<1x1x16x512xbf16>
    %9 = vector.shape_cast %8 : vector<1x1x16x512xbf16> to vector<16x512xbf16>
    %10 = arith.extf %9 : vector<16x512xbf16> to vector<16x512xf32>
    %11 = vector.extract_strided_slice %1 {offsets = [0, 1], sizes = [16, 1], strides = [1, 1]} : vector<16x6xf32> to vector<16x1xf32>
    %12 = vector.broadcast %11 : vector<16x1xf32> to vector<16x512xf32>
    %13 = arith.mulf %10, %12 : vector<16x512xf32>
    %14 = arith.addf %7, %13 : vector<16x512xf32>
    %c2 = arith.constant 2 : index
    %c0_9 = arith.constant 0 : index
    %c0_10 = arith.constant 0 : index
    %c0_11 = arith.constant 0 : index
    %15 = vector.load %arg2[%c2, %c0_9, %c0_10, %c0_11] : memref<6x1x16x512xbf16, #tpu.memory_space<vmem>>, vector<1x1x16x512xbf16>
    %16 = vector.shape_cast %15 : vector<1x1x16x512xbf16> to vector<16x512xbf16>
    %17 = arith.extf %16 : vector<16x512xbf16> to vector<16x512xf32>
    %18 = vector.extract_strided_slice %1 {offsets = [0, 2], sizes = [16, 1], strides = [1, 1]} : vector<16x6xf32> to vector<16x1xf32>
    %19 = vector.broadcast %18 : vector<16x1xf32> to vector<16x512xf32>
    %20 = arith.mulf %17, %19 : vector<16x512xf32>
    %21 = arith.addf %14, %20 : vector<16x512xf32>
    %c3 = arith.constant 3 : index
    %c0_12 = arith.constant 0 : index
    %c0_13 = arith.constant 0 : index
    %c0_14 = arith.constant 0 : index
    %22 = vector.load %arg2[%c3, %c0_12, %c0_13, %c0_14] : memref<6x1x16x512xbf16, #tpu.memory_space<vmem>>, vector<1x1x16x512xbf16>
    %23 = vector.shape_cast %22 : vector<1x1x16x512xbf16> to vector<16x512xbf16>
    %24 = arith.extf %23 : vector<16x512xbf16> to vector<16x512xf32>
    %25 = vector.extract_strided_slice %1 {offsets = [0, 3], sizes = [16, 1], strides = [1, 1]} : vector<16x6xf32> to vector<16x1xf32>
    %26 = vector.broadcast %25 : vector<16x1xf32> to vector<16x512xf32>
    %27 = arith.mulf %24, %26 : vector<16x512xf32>
    %28 = arith.addf %21, %27 : vector<16x512xf32>
    %c4 = arith.constant 4 : index
    %c0_15 = arith.constant 0 : index
    %c0_16 = arith.constant 0 : index
    %c0_17 = arith.constant 0 : index
    %29 = vector.load %arg2[%c4, %c0_15, %c0_16, %c0_17] : memref<6x1x16x512xbf16, #tpu.memory_space<vmem>>, vector<1x1x16x512xbf16>
    %30 = vector.shape_cast %29 : vector<1x1x16x512xbf16> to vector<16x512xbf16>
    %31 = arith.extf %30 : vector<16x512xbf16> to vector<16x512xf32>
    %32 = vector.extract_strided_slice %1 {offsets = [0, 4], sizes = [16, 1], strides = [1, 1]} : vector<16x6xf32> to vector<16x1xf32>
    %33 = vector.broadcast %32 : vector<16x1xf32> to vector<16x512xf32>
    %34 = arith.mulf %31, %33 : vector<16x512xf32>
    %35 = arith.addf %28, %34 : vector<16x512xf32>
    %c5 = arith.constant 5 : index
    %c0_18 = arith.constant 0 : index
    %c0_19 = arith.constant 0 : index
    %c0_20 = arith.constant 0 : index
    %36 = vector.load %arg2[%c5, %c0_18, %c0_19, %c0_20] : memref<6x1x16x512xbf16, #tpu.memory_space<vmem>>, vector<1x1x16x512xbf16>
    %37 = vector.shape_cast %36 : vector<1x1x16x512xbf16> to vector<16x512xbf16>
    %38 = arith.extf %37 : vector<16x512xbf16> to vector<16x512xf32>
    %39 = vector.extract_strided_slice %1 {offsets = [0, 5], sizes = [16, 1], strides = [1, 1]} : vector<16x6xf32> to vector<16x1xf32>
    %40 = vector.broadcast %39 : vector<16x1xf32> to vector<16x512xf32>
    %41 = arith.mulf %38, %40 : vector<16x512xf32>
    %42 = arith.addf %35, %41 : vector<16x512xf32>
    %c0_21 = arith.constant 0 : index
    %c0_22 = arith.constant 0 : index
    %43 = vector.load %arg5[%c0_21, %c0_22] : memref<16x4xf32, #tpu.memory_space<vmem>>, vector<16x4xf32>
    %c0_23 = arith.constant 0 : index
    %c0_24 = arith.constant 0 : index
    %c0_25 = arith.constant 0 : index
    %44 = vector.load %arg4[%c0_23, %c0_24, %c0_25] : memref<1x4x512xf32, #tpu.memory_space<vmem>>, vector<1x4x512xf32>
    %45 = vector.shape_cast %44 : vector<1x4x512xf32> to vector<4x512xf32>
    %cst = arith.constant dense<0.000000e+00> : vector<16x512xf32>
    %46 = tpu.matmul %43, %45, %cst {dimension_numbers = #tpu.dot_dimension_numbers<[1], [0], [0], [1], [0, 0, 1, 1], [], []>} : vector<16x4xf32>, vector<4x512xf32>, vector<16x512xf32> -> vector<16x512xf32>
    %47 = arith.addf %42, %46 : vector<16x512xf32>
    %cst_26 = arith.constant 0.000000e+00 : f32
    %48 = vector.broadcast %cst_26 : f32 to vector<16x512xf32>
    %49 = arith.maximumf %47, %48 : vector<16x512xf32>
    %c0_27 = arith.constant 0 : index
    %c0_28 = arith.constant 0 : index
    %c0_29 = arith.constant 0 : index
    %50 = vector.load %arg6[%c0_27, %c0_28, %c0_29] : memref<1x16x512xf32, #tpu.memory_space<vmem>>, vector<1x16x512xf32>
    %51 = vector.shape_cast %50 : vector<1x16x512xf32> to vector<16x512xf32>
    %52 = vector.shape_cast %49 : vector<16x512xf32> to vector<1x16x512xf32>
    tpu.vector_store %arg6[%c0_27, %c0_28, %c0_29], %52 {strides = array<i32>} : memref<1x16x512xf32, #tpu.memory_space<vmem>>, vector<1x16x512xf32>,
    return
  }
  func.func @transform_0(%arg0: i32, %arg1: i32) -> (i32, i32, i32, i32) {
    %c0_i32 = arith.constant 0 : i32
    %c0_i32_0 = arith.constant 0 : i32
    %c0_i32_1 = arith.constant 0 : i32
    return %c0_i32, %arg0, %c0_i32_0, %arg1 : i32, i32, i32, i32
  }
  func.func @transform_1(%arg0: i32, %arg1: i32) -> (i32, i32, i32) {
    %c0_i32 = arith.constant 0 : i32
    %c0_i32_0 = arith.constant 0 : i32
    %c0_i32_1 = arith.constant 0 : i32
    return %arg0, %c0_i32, %c0_i32_0 : i32, i32, i32
  }
  func.func @transform_2(%arg0: i32, %arg1: i32) -> (i32, i32, i32) {
    %c0_i32 = arith.constant 0 : i32
    %c0_i32_0 = arith.constant 0 : i32
    return %arg0, %c0_i32, %arg1 : i32, i32, i32
  }
  func.func @transform_3(%arg0: i32, %arg1: i32) -> (i32, i32) {
    %c0_i32 = arith.constant 0 : i32
    %c0_i32_0 = arith.constant 0 : i32
    %c0_i32_1 = arith.constant 0 : i32
    return %c0_i32, %c0_i32_0 : i32, i32
  }
  func.func @transform_4(%arg0: i32, %arg1: i32) -> (i32, i32, i32) {
    %c0_i32 = arith.constant 0 : i32
    %c0_i32_0 = arith.constant 0 : i32
    return %arg0, %c0_i32, %arg1 : i32, i32, i32
  }
}

</mosaic_0001>

<llo_original>
// kernel: neg.6
$region0: #{neg.6}
  #allocation0 [shape = 's32[1]{0}', space=sflag, size = 0x4, scoped, tag = 'scoped memory for neg.6']
  %s0 = inlined_call_operand.vmem [shape: f32[2,6], index: 0, kind: input, shape index: {}]
  %s1 = inlined_call_operand.vmem [shape: f32[2,6], index: 1, kind: output, shape index: {}]
  %v2 = vld [vmem:[%s0] sm:$0x3]
  %3 = xla_tuple %v2
  %4 = xla_tuple %3
  %v5 = vxor.u32 %v2, 2147483648
  %6 = xla_tuple %v5
  %7 = vst [vmem:[%s1] sm:$0x3] %v5

// kernel: unit_gcn_pallas.3
$region0: #{unit_gcn_pallas.3}
  #allocation0 [shape = 'u32[]', space=smem, size = 0x4, offset = 0x4, fixed_abs, tag = 'smem constant byte address 0x4 - core index']
  #allocation1 [shape = 'u32[144,128]{1,0:T(1,128)}', space=vmem, size = 0x12000, scoped, tag = 'internal scratch']
  #allocation11 [shape = 's32[]', space=sflag, size = 0x4, offset = 0, fixed_abs, tag = 'sflag constant byte address 0x0 - dummy sync flag']
  %s0 = inlined_call_operand.hbm [shape: bf16[6,2,16,512], index: 0, kind: input, shape index: {}]
  %s1 = inlined_call_operand.hbm [shape: f32[2,16,6], index: 1, kind: input, shape index: {}]
  %s2 = inlined_call_operand.hbm [shape: f32[2,4,512], index: 2, kind: input, shape index: {}]
  %s3 = inlined_call_operand.hbm [shape: f32[16,4], index: 3, kind: input, shape index: {}]
  %s4 = inlined_call_operand.hbm [shape: f32[2,16,512], index: 4, kind: output, shape index: {}]
  %s5 = sld [smem:[#allocation0]]
  $region65: #{unit_gcn_pallas.3} parent=0
    _
  %s7 = ssub.s32 1, %s5
  %s8 = scalar_select 0, %s7, %s5
  $region1: #{unit_gcn_pallas.3} parent=0
    #allocation2 [shape = 'u8[196608]{0}', space=vmem, size = 0x30000, scoped, tag = 'input window, operand 0']
    #allocation3 [shape = 's32[2]{0}', space=sflag, size = 0x8, scoped, tag = 'scoped memory for unit_gcn_pallas.3']
    #allocation4 [shape = 's32[2]{0}', space=sflag, size = 0x8, scoped, tag = 'scoped memory for unit_gcn_pallas.3']
    #allocation5 [shape = 'u8[16384]{0}', space=vmem, size = 0x4000, scoped, tag = 'input window, operand 1']
    #allocation6 [shape = 's32[2]{0}', space=sflag, size = 0x8, scoped, tag = 'scoped memory for unit_gcn_pallas.3']
    #allocation7 [shape = 'u8[16384]{0}', space=vmem, size = 0x4000, scoped, tag = 'input window, operand 2']
    #allocation8 [shape = 'u8[8192]{0}', space=vmem, size = 0x2000, scoped, tag = 'input window, operand 3, single buffered']
    #allocation9 [shape = 's32[1]{0}', space=sflag, size = 0x4, scoped, tag = 'scoped memory for unit_gcn_pallas.3']
    #allocation10 [shape = 'u8[65536]{0}', space=vmem, size = 0x10000, scoped, tag = 'output window, operand 0']
    %9 = vsyncpa [#allocation3], 0
    %s10 = scalar_lea.sflag [#allocation3], 1
    %11 = vsyncpa %s10, 0
    %12 = vsyncpa [#allocation6], 0
    %s13 = scalar_lea.sflag [#allocation6], 1
    %14 = vsyncpa %s13, 0
    %15 = vsyncpa [#allocation9], 0
    %16 = vsyncpa [#allocation4], 0
    %s17 = scalar_lea.sflag [#allocation4], 1
    %18 = vsyncpa %s17, 0
    loop: start=0, step=1, limit=4
    $region2: #{unit_gcn_pallas.3} parent=1 // loop_pre_header
      _
    $region3: #{unit_gcn_pallas.3} parent=1 // loop_header
      %s20 = sphi 0, %s24
      %p21 = scmp.ge.s32.totalorder %s20, 4
      %s27 = sphi 0, %s39
      %s28 = sphi 0, %s35
      %s29 = sphi 0, %s27
      %s30 = sphi 0, %s28
      %s31 = sphi 0, %s29
      %s32 = sphi 0, %s30
      %s44 = sphi 0, %s46
      %s47 = sphi 0, %s44
      %s48 = sphi 0, %s47
      %s64 = sphi 0, %s48
      %s70 = sphi 0, %s72
      %s73 = sphi 0, %s70
      %s74 = sphi 0, %s73
      %s90 = sphi 0, %s74
      %s98 = sphi 0, %s100
      %s101 = sphi 0, %s98
      %s102 = sphi 0, %s101
      %s118 = sphi 0, %s102
      %s122 = sphi 0, %s122
      %s124 = sphi 0, %s122
      %s125 = sphi 0, %s124
      %s139 = sphi 0, %s125
      %s147 = sphi 0, %s149
      %s150 = sphi 0, %s147
      %s151 = sphi 0, %s150
      %s167 = sphi 0, %s151
    $region4: #{unit_gcn_pallas.3} parent=1 // loop_header_branch
      %23 = sbr.rel (%p21) target = $region8
    $region5: #{unit_gcn_pallas.3} parent=1 // loop_body
      %s25 = ssub.s32 %s20, 1
      %s26 = ssub.s32 %s20, 2
      %s33 = sadd.s32 1, %s28
      %p34 = scmp.ge.s32.totalorder %s33, 1
      %s35 = scalar_select %p34, 0, %s33
      %s36 = sadd.s32 1, %s27
      %s37 = scalar_select %p34, %s36, %s27
      %p38 = scmp.ge.s32.totalorder %s37, 2
      %s39 = scalar_select %p38, 0, %s37
      %s40 = ssub.s32 %s27, %s39
      %s41 = ssub.s32 %s28, %s35
      %s42 = sor.u32 %s40, %s41
      %p43 = scmp.eq.s32.totalorder %s42, 0
      %s45 = sadd.s32 %s44, 1
      %s46 = scalar_select %p43, %s44, %s45
      %p49 = pneg %p43
      %p50 = scmp.eq.s32.totalorder %s20, 1
      %p51 = por %p49, %p50
      %p52 = scmp.ne.s32.totalorder %s44, %s47
      %p53 = scmp.eq.s32.totalorder %s20, 0
      %p54 = por %p52, %p53
      %p55 = scmp.ne.s32.totalorder %s44, %s47
      %p56 = scmp.eq.s32.totalorder %s25, 1
      %p57 = por %p55, %p56
      %p58 = scmp.ne.s32.totalorder %s47, %s48
      %p59 = scmp.eq.s32.totalorder %s25, 0
      %p60 = por %p58, %p59
      %p61 = scmp.ne.s32.totalorder %s47, %s48
      %p62 = scmp.eq.s32.totalorder %s26, 1
      %p63 = por %p61, %p62
      %p65 = scmp.ne.s32.totalorder %s48, %s64
      %p66 = scmp.eq.s32.totalorder %s26, 0
      %p67 = por %p65, %p66
      %s68 = ssub.s32 %s27, %s39
      %p69 = scmp.eq.s32.totalorder %s68, 0
      %s71 = sadd.s32 %s70, 1
      %s72 = scalar_select %p69, %s70, %s71
      %p75 = pneg %p69
      %p76 = scmp.eq.s32.totalorder %s20, 1
      %p77 = por %p75, %p76
      %p78 = scmp.ne.s32.totalorder %s70, %s73
      %p79 = scmp.eq.s32.totalorder %s20, 0
      %p80 = por %p78, %p79
      %p81 = scmp.ne.s32.totalorder %s70, %s73
      %p82 = scmp.eq.s32.totalorder %s25, 1
      %p83 = por %p81, %p82
      %p84 = scmp.ne.s32.totalorder %s73, %s74
      %p85 = scmp.eq.s32.totalorder %s25, 0
      %p86 = por %p84, %p85
      %p87 = scmp.ne.s32.totalorder %s73, %s74
      %p88 = scmp.eq.s32.totalorder %s26, 1
      %p89 = por %p87, %p88
      %p91 = scmp.ne.s32.totalorder %s74, %s90
      %p92 = scmp.eq.s32.totalorder %s26, 0
      %p93 = por %p91, %p92
      %s94 = ssub.s32 %s27, %s39
      %s95 = ssub.s32 %s28, %s35
      %s96 = sor.u32 %s94, %s95
      %p97 = scmp.eq.s32.totalorder %s96, 0
      %s99 = sadd.s32 %s98, 1
      %s100 = scalar_select %p97, %s98, %s99
      %p103 = pneg %p97
      %p104 = scmp.eq.s32.totalorder %s20, 1
      %p105 = por %p103, %p104
      %p106 = scmp.ne.s32.totalorder %s98, %s101
      %p107 = scmp.eq.s32.totalorder %s20, 0
      %p108 = por %p106, %p107
      %p109 = scmp.ne.s32.totalorder %s98, %s101
      %p110 = scmp.eq.s32.totalorder %s25, 1
      %p111 = por %p109, %p110
      %p112 = scmp.ne.s32.totalorder %s101, %s102
      %p113 = scmp.eq.s32.totalorder %s25, 0
      %p114 = por %p112, %p113
      %p115 = scmp.ne.s32.totalorder %s101, %s102
      %p116 = scmp.eq.s32.totalorder %s26, 1
      %p117 = por %p115, %p116
      %p119 = scmp.ne.s32.totalorder %s102, %s118
      %p120 = scmp.eq.s32.totalorder %s26, 0
      %p121 = por %p119, %p120
      %s123 = sadd.s32 %s122, 1
      %p126 = scmp.eq.s32.totalorder %s20, 1
      %p127 = scmp.ne.s32.totalorder %s122, %s124
      %p128 = scmp.eq.s32.totalorder %s20, 0
      %p129 = por %p127, %p128
      %p130 = scmp.ne.s32.totalorder %s122, %s124
      %p131 = scmp.eq.s32.totalorder %s25, 1
      %p132 = por %p130, %p131
      %p133 = scmp.ne.s32.totalorder %s124, %s125
      %p134 = scmp.eq.s32.totalorder %s25, 0
      %p135 = por %p133, %p134
      %p136 = scmp.ne.s32.totalorder %s124, %s125
      %p137 = scmp.eq.s32.totalorder %s26, 1
      %p138 = por %p136, %p137
      %p140 = scmp.ne.s32.totalorder %s125, %s139
      %p141 = scmp.eq.s32.totalorder %s26, 0
      %p142 = por %p140, %p141
      %s143 = ssub.s32 %s27, %s39
      %s144 = ssub.s32 %s28, %s35
      %s145 = sor.u32 %s143, %s144
      %p146 = scmp.eq.s32.totalorder %s145, 0
      %s148 = sadd.s32 %s147, 1
      %s149 = scalar_select %p146, %s147, %s148
      %p152 = pneg %p146
      %p153 = scmp.eq.s32.totalorder %s20, 1
      %p154 = por %p152, %p153
      %p155 = scmp.ne.s32.totalorder %s147, %s150
      %p156 = scmp.eq.s32.totalorder %s20, 0
      %p157 = por %p155, %p156
      %p158 = scmp.ne.s32.totalorder %s147, %s150
      %p159 = scmp.eq.s32.totalorder %s25, 1
      %p160 = por %p158, %p159
      %p161 = scmp.ne.s32.totalorder %s150, %s151
      %p162 = scmp.eq.s32.totalorder %s25, 0
      %p163 = por %p161, %p162
      %p164 = scmp.ne.s32.totalorder %s150, %s151
      %p165 = scmp.eq.s32.totalorder %s26, 1
      %p166 = por %p164, %p165
      %p168 = scmp.ne.s32.totalorder %s151, %s167
      %p169 = scmp.eq.s32.totalorder %s26, 0
      %p170 = por %p168, %p169
      %p171 = scmp.le.s32.totalorder 1, %s20
      %p172 = scmp.lt.s32.totalorder %s20, 3
      %p173 = pnand %p171, %p172
      %p174 = pneg %p173
      // Predicated region
      $region9: #{unit_gcn_pallas.3} parent=5 // pred_check
        _
      $region10: #{unit_gcn_pallas.3} parent=5 // pred_check_branch
        %176 = sbr.rel (%p173) target = $region12
      $region11: #{unit_gcn_pallas.3} parent=5 // pred_region
        %s177 = ssub.s32 %s20, 1
        // Predicated region
        $region13: #{unit_gcn_pallas.3} parent=11 // pred_check
          %p178 = pneg %p135
        $region14: #{unit_gcn_pallas.3} parent=11 // pred_check_branch
          %180 = sbr.rel (%p178) target = $region16
        $region15: #{unit_gcn_pallas.3} parent=11 // pred_region
          %s182 = ssub.s32 256, 256
          %183 = vsyncadd [#allocation9], %s182
          %s184 = sshll.u32 [#allocation8], 4
          %s185 = int_to_ptr.vmem [resolvable:$true] %s184
          %190 = dma.hbm_to_vmem [thread:$0]  %s3, 256, %s185, [#allocation9], 128, 128, 8
        $region16: #{unit_gcn_pallas.3} parent=11 // pred_fallthru
          _
      $region12: #{unit_gcn_pallas.3} parent=5 // pred_fallthru
        _
      %p191 = scmp.lt.s32.totalorder %s20, 2
      // Predicated region
      $region17: #{unit_gcn_pallas.3} parent=5 // pred_check
        %p192 = pneg %p191
      $region18: #{unit_gcn_pallas.3} parent=5 // pred_check_branch
        %194 = sbr.rel (%p192) target = $region20
      $region19: #{unit_gcn_pallas.3} parent=5 // pred_region
        // Predicated region
        $region21: #{unit_gcn_pallas.3} parent=19 // pred_check
          %p195 = pneg %p54
        $region22: #{unit_gcn_pallas.3} parent=19 // pred_check_branch
          %197 = sbr.rel (%p195) target = $region24
        $region23: #{unit_gcn_pallas.3} parent=19 // pred_region
          #allocation12 [shape = 'u32[6]{0}', space=smem, size = 0x18, scoped, tag = 'DMA stride descriptor']
          %s198 = sand.u32 %s44, 1
          %s199 = scalar_lea.sflag [#allocation3], %s198
          %s200 = sand.u32 %s44, 1
          %s201 = smul.addr %s200, 192
          %s202 = scalar_lea.vmem [#allocation2], %s201
          %s203 = smul.u32 4, %s28
          %s205 = ssub.s32 3072, 3072
          %206 = vsyncadd %s199, %s205
          %s207 = smul.addr %s27, 8
          %s208 = sadd.s32 %s203, %s207
          %s209 = smul.addr %s208, 64
          %s210 = scalar_lea.hbm %s0, %s209
          %s212 = sshll.u32 1, 14
          %s213 = sxor.u32 4294967295, %s212
          %s215 = sld [smem:[#allocation0]]
          %s216 = sadd.s32 2, %s215
          %s218 = sshll.u32 7, 26
          %s219 = sxor.u32 4294967295, %s218
          %s220 = sand.u32 0, %s219
          %s221 = sshll.u32 %s216, 26
          %s222 = sor.u32 %s220, %s221
          %s223 = sshll.u32 %s202, 4
          %s224 = int_to_ptr.vmem [resolvable:$true] %s223
          %230 = sst [smem:[#allocation12]] 1024
          %s231 = scalar_lea.smem [#allocation12], 1
          %232 = sst [smem:[%s231]] 512
          %s233 = scalar_lea.smem [#allocation12], 2
          %234 = sst [smem:[%s233]] 2
          %s235 = scalar_lea.smem [#allocation12], 3
          %236 = sst [smem:[%s235]] 256
          %s237 = scalar_lea.smem [#allocation12], 4
          %238 = sst [smem:[%s237]] 256
          %s239 = scalar_lea.smem [#allocation12], 5
          %240 = sst [smem:[%s239]] 16
          %242 = dma.general %s210, 3072, %s224, %s199, [#allocation11], [#allocation12], %s222, 0
        $region24: #{unit_gcn_pallas.3} parent=19 // pred_fallthru
          _
        // Predicated region
        $region25: #{unit_gcn_pallas.3} parent=19 // pred_check
          %p243 = pneg %p80
        $region26: #{unit_gcn_pallas.3} parent=19 // pred_check_branch
          %245 = sbr.rel (%p243) target = $region28
        $region27: #{unit_gcn_pallas.3} parent=19 // pred_region
          %s246 = sand.u32 %s20, 1
          %s247 = scalar_lea.sflag [#allocation6], %s246
          %s248 = sand.u32 %s70, 1
          %s249 = smul.addr %s248, 16
          %s250 = scalar_lea.vmem [#allocation5], %s249
          %s252 = ssub.s32 256, 256
          %253 = vsyncadd %s247, %s252
          %s254 = smul.addr %s27, 2
          %s255 = smul.addr %s254, 128
          %s256 = scalar_lea.hbm %s1, %s255
          %s257 = sshll.u32 %s250, 4
          %s258 = int_to_ptr.vmem [resolvable:$true] %s257
          %263 = dma.hbm_to_vmem [thread:$0]  %s256, 256, %s258, %s247, 128, 128, 8
        $region28: #{unit_gcn_pallas.3} parent=19 // pred_fallthru
          _
        // Predicated region
        $region29: #{unit_gcn_pallas.3} parent=19 // pred_check
          %p264 = pneg %p108
        $region30: #{unit_gcn_pallas.3} parent=19 // pred_check_branch
          %266 = sbr.rel (%p264) target = $region32
        $region31: #{unit_gcn_pallas.3} parent=19 // pred_region
          %s267 = sand.u32 %s20, 1
          %s268 = scalar_lea.sflag [#allocation6], %s267
          %s269 = sand.u32 %s98, 1
          %s270 = smul.addr %s269, 16
          %s271 = scalar_lea.vmem [#allocation7], %s270
          %s272 = smul.u32 4, %s28
          %s274 = ssub.s32 256, 256
          %275 = vsyncadd %s268, %s274
          %s276 = smul.addr %s27, 4
          %s277 = sadd.s32 %s272, %s276
          %s278 = smul.addr %s277, 64
          %s279 = scalar_lea.hbm %s2, %s278
          %s281 = sshll.u32 %s271, 4
          %s282 = int_to_ptr.vmem [resolvable:$true] %s281
          %284 = dma.hbm_to_vmem [thread:$0]  %s279, 256, %s282, %s268
        $region32: #{unit_gcn_pallas.3} parent=19 // pred_fallthru
          _
      $region20: #{unit_gcn_pallas.3} parent=5 // pred_fallthru
        _
      %p285 = scmp.le.s32.totalorder 1, %s20
      %p286 = scmp.lt.s32.totalorder %s20, 3
      %p287 = pnand %p285, %p286
      %p288 = pneg %p287
      // Predicated region
      $region33: #{unit_gcn_pallas.3} parent=5 // pred_check
        _
      $region34: #{unit_gcn_pallas.3} parent=5 // pred_check_branch
        %290 = sbr.rel (%p287) target = $region36
      $region35: #{unit_gcn_pallas.3} parent=5 // pred_region
        %s291 = ssub.s32 %s20, 1
        %s292 = sand.u32 %s47, 1
        %s293 = scalar_lea.sflag [#allocation3], %s292
        %s294 = sand.u32 %s47, 1
        %s295 = smul.addr %s294, 192
        %s296 = scalar_lea.vmem [#allocation2], %s295
        // Predicated region
        $region37: #{unit_gcn_pallas.3} parent=35 // pred_check
          %p297 = pneg %p60
        $region38: #{unit_gcn_pallas.3} parent=35 // pred_check_branch
          %299 = sbr.rel (%p297) target = $region40
        $region39: #{unit_gcn_pallas.3} parent=35 // pred_region
          %300 = dma.done %s293, 3072
        $region40: #{unit_gcn_pallas.3} parent=35 // pred_fallthru
          _
        %s301 = sand.u32 %s25, 1
        %s302 = scalar_lea.sflag [#allocation6], %s301
        %s303 = sand.u32 %s73, 1
        %s304 = smul.addr %s303, 16
        %s305 = scalar_lea.vmem [#allocation5], %s304
        // Predicated region
        $region41: #{unit_gcn_pallas.3} parent=35 // pred_check
          %p306 = pneg %p86
        $region42: #{unit_gcn_pallas.3} parent=35 // pred_check_branch
          %308 = sbr.rel (%p306) target = $region44
        $region43: #{unit_gcn_pallas.3} parent=35 // pred_region
          %309 = dma.done %s302, 256
        $region44: #{unit_gcn_pallas.3} parent=35 // pred_fallthru
          _
        %s310 = sand.u32 %s25, 1
        %s311 = scalar_lea.sflag [#allocation6], %s310
        %s312 = sand.u32 %s101, 1
        %s313 = smul.addr %s312, 16
        %s314 = scalar_lea.vmem [#allocation7], %s313
        // Predicated region
        $region45: #{unit_gcn_pallas.3} parent=35 // pred_check
          %p315 = pneg %p114
        $region46: #{unit_gcn_pallas.3} parent=35 // pred_check_branch
          %317 = sbr.rel (%p315) target = $region48
        $region47: #{unit_gcn_pallas.3} parent=35 // pred_region
          %318 = dma.done %s311, 256
        $region48: #{unit_gcn_pallas.3} parent=35 // pred_fallthru
          _
        // Predicated region
        $region49: #{unit_gcn_pallas.3} parent=35 // pred_check
          %p319 = pneg %p135
        $region50: #{unit_gcn_pallas.3} parent=35 // pred_check_branch
          %321 = sbr.rel (%p319) target = $region52
        $region51: #{unit_gcn_pallas.3} parent=35 // pred_region
          %322 = dma.done [#allocation9], 256
        $region52: #{unit_gcn_pallas.3} parent=35 // pred_fallthru
          _
        %s323 = sand.u32 %s47, 1
        %s324 = scalar_lea.sflag [#allocation3], %s323
        %s325 = sand.u32 %s47, 1
        %s326 = smul.addr %s325, 192
        %s327 = scalar_lea.vmem [#allocation2], %s326
        %p328 = pneg %p60
        %p329 = pneg %p57
        %s330 = sand.u32 %s25, 1
        %s331 = scalar_lea.sflag [#allocation6], %s330
        %s332 = sand.u32 %s73, 1
        %s333 = smul.addr %s332, 16
        %s334 = scalar_lea.vmem [#allocation5], %s333
        %p335 = pneg %p86
        %p336 = pneg %p83
        %s337 = sand.u32 %s25, 1
        %s338 = scalar_lea.sflag [#allocation6], %s337
        %s339 = sand.u32 %s101, 1
        %s340 = smul.addr %s339, 16
        %s341 = scalar_lea.vmem [#allocation7], %s340
        %p342 = pneg %p114
        %p343 = pneg %p111
        %p344 = pneg %p135
        %p345 = pneg %p132
        %p346 = pneg %p163
        %p347 = pneg %p160
        %s348 = sand.u32 %s150, 1
        %s349 = scalar_lea.sflag [#allocation4], %s348
        %s350 = sand.u32 %s150, 1
        %s351 = smul.addr %s350, 64
        %s352 = scalar_lea.vmem [#allocation10], %s351
        %s353 = smul.u32 4, %s30
        %s354 = smul.u32 4, %s30
        %s355 = smul.u32 4, %s30
        %v356 = vld [vmem:[%s305] sm:$0xff]
        %v357 = vld [vmem:[%s305 + $0x8] sm:$0xff]
        %v358 = vld [vmem:[%s296] sm:$0xff]
        %v359 = vld [vmem:[%s296 + $0x8] sm:$0xff]
        %v360 = vld [vmem:[%s296 + $0x10] sm:$0xff]
        %v361 = vld [vmem:[%s296 + $0x18] sm:$0xff]
        %v362 = vunpack.c.l.bf16 %v358
        %v363 = vunpack.c.h.bf16 %v358
        %v364 = vunpack.c.l.bf16 %v359
        %v365 = vunpack.c.h.bf16 %v359
        %v366 = vunpack.c.l.bf16 %v360
        %v367 = vunpack.c.h.bf16 %v360
        %v368 = vunpack.c.l.bf16 %v361
        %v369 = vunpack.c.h.bf16 %v361
        %371 = vset.pattern.permute.xlu0 0
        %372 = vperm.xlu0 %371, %v356
        %v373 = vpop.permute.xlu0 %372
        %376 = vset.pattern.permute.xlu0 0
        %377 = vperm.xlu0 %376, %v357
        %v378 = vpop.permute.xlu0 %377
        %v380 = vmul.f32 %v362, %v373
        %v381 = vmul.f32 %v363, %v373
        %v382 = vmul.f32 %v364, %v373
        %v383 = vmul.f32 %v365, %v373
        %v384 = vmul.f32 %v366, %v378
        %v385 = vmul.f32 %v367, %v378
        %v386 = vmul.f32 %v368, %v378
        %v387 = vmul.f32 %v369, %v378
        %s388 = scalar_lea.vmem %s296, 32 [#allocation2]
        %v389 = vld [vmem:[%s388] sm:$0xff]
        %v390 = vld [vmem:[%s388 + $0x8] sm:$0xff]
        %v391 = vld [vmem:[%s388 + $0x10] sm:$0xff]
        %v392 = vld [vmem:[%s388 + $0x18] sm:$0xff]
        %v393 = vunpack.c.l.bf16 %v389
        %v394 = vunpack.c.h.bf16 %v389
        %v395 = vunpack.c.l.bf16 %v390
        %v396 = vunpack.c.h.bf16 %v390
        %v397 = vunpack.c.l.bf16 %v391
        %v398 = vunpack.c.h.bf16 %v391
        %v399 = vunpack.c.l.bf16 %v392
        %v400 = vunpack.c.h.bf16 %v392
        %401 = vset.pattern.permute.xlu0 1
        %402 = vperm.xlu0 %401, %v356
        %v403 = vpop.permute.xlu0 %402
        %405 = vset.pattern.permute.xlu0 1
        %406 = vperm.xlu0 %405, %v357
        %v407 = vpop.permute.xlu0 %406
        %v409 = vmul.f32 %v393, %v403
        %v410 = vmul.f32 %v394, %v403
        %v411 = vmul.f32 %v395, %v403
        %v412 = vmul.f32 %v396, %v403
        %v413 = vmul.f32 %v397, %v407
        %v414 = vmul.f32 %v398, %v407
        %v415 = vmul.f32 %v399, %v407
        %v416 = vmul.f32 %v400, %v407
        %v417 = vadd.f32 %v380, %v409
        %v418 = vadd.f32 %v381, %v410
        %v419 = vadd.f32 %v382, %v411
        %v420 = vadd.f32 %v383, %v412
        %v421 = vadd.f32 %v384, %v413
        %v422 = vadd.f32 %v385, %v414
        %v423 = vadd.f32 %v386, %v415
        %v424 = vadd.f32 %v387, %v416
        %s425 = scalar_lea.vmem %s296, 64 [#allocation2]
        %v426 = vld [vmem:[%s425] sm:$0xff]
        %v427 = vld [vmem:[%s425 + $0x8] sm:$0xff]
        %v428 = vld [vmem:[%s425 + $0x10] sm:$0xff]
        %v429 = vld [vmem:[%s425 + $0x18] sm:$0xff]
        %v430 = vunpack.c.l.bf16 %v426
        %v431 = vunpack.c.h.bf16 %v426
        %v432 = vunpack.c.l.bf16 %v427
        %v433 = vunpack.c.h.bf16 %v427
        %v434 = vunpack.c.l.bf16 %v428
        %v435 = vunpack.c.h.bf16 %v428
        %v436 = vunpack.c.l.bf16 %v429
        %v437 = vunpack.c.h.bf16 %v429
        %438 = vset.pattern.permute.xlu0 2
        %439 = vperm.xlu0 %438, %v356
        %v440 = vpop.permute.xlu0 %439
        %442 = vset.pattern.permute.xlu0 2
        %443 = vperm.xlu0 %442, %v357
        %v444 = vpop.permute.xlu0 %443
        %v446 = vmul.f32 %v430, %v440
        %v447 = vmul.f32 %v431, %v440
        %v448 = vmul.f32 %v432, %v440
        %v449 = vmul.f32 %v433, %v440
        %v450 = vmul.f32 %v434, %v444
        %v451 = vmul.f32 %v435, %v444
        %v452 = vmul.f32 %v436, %v444
        %v453 = vmul.f32 %v437, %v444
        %v454 = vadd.f32 %v417, %v446
        %v455 = vadd.f32 %v418, %v447
        %v456 = vadd.f32 %v419, %v448
        %v457 = vadd.f32 %v420, %v449
        %v458 = vadd.f32 %v421, %v450
        %v459 = vadd.f32 %v422, %v451
        %v460 = vadd.f32 %v423, %v452
        %v461 = vadd.f32 %v424, %v453
        %s462 = scalar_lea.vmem %s296, 96 [#allocation2]
        %v463 = vld [vmem:[%s462] sm:$0xff]
        %v464 = vld [vmem:[%s462 + $0x8] sm:$0xff]
        %v465 = vld [vmem:[%s462 + $0x10] sm:$0xff]
        %v466 = vld [vmem:[%s462 + $0x18] sm:$0xff]
        %v467 = vunpack.c.l.bf16 %v463
        %v468 = vunpack.c.h.bf16 %v463
        %v469 = vunpack.c.l.bf16 %v464
        %v470 = vunpack.c.h.bf16 %v464
        %v471 = vunpack.c.l.bf16 %v465
        %v472 = vunpack.c.h.bf16 %v465
        %v473 = vunpack.c.l.bf16 %v466
        %v474 = vunpack.c.h.bf16 %v466
        %475 = vset.pattern.permute.xlu0 3
        %476 = vperm.xlu0 %475, %v356
        %v477 = vpop.permute.xlu0 %476
        %479 = vset.pattern.permute.xlu0 3
        %480 = vperm.xlu0 %479, %v357
        %v481 = vpop.permute.xlu0 %480
        %v483 = vmul.f32 %v467, %v477
        %v484 = vmul.f32 %v468, %v477
        %v485 = vmul.f32 %v469, %v477
        %v486 = vmul.f32 %v470, %v477
        %v487 = vmul.f32 %v471, %v481
        %v488 = vmul.f32 %v472, %v481
        %v489 = vmul.f32 %v473, %v481
        %v490 = vmul.f32 %v474, %v481
        %v491 = vadd.f32 %v454, %v483
        %v492 = vadd.f32 %v455, %v484
        %v493 = vadd.f32 %v456, %v485
        %v494 = vadd.f32 %v457, %v486
        %v495 = vadd.f32 %v458, %v487
        %v496 = vadd.f32 %v459, %v488
        %v497 = vadd.f32 %v460, %v489
        %v498 = vadd.f32 %v461, %v490
        %s499 = scalar_lea.vmem %s296, 128 [#allocation2]
        %v500 = vld [vmem:[%s499] sm:$0xff]
        %v501 = vld [vmem:[%s499 + $0x8] sm:$0xff]
        %v502 = vld [vmem:[%s499 + $0x10] sm:$0xff]
        %v503 = vld [vmem:[%s499 + $0x18] sm:$0xff]
        %v504 = vunpack.c.l.bf16 %v500
        %v505 = vunpack.c.h.bf16 %v500
        %v506 = vunpack.c.l.bf16 %v501
        %v507 = vunpack.c.h.bf16 %v501
        %v508 = vunpack.c.l.bf16 %v502
        %v509 = vunpack.c.h.bf16 %v502
        %v510 = vunpack.c.l.bf16 %v503
        %v511 = vunpack.c.h.bf16 %v503
        %512 = vset.pattern.permute.xlu0 4
        %513 = vperm.xlu0 %512, %v356
        %v514 = vpop.permute.xlu0 %513
        %516 = vset.pattern.permute.xlu0 4
        %517 = vperm.xlu0 %516, %v357
        %v518 = vpop.permute.xlu0 %517
        %v520 = vmul.f32 %v504, %v514
        %v521 = vmul.f32 %v505, %v514
        %v522 = vmul.f32 %v506, %v514
        %v523 = vmul.f32 %v507, %v514
        %v524 = vmul.f32 %v508, %v518
        %v525 = vmul.f32 %v509, %v518
        %v526 = vmul.f32 %v510, %v518
        %v527 = vmul.f32 %v511, %v518
        %v528 = vadd.f32 %v491, %v520
        %v529 = vadd.f32 %v492, %v521
        %v530 = vadd.f32 %v493, %v522
        %v531 = vadd.f32 %v494, %v523
        %v532 = vadd.f32 %v495, %v524
        %v533 = vadd.f32 %v496, %v525
        %v534 = vadd.f32 %v497, %v526
        %v535 = vadd.f32 %v498, %v527
        %s536 = scalar_lea.vmem %s296, 160 [#allocation2]
        %v537 = vld [vmem:[%s536] sm:$0xff]
        %v538 = vld [vmem:[%s536 + $0x8] sm:$0xff]
        %v539 = vld [vmem:[%s536 + $0x10] sm:$0xff]
        %v540 = vld [vmem:[%s536 + $0x18] sm:$0xff]
        %v541 = vunpack.c.l.bf16 %v537
        %v542 = vunpack.c.h.bf16 %v537
        %v543 = vunpack.c.l.bf16 %v538
        %v544 = vunpack.c.h.bf16 %v538
        %v545 = vunpack.c.l.bf16 %v539
        %v546 = vunpack.c.h.bf16 %v539
        %v547 = vunpack.c.l.bf16 %v540
        %v548 = vunpack.c.h.bf16 %v540
        %549 = vset.pattern.permute.xlu0 5
        %550 = vperm.xlu0 %549, %v356
        %v551 = vpop.permute.xlu0 %550
        %553 = vset.pattern.permute.xlu0 5
        %554 = vperm.xlu0 %553, %v357
        %v555 = vpop.permute.xlu0 %554
        %v557 = vmul.f32 %v541, %v551
        %v558 = vmul.f32 %v542, %v551
        %v559 = vmul.f32 %v543, %v551
        %v560 = vmul.f32 %v544, %v551
        %v561 = vmul.f32 %v545, %v555
        %v562 = vmul.f32 %v546, %v555
        %v563 = vmul.f32 %v547, %v555
        %v564 = vmul.f32 %v548, %v555
        %v565 = vadd.f32 %v528, %v557
        %v566 = vadd.f32 %v529, %v558
        %v567 = vadd.f32 %v530, %v559
        %v568 = vadd.f32 %v531, %v560
        %v569 = vadd.f32 %v532, %v561
        %v570 = vadd.f32 %v533, %v562
        %v571 = vadd.f32 %v534, %v563
        %v572 = vadd.f32 %v535, %v564
        %v573 = vld [vmem:[#allocation8] sm:$0xff]
        %v574 = vld [vmem:[#allocation8 + $0x8] sm:$0xff]
        %v575 = vld [vmem:[%s314] sm:$0xff]
        %v576 = vld [vmem:[%s314 + $0x8] sm:$0xff]
        %v579 = vcombine.high %v575, %v575
        %v580 = vcombine.high %v576, %v576
        %vm581 = vcmask 31744
        %v583 = vsel %vm581, %v573, 0
        %v586 = vsel %vm581, %v574, 0
        %vm588 = vcmask 1043456
        %v589 = vsel %vm588, %v575, 0
        %v591 = vsel %vm588, %v579, 0
        %v593 = vsel %vm588, %v576, 0
        %v595 = vsel %vm588, %v580, 0
        %597 = vmatprep.subr.mxu0 %v591
        %598 = vmatpush1.msra.mxu0 %v589
        %599 = vmatprep.subr.mxu0 0.0
        %600 = vmatpush1.msra.mxu0 0.0
        %601 = vmatprep.subr.mxu0 0.0
        %602 = vmatpush1.msra.mxu0 0.0
        %603 = vmatprep.subr.mxu0 0.0
        %604 = vmatpush1.msra.mxu0 0.0
        %605 = vmatprep.subr.mxu0 0.0
        %606 = vmatpush1.msra.mxu0 0.0
        %607 = vmatprep.subr.mxu0 0.0
        %608 = vmatpush1.msra.mxu0 0.0
        %609 = vmatprep.subr.mxu0 0.0
        %610 = vmatpush1.msra.mxu0 0.0
        %611 = vmatprep.subr.mxu0 0.0
        %612 = vmatpush1.msra.mxu0 0.0
        %613 = vmatprep.subr.mxu0 0.0
        %614 = vmatpush1.msra.mxu0 0.0
        %615 = vmatprep.subr.mxu0 0.0
        %616 = vmatpush1.msra.mxu0 0.0
        %617 = vmatprep.subr.mxu0 0.0
        %618 = vmatpush1.msra.mxu0 0.0
        %619 = vmatprep.subr.mxu0 0.0
        %620 = vmatpush1.msra.mxu0 0.0
        %621 = vmatprep.subr.mxu0 0.0
        %622 = vmatpush1.msra.mxu0 0.0
        %623 = vmatprep.subr.mxu0 0.0
        %624 = vmatpush1.msra.mxu0 0.0
        %625 = vmatprep.subr.mxu0 0.0
        %626 = vmatpush1.msra.mxu0 0.0
        %627 = vmatprep.subr.mxu0 0.0
        %628 = vmatpush1.msra.mxu0 0.0
        %629 = vmatprep.subr.mxu0 0.0
        %630 = vmatpush1.msra.mxu0 0.0
        %631 = vmatprep.subr.mxu0 0.0
        %632 = vmatpush1.msra.mxu0 0.0
        %633 = vmatprep.subr.mxu0 0.0
        %634 = vmatpush1.msra.mxu0 0.0
        %635 = vmatprep.subr.mxu0 0.0
        %636 = vmatpush1.msra.mxu0 0.0
        %637 = vmatprep.subr.mxu0 0.0
        %638 = vmatpush1.msra.mxu0 0.0
        %639 = vmatprep.subr.mxu0 0.0
        %640 = vmatpush1.msra.mxu0 0.0
        %641 = vmatprep.subr.mxu0 0.0
        %642 = vmatpush1.msra.mxu0 0.0
        %643 = vmatprep.subr.mxu0 0.0
        %644 = vmatpush1.msra.mxu0 0.0
        %645 = vmatprep.subr.mxu0 0.0
        %646 = vmatpush1.msra.mxu0 0.0
        %647 = vmatprep.subr.mxu0 0.0
        %648 = vmatpush1.msra.mxu0 0.0
        %649 = vmatprep.subr.mxu0 0.0
        %650 = vmatpush1.msra.mxu0 0.0
        %651 = vmatprep.subr.mxu0 0.0
        %652 = vmatpush1.msra.mxu0 0.0
        %653 = vmatprep.subr.mxu0 0.0
        %654 = vmatpush1.msra.mxu0 0.0
        %655 = vmatprep.subr.mxu0 0.0
        %656 = vmatpush1.msra.mxu0 0.0
        %657 = vmatprep.subr.mxu0 0.0
        %658 = vmatpush1.msra.mxu0 0.0
        %659 = vmatprep.subr.mxu0 0.0
        %660 = vmatpush1.msra.mxu0 0.0
        %661 = vmatprep.mubr.f32.mxu0 0.0
        %662 = vmatmul.mubr.f32.gmra.mrb[0].mxu0 %v583
        %v663 = vpop.f32.mrb[0].mxu0
        %v664 = vadd.f32 0.0, %v663
        %v665 = vpop.f32.mrb[0].mxu0
        %v666 = vadd.f32 0.0, %v665
        %667 = vmatprep.mubr.f32.mxu0 0.0
        %668 = vmatmul.mubr.f32.gmra.mrb[0].mxu0 %v586
        %v669 = vpop.f32.mrb[0].mxu0
        %v670 = vadd.f32 0.0, %v669
        %v671 = vpop.f32.mrb[0].mxu0
        %v672 = vadd.f32 0.0, %v671
        %673 = vdwg.mxu0
        %674 = vmatprep.subr.mxu0 %v595
        %675 = vmatpush1.msra.mxu0 %v593
        %676 = vmatprep.subr.mxu0 0.0
        %677 = vmatpush1.msra.mxu0 0.0
        %678 = vmatprep.subr.mxu0 0.0
        %679 = vmatpush1.msra.mxu0 0.0
        %680 = vmatprep.subr.mxu0 0.0
        %681 = vmatpush1.msra.mxu0 0.0
        %682 = vmatprep.subr.mxu0 0.0
        %683 = vmatpush1.msra.mxu0 0.0
        %684 = vmatprep.subr.mxu0 0.0
        %685 = vmatpush1.msra.mxu0 0.0
        %686 = vmatprep.subr.mxu0 0.0
        %687 = vmatpush1.msra.mxu0 0.0
        %688 = vmatprep.subr.mxu0 0.0
        %689 = vmatpush1.msra.mxu0 0.0
        %690 = vmatprep.subr.mxu0 0.0
        %691 = vmatpush1.msra.mxu0 0.0
        %692 = vmatprep.subr.mxu0 0.0
        %693 = vmatpush1.msra.mxu0 0.0
        %694 = vmatprep.subr.mxu0 0.0
        %695 = vmatpush1.msra.mxu0 0.0
        %696 = vmatprep.subr.mxu0 0.0
        %697 = vmatpush1.msra.mxu0 0.0
        %698 = vmatprep.subr.mxu0 0.0
        %699 = vmatpush1.msra.mxu0 0.0
        %700 = vmatprep.subr.mxu0 0.0
        %701 = vmatpush1.msra.mxu0 0.0
        %702 = vmatprep.subr.mxu0 0.0
        %703 = vmatpush1.msra.mxu0 0.0
        %704 = vmatprep.subr.mxu0 0.0
        %705 = vmatpush1.msra.mxu0 0.0
        %706 = vmatprep.subr.mxu0 0.0
        %707 = vmatpush1.msra.mxu0 0.0
        %708 = vmatprep.subr.mxu0 0.0
        %709 = vmatpush1.msra.mxu0 0.0
        %710 = vmatprep.subr.mxu0 0.0
        %711 = vmatpush1.msra.mxu0 0.0
        %712 = vmatprep.subr.mxu0 0.0
        %713 = vmatpush1.msra.mxu0 0.0
        %714 = vmatprep.subr.mxu0 0.0
        %715 = vmatpush1.msra.mxu0 0.0
        %716 = vmatprep.subr.mxu0 0.0
        %717 = vmatpush1.msra.mxu0 0.0
        %718 = vmatprep.subr.mxu0 0.0
        %719 = vmatpush1.msra.mxu0 0.0
        %720 = vmatprep.subr.mxu0 0.0
        %721 = vmatpush1.msra.mxu0 0.0
        %722 = vmatprep.subr.mxu0 0.0
        %723 = vmatpush1.msra.mxu0 0.0
        %724 = vmatprep.subr.mxu0 0.0
        %725 = vmatpush1.msra.mxu0 0.0
        %726 = vmatprep.subr.mxu0 0.0
        %727 = vmatpush1.msra.mxu0 0.0
        %728 = vmatprep.subr.mxu0 0.0
        %729 = vmatpush1.msra.mxu0 0.0
        %730 = vmatprep.subr.mxu0 0.0
        %731 = vmatpush1.msra.mxu0 0.0
        %732 = vmatprep.subr.mxu0 0.0
        %733 = vmatpush1.msra.mxu0 0.0
        %734 = vmatprep.subr.mxu0 0.0
        %735 = vmatpush1.msra.mxu0 0.0
        %736 = vmatprep.subr.mxu0 0.0
        %737 = vmatpush1.msra.mxu0 0.0
        %738 = vmatprep.mubr.f32.mxu0 0.0
        %739 = vmatmul.mubr.f32.gmra.mrb[0].mxu0 %v583
        %v740 = vpop.f32.mrb[0].mxu0
        %v741 = vadd.f32 0.0, %v740
        %v742 = vpop.f32.mrb[0].mxu0
        %v743 = vadd.f32 0.0, %v742
        %744 = vmatprep.mubr.f32.mxu0 0.0
        %745 = vmatmul.mubr.f32.gmra.mrb[0].mxu0 %v586
        %v746 = vpop.f32.mrb[0].mxu0
        %v747 = vadd.f32 0.0, %v746
        %v748 = vpop.f32.mrb[0].mxu0
        %v749 = vadd.f32 0.0, %v748
        %750 = vdwg.mxu0
        %v751 = vadd.f32 %v565, %v664
        %v752 = vadd.f32 %v566, %v666
        %v753 = vadd.f32 %v567, %v741
        %v754 = vadd.f32 %v568, %v743
        %v755 = vadd.f32 %v569, %v670
        %v756 = vadd.f32 %v570, %v672
        %v757 = vadd.f32 %v571, %v747
        %v758 = vadd.f32 %v572, %v749
        %v759 = vmax.f32 %v751, 0.0
        %v760 = vmax.f32 %v752, 0.0
        %v761 = vmax.f32 %v753, 0.0
        %v762 = vmax.f32 %v754, 0.0
        %v763 = vmax.f32 %v755, 0.0
        %v764 = vmax.f32 %v756, 0.0
        %v765 = vmax.f32 %v757, 0.0
        %v766 = vmax.f32 %v758, 0.0
        %767 = vst [vmem:[%s352] sm:$0xff] %v759
        %768 = vst [vmem:[%s352 + $0x8] sm:$0xff] %v760
        %769 = vst [vmem:[%s352 + $0x10] sm:$0xff] %v761
        %770 = vst [vmem:[%s352 + $0x18] sm:$0xff] %v762
        %771 = vst [vmem:[%s352 + $0x20] sm:$0xff] %v763
        %772 = vst [vmem:[%s352 + $0x28] sm:$0xff] %v764
        %773 = vst [vmem:[%s352 + $0x30] sm:$0xff] %v765
        %774 = vst [vmem:[%s352 + $0x38] sm:$0xff] %v766
        %s775 = sand.u32 %s150, 1
        %s776 = scalar_lea.sflag [#allocation4], %s775
        %s777 = sand.u32 %s150, 1
        %s778 = smul.addr %s777, 64
        %s779 = scalar_lea.vmem [#allocation10], %s778
        // Predicated region
        $region53: #{unit_gcn_pallas.3} parent=35 // pred_check
          %p780 = pneg %p160
        $region54: #{unit_gcn_pallas.3} parent=35 // pred_check_branch
          %782 = sbr.rel (%p780) target = $region56
        $region55: #{unit_gcn_pallas.3} parent=35 // pred_region
          %s783 = smul.u32 4, %s30
          %s785 = ssub.s32 1024, 1024
          %786 = vsyncadd %s776, %s785
          %s787 = smul.addr %s29, 8
          %s788 = sadd.s32 %s783, %s787
          %s789 = smul.addr %s788, 128
          %s790 = scalar_lea.hbm %s4, %s789
          %s791 = sshll.u32 %s779, 4
          %s792 = int_to_ptr.vmem [resolvable:$true] %s791
          %797 = dma.vmem_to_hbm [thread:$0]  %s792, 1024, %s790, %s776, 512, 512, 32
        $region56: #{unit_gcn_pallas.3} parent=35 // pred_fallthru
          _
      $region36: #{unit_gcn_pallas.3} parent=5 // pred_fallthru
        _
      %p798 = scmp.le.s32.totalorder 2, %s20
      // Predicated region
      $region57: #{unit_gcn_pallas.3} parent=5 // pred_check
        %p799 = pneg %p798
      $region58: #{unit_gcn_pallas.3} parent=5 // pred_check_branch
        %801 = sbr.rel (%p799) target = $region60
      $region59: #{unit_gcn_pallas.3} parent=5 // pred_region
        %s802 = ssub.s32 %s20, 2
        // Predicated region
        $region61: #{unit_gcn_pallas.3} parent=59 // pred_check
          %p803 = pneg %p166
        $region62: #{unit_gcn_pallas.3} parent=59 // pred_check_branch
          %805 = sbr.rel (%p803) target = $region64
        $region63: #{unit_gcn_pallas.3} parent=59 // pred_region
          %s806 = sand.u32 %s151, 1
          %s807 = scalar_lea.sflag [#allocation4], %s806
          %s808 = sand.u32 %s151, 1
          %s809 = smul.addr %s808, 64
          %s810 = scalar_lea.vmem [#allocation10], %s809
          %811 = dma.done %s807, 1024
        $region64: #{unit_gcn_pallas.3} parent=59 // pred_fallthru
          _
      $region60: #{unit_gcn_pallas.3} parent=5 // pred_fallthru
        _
    $region6: #{unit_gcn_pallas.3} parent=1 // loop_footer
      %s24 = sadd.s32 1, %s20
    $region7: #{unit_gcn_pallas.3} parent=1 // loop_footer_branch
      %19 = sbr.rel target = $region3
    $region8: #{unit_gcn_pallas.3} parent=1 // loop_exit
      _
    %812 = vsyncpa [#allocation3], 1
    %s813 = scalar_lea.sflag [#allocation3], 1
    %814 = vsyncpa %s813, 1
    %815 = vsyncpa [#allocation6], 1
    %s816 = scalar_lea.sflag [#allocation6], 1
    %817 = vsyncpa %s816, 1
    %818 = vsyncpa [#allocation9], 1
    %819 = vsyncpa [#allocation4], 1
    %s820 = scalar_lea.sflag [#allocation4], 1
    %821 = vsyncpa %s820, 1

// kernel: unit_gcn_pallas.2
$region0: #{unit_gcn_pallas.2}
  #allocation0 [shape = 'u32[]', space=smem, size = 0x4, offset = 0x4, fixed_abs, tag = 'smem constant byte address 0x4 - core index']
  #allocation1 [shape = 'u32[144,128]{1,0:T(1,128)}', space=vmem, size = 0x12000, scoped, tag = 'internal scratch']
  %s0 = inlined_call_operand.hbm [shape: f32[2,4,512], index: 0, kind: input, shape index: {}]
  %s1 = inlined_call_operand.hbm [shape: f32[2,4,64], index: 1, kind: input, shape index: {}]
  %s2 = inlined_call_operand.hbm [shape: f32[6,64,64], index: 2, kind: input, shape index: {}]
  %s3 = inlined_call_operand.hbm [shape: f32[6,8,4], index: 3, kind: input, shape index: {}]
  %s4 = inlined_call_operand.hbm [shape: f32[6,8,4], index: 4, kind: input, shape index: {}]
  %s5 = inlined_call_operand.hbm [shape: f32[6,16,4], index: 5, kind: input, shape index: {}]
  %s6 = inlined_call_operand.hbm [shape: f32[6,16,8], index: 6, kind: input, shape index: {}]
  %s7 = inlined_call_operand.hbm [shape: f32[6,16,1], index: 7, kind: input, shape index: {}]
  %s8 = inlined_call_operand.hbm [shape: bf16[6,2,16,512], index: 8, kind: output, shape index: {0}]
  %s9 = inlined_call_operand.hbm [shape: f32[6,2,16,64], index: 9, kind: output, shape index: {1}]
  %10 = xla_tuple %s8, %s9
  %s11 = sld [smem:[#allocation0]]
  $region105: #{unit_gcn_pallas.2} parent=0
    _
  %s13 = ssub.s32 1, %s11
  %s14 = scalar_select 0, %s13, %s11
  $region1: #{unit_gcn_pallas.2} parent=0
    #allocation2 [shape = 'u8[16384]{0}', space=vmem, size = 0x4000, scoped, tag = 'input window, operand 0']
    #allocation3 [shape = 's32[2]{0}', space=sflag, size = 0x8, scoped, tag = 'scoped memory for unit_gcn_pallas.2']
    #allocation4 [shape = 's32[2]{0}', space=sflag, size = 0x8, scoped, tag = 'scoped memory for unit_gcn_pallas.2']
    #allocation5 [shape = 'u8[4096]{0}', space=vmem, size = 0x1000, scoped, tag = 'input window, operand 1']
    #allocation6 [shape = 's32[2]{0}', space=sflag, size = 0x8, scoped, tag = 'scoped memory for unit_gcn_pallas.2']
    #allocation7 [shape = 'u8[65536]{0}', space=vmem, size = 0x10000, scoped, tag = 'input window, operand 2']
    #allocation8 [shape = 'u8[8192]{0}', space=vmem, size = 0x2000, scoped, tag = 'input window, operand 3']
    #allocation9 [shape = 's32[2]{0}', space=sflag, size = 0x8, scoped, tag = 'scoped memory for unit_gcn_pallas.2']
    #allocation10 [shape = 'u8[8192]{0}', space=vmem, size = 0x2000, scoped, tag = 'input window, operand 4']
    #allocation11 [shape = 'u8[16384]{0}', space=vmem, size = 0x4000, scoped, tag = 'input window, operand 5']
    #allocation12 [shape = 's32[2]{0}', space=sflag, size = 0x8, scoped, tag = 'scoped memory for unit_gcn_pallas.2']
    #allocation13 [shape = 'u8[16384]{0}', space=vmem, size = 0x4000, scoped, tag = 'input window, operand 6']
    #allocation14 [shape = 'u8[16384]{0}', space=vmem, size = 0x4000, scoped, tag = 'input window, operand 7']
    #allocation15 [shape = 's32[2]{0}', space=sflag, size = 0x8, scoped, tag = 'scoped memory for unit_gcn_pallas.2']
    #allocation16 [shape = 'u8[32768]{0}', space=vmem, size = 0x8000, scoped, tag = 'output window, operand 0']
    #allocation17 [shape = 'u8[16384]{0}', space=vmem, size = 0x4000, scoped, tag = 'output window, operand 1']
    #allocation18 [shape = 's32[2]{0}', space=sflag, size = 0x8, scoped, tag = 'scoped memory for unit_gcn_pallas.2']
    %15 = vsyncpa [#allocation3], 0
    %s16 = scalar_lea.sflag [#allocation3], 1
    %17 = vsyncpa %s16, 0
    %18 = vsyncpa [#allocation6], 0
    %s19 = scalar_lea.sflag [#allocation6], 1
    %20 = vsyncpa %s19, 0
    %21 = vsyncpa [#allocation9], 0
    %s22 = scalar_lea.sflag [#allocation9], 1
    %23 = vsyncpa %s22, 0
    %24 = vsyncpa [#allocation12], 0
    %s25 = scalar_lea.sflag [#allocation12], 1
    %26 = vsyncpa %s25, 0
    %27 = vsyncpa [#allocation15], 0
    %s28 = scalar_lea.sflag [#allocation15], 1
    %29 = vsyncpa %s28, 0
    %30 = vsyncpa [#allocation4], 0
    %s31 = scalar_lea.sflag [#allocation4], 1
    %32 = vsyncpa %s31, 0
    %33 = vsyncpa [#allocation18], 0
    %s34 = scalar_lea.sflag [#allocation18], 1
    %35 = vsyncpa %s34, 0
    loop: start=0, step=1, limit=14
    $region2: #{unit_gcn_pallas.2} parent=1 // loop_pre_header
      _
    $region3: #{unit_gcn_pallas.2} parent=1 // loop_header
      %s37 = sphi 0, %s41
      %p38 = scmp.ge.s32.totalorder %s37, 14
      %s44 = sphi 0, %s56
      %s45 = sphi 0, %s52
      %s46 = sphi 0, %s44
      %s47 = sphi 0, %s45
      %s48 = sphi 0, %s46
      %s49 = sphi 0, %s47
      %s59 = sphi 0, %s61
      %s62 = sphi 0, %s59
      %s63 = sphi 0, %s62
      %s79 = sphi 0, %s63
      %s85 = sphi 0, %s87
      %s88 = sphi 0, %s85
      %s89 = sphi 0, %s88
      %s105 = sphi 0, %s89
      %s111 = sphi 0, %s113
      %s114 = sphi 0, %s111
      %s115 = sphi 0, %s114
      %s131 = sphi 0, %s115
      %s137 = sphi 0, %s139
      %s140 = sphi 0, %s137
      %s141 = sphi 0, %s140
      %s157 = sphi 0, %s141
      %s163 = sphi 0, %s165
      %s166 = sphi 0, %s163
      %s167 = sphi 0, %s166
      %s183 = sphi 0, %s167
      %s189 = sphi 0, %s191
      %s192 = sphi 0, %s189
      %s193 = sphi 0, %s192
      %s209 = sphi 0, %s193
      %s215 = sphi 0, %s217
      %s218 = sphi 0, %s215
      %s219 = sphi 0, %s218
      %s235 = sphi 0, %s219
      %s241 = sphi 0, %s243
      %s244 = sphi 0, %s241
      %s245 = sphi 0, %s244
      %s261 = sphi 0, %s245
      %s269 = sphi 0, %s271
      %s272 = sphi 0, %s269
      %s273 = sphi 0, %s272
      %s289 = sphi 0, %s273
      %s297 = sphi 0, %s299
      %s300 = sphi 0, %s297
      %s301 = sphi 0, %s300
      %s317 = sphi 0, %s301
    $region4: #{unit_gcn_pallas.2} parent=1 // loop_header_branch
      %40 = sbr.rel (%p38) target = $region8
    $region5: #{unit_gcn_pallas.2} parent=1 // loop_body
      %s42 = ssub.s32 %s37, 1
      %s43 = ssub.s32 %s37, 2
      %s50 = sadd.s32 1, %s45
      %p51 = scmp.ge.s32.totalorder %s50, 2
      %s52 = scalar_select %p51, 0, %s50
      %s53 = sadd.s32 1, %s44
      %s54 = scalar_select %p51, %s53, %s44
      %p55 = scmp.ge.s32.totalorder %s54, 6
      %s56 = scalar_select %p55, 0, %s54
      %s57 = ssub.s32 %s45, %s52
      %p58 = scmp.eq.s32.totalorder %s57, 0
      %s60 = sadd.s32 %s59, 1
      %s61 = scalar_select %p58, %s59, %s60
      %p64 = pneg %p58
      %p65 = scmp.eq.s32.totalorder %s37, 11
      %p66 = por %p64, %p65
      %p67 = scmp.ne.s32.totalorder %s59, %s62
      %p68 = scmp.eq.s32.totalorder %s37, 0
      %p69 = por %p67, %p68
      %p70 = scmp.ne.s32.totalorder %s59, %s62
      %p71 = scmp.eq.s32.totalorder %s42, 11
      %p72 = por %p70, %p71
      %p73 = scmp.ne.s32.totalorder %s62, %s63
      %p74 = scmp.eq.s32.totalorder %s42, 0
      %p75 = por %p73, %p74
      %p76 = scmp.ne.s32.totalorder %s62, %s63
      %p77 = scmp.eq.s32.totalorder %s43, 11
      %p78 = por %p76, %p77
      %p80 = scmp.ne.s32.totalorder %s63, %s79
      %p81 = scmp.eq.s32.totalorder %s43, 0
      %p82 = por %p80, %p81
      %s83 = ssub.s32 %s45, %s52
      %p84 = scmp.eq.s32.totalorder %s83, 0
      %s86 = sadd.s32 %s85, 1
      %s87 = scalar_select %p84, %s85, %s86
      %p90 = pneg %p84
      %p91 = scmp.eq.s32.totalorder %s37, 11
      %p92 = por %p90, %p91
      %p93 = scmp.ne.s32.totalorder %s85, %s88
      %p94 = scmp.eq.s32.totalorder %s37, 0
      %p95 = por %p93, %p94
      %p96 = scmp.ne.s32.totalorder %s85, %s88
      %p97 = scmp.eq.s32.totalorder %s42, 11
      %p98 = por %p96, %p97
      %p99 = scmp.ne.s32.totalorder %s88, %s89
      %p100 = scmp.eq.s32.totalorder %s42, 0
      %p101 = por %p99, %p100
      %p102 = scmp.ne.s32.totalorder %s88, %s89
      %p103 = scmp.eq.s32.totalorder %s43, 11
      %p104 = por %p102, %p103
      %p106 = scmp.ne.s32.totalorder %s89, %s105
      %p107 = scmp.eq.s32.totalorder %s43, 0
      %p108 = por %p106, %p107
      %s109 = ssub.s32 %s44, %s56
      %p110 = scmp.eq.s32.totalorder %s109, 0
      %s112 = sadd.s32 %s111, 1
      %s113 = scalar_select %p110, %s111, %s112
      %p116 = pneg %p110
      %p117 = scmp.eq.s32.totalorder %s37, 11
      %p118 = por %p116, %p117
      %p119 = scmp.ne.s32.totalorder %s111, %s114
      %p120 = scmp.eq.s32.totalorder %s37, 0
      %p121 = por %p119, %p120
      %p122 = scmp.ne.s32.totalorder %s111, %s114
      %p123 = scmp.eq.s32.totalorder %s42, 11
      %p124 = por %p122, %p123
      %p125 = scmp.ne.s32.totalorder %s114, %s115
      %p126 = scmp.eq.s32.totalorder %s42, 0
      %p127 = por %p125, %p126
      %p128 = scmp.ne.s32.totalorder %s114, %s115
      %p129 = scmp.eq.s32.totalorder %s43, 11
      %p130 = por %p128, %p129
      %p132 = scmp.ne.s32.totalorder %s115, %s131
      %p133 = scmp.eq.s32.totalorder %s43, 0
      %p134 = por %p132, %p133
      %s135 = ssub.s32 %s44, %s56
      %p136 = scmp.eq.s32.totalorder %s135, 0
      %s138 = sadd.s32 %s137, 1
      %s139 = scalar_select %p136, %s137, %s138
      %p142 = pneg %p136
      %p143 = scmp.eq.s32.totalorder %s37, 11
      %p144 = por %p142, %p143
      %p145 = scmp.ne.s32.totalorder %s137, %s140
      %p146 = scmp.eq.s32.totalorder %s37, 0
      %p147 = por %p145, %p146
      %p148 = scmp.ne.s32.totalorder %s137, %s140
      %p149 = scmp.eq.s32.totalorder %s42, 11
      %p150 = por %p148, %p149
      %p151 = scmp.ne.s32.totalorder %s140, %s141
      %p152 = scmp.eq.s32.totalorder %s42, 0
      %p153 = por %p151, %p152
      %p154 = scmp.ne.s32.totalorder %s140, %s141
      %p155 = scmp.eq.s32.totalorder %s43, 11
      %p156 = por %p154, %p155
      %p158 = scmp.ne.s32.totalorder %s141, %s157
      %p159 = scmp.eq.s32.totalorder %s43, 0
      %p160 = por %p158, %p159
      %s161 = ssub.s32 %s44, %s56
      %p162 = scmp.eq.s32.totalorder %s161, 0
      %s164 = sadd.s32 %s163, 1
      %s165 = scalar_select %p162, %s163, %s164
      %p168 = pneg %p162
      %p169 = scmp.eq.s32.totalorder %s37, 11
      %p170 = por %p168, %p169
      %p171 = scmp.ne.s32.totalorder %s163, %s166
      %p172 = scmp.eq.s32.totalorder %s37, 0
      %p173 = por %p171, %p172
      %p174 = scmp.ne.s32.totalorder %s163, %s166
      %p175 = scmp.eq.s32.totalorder %s42, 11
      %p176 = por %p174, %p175
      %p177 = scmp.ne.s32.totalorder %s166, %s167
      %p178 = scmp.eq.s32.totalorder %s42, 0
      %p179 = por %p177, %p178
      %p180 = scmp.ne.s32.totalorder %s166, %s167
      %p181 = scmp.eq.s32.totalorder %s43, 11
      %p182 = por %p180, %p181
      %p184 = scmp.ne.s32.totalorder %s167, %s183
      %p185 = scmp.eq.s32.totalorder %s43, 0
      %p186 = por %p184, %p185
      %s187 = ssub.s32 %s44, %s56
      %p188 = scmp.eq.s32.totalorder %s187, 0
      %s190 = sadd.s32 %s189, 1
      %s191 = scalar_select %p188, %s189, %s190
      %p194 = pneg %p188
      %p195 = scmp.eq.s32.totalorder %s37, 11
      %p196 = por %p194, %p195
      %p197 = scmp.ne.s32.totalorder %s189, %s192
      %p198 = scmp.eq.s32.totalorder %s37, 0
      %p199 = por %p197, %p198
      %p200 = scmp.ne.s32.totalorder %s189, %s192
      %p201 = scmp.eq.s32.totalorder %s42, 11
      %p202 = por %p200, %p201
      %p203 = scmp.ne.s32.totalorder %s192, %s193
      %p204 = scmp.eq.s32.totalorder %s42, 0
      %p205 = por %p203, %p204
      %p206 = scmp.ne.s32.totalorder %s192, %s193
      %p207 = scmp.eq.s32.totalorder %s43, 11
      %p208 = por %p206, %p207
      %p210 = scmp.ne.s32.totalorder %s193, %s209
      %p211 = scmp.eq.s32.totalorder %s43, 0
      %p212 = por %p210, %p211
      %s213 = ssub.s32 %s44, %s56
      %p214 = scmp.eq.s32.totalorder %s213, 0
      %s216 = sadd.s32 %s215, 1
      %s217 = scalar_select %p214, %s215, %s216
      %p220 = pneg %p214
      %p221 = scmp.eq.s32.totalorder %s37, 11
      %p222 = por %p220, %p221
      %p223 = scmp.ne.s32.totalorder %s215, %s218
      %p224 = scmp.eq.s32.totalorder %s37, 0
      %p225 = por %p223, %p224
      %p226 = scmp.ne.s32.totalorder %s215, %s218
      %p227 = scmp.eq.s32.totalorder %s42, 11
      %p228 = por %p226, %p227
      %p229 = scmp.ne.s32.totalorder %s218, %s219
      %p230 = scmp.eq.s32.totalorder %s42, 0
      %p231 = por %p229, %p230
      %p232 = scmp.ne.s32.totalorder %s218, %s219
      %p233 = scmp.eq.s32.totalorder %s43, 11
      %p234 = por %p232, %p233
      %p236 = scmp.ne.s32.totalorder %s219, %s235
      %p237 = scmp.eq.s32.totalorder %s43, 0
      %p238 = por %p236, %p237
      %s239 = ssub.s32 %s44, %s56
      %p240 = scmp.eq.s32.totalorder %s239, 0
      %s242 = sadd.s32 %s241, 1
      %s243 = scalar_select %p240, %s241, %s242
      %p246 = pneg %p240
      %p247 = scmp.eq.s32.totalorder %s37, 11
      %p248 = por %p246, %p247
      %p249 = scmp.ne.s32.totalorder %s241, %s244
      %p250 = scmp.eq.s32.totalorder %s37, 0
      %p251 = por %p249, %p250
      %p252 = scmp.ne.s32.totalorder %s241, %s244
      %p253 = scmp.eq.s32.totalorder %s42, 11
      %p254 = por %p252, %p253
      %p255 = scmp.ne.s32.totalorder %s244, %s245
      %p256 = scmp.eq.s32.totalorder %s42, 0
      %p257 = por %p255, %p256
      %p258 = scmp.ne.s32.totalorder %s244, %s245
      %p259 = scmp.eq.s32.totalorder %s43, 11
      %p260 = por %p258, %p259
      %p262 = scmp.ne.s32.totalorder %s245, %s261
      %p263 = scmp.eq.s32.totalorder %s43, 0
      %p264 = por %p262, %p263
      %s265 = ssub.s32 %s44, %s56
      %s266 = ssub.s32 %s45, %s52
      %s267 = sor.u32 %s265, %s266
      %p268 = scmp.eq.s32.totalorder %s267, 0
      %s270 = sadd.s32 %s269, 1
      %s271 = scalar_select %p268, %s269, %s270
      %p274 = pneg %p268
      %p275 = scmp.eq.s32.totalorder %s37, 11
      %p276 = por %p274, %p275
      %p277 = scmp.ne.s32.totalorder %s269, %s272
      %p278 = scmp.eq.s32.totalorder %s37, 0
      %p279 = por %p277, %p278
      %p280 = scmp.ne.s32.totalorder %s269, %s272
      %p281 = scmp.eq.s32.totalorder %s42, 11
      %p282 = por %p280, %p281
      %p283 = scmp.ne.s32.totalorder %s272, %s273
      %p284 = scmp.eq.s32.totalorder %s42, 0
      %p285 = por %p283, %p284
      %p286 = scmp.ne.s32.totalorder %s272, %s273
      %p287 = scmp.eq.s32.totalorder %s43, 11
      %p288 = por %p286, %p287
      %p290 = scmp.ne.s32.totalorder %s273, %s289
      %p291 = scmp.eq.s32.totalorder %s43, 0
      %p292 = por %p290, %p291
      %s293 = ssub.s32 %s44, %s56
      %s294 = ssub.s32 %s45, %s52
      %s295 = sor.u32 %s293, %s294
      %p296 = scmp.eq.s32.totalorder %s295, 0
      %s298 = sadd.s32 %s297, 1
      %s299 = scalar_select %p296, %s297, %s298
      %p302 = pneg %p296
      %p303 = scmp.eq.s32.totalorder %s37, 11
      %p304 = por %p302, %p303
      %p305 = scmp.ne.s32.totalorder %s297, %s300
      %p306 = scmp.eq.s32.totalorder %s37, 0
      %p307 = por %p305, %p306
      %p308 = scmp.ne.s32.totalorder %s297, %s300
      %p309 = scmp.eq.s32.totalorder %s42, 11
      %p310 = por %p308, %p309
      %p311 = scmp.ne.s32.totalorder %s300, %s301
      %p312 = scmp.eq.s32.totalorder %s42, 0
      %p313 = por %p311, %p312
      %p314 = scmp.ne.s32.totalorder %s300, %s301
      %p315 = scmp.eq.s32.totalorder %s43, 11
      %p316 = por %p314, %p315
      %p318 = scmp.ne.s32.totalorder %s301, %s317
      %p319 = scmp.eq.s32.totalorder %s43, 0
      %p320 = por %p318, %p319
      %p321 = scmp.le.s32.totalorder 1, %s37
      %p322 = scmp.lt.s32.totalorder %s37, 13
      %p323 = pnand %p321, %p322
      %p324 = pneg %p323
      // Predicated region
      $region9: #{unit_gcn_pallas.2} parent=5 // pred_check
        _
      $region10: #{unit_gcn_pallas.2} parent=5 // pred_check_branch
        %326 = sbr.rel (%p323) target = $region12
      $region11: #{unit_gcn_pallas.2} parent=5 // pred_region
        %s327 = ssub.s32 %s37, 1
      $region12: #{unit_gcn_pallas.2} parent=5 // pred_fallthru
        _
      %p328 = scmp.lt.s32.totalorder %s37, 12
      // Predicated region
      $region13: #{unit_gcn_pallas.2} parent=5 // pred_check
        %p329 = pneg %p328
      $region14: #{unit_gcn_pallas.2} parent=5 // pred_check_branch
        %331 = sbr.rel (%p329) target = $region16
      $region15: #{unit_gcn_pallas.2} parent=5 // pred_region
        // Predicated region
        $region17: #{unit_gcn_pallas.2} parent=15 // pred_check
          %p332 = pneg %p69
        $region18: #{unit_gcn_pallas.2} parent=15 // pred_check_branch
          %334 = sbr.rel (%p332) target = $region20
        $region19: #{unit_gcn_pallas.2} parent=15 // pred_region
          %s335 = sand.u32 %s59, 1
          %s336 = scalar_lea.sflag [#allocation3], %s335
          %s337 = sand.u32 %s59, 1
          %s338 = smul.addr %s337, 16
          %s339 = scalar_lea.vmem [#allocation2], %s338
          %s341 = ssub.s32 256, 256
          %342 = vsyncadd %s336, %s341
          %s343 = smul.addr %s45, 4
          %s344 = smul.addr %s343, 64
          %s345 = scalar_lea.hbm %s0, %s344
          %s347 = sshll.u32 %s339, 4
          %s348 = int_to_ptr.vmem [resolvable:$true] %s347
          %350 = dma.hbm_to_vmem [thread:$0]  %s345, 256, %s348, %s336
        $region20: #{unit_gcn_pallas.2} parent=15 // pred_fallthru
          _
        // Predicated region
        $region21: #{unit_gcn_pallas.2} parent=15 // pred_check
          %p351 = pneg %p95
        $region22: #{unit_gcn_pallas.2} parent=15 // pred_check_branch
          %353 = sbr.rel (%p351) target = $region24
        $region23: #{unit_gcn_pallas.2} parent=15 // pred_region
          %s354 = sand.u32 %s37, 1
          %s355 = scalar_lea.sflag [#allocation6], %s354
          %s356 = sand.u32 %s85, 1
          %s357 = smul.addr %s356, 4
          %s358 = scalar_lea.vmem [#allocation5], %s357
          %s360 = ssub.s32 64, 64
          %361 = vsyncadd %s355, %s360
          %s362 = smul.addr %s45, 64
          %s363 = scalar_lea.hbm %s1, %s362
          %s365 = sshll.u32 %s358, 4
          %s366 = int_to_ptr.vmem [resolvable:$true] %s365
          %368 = dma.hbm_to_vmem [thread:$0]  %s363, 64, %s366, %s355
        $region24: #{unit_gcn_pallas.2} parent=15 // pred_fallthru
          _
        // Predicated region
        $region25: #{unit_gcn_pallas.2} parent=15 // pred_check
          %p369 = pneg %p121
        $region26: #{unit_gcn_pallas.2} parent=15 // pred_check_branch
          %371 = sbr.rel (%p369) target = $region28
        $region27: #{unit_gcn_pallas.2} parent=15 // pred_region
          %s372 = sand.u32 %s37, 1
          %s373 = scalar_lea.sflag [#allocation6], %s372
          %s374 = sand.u32 %s111, 1
          %s375 = smul.addr %s374, 64
          %s376 = scalar_lea.vmem [#allocation7], %s375
          %s378 = ssub.s32 1024, 1024
          %379 = vsyncadd %s373, %s378
          %s380 = smul.addr %s44, 8
          %s381 = smul.addr %s380, 128
          %s382 = scalar_lea.hbm %s2, %s381
          %s383 = sshll.u32 %s376, 4
          %s384 = int_to_ptr.vmem [resolvable:$true] %s383
          %389 = dma.hbm_to_vmem [thread:$0]  %s382, 1024, %s384, %s373, 128, 128, 8
        $region28: #{unit_gcn_pallas.2} parent=15 // pred_fallthru
          _
        // Predicated region
        $region29: #{unit_gcn_pallas.2} parent=15 // pred_check
          %p390 = pneg %p147
        $region30: #{unit_gcn_pallas.2} parent=15 // pred_check_branch
          %392 = sbr.rel (%p390) target = $region32
        $region31: #{unit_gcn_pallas.2} parent=15 // pred_region
          %s393 = sand.u32 %s37, 1
          %s394 = scalar_lea.sflag [#allocation9], %s393
          %s395 = sand.u32 %s137, 1
          %s396 = smul.addr %s395, 8
          %s397 = scalar_lea.vmem [#allocation8], %s396
          %s399 = ssub.s32 128, 128
          %400 = vsyncadd %s394, %s399
          %s401 = smul.addr %s44, 128
          %s402 = scalar_lea.hbm %s3, %s401
          %s404 = sshll.u32 %s397, 4
          %s405 = int_to_ptr.vmem [resolvable:$true] %s404
          %407 = dma.hbm_to_vmem [thread:$0]  %s402, 128, %s405, %s394
        $region32: #{unit_gcn_pallas.2} parent=15 // pred_fallthru
          _
        // Predicated region
        $region33: #{unit_gcn_pallas.2} parent=15 // pred_check
          %p408 = pneg %p173
        $region34: #{unit_gcn_pallas.2} parent=15 // pred_check_branch
          %410 = sbr.rel (%p408) target = $region36
        $region35: #{unit_gcn_pallas.2} parent=15 // pred_region
          %s411 = sand.u32 %s37, 1
          %s412 = scalar_lea.sflag [#allocation9], %s411
          %s413 = sand.u32 %s163, 1
          %s414 = smul.addr %s413, 8
          %s415 = scalar_lea.vmem [#allocation10], %s414
          %s417 = ssub.s32 128, 128
          %418 = vsyncadd %s412, %s417
          %s419 = smul.addr %s44, 128
          %s420 = scalar_lea.hbm %s4, %s419
          %s422 = sshll.u32 %s415, 4
          %s423 = int_to_ptr.vmem [resolvable:$true] %s422
          %425 = dma.hbm_to_vmem [thread:$0]  %s420, 128, %s423, %s412
        $region36: #{unit_gcn_pallas.2} parent=15 // pred_fallthru
          _
        // Predicated region
        $region37: #{unit_gcn_pallas.2} parent=15 // pred_check
          %p426 = pneg %p199
        $region38: #{unit_gcn_pallas.2} parent=15 // pred_check_branch
          %428 = sbr.rel (%p426) target = $region40
        $region39: #{unit_gcn_pallas.2} parent=15 // pred_region
          %s429 = sand.u32 %s37, 1
          %s430 = scalar_lea.sflag [#allocation12], %s429
          %s431 = sand.u32 %s189, 1
          %s432 = smul.addr %s431, 16
          %s433 = scalar_lea.vmem [#allocation11], %s432
          %s435 = ssub.s32 256, 256
          %436 = vsyncadd %s430, %s435
          %s437 = smul.addr %s44, 2
          %s438 = smul.addr %s437, 128
          %s439 = scalar_lea.hbm %s5, %s438
          %s440 = sshll.u32 %s433, 4
          %s441 = int_to_ptr.vmem [resolvable:$true] %s440
          %446 = dma.hbm_to_vmem [thread:$0]  %s439, 256, %s441, %s430, 128, 128, 8
        $region40: #{unit_gcn_pallas.2} parent=15 // pred_fallthru
          _
        // Predicated region
        $region41: #{unit_gcn_pallas.2} parent=15 // pred_check
          %p447 = pneg %p225
        $region42: #{unit_gcn_pallas.2} parent=15 // pred_check_branch
          %449 = sbr.rel (%p447) target = $region44
        $region43: #{unit_gcn_pallas.2} parent=15 // pred_region
          %s450 = sand.u32 %s37, 1
          %s451 = scalar_lea.sflag [#allocation12], %s450
          %s452 = sand.u32 %s215, 1
          %s453 = smul.addr %s452, 16
          %s454 = scalar_lea.vmem [#allocation13], %s453
          %s456 = ssub.s32 256, 256
          %457 = vsyncadd %s451, %s456
          %s458 = smul.addr %s44, 2
          %s459 = smul.addr %s458, 128
          %s460 = scalar_lea.hbm %s6, %s459
          %s461 = sshll.u32 %s454, 4
          %s462 = int_to_ptr.vmem [resolvable:$true] %s461
          %467 = dma.hbm_to_vmem [thread:$0]  %s460, 256, %s462, %s451, 128, 128, 8
        $region44: #{unit_gcn_pallas.2} parent=15 // pred_fallthru
          _
        // Predicated region
        $region45: #{unit_gcn_pallas.2} parent=15 // pred_check
          %p468 = pneg %p251
        $region46: #{unit_gcn_pallas.2} parent=15 // pred_check_branch
          %470 = sbr.rel (%p468) target = $region48
        $region47: #{unit_gcn_pallas.2} parent=15 // pred_region
          %s471 = sand.u32 %s241, 1
          %s472 = scalar_lea.sflag [#allocation15], %s471
          %s473 = sand.u32 %s241, 1
          %s474 = smul.addr %s473, 16
          %s475 = scalar_lea.vmem [#allocation14], %s474
          %s477 = ssub.s32 256, 256
          %478 = vsyncadd %s472, %s477
          %s479 = smul.addr %s44, 2
          %s480 = smul.addr %s479, 128
          %s481 = scalar_lea.hbm %s7, %s480
          %s482 = sshll.u32 %s475, 4
          %s483 = int_to_ptr.vmem [resolvable:$true] %s482
          %488 = dma.hbm_to_vmem [thread:$0]  %s481, 256, %s483, %s472, 128, 128, 8
        $region48: #{unit_gcn_pallas.2} parent=15 // pred_fallthru
          _
      $region16: #{unit_gcn_pallas.2} parent=5 // pred_fallthru
        _
      %p489 = scmp.le.s32.totalorder 1, %s37
      %p490 = scmp.lt.s32.totalorder %s37, 13
      %p491 = pnand %p489, %p490
      %p492 = pneg %p491
      // Predicated region
      $region49: #{unit_gcn_pallas.2} parent=5 // pred_check
        _
      $region50: #{unit_gcn_pallas.2} parent=5 // pred_check_branch
        %494 = sbr.rel (%p491) target = $region52
      $region51: #{unit_gcn_pallas.2} parent=5 // pred_region
        %s495 = ssub.s32 %s37, 1
        %s496 = sand.u32 %s62, 1
        %s497 = scalar_lea.sflag [#allocation3], %s496
        %s498 = sand.u32 %s62, 1
        %s499 = smul.addr %s498, 16
        %s500 = scalar_lea.vmem [#allocation2], %s499
        // Predicated region
        $region53: #{unit_gcn_pallas.2} parent=51 // pred_check
          %p501 = pneg %p75
        $region54: #{unit_gcn_pallas.2} parent=51 // pred_check_branch
          %503 = sbr.rel (%p501) target = $region56
        $region55: #{unit_gcn_pallas.2} parent=51 // pred_region
          %504 = dma.done %s497, 256
        $region56: #{unit_gcn_pallas.2} parent=51 // pred_fallthru
          _
        %s505 = sand.u32 %s42, 1
        %s506 = scalar_lea.sflag [#allocation6], %s505
        %s507 = sand.u32 %s88, 1
        %s508 = smul.addr %s507, 4
        %s509 = scalar_lea.vmem [#allocation5], %s508
        // Predicated region
        $region57: #{unit_gcn_pallas.2} parent=51 // pred_check
          %p510 = pneg %p101
        $region58: #{unit_gcn_pallas.2} parent=51 // pred_check_branch
          %512 = sbr.rel (%p510) target = $region60
        $region59: #{unit_gcn_pallas.2} parent=51 // pred_region
          %513 = dma.done %s506, 64
        $region60: #{unit_gcn_pallas.2} parent=51 // pred_fallthru
          _
        %s514 = sand.u32 %s42, 1
        %s515 = scalar_lea.sflag [#allocation6], %s514
        %s516 = sand.u32 %s114, 1
        %s517 = smul.addr %s516, 64
        %s518 = scalar_lea.vmem [#allocation7], %s517
        // Predicated region
        $region61: #{unit_gcn_pallas.2} parent=51 // pred_check
          %p519 = pneg %p127
        $region62: #{unit_gcn_pallas.2} parent=51 // pred_check_branch
          %521 = sbr.rel (%p519) target = $region64
        $region63: #{unit_gcn_pallas.2} parent=51 // pred_region
          %522 = dma.done %s515, 1024
        $region64: #{unit_gcn_pallas.2} parent=51 // pred_fallthru
          _
        %s523 = sand.u32 %s42, 1
        %s524 = scalar_lea.sflag [#allocation9], %s523
        %s525 = sand.u32 %s140, 1
        %s526 = smul.addr %s525, 8
        %s527 = scalar_lea.vmem [#allocation8], %s526
        // Predicated region
        $region65: #{unit_gcn_pallas.2} parent=51 // pred_check
          %p528 = pneg %p153
        $region66: #{unit_gcn_pallas.2} parent=51 // pred_check_branch
          %530 = sbr.rel (%p528) target = $region68
        $region67: #{unit_gcn_pallas.2} parent=51 // pred_region
          %531 = dma.done %s524, 128
        $region68: #{unit_gcn_pallas.2} parent=51 // pred_fallthru
          _
        %s532 = sand.u32 %s42, 1
        %s533 = scalar_lea.sflag [#allocation9], %s532
        %s534 = sand.u32 %s166, 1
        %s535 = smul.addr %s534, 8
        %s536 = scalar_lea.vmem [#allocation10], %s535
        // Predicated region
        $region69: #{unit_gcn_pallas.2} parent=51 // pred_check
          %p537 = pneg %p179
        $region70: #{unit_gcn_pallas.2} parent=51 // pred_check_branch
          %539 = sbr.rel (%p537) target = $region72
        $region71: #{unit_gcn_pallas.2} parent=51 // pred_region
          %540 = dma.done %s533, 128
        $region72: #{unit_gcn_pallas.2} parent=51 // pred_fallthru
          _
        %s541 = sand.u32 %s42, 1
        %s542 = scalar_lea.sflag [#allocation12], %s541
        %s543 = sand.u32 %s192, 1
        %s544 = smul.addr %s543, 16
        %s545 = scalar_lea.vmem [#allocation11], %s544
        // Predicated region
        $region73: #{unit_gcn_pallas.2} parent=51 // pred_check
          %p546 = pneg %p205
        $region74: #{unit_gcn_pallas.2} parent=51 // pred_check_branch
          %548 = sbr.rel (%p546) target = $region76
        $region75: #{unit_gcn_pallas.2} parent=51 // pred_region
          %549 = dma.done %s542, 256
        $region76: #{unit_gcn_pallas.2} parent=51 // pred_fallthru
          _
        %s550 = sand.u32 %s42, 1
        %s551 = scalar_lea.sflag [#allocation12], %s550
        %s552 = sand.u32 %s218, 1
        %s553 = smul.addr %s552, 16
        %s554 = scalar_lea.vmem [#allocation13], %s553
        // Predicated region
        $region77: #{unit_gcn_pallas.2} parent=51 // pred_check
          %p555 = pneg %p231
        $region78: #{unit_gcn_pallas.2} parent=51 // pred_check_branch
          %557 = sbr.rel (%p555) target = $region80
        $region79: #{unit_gcn_pallas.2} parent=51 // pred_region
          %558 = dma.done %s551, 256
        $region80: #{unit_gcn_pallas.2} parent=51 // pred_fallthru
          _
        %s559 = sand.u32 %s244, 1
        %s560 = scalar_lea.sflag [#allocation15], %s559
        %s561 = sand.u32 %s244, 1
        %s562 = smul.addr %s561, 16
        %s563 = scalar_lea.vmem [#allocation14], %s562
        // Predicated region
        $region81: #{unit_gcn_pallas.2} parent=51 // pred_check
          %p564 = pneg %p257
        $region82: #{unit_gcn_pallas.2} parent=51 // pred_check_branch
          %566 = sbr.rel (%p564) target = $region84
        $region83: #{unit_gcn_pallas.2} parent=51 // pred_region
          %567 = dma.done %s560, 256
        $region84: #{unit_gcn_pallas.2} parent=51 // pred_fallthru
          _
        %s568 = sand.u32 %s62, 1
        %s569 = scalar_lea.sflag [#allocation3], %s568
        %s570 = sand.u32 %s62, 1
        %s571 = smul.addr %s570, 16
        %s572 = scalar_lea.vmem [#allocation2], %s571
        %p573 = pneg %p75
        %p574 = pneg %p72
        %s575 = sand.u32 %s42, 1
        %s576 = scalar_lea.sflag [#allocation6], %s575
        %s577 = sand.u32 %s88, 1
        %s578 = smul.addr %s577, 4
        %s579 = scalar_lea.vmem [#allocation5], %s578
        %p580 = pneg %p101
        %p581 = pneg %p98
        %s582 = sand.u32 %s42, 1
        %s583 = scalar_lea.sflag [#allocation6], %s582
        %s584 = sand.u32 %s114, 1
        %s585 = smul.addr %s584, 64
        %s586 = scalar_lea.vmem [#allocation7], %s585
        %p587 = pneg %p127
        %p588 = pneg %p124
        %s589 = sand.u32 %s42, 1
        %s590 = scalar_lea.sflag [#allocation9], %s589
        %s591 = sand.u32 %s140, 1
        %s592 = smul.addr %s591, 8
        %s593 = scalar_lea.vmem [#allocation8], %s592
        %p594 = pneg %p153
        %p595 = pneg %p150
        %s596 = sand.u32 %s42, 1
        %s597 = scalar_lea.sflag [#allocation9], %s596
        %s598 = sand.u32 %s166, 1
        %s599 = smul.addr %s598, 8
        %s600 = scalar_lea.vmem [#allocation10], %s599
        %p601 = pneg %p179
        %p602 = pneg %p176
        %s603 = sand.u32 %s42, 1
        %s604 = scalar_lea.sflag [#allocation12], %s603
        %s605 = sand.u32 %s192, 1
        %s606 = smul.addr %s605, 16
        %s607 = scalar_lea.vmem [#allocation11], %s606
        %p608 = pneg %p205
        %p609 = pneg %p202
        %s610 = sand.u32 %s42, 1
        %s611 = scalar_lea.sflag [#allocation12], %s610
        %s612 = sand.u32 %s218, 1
        %s613 = smul.addr %s612, 16
        %s614 = scalar_lea.vmem [#allocation13], %s613
        %p615 = pneg %p231
        %p616 = pneg %p228
        %s617 = sand.u32 %s244, 1
        %s618 = scalar_lea.sflag [#allocation15], %s617
        %s619 = sand.u32 %s244, 1
        %s620 = smul.addr %s619, 16
        %s621 = scalar_lea.vmem [#allocation14], %s620
        %p622 = pneg %p257
        %p623 = pneg %p254
        %p624 = pneg %p285
        %p625 = pneg %p282
        %s626 = sand.u32 %s272, 1
        %s627 = scalar_lea.sflag [#allocation4], %s626
        %s628 = sand.u32 %s272, 1
        %s629 = smul.addr %s628, 32
        %s630 = scalar_lea.vmem [#allocation16], %s629
        %p631 = pneg %p313
        %p632 = pneg %p310
        %s633 = sand.u32 %s300, 1
        %s634 = scalar_lea.sflag [#allocation18], %s633
        %s635 = sand.u32 %s300, 1
        %s636 = smul.addr %s635, 16
        %s637 = scalar_lea.vmem [#allocation17], %s636
        %v638 = vld [vmem:[%s500] sm:$0xff]
        %v639 = vld [vmem:[%s500 + $0x8] sm:$0xff]
        %v640 = vld [vmem:[%s509] sm:$0xf]
        %v641 = vld [vmem:[%s518] sm:$0xff]
        %v642 = vld [vmem:[%s518 + $0x8] sm:$0xff]
        %v643 = vld [vmem:[%s518 + $0x10] sm:$0xff]
        %v644 = vld [vmem:[%s518 + $0x18] sm:$0xff]
        %v645 = vld [vmem:[%s518 + $0x20] sm:$0xff]
        %v646 = vld [vmem:[%s518 + $0x28] sm:$0xff]
        %v647 = vld [vmem:[%s518 + $0x30] sm:$0xff]
        %v648 = vld [vmem:[%s518 + $0x38] sm:$0xff]
        %v649 = vld [vmem:[%s527] sm:$0xff]
        %v650 = vld [vmem:[%s536] sm:$0xff]
        %v651 = vld [vmem:[%s545] sm:$0xff]
        %v652 = vld [vmem:[%s545 + $0x8] sm:$0xff]
        %v653 = vld [vmem:[%s554] sm:$0xff]
        %v654 = vld [vmem:[%s554 + $0x8] sm:$0xff]
        %v655 = vld [vmem:[%s563] sm:$0xff]
        %v656 = vld [vmem:[%s563 + $0x8] sm:$0xff]
        %vm657 = vcmask 31744
        %v659 = vsel %vm657, %v649, 0
        %vm661 = vcmask 1043456
        %v663 = vsel %vm661, %v640, 0
        %665 = vmatprep.subr.mxu0 0.0
        %666 = vmatpush1.msra.mxu0 %v663
        %667 = vmatprep.subr.mxu0 0.0
        %668 = vmatpush1.msra.mxu0 0.0
        %669 = vmatprep.subr.mxu0 0.0
        %670 = vmatpush1.msra.mxu0 0.0
        %671 = vmatprep.subr.mxu0 0.0
        %672 = vmatpush1.msra.mxu0 0.0
        %673 = vmatprep.subr.mxu0 0.0
        %674 = vmatpush1.msra.mxu0 0.0
        %675 = vmatprep.subr.mxu0 0.0
        %676 = vmatpush1.msra.mxu0 0.0
        %677 = vmatprep.subr.mxu0 0.0
        %678 = vmatpush1.msra.mxu0 0.0
        %679 = vmatprep.subr.mxu0 0.0
        %680 = vmatpush1.msra.mxu0 0.0
        %681 = vmatprep.subr.mxu0 0.0
        %682 = vmatpush1.msra.mxu0 0.0
        %683 = vmatprep.subr.mxu0 0.0
        %684 = vmatpush1.msra.mxu0 0.0
        %685 = vmatprep.subr.mxu0 0.0
        %686 = vmatpush1.msra.mxu0 0.0
        %687 = vmatprep.subr.mxu0 0.0
        %688 = vmatpush1.msra.mxu0 0.0
        %689 = vmatprep.subr.mxu0 0.0
        %690 = vmatpush1.msra.mxu0 0.0
        %691 = vmatprep.subr.mxu0 0.0
        %692 = vmatpush1.msra.mxu0 0.0
        %693 = vmatprep.subr.mxu0 0.0
        %694 = vmatpush1.msra.mxu0 0.0
        %695 = vmatprep.subr.mxu0 0.0
        %696 = vmatpush1.msra.mxu0 0.0
        %697 = vmatprep.subr.mxu0 0.0
        %698 = vmatpush1.msra.mxu0 0.0
        %699 = vmatprep.subr.mxu0 0.0
        %700 = vmatpush1.msra.mxu0 0.0
        %701 = vmatprep.subr.mxu0 0.0
        %702 = vmatpush1.msra.mxu0 0.0
        %703 = vmatprep.subr.mxu0 0.0
        %704 = vmatpush1.msra.mxu0 0.0
        %705 = vmatprep.subr.mxu0 0.0
        %706 = vmatpush1.msra.mxu0 0.0
        %707 = vmatprep.subr.mxu0 0.0
        %708 = vmatpush1.msra.mxu0 0.0
        %709 = vmatprep.subr.mxu0 0.0
        %710 = vmatpush1.msra.mxu0 0.0
        %711 = vmatprep.subr.mxu0 0.0
        %712 = vmatpush1.msra.mxu0 0.0
        %713 = vmatprep.subr.mxu0 0.0
        %714 = vmatpush1.msra.mxu0 0.0
        %715 = vmatprep.subr.mxu0 0.0
        %716 = vmatpush1.msra.mxu0 0.0
        %717 = vmatprep.subr.mxu0 0.0
        %718 = vmatpush1.msra.mxu0 0.0
        %719 = vmatprep.subr.mxu0 0.0
        %720 = vmatpush1.msra.mxu0 0.0
        %721 = vmatprep.subr.mxu0 0.0
        %722 = vmatpush1.msra.mxu0 0.0
        %723 = vmatprep.subr.mxu0 0.0
        %724 = vmatpush1.msra.mxu0 0.0
        %725 = vmatprep.subr.mxu0 0.0
        %726 = vmatpush1.msra.mxu0 0.0
        %727 = vmatprep.subr.mxu0 0.0
        %728 = vmatpush1.msra.mxu0 0.0
        %729 = vmatprep.mubr.f32.mxu0 0.0
        %730 = vmatmul.mubr.f32.gmra.mrb[0].mxu0 %v659
        %v731 = vpop.f32.mrb[0].mxu0
        %v732 = vadd.f32 0.0, %v731
        %v733 = vpop.f32.mrb[0].mxu0
        %734 = vdwg.mxu0
        %v736 = vsel %vm657, %v650, 0
        %738 = vmatprep.subr.mxu0 0.0
        %739 = vmatpush1.msra.mxu0 %v663
        %740 = vmatprep.subr.mxu0 0.0
        %741 = vmatpush1.msra.mxu0 0.0
        %742 = vmatprep.subr.mxu0 0.0
        %743 = vmatpush1.msra.mxu0 0.0
        %744 = vmatprep.subr.mxu0 0.0
        %745 = vmatpush1.msra.mxu0 0.0
        %746 = vmatprep.subr.mxu0 0.0
        %747 = vmatpush1.msra.mxu0 0.0
        %748 = vmatprep.subr.mxu0 0.0
        %749 = vmatpush1.msra.mxu0 0.0
        %750 = vmatprep.subr.mxu0 0.0
        %751 = vmatpush1.msra.mxu0 0.0
        %752 = vmatprep.subr.mxu0 0.0
        %753 = vmatpush1.msra.mxu0 0.0
        %754 = vmatprep.subr.mxu0 0.0
        %755 = vmatpush1.msra.mxu0 0.0
        %756 = vmatprep.subr.mxu0 0.0
        %757 = vmatpush1.msra.mxu0 0.0
        %758 = vmatprep.subr.mxu0 0.0
        %759 = vmatpush1.msra.mxu0 0.0
        %760 = vmatprep.subr.mxu0 0.0
        %761 = vmatpush1.msra.mxu0 0.0
        %762 = vmatprep.subr.mxu0 0.0
        %763 = vmatpush1.msra.mxu0 0.0
        %764 = vmatprep.subr.mxu0 0.0
        %765 = vmatpush1.msra.mxu0 0.0
        %766 = vmatprep.subr.mxu0 0.0
        %767 = vmatpush1.msra.mxu0 0.0
        %768 = vmatprep.subr.mxu0 0.0
        %769 = vmatpush1.msra.mxu0 0.0
        %770 = vmatprep.subr.mxu0 0.0
        %771 = vmatpush1.msra.mxu0 0.0
        %772 = vmatprep.subr.mxu0 0.0
        %773 = vmatpush1.msra.mxu0 0.0
        %774 = vmatprep.subr.mxu0 0.0
        %775 = vmatpush1.msra.mxu0 0.0
        %776 = vmatprep.subr.mxu0 0.0
        %777 = vmatpush1.msra.mxu0 0.0
        %778 = vmatprep.subr.mxu0 0.0
        %779 = vmatpush1.msra.mxu0 0.0
        %780 = vmatprep.subr.mxu0 0.0
        %781 = vmatpush1.msra.mxu0 0.0
        %782 = vmatprep.subr.mxu0 0.0
        %783 = vmatpush1.msra.mxu0 0.0
        %784 = vmatprep.subr.mxu0 0.0
        %785 = vmatpush1.msra.mxu0 0.0
        %786 = vmatprep.subr.mxu0 0.0
        %787 = vmatpush1.msra.mxu0 0.0
        %788 = vmatprep.subr.mxu0 0.0
        %789 = vmatpush1.msra.mxu0 0.0
        %790 = vmatprep.subr.mxu0 0.0
        %791 = vmatpush1.msra.mxu0 0.0
        %792 = vmatprep.subr.mxu0 0.0
        %793 = vmatpush1.msra.mxu0 0.0
        %794 = vmatprep.subr.mxu0 0.0
        %795 = vmatpush1.msra.mxu0 0.0
        %796 = vmatprep.subr.mxu0 0.0
        %797 = vmatpush1.msra.mxu0 0.0
        %798 = vmatprep.subr.mxu0 0.0
        %799 = vmatpush1.msra.mxu0 0.0
        %800 = vmatprep.subr.mxu0 0.0
        %801 = vmatpush1.msra.mxu0 0.0
        %802 = vmatprep.mubr.f32.mxu0 0.0
        %803 = vmatmul.mubr.f32.gmra.mrb[0].mxu0 %v736
        %v804 = vpop.f32.mrb[0].mxu0
        %v805 = vadd.f32 0.0, %v804
        %v806 = vpop.f32.mrb[0].mxu0
        %807 = vdwg.mxu0
        %v810 = vcombine.high %v638, %v638
        %v811 = vcombine.high %v639, %v639
        %v813 = vsel %vm657, %v651, 0
        %v816 = vsel %vm657, %v652, 0
        %v818 = vsel %vm661, %v638, 0
        %v820 = vsel %vm661, %v810, 0
        %v822 = vsel %vm661, %v639, 0
        %v824 = vsel %vm661, %v811, 0
        %826 = vmatprep.subr.mxu0 %v820
        %827 = vmatpush1.msra.mxu0 %v818
        %828 = vmatprep.subr.mxu0 0.0
        %829 = vmatpush1.msra.mxu0 0.0
        %830 = vmatprep.subr.mxu0 0.0
        %831 = vmatpush1.msra.mxu0 0.0
        %832 = vmatprep.subr.mxu0 0.0
        %833 = vmatpush1.msra.mxu0 0.0
        %834 = vmatprep.subr.mxu0 0.0
        %835 = vmatpush1.msra.mxu0 0.0
        %836 = vmatprep.subr.mxu0 0.0
        %837 = vmatpush1.msra.mxu0 0.0
        %838 = vmatprep.subr.mxu0 0.0
        %839 = vmatpush1.msra.mxu0 0.0
        %840 = vmatprep.subr.mxu0 0.0
        %841 = vmatpush1.msra.mxu0 0.0
        %842 = vmatprep.subr.mxu0 0.0
        %843 = vmatpush1.msra.mxu0 0.0
        %844 = vmatprep.subr.mxu0 0.0
        %845 = vmatpush1.msra.mxu0 0.0
        %846 = vmatprep.subr.mxu0 0.0
        %847 = vmatpush1.msra.mxu0 0.0
        %848 = vmatprep.subr.mxu0 0.0
        %849 = vmatpush1.msra.mxu0 0.0
        %850 = vmatprep.subr.mxu0 0.0
        %851 = vmatpush1.msra.mxu0 0.0
        %852 = vmatprep.subr.mxu0 0.0
        %853 = vmatpush1.msra.mxu0 0.0
        %854 = vmatprep.subr.mxu0 0.0
        %855 = vmatpush1.msra.mxu0 0.0
        %856 = vmatprep.subr.mxu0 0.0
        %857 = vmatpush1.msra.mxu0 0.0
        %858 = vmatprep.subr.mxu0 0.0
        %859 = vmatpush1.msra.mxu0 0.0
        %860 = vmatprep.subr.mxu0 0.0
        %861 = vmatpush1.msra.mxu0 0.0
        %862 = vmatprep.subr.mxu0 0.0
        %863 = vmatpush1.msra.mxu0 0.0
        %864 = vmatprep.subr.mxu0 0.0
        %865 = vmatpush1.msra.mxu0 0.0
        %866 = vmatprep.subr.mxu0 0.0
        %867 = vmatpush1.msra.mxu0 0.0
        %868 = vmatprep.subr.mxu0 0.0
        %869 = vmatpush1.msra.mxu0 0.0
        %870 = vmatprep.subr.mxu0 0.0
        %871 = vmatpush1.msra.mxu0 0.0
        %872 = vmatprep.subr.mxu0 0.0
        %873 = vmatpush1.msra.mxu0 0.0
        %874 = vmatprep.subr.mxu0 0.0
        %875 = vmatpush1.msra.mxu0 0.0
        %876 = vmatprep.subr.mxu0 0.0
        %877 = vmatpush1.msra.mxu0 0.0
        %878 = vmatprep.subr.mxu0 0.0
        %879 = vmatpush1.msra.mxu0 0.0
        %880 = vmatprep.subr.mxu0 0.0
        %881 = vmatpush1.msra.mxu0 0.0
        %882 = vmatprep.subr.mxu0 0.0
        %883 = vmatpush1.msra.mxu0 0.0
        %884 = vmatprep.subr.mxu0 0.0
        %885 = vmatpush1.msra.mxu0 0.0
        %886 = vmatprep.subr.mxu0 0.0
        %887 = vmatpush1.msra.mxu0 0.0
        %888 = vmatprep.subr.mxu0 0.0
        %889 = vmatpush1.msra.mxu0 0.0
        %890 = vmatprep.mubr.f32.mxu0 0.0
        %891 = vmatmul.mubr.f32.gmra.mrb[0].mxu0 %v813
        %v892 = vpop.f32.mrb[0].mxu0
        %v893 = vadd.f32 0.0, %v892
        %v894 = vpop.f32.mrb[0].mxu0
        %v895 = vadd.f32 0.0, %v894
        %896 = vmatprep.mubr.f32.mxu0 0.0
        %897 = vmatmul.mubr.f32.gmra.mrb[0].mxu0 %v816
        %v898 = vpop.f32.mrb[0].mxu0
        %v899 = vadd.f32 0.0, %v898
        %v900 = vpop.f32.mrb[0].mxu0
        %v901 = vadd.f32 0.0, %v900
        %902 = vdwg.mxu0
        %903 = vmatprep.subr.mxu0 %v824
        %904 = vmatpush1.msra.mxu0 %v822
        %905 = vmatprep.subr.mxu0 0.0
        %906 = vmatpush1.msra.mxu0 0.0
        %907 = vmatprep.subr.mxu0 0.0
        %908 = vmatpush1.msra.mxu0 0.0
        %909 = vmatprep.subr.mxu0 0.0
        %910 = vmatpush1.msra.mxu0 0.0
        %911 = vmatprep.subr.mxu0 0.0
        %912 = vmatpush1.msra.mxu0 0.0
        %913 = vmatprep.subr.mxu0 0.0
        %914 = vmatpush1.msra.mxu0 0.0
        %915 = vmatprep.subr.mxu0 0.0
        %916 = vmatpush1.msra.mxu0 0.0
        %917 = vmatprep.subr.mxu0 0.0
        %918 = vmatpush1.msra.mxu0 0.0
        %919 = vmatprep.subr.mxu0 0.0
        %920 = vmatpush1.msra.mxu0 0.0
        %921 = vmatprep.subr.mxu0 0.0
        %922 = vmatpush1.msra.mxu0 0.0
        %923 = vmatprep.subr.mxu0 0.0
        %924 = vmatpush1.msra.mxu0 0.0
        %925 = vmatprep.subr.mxu0 0.0
        %926 = vmatpush1.msra.mxu0 0.0
        %927 = vmatprep.subr.mxu0 0.0
        %928 = vmatpush1.msra.mxu0 0.0
        %929 = vmatprep.subr.mxu0 0.0
        %930 = vmatpush1.msra.mxu0 0.0
        %931 = vmatprep.subr.mxu0 0.0
        %932 = vmatpush1.msra.mxu0 0.0
        %933 = vmatprep.subr.mxu0 0.0
        %934 = vmatpush1.msra.mxu0 0.0
        %935 = vmatprep.subr.mxu0 0.0
        %936 = vmatpush1.msra.mxu0 0.0
        %937 = vmatprep.subr.mxu0 0.0
        %938 = vmatpush1.msra.mxu0 0.0
        %939 = vmatprep.subr.mxu0 0.0
        %940 = vmatpush1.msra.mxu0 0.0
        %941 = vmatprep.subr.mxu0 0.0
        %942 = vmatpush1.msra.mxu0 0.0
        %943 = vmatprep.subr.mxu0 0.0
        %944 = vmatpush1.msra.mxu0 0.0
        %945 = vmatprep.subr.mxu0 0.0
        %946 = vmatpush1.msra.mxu0 0.0
        %947 = vmatprep.subr.mxu0 0.0
        %948 = vmatpush1.msra.mxu0 0.0
        %949 = vmatprep.subr.mxu0 0.0
        %950 = vmatpush1.msra.mxu0 0.0
        %951 = vmatprep.subr.mxu0 0.0
        %952 = vmatpush1.msra.mxu0 0.0
        %953 = vmatprep.subr.mxu0 0.0
        %954 = vmatpush1.msra.mxu0 0.0
        %955 = vmatprep.subr.mxu0 0.0
        %956 = vmatpush1.msra.mxu0 0.0
        %957 = vmatprep.subr.mxu0 0.0
        %958 = vmatpush1.msra.mxu0 0.0
        %959 = vmatprep.subr.mxu0 0.0
        %960 = vmatpush1.msra.mxu0 0.0
        %961 = vmatprep.subr.mxu0 0.0
        %962 = vmatpush1.msra.mxu0 0.0
        %963 = vmatprep.subr.mxu0 0.0
        %964 = vmatpush1.msra.mxu0 0.0
        %965 = vmatprep.subr.mxu0 0.0
        %966 = vmatpush1.msra.mxu0 0.0
        %967 = vmatprep.mubr.f32.mxu0 0.0
        %968 = vmatmul.mubr.f32.gmra.mrb[0].mxu0 %v813
        %v969 = vpop.f32.mrb[0].mxu0
        %v970 = vadd.f32 0.0, %v969
        %v971 = vpop.f32.mrb[0].mxu0
        %v972 = vadd.f32 0.0, %v971
        %973 = vmatprep.mubr.f32.mxu0 0.0
        %974 = vmatmul.mubr.f32.gmra.mrb[0].mxu0 %v816
        %v975 = vpop.f32.mrb[0].mxu0
        %v976 = vadd.f32 0.0, %v975
        %v977 = vpop.f32.mrb[0].mxu0
        %v978 = vadd.f32 0.0, %v977
        %979 = vdwg.mxu0
        %982 = vrot.lane.b32.xlu0 %v893, 64
        %v983 = vpop.permute.xlu0 %982
        %984 = vrot.lane.b32.xlu0 %v899, 64
        %v985 = vpop.permute.xlu0 %984
        %990 = vrot.lane.b32.xlu0 %v895, 64
        %v991 = vpop.permute.xlu0 %990
        %992 = vrot.lane.b32.xlu0 %v901, 64
        %v993 = vpop.permute.xlu0 %992
        %998 = vrot.lane.b32.xlu0 %v970, 64
        %v999 = vpop.permute.xlu0 %998
        %1000 = vrot.lane.b32.xlu0 %v976, 64
        %v1001 = vpop.permute.xlu0 %1000
        %1006 = vrot.lane.b32.xlu0 %v972, 64
        %v1007 = vpop.permute.xlu0 %1006
        %1008 = vrot.lane.b32.xlu0 %v978, 64
        %v1009 = vpop.permute.xlu0 %1008
        %v1012 = vcombine.low %v893, %v895
        %v1013 = vcombine.high %v893, %v895
        %v1015 = vunpack.c.l.s4 1983009808
        %v1016 = vunpack.c.0.s8 %v1015
        %v1017 = vlaneseq
        %v1018 = vshrl.u32 %v1017, 7
        %v1019 = vsub.s32 %v1016, %v1018
        %v1020 = vrot.slane %v1012, %v1019
        %v1022 = vunpack.c.l.s4 1983009808
        %v1023 = vunpack.c.0.s8 %v1022
        %v1024 = vlaneseq
        %v1025 = vshrl.u32 %v1024, 7
        %v1026 = vsub.s32 %v1023, %v1025
        %v1027 = vrot.slane %v1013, %v1026
        %v1028 = vcombine.low %v983, %v991
        %v1029 = vcombine.high %v983, %v991
        %v1031 = vunpack.c.l.s4 1983009808
        %v1032 = vunpack.c.0.s8 %v1031
        %v1033 = vlaneseq
        %v1034 = vshrl.u32 %v1033, 7
        %v1035 = vsub.s32 %v1032, %v1034
        %v1036 = vrot.slane %v1028, %v1035
        %v1038 = vunpack.c.l.s4 1983009808
        %v1039 = vunpack.c.0.s8 %v1038
        %v1040 = vlaneseq
        %v1041 = vshrl.u32 %v1040, 7
        %v1042 = vsub.s32 %v1039, %v1041
        %v1043 = vrot.slane %v1029, %v1042
        %v1044 = vcombine.low %v970, %v972
        %v1045 = vcombine.high %v970, %v972
        %v1047 = vunpack.c.l.s4 1983009808
        %v1048 = vunpack.c.0.s8 %v1047
        %v1049 = vlaneseq
        %v1050 = vshrl.u32 %v1049, 7
        %v1051 = vsub.s32 %v1048, %v1050
        %v1052 = vrot.slane %v1044, %v1051
        %v1054 = vunpack.c.l.s4 1983009808
        %v1055 = vunpack.c.0.s8 %v1054
        %v1056 = vlaneseq
        %v1057 = vshrl.u32 %v1056, 7
        %v1058 = vsub.s32 %v1055, %v1057
        %v1059 = vrot.slane %v1045, %v1058
        %v1060 = vcombine.low %v999, %v1007
        %v1061 = vcombine.high %v999, %v1007
        %v1063 = vunpack.c.l.s4 1983009808
        %v1064 = vunpack.c.0.s8 %v1063
        %v1065 = vlaneseq
        %v1066 = vshrl.u32 %v1065, 7
        %v1067 = vsub.s32 %v1064, %v1066
        %v1068 = vrot.slane %v1060, %v1067
        %v1070 = vunpack.c.l.s4 1983009808
        %v1071 = vunpack.c.0.s8 %v1070
        %v1072 = vlaneseq
        %v1073 = vshrl.u32 %v1072, 7
        %v1074 = vsub.s32 %v1071, %v1073
        %v1075 = vrot.slane %v1061, %v1074
        %v1076 = vcombine.low %v1020, %v1036
        %v1077 = vcombine.high %v1020, %v1036
        %v1079 = vunpack.c.l.s4 1934713408
        %v1080 = vunpack.c.0.s8 %v1079
        %v1081 = vlaneseq
        %v1082 = vshrl.u32 %v1081, 7
        %v1083 = vsub.s32 %v1080, %v1082
        %v1084 = vrot.slane %v1076, %v1083
        %v1086 = vunpack.c.l.s4 1934713408
        %v1087 = vunpack.c.0.s8 %v1086
        %v1088 = vlaneseq
        %v1089 = vshrl.u32 %v1088, 7
        %v1090 = vsub.s32 %v1087, %v1089
        %v1091 = vrot.slane %v1077, %v1090
        %v1092 = vcombine.low %v1027, %v1043
        %v1093 = vcombine.high %v1027, %v1043
        %v1095 = vunpack.c.l.s4 1934713408
        %v1096 = vunpack.c.0.s8 %v1095
        %v1097 = vlaneseq
        %v1098 = vshrl.u32 %v1097, 7
        %v1099 = vsub.s32 %v1096, %v1098
        %v1100 = vrot.slane %v1092, %v1099
        %v1102 = vunpack.c.l.s4 1934713408
        %v1103 = vunpack.c.0.s8 %v1102
        %v1104 = vlaneseq
        %v1105 = vshrl.u32 %v1104, 7
        %v1106 = vsub.s32 %v1103, %v1105
        %v1107 = vrot.slane %v1093, %v1106
        %v1108 = vcombine.low %v1052, %v1068
        %v1109 = vcombine.high %v1052, %v1068
        %v1111 = vunpack.c.l.s4 1934713408
        %v1112 = vunpack.c.0.s8 %v1111
        %v1113 = vlaneseq
        %v1114 = vshrl.u32 %v1113, 7
        %v1115 = vsub.s32 %v1112, %v1114
        %v1116 = vrot.slane %v1108, %v1115
        %v1118 = vunpack.c.l.s4 1934713408
        %v1119 = vunpack.c.0.s8 %v1118
        %v1120 = vlaneseq
        %v1121 = vshrl.u32 %v1120, 7
        %v1122 = vsub.s32 %v1119, %v1121
        %v1123 = vrot.slane %v1109, %v1122
        %v1124 = vcombine.low %v1059, %v1075
        %v1125 = vcombine.high %v1059, %v1075
        %v1127 = vunpack.c.l.s4 1934713408
        %v1128 = vunpack.c.0.s8 %v1127
        %v1129 = vlaneseq
        %v1130 = vshrl.u32 %v1129, 7
        %v1131 = vsub.s32 %v1128, %v1130
        %v1132 = vrot.slane %v1124, %v1131
        %v1134 = vunpack.c.l.s4 1934713408
        %v1135 = vunpack.c.0.s8 %v1134
        %v1136 = vlaneseq
        %v1137 = vshrl.u32 %v1136, 7
        %v1138 = vsub.s32 %v1135, %v1137
        %v1139 = vrot.slane %v1125, %v1138
        %v1140 = vcombine.low %v1084, %v1116
        %v1141 = vcombine.high %v1084, %v1116
        %v1142 = vcombine.low %v1091, %v1123
        %v1143 = vcombine.high %v1091, %v1123
        %v1144 = vcombine.low %v1100, %v1132
        %v1145 = vcombine.high %v1100, %v1132
        %v1146 = vcombine.low %v1107, %v1139
        %v1147 = vcombine.high %v1107, %v1139
        %v1148 = vcombine.low %v899, %v901
        %v1149 = vcombine.high %v899, %v901
        %v1151 = vunpack.c.l.s4 1983009808
        %v1152 = vunpack.c.0.s8 %v1151
        %v1153 = vlaneseq
        %v1154 = vshrl.u32 %v1153, 7
        %v1155 = vsub.s32 %v1152, %v1154
        %v1156 = vrot.slane %v1148, %v1155
        %v1158 = vunpack.c.l.s4 1983009808
        %v1159 = vunpack.c.0.s8 %v1158
        %v1160 = vlaneseq
        %v1161 = vshrl.u32 %v1160, 7
        %v1162 = vsub.s32 %v1159, %v1161
        %v1163 = vrot.slane %v1149, %v1162
        %v1164 = vcombine.low %v985, %v993
        %v1165 = vcombine.high %v985, %v993
        %v1167 = vunpack.c.l.s4 1983009808
        %v1168 = vunpack.c.0.s8 %v1167
        %v1169 = vlaneseq
        %v1170 = vshrl.u32 %v1169, 7
        %v1171 = vsub.s32 %v1168, %v1170
        %v1172 = vrot.slane %v1164, %v1171
        %v1174 = vunpack.c.l.s4 1983009808
        %v1175 = vunpack.c.0.s8 %v1174
        %v1176 = vlaneseq
        %v1177 = vshrl.u32 %v1176, 7
        %v1178 = vsub.s32 %v1175, %v1177
        %v1179 = vrot.slane %v1165, %v1178
        %v1180 = vcombine.low %v976, %v978
        %v1181 = vcombine.high %v976, %v978
        %v1183 = vunpack.c.l.s4 1983009808
        %v1184 = vunpack.c.0.s8 %v1183
        %v1185 = vlaneseq
        %v1186 = vshrl.u32 %v1185, 7
        %v1187 = vsub.s32 %v1184, %v1186
        %v1188 = vrot.slane %v1180, %v1187
        %v1190 = vunpack.c.l.s4 1983009808
        %v1191 = vunpack.c.0.s8 %v1190
        %v1192 = vlaneseq
        %v1193 = vshrl.u32 %v1192, 7
        %v1194 = vsub.s32 %v1191, %v1193
        %v1195 = vrot.slane %v1181, %v1194
        %v1196 = vcombine.low %v1001, %v1009
        %v1197 = vcombine.high %v1001, %v1009
        %v1199 = vunpack.c.l.s4 1983009808
        %v1200 = vunpack.c.0.s8 %v1199
        %v1201 = vlaneseq
        %v1202 = vshrl.u32 %v1201, 7
        %v1203 = vsub.s32 %v1200, %v1202
        %v1204 = vrot.slane %v1196, %v1203
        %v1206 = vunpack.c.l.s4 1983009808
        %v1207 = vunpack.c.0.s8 %v1206
        %v1208 = vlaneseq
        %v1209 = vshrl.u32 %v1208, 7
        %v1210 = vsub.s32 %v1207, %v1209
        %v1211 = vrot.slane %v1197, %v1210
        %v1212 = vcombine.low %v1156, %v1172
        %v1213 = vcombine.high %v1156, %v1172
        %v1215 = vunpack.c.l.s4 1934713408
        %v1216 = vunpack.c.0.s8 %v1215
        %v1217 = vlaneseq
        %v1218 = vshrl.u32 %v1217, 7
        %v1219 = vsub.s32 %v1216, %v1218
        %v1220 = vrot.slane %v1212, %v1219
        %v1222 = vunpack.c.l.s4 1934713408
        %v1223 = vunpack.c.0.s8 %v1222
        %v1224 = vlaneseq
        %v1225 = vshrl.u32 %v1224, 7
        %v1226 = vsub.s32 %v1223, %v1225
        %v1227 = vrot.slane %v1213, %v1226
        %v1228 = vcombine.low %v1163, %v1179
        %v1229 = vcombine.high %v1163, %v1179
        %v1231 = vunpack.c.l.s4 1934713408
        %v1232 = vunpack.c.0.s8 %v1231
        %v1233 = vlaneseq
        %v1234 = vshrl.u32 %v1233, 7
        %v1235 = vsub.s32 %v1232, %v1234
        %v1236 = vrot.slane %v1228, %v1235
        %v1238 = vunpack.c.l.s4 1934713408
        %v1239 = vunpack.c.0.s8 %v1238
        %v1240 = vlaneseq
        %v1241 = vshrl.u32 %v1240, 7
        %v1242 = vsub.s32 %v1239, %v1241
        %v1243 = vrot.slane %v1229, %v1242
        %v1244 = vcombine.low %v1188, %v1204
        %v1245 = vcombine.high %v1188, %v1204
        %v1247 = vunpack.c.l.s4 1934713408
        %v1248 = vunpack.c.0.s8 %v1247
        %v1249 = vlaneseq
        %v1250 = vshrl.u32 %v1249, 7
        %v1251 = vsub.s32 %v1248, %v1250
        %v1252 = vrot.slane %v1244, %v1251
        %v1254 = vunpack.c.l.s4 1934713408
        %v1255 = vunpack.c.0.s8 %v1254
        %v1256 = vlaneseq
        %v1257 = vshrl.u32 %v1256, 7
        %v1258 = vsub.s32 %v1255, %v1257
        %v1259 = vrot.slane %v1245, %v1258
        %v1260 = vcombine.low %v1195, %v1211
        %v1261 = vcombine.high %v1195, %v1211
        %v1263 = vunpack.c.l.s4 1934713408
        %v1264 = vunpack.c.0.s8 %v1263
        %v1265 = vlaneseq
        %v1266 = vshrl.u32 %v1265, 7
        %v1267 = vsub.s32 %v1264, %v1266
        %v1268 = vrot.slane %v1260, %v1267
        %v1270 = vunpack.c.l.s4 1934713408
        %v1271 = vunpack.c.0.s8 %v1270
        %v1272 = vlaneseq
        %v1273 = vshrl.u32 %v1272, 7
        %v1274 = vsub.s32 %v1271, %v1273
        %v1275 = vrot.slane %v1261, %v1274
        %v1276 = vcombine.low %v1220, %v1252
        %v1277 = vcombine.high %v1220, %v1252
        %v1278 = vcombine.low %v1227, %v1259
        %v1279 = vcombine.high %v1227, %v1259
        %v1280 = vcombine.low %v1236, %v1268
        %v1281 = vcombine.high %v1236, %v1268
        %v1282 = vcombine.low %v1243, %v1275
        %v1283 = vcombine.high %v1243, %v1275
        %v1285 = vcombine.high %v732, %v732
        %v1287 = vunpack.c.l.s4 1966171168
        %v1288 = vunpack.c.0.s8 %v1287
        %v1289 = vlaneseq
        %v1290 = vshrl.u32 %v1289, 7
        %v1291 = vsub.s32 %v1288, %v1290
        %v1292 = vrot.slane %v732, %v1291
        %v1294 = vunpack.c.l.s4 1966171168
        %v1295 = vunpack.c.0.s8 %v1294
        %v1296 = vlaneseq
        %v1297 = vshrl.u32 %v1296, 7
        %v1298 = vsub.s32 %v1295, %v1297
        %v1299 = vrot.slane %v1285, %v1298
        %v1300 = vcombine.high %v1292, %v1292
        %v1301 = vcombine.high %v1299, %v1299
        %v1303 = vunpack.c.l.s4 1966171168
        %v1304 = vunpack.c.0.s8 %v1303
        %v1305 = vlaneseq
        %v1306 = vshrl.u32 %v1305, 7
        %v1307 = vsub.s32 %v1304, %v1306
        %v1308 = vrot.slane %v1292, %v1307
        %v1310 = vunpack.c.l.s4 1966171168
        %v1311 = vunpack.c.0.s8 %v1310
        %v1312 = vlaneseq
        %v1313 = vshrl.u32 %v1312, 7
        %v1314 = vsub.s32 %v1311, %v1313
        %v1315 = vrot.slane %v1299, %v1314
        %v1317 = vunpack.c.l.s4 1966171168
        %v1318 = vunpack.c.0.s8 %v1317
        %v1319 = vlaneseq
        %v1320 = vshrl.u32 %v1319, 7
        %v1321 = vsub.s32 %v1318, %v1320
        %v1322 = vrot.slane %v1300, %v1321
        %v1324 = vunpack.c.l.s4 1966171168
        %v1325 = vunpack.c.0.s8 %v1324
        %v1326 = vlaneseq
        %v1327 = vshrl.u32 %v1326, 7
        %v1328 = vsub.s32 %v1325, %v1327
        %v1329 = vrot.slane %v1301, %v1328
        %v1330 = vcombine.high %v1308, %v1308
        %v1331 = vcombine.high %v1315, %v1315
        %v1332 = vcombine.high %v1322, %v1322
        %v1333 = vcombine.high %v1329, %v1329
        %v1334 = vlaneseq
        %v1335 = vshrl.u32 %v1334, 7
        %v1336 = vsub.s32 0, %v1335
        %v1337 = vrot.slane %v805, %v1336
        %1339 = vbcast.lane.b32.xlu0 %v1337, 256
        %v1340 = vpop.permute.xlu0 %1339
        %s1342 = sor.u32 256, 8
        %1343 = vbcast.lane.b32.xlu0 %v1337, %s1342
        %v1344 = vpop.permute.xlu0 %1343
        %s1346 = sor.u32 256, 16
        %1347 = vbcast.lane.b32.xlu0 %v1337, %s1346
        %v1348 = vpop.permute.xlu0 %1347
        %s1350 = sor.u32 256, 24
        %1351 = vbcast.lane.b32.xlu0 %v1337, %s1350
        %v1352 = vpop.permute.xlu0 %1351
        %s1354 = sor.u32 256, 32
        %1355 = vbcast.lane.b32.xlu0 %v1337, %s1354
        %v1356 = vpop.permute.xlu0 %1355
        %s1358 = sor.u32 256, 40
        %1359 = vbcast.lane.b32.xlu0 %v1337, %s1358
        %v1360 = vpop.permute.xlu0 %1359
        %s1362 = sor.u32 256, 48
        %1363 = vbcast.lane.b32.xlu0 %v1337, %s1362
        %v1364 = vpop.permute.xlu0 %1363
        %s1366 = sor.u32 256, 56
        %1367 = vbcast.lane.b32.xlu0 %v1337, %s1366
        %v1368 = vpop.permute.xlu0 %1367
        %v1369 = vlaneseq
        %v1370 = vshrl.u32 %v1369, 7
        %v1371 = vsub.s32 1, %v1370
        %v1372 = vrot.slane %v805, %v1371
        %1374 = vbcast.lane.b32.xlu0 %v1372, 256
        %v1375 = vpop.permute.xlu0 %1374
        %s1377 = sor.u32 256, 8
        %1378 = vbcast.lane.b32.xlu0 %v1372, %s1377
        %v1379 = vpop.permute.xlu0 %1378
        %s1381 = sor.u32 256, 16
        %1382 = vbcast.lane.b32.xlu0 %v1372, %s1381
        %v1383 = vpop.permute.xlu0 %1382
        %s1385 = sor.u32 256, 24
        %1386 = vbcast.lane.b32.xlu0 %v1372, %s1385
        %v1387 = vpop.permute.xlu0 %1386
        %s1389 = sor.u32 256, 32
        %1390 = vbcast.lane.b32.xlu0 %v1372, %s1389
        %v1391 = vpop.permute.xlu0 %1390
        %s1393 = sor.u32 256, 40
        %1394 = vbcast.lane.b32.xlu0 %v1372, %s1393
        %v1395 = vpop.permute.xlu0 %1394
        %s1397 = sor.u32 256, 48
        %1398 = vbcast.lane.b32.xlu0 %v1372, %s1397
        %v1399 = vpop.permute.xlu0 %1398
        %s1401 = sor.u32 256, 56
        %1402 = vbcast.lane.b32.xlu0 %v1372, %s1401
        %v1403 = vpop.permute.xlu0 %1402
        %v1404 = vlaneseq
        %v1405 = vshrl.u32 %v1404, 7
        %v1406 = vsub.s32 2, %v1405
        %v1407 = vrot.slane %v805, %v1406
        %1409 = vbcast.lane.b32.xlu0 %v1407, 256
        %v1410 = vpop.permute.xlu0 %1409
        %s1412 = sor.u32 256, 8
        %1413 = vbcast.lane.b32.xlu0 %v1407, %s1412
        %v1414 = vpop.permute.xlu0 %1413
        %s1416 = sor.u32 256, 16
        %1417 = vbcast.lane.b32.xlu0 %v1407, %s1416
        %v1418 = vpop.permute.xlu0 %1417
        %s1420 = sor.u32 256, 24
        %1421 = vbcast.lane.b32.xlu0 %v1407, %s1420
        %v1422 = vpop.permute.xlu0 %1421
        %s1424 = sor.u32 256, 32
        %1425 = vbcast.lane.b32.xlu0 %v1407, %s1424
        %v1426 = vpop.permute.xlu0 %1425
        %s1428 = sor.u32 256, 40
        %1429 = vbcast.lane.b32.xlu0 %v1407, %s1428
        %v1430 = vpop.permute.xlu0 %1429
        %s1432 = sor.u32 256, 48
        %1433 = vbcast.lane.b32.xlu0 %v1407, %s1432
        %v1434 = vpop.permute.xlu0 %1433
        %s1436 = sor.u32 256, 56
        %1437 = vbcast.lane.b32.xlu0 %v1407, %s1436
        %v1438 = vpop.permute.xlu0 %1437
        %v1439 = vlaneseq
        %v1440 = vshrl.u32 %v1439, 7
        %v1441 = vsub.s32 3, %v1440
        %v1442 = vrot.slane %v805, %v1441
        %1444 = vbcast.lane.b32.xlu0 %v1442, 256
        %v1445 = vpop.permute.xlu0 %1444
        %s1447 = sor.u32 256, 8
        %1448 = vbcast.lane.b32.xlu0 %v1442, %s1447
        %v1449 = vpop.permute.xlu0 %1448
        %s1451 = sor.u32 256, 16
        %1452 = vbcast.lane.b32.xlu0 %v1442, %s1451
        %v1453 = vpop.permute.xlu0 %1452
        %s1455 = sor.u32 256, 24
        %1456 = vbcast.lane.b32.xlu0 %v1442, %s1455
        %v1457 = vpop.permute.xlu0 %1456
        %s1459 = sor.u32 256, 32
        %1460 = vbcast.lane.b32.xlu0 %v1442, %s1459
        %v1461 = vpop.permute.xlu0 %1460
        %s1463 = sor.u32 256, 40
        %1464 = vbcast.lane.b32.xlu0 %v1442, %s1463
        %v1465 = vpop.permute.xlu0 %1464
        %s1467 = sor.u32 256, 48
        %1468 = vbcast.lane.b32.xlu0 %v1442, %s1467
        %v1469 = vpop.permute.xlu0 %1468
        %s1471 = sor.u32 256, 56
        %1472 = vbcast.lane.b32.xlu0 %v1442, %s1471
        %v1473 = vpop.permute.xlu0 %1472
        %v1474 = vlaneseq
        %v1475 = vshrl.u32 %v1474, 7
        %v1476 = vsub.s32 4, %v1475
        %v1477 = vrot.slane %v805, %v1476
        %1479 = vbcast.lane.b32.xlu0 %v1477, 256
        %v1480 = vpop.permute.xlu0 %1479
        %s1482 = sor.u32 256, 8
        %1483 = vbcast.lane.b32.xlu0 %v1477, %s1482
        %v1484 = vpop.permute.xlu0 %1483
        %s1486 = sor.u32 256, 16
        %1487 = vbcast.lane.b32.xlu0 %v1477, %s1486
        %v1488 = vpop.permute.xlu0 %1487
        %s1490 = sor.u32 256, 24
        %1491 = vbcast.lane.b32.xlu0 %v1477, %s1490
        %v1492 = vpop.permute.xlu0 %1491
        %s1494 = sor.u32 256, 32
        %1495 = vbcast.lane.b32.xlu0 %v1477, %s1494
        %v1496 = vpop.permute.xlu0 %1495
        %s1498 = sor.u32 256, 40
        %1499 = vbcast.lane.b32.xlu0 %v1477, %s1498
        %v1500 = vpop.permute.xlu0 %1499
        %s1502 = sor.u32 256, 48
        %1503 = vbcast.lane.b32.xlu0 %v1477, %s1502
        %v1504 = vpop.permute.xlu0 %1503
        %s1506 = sor.u32 256, 56
        %1507 = vbcast.lane.b32.xlu0 %v1477, %s1506
        %v1508 = vpop.permute.xlu0 %1507
        %v1509 = vlaneseq
        %v1510 = vshrl.u32 %v1509, 7
        %v1511 = vsub.s32 5, %v1510
        %v1512 = vrot.slane %v805, %v1511
        %1514 = vbcast.lane.b32.xlu0 %v1512, 256
        %v1515 = vpop.permute.xlu0 %1514
        %s1517 = sor.u32 256, 8
        %1518 = vbcast.lane.b32.xlu0 %v1512, %s1517
        %v1519 = vpop.permute.xlu0 %1518
        %s1521 = sor.u32 256, 16
        %1522 = vbcast.lane.b32.xlu0 %v1512, %s1521
        %v1523 = vpop.permute.xlu0 %1522
        %s1525 = sor.u32 256, 24
        %1526 = vbcast.lane.b32.xlu0 %v1512, %s1525
        %v1527 = vpop.permute.xlu0 %1526
        %s1529 = sor.u32 256, 32
        %1530 = vbcast.lane.b32.xlu0 %v1512, %s1529
        %v1531 = vpop.permute.xlu0 %1530
        %s1533 = sor.u32 256, 40
        %1534 = vbcast.lane.b32.xlu0 %v1512, %s1533
        %v1535 = vpop.permute.xlu0 %1534
        %s1537 = sor.u32 256, 48
        %1538 = vbcast.lane.b32.xlu0 %v1512, %s1537
        %v1539 = vpop.permute.xlu0 %1538
        %s1541 = sor.u32 256, 56
        %1542 = vbcast.lane.b32.xlu0 %v1512, %s1541
        %v1543 = vpop.permute.xlu0 %1542
        %v1544 = vlaneseq
        %v1545 = vshrl.u32 %v1544, 7
        %v1546 = vsub.s32 6, %v1545
        %v1547 = vrot.slane %v805, %v1546
        %1549 = vbcast.lane.b32.xlu0 %v1547, 256
        %v1550 = vpop.permute.xlu0 %1549
        %s1552 = sor.u32 256, 8
        %1553 = vbcast.lane.b32.xlu0 %v1547, %s1552
        %v1554 = vpop.permute.xlu0 %1553
        %s1556 = sor.u32 256, 16
        %1557 = vbcast.lane.b32.xlu0 %v1547, %s1556
        %v1558 = vpop.permute.xlu0 %1557
        %s1560 = sor.u32 256, 24
        %1561 = vbcast.lane.b32.xlu0 %v1547, %s1560
        %v1562 = vpop.permute.xlu0 %1561
        %s1564 = sor.u32 256, 32
        %1565 = vbcast.lane.b32.xlu0 %v1547, %s1564
        %v1566 = vpop.permute.xlu0 %1565
        %s1568 = sor.u32 256, 40
        %1569 = vbcast.lane.b32.xlu0 %v1547, %s1568
        %v1570 = vpop.permute.xlu0 %1569
        %s1572 = sor.u32 256, 48
        %1573 = vbcast.lane.b32.xlu0 %v1547, %s1572
        %v1574 = vpop.permute.xlu0 %1573
        %s1576 = sor.u32 256, 56
        %1577 = vbcast.lane.b32.xlu0 %v1547, %s1576
        %v1578 = vpop.permute.xlu0 %1577
        %v1579 = vlaneseq
        %v1580 = vshrl.u32 %v1579, 7
        %v1581 = vsub.s32 7, %v1580
        %v1582 = vrot.slane %v805, %v1581
        %1584 = vbcast.lane.b32.xlu0 %v1582, 256
        %v1585 = vpop.permute.xlu0 %1584
        %s1587 = sor.u32 256, 8
        %1588 = vbcast.lane.b32.xlu0 %v1582, %s1587
        %v1589 = vpop.permute.xlu0 %1588
        %s1591 = sor.u32 256, 16
        %1592 = vbcast.lane.b32.xlu0 %v1582, %s1591
        %v1593 = vpop.permute.xlu0 %1592
        %s1595 = sor.u32 256, 24
        %1596 = vbcast.lane.b32.xlu0 %v1582, %s1595
        %v1597 = vpop.permute.xlu0 %1596
        %s1599 = sor.u32 256, 32
        %1600 = vbcast.lane.b32.xlu0 %v1582, %s1599
        %v1601 = vpop.permute.xlu0 %1600
        %s1603 = sor.u32 256, 40
        %1604 = vbcast.lane.b32.xlu0 %v1582, %s1603
        %v1605 = vpop.permute.xlu0 %1604
        %s1607 = sor.u32 256, 48
        %1608 = vbcast.lane.b32.xlu0 %v1582, %s1607
        %v1609 = vpop.permute.xlu0 %1608
        %s1611 = sor.u32 256, 56
        %1612 = vbcast.lane.b32.xlu0 %v1582, %s1611
        %v1613 = vpop.permute.xlu0 %1612
        %v1614 = vlaneseq
        %v1615 = vshrl.u32 %v1614, 7
        %v1616 = vsub.s32 0, %v1615
        %v1617 = vrot.slane %v1308, %v1616
        %v1618 = vlaneseq
        %v1619 = vshrl.u32 %v1618, 7
        %v1620 = vsub.s32 0, %v1619
        %v1621 = vrot.slane %v1322, %v1620
        %v1622 = vlaneseq
        %v1623 = vshrl.u32 %v1622, 7
        %v1624 = vsub.s32 0, %v1623
        %v1625 = vrot.slane %v1330, %v1624
        %v1626 = vlaneseq
        %v1627 = vshrl.u32 %v1626, 7
        %v1628 = vsub.s32 0, %v1627
        %v1629 = vrot.slane %v1332, %v1628
        %v1630 = vlaneseq
        %v1631 = vshrl.u32 %v1630, 7
        %v1632 = vsub.s32 0, %v1631
        %v1633 = vrot.slane %v1315, %v1632
        %v1634 = vlaneseq
        %v1635 = vshrl.u32 %v1634, 7
        %v1636 = vsub.s32 0, %v1635
        %v1637 = vrot.slane %v1329, %v1636
        %v1638 = vlaneseq
        %v1639 = vshrl.u32 %v1638, 7
        %v1640 = vsub.s32 0, %v1639
        %v1641 = vrot.slane %v1331, %v1640
        %v1642 = vlaneseq
        %v1643 = vshrl.u32 %v1642, 7
        %v1644 = vsub.s32 0, %v1643
        %v1645 = vrot.slane %v1333, %v1644
        %v1654 = vsub.f32 %v1617, %v1340
        %v1655 = vsub.f32 %v1617, %v1344
        %v1656 = vsub.f32 %v1617, %v1348
        %v1657 = vsub.f32 %v1617, %v1352
        %v1658 = vsub.f32 %v1617, %v1356
        %v1659 = vsub.f32 %v1617, %v1360
        %v1660 = vsub.f32 %v1617, %v1364
        %v1661 = vsub.f32 %v1617, %v1368
        %v1662 = vsub.f32 %v1621, %v1375
        %v1663 = vsub.f32 %v1621, %v1379
        %v1664 = vsub.f32 %v1621, %v1383
        %v1665 = vsub.f32 %v1621, %v1387
        %v1666 = vsub.f32 %v1621, %v1391
        %v1667 = vsub.f32 %v1621, %v1395
        %v1668 = vsub.f32 %v1621, %v1399
        %v1669 = vsub.f32 %v1621, %v1403
        %v1670 = vsub.f32 %v1625, %v1410
        %v1671 = vsub.f32 %v1625, %v1414
        %v1672 = vsub.f32 %v1625, %v1418
        %v1673 = vsub.f32 %v1625, %v1422
        %v1674 = vsub.f32 %v1625, %v1426
        %v1675 = vsub.f32 %v1625, %v1430
        %v1676 = vsub.f32 %v1625, %v1434
        %v1677 = vsub.f32 %v1625, %v1438
        %v1678 = vsub.f32 %v1629, %v1445
        %v1679 = vsub.f32 %v1629, %v1449
        %v1680 = vsub.f32 %v1629, %v1453
        %v1681 = vsub.f32 %v1629, %v1457
        %v1682 = vsub.f32 %v1629, %v1461
        %v1683 = vsub.f32 %v1629, %v1465
        %v1684 = vsub.f32 %v1629, %v1469
        %v1685 = vsub.f32 %v1629, %v1473
        %v1686 = vsub.f32 %v1633, %v1480
        %v1687 = vsub.f32 %v1633, %v1484
        %v1688 = vsub.f32 %v1633, %v1488
        %v1689 = vsub.f32 %v1633, %v1492
        %v1690 = vsub.f32 %v1633, %v1496
        %v1691 = vsub.f32 %v1633, %v1500
        %v1692 = vsub.f32 %v1633, %v1504
        %v1693 = vsub.f32 %v1633, %v1508
        %v1694 = vsub.f32 %v1637, %v1515
        %v1695 = vsub.f32 %v1637, %v1519
        %v1696 = vsub.f32 %v1637, %v1523
        %v1697 = vsub.f32 %v1637, %v1527
        %v1698 = vsub.f32 %v1637, %v1531
        %v1699 = vsub.f32 %v1637, %v1535
        %v1700 = vsub.f32 %v1637, %v1539
        %v1701 = vsub.f32 %v1637, %v1543
        %v1702 = vsub.f32 %v1641, %v1550
        %v1703 = vsub.f32 %v1641, %v1554
        %v1704 = vsub.f32 %v1641, %v1558
        %v1705 = vsub.f32 %v1641, %v1562
        %v1706 = vsub.f32 %v1641, %v1566
        %v1707 = vsub.f32 %v1641, %v1570
        %v1708 = vsub.f32 %v1641, %v1574
        %v1709 = vsub.f32 %v1641, %v1578
        %v1710 = vsub.f32 %v1645, %v1585
        %v1711 = vsub.f32 %v1645, %v1589
        %v1712 = vsub.f32 %v1645, %v1593
        %v1713 = vsub.f32 %v1645, %v1597
        %v1714 = vsub.f32 %v1645, %v1601
        %v1715 = vsub.f32 %v1645, %v1605
        %v1716 = vsub.f32 %v1645, %v1609
        %v1717 = vsub.f32 %v1645, %v1613
        %v1718 = vpack.c.bf16 %v1655, %v1654
        %v1719 = vpack.c.bf16 %v1657, %v1656
        %v1720 = vpack.c.bf16 %v1659, %v1658
        %v1721 = vpack.c.bf16 %v1661, %v1660
        %v1722 = vpack.c.bf16 %v1663, %v1662
        %v1723 = vpack.c.bf16 %v1665, %v1664
        %v1724 = vpack.c.bf16 %v1667, %v1666
        %v1725 = vpack.c.bf16 %v1669, %v1668
        %v1726 = vpack.c.bf16 %v1671, %v1670
        %v1727 = vpack.c.bf16 %v1673, %v1672
        %v1728 = vpack.c.bf16 %v1675, %v1674
        %v1729 = vpack.c.bf16 %v1677, %v1676
        %v1730 = vpack.c.bf16 %v1679, %v1678
        %v1731 = vpack.c.bf16 %v1681, %v1680
        %v1732 = vpack.c.bf16 %v1683, %v1682
        %v1733 = vpack.c.bf16 %v1685, %v1684
        %v1734 = vpack.c.bf16 %v1687, %v1686
        %v1735 = vpack.c.bf16 %v1689, %v1688
        %v1736 = vpack.c.bf16 %v1691, %v1690
        %v1737 = vpack.c.bf16 %v1693, %v1692
        %v1738 = vpack.c.bf16 %v1695, %v1694
        %v1739 = vpack.c.bf16 %v1697, %v1696
        %v1740 = vpack.c.bf16 %v1699, %v1698
        %v1741 = vpack.c.bf16 %v1701, %v1700
        %v1742 = vpack.c.bf16 %v1703, %v1702
        %v1743 = vpack.c.bf16 %v1705, %v1704
        %v1744 = vpack.c.bf16 %v1707, %v1706
        %v1745 = vpack.c.bf16 %v1709, %v1708
        %v1746 = vpack.c.bf16 %v1711, %v1710
        %v1747 = vpack.c.bf16 %v1713, %v1712
        %v1748 = vpack.c.bf16 %v1715, %v1714
        %v1749 = vpack.c.bf16 %v1717, %v1716
        %v1750 = vtanh.bf16.pop %v1718
        %v1751 = vtanh.bf16.pop %v1719
        %v1752 = vtanh.bf16.pop %v1720
        %v1753 = vtanh.bf16.pop %v1721
        %v1754 = vtanh.bf16.pop %v1722
        %v1755 = vtanh.bf16.pop %v1723
        %v1756 = vtanh.bf16.pop %v1724
        %v1757 = vtanh.bf16.pop %v1725
        %v1758 = vtanh.bf16.pop %v1726
        %v1759 = vtanh.bf16.pop %v1727
        %v1760 = vtanh.bf16.pop %v1728
        %v1761 = vtanh.bf16.pop %v1729
        %v1762 = vtanh.bf16.pop %v1730
        %v1763 = vtanh.bf16.pop %v1731
        %v1764 = vtanh.bf16.pop %v1732
        %v1765 = vtanh.bf16.pop %v1733
        %v1766 = vtanh.bf16.pop %v1734
        %v1767 = vtanh.bf16.pop %v1735
        %v1768 = vtanh.bf16.pop %v1736
        %v1769 = vtanh.bf16.pop %v1737
        %v1770 = vtanh.bf16.pop %v1738
        %v1771 = vtanh.bf16.pop %v1739
        %v1772 = vtanh.bf16.pop %v1740
        %v1773 = vtanh.bf16.pop %v1741
        %v1774 = vtanh.bf16.pop %v1742
        %v1775 = vtanh.bf16.pop %v1743
        %v1776 = vtanh.bf16.pop %v1744
        %v1777 = vtanh.bf16.pop %v1745
        %v1778 = vtanh.bf16.pop %v1746
        %v1779 = vtanh.bf16.pop %v1747
        %v1780 = vtanh.bf16.pop %v1748
        %v1781 = vtanh.bf16.pop %v1749
        %v1782 = vunpack.c.l.bf16 %v1750
        %v1783 = vunpack.c.h.bf16 %v1750
        %v1784 = vunpack.c.l.bf16 %v1751
        %v1785 = vunpack.c.h.bf16 %v1751
        %v1786 = vunpack.c.l.bf16 %v1752
        %v1787 = vunpack.c.h.bf16 %v1752
        %v1788 = vunpack.c.l.bf16 %v1753
        %v1789 = vunpack.c.h.bf16 %v1753
        %v1790 = vunpack.c.l.bf16 %v1754
        %v1791 = vunpack.c.h.bf16 %v1754
        %v1792 = vunpack.c.l.bf16 %v1755
        %v1793 = vunpack.c.h.bf16 %v1755
        %v1794 = vunpack.c.l.bf16 %v1756
        %v1795 = vunpack.c.h.bf16 %v1756
        %v1796 = vunpack.c.l.bf16 %v1757
        %v1797 = vunpack.c.h.bf16 %v1757
        %v1798 = vunpack.c.l.bf16 %v1758
        %v1799 = vunpack.c.h.bf16 %v1758
        %v1800 = vunpack.c.l.bf16 %v1759
        %v1801 = vunpack.c.h.bf16 %v1759
        %v1802 = vunpack.c.l.bf16 %v1760
        %v1803 = vunpack.c.h.bf16 %v1760
        %v1804 = vunpack.c.l.bf16 %v1761
        %v1805 = vunpack.c.h.bf16 %v1761
        %v1806 = vunpack.c.l.bf16 %v1762
        %v1807 = vunpack.c.h.bf16 %v1762
        %v1808 = vunpack.c.l.bf16 %v1763
        %v1809 = vunpack.c.h.bf16 %v1763
        %v1810 = vunpack.c.l.bf16 %v1764
        %v1811 = vunpack.c.h.bf16 %v1764
        %v1812 = vunpack.c.l.bf16 %v1765
        %v1813 = vunpack.c.h.bf16 %v1765
        %v1814 = vunpack.c.l.bf16 %v1766
        %v1815 = vunpack.c.h.bf16 %v1766
        %v1816 = vunpack.c.l.bf16 %v1767
        %v1817 = vunpack.c.h.bf16 %v1767
        %v1818 = vunpack.c.l.bf16 %v1768
        %v1819 = vunpack.c.h.bf16 %v1768
        %v1820 = vunpack.c.l.bf16 %v1769
        %v1821 = vunpack.c.h.bf16 %v1769
        %v1822 = vunpack.c.l.bf16 %v1770
        %v1823 = vunpack.c.h.bf16 %v1770
        %v1824 = vunpack.c.l.bf16 %v1771
        %v1825 = vunpack.c.h.bf16 %v1771
        %v1826 = vunpack.c.l.bf16 %v1772
        %v1827 = vunpack.c.h.bf16 %v1772
        %v1828 = vunpack.c.l.bf16 %v1773
        %v1829 = vunpack.c.h.bf16 %v1773
        %v1830 = vunpack.c.l.bf16 %v1774
        %v1831 = vunpack.c.h.bf16 %v1774
        %v1832 = vunpack.c.l.bf16 %v1775
        %v1833 = vunpack.c.h.bf16 %v1775
        %v1834 = vunpack.c.l.bf16 %v1776
        %v1835 = vunpack.c.h.bf16 %v1776
        %v1836 = vunpack.c.l.bf16 %v1777
        %v1837 = vunpack.c.h.bf16 %v1777
        %v1838 = vunpack.c.l.bf16 %v1778
        %v1839 = vunpack.c.h.bf16 %v1778
        %v1840 = vunpack.c.l.bf16 %v1779
        %v1841 = vunpack.c.h.bf16 %v1779
        %v1842 = vunpack.c.l.bf16 %v1780
        %v1843 = vunpack.c.h.bf16 %v1780
        %v1844 = vunpack.c.l.bf16 %v1781
        %v1845 = vunpack.c.h.bf16 %v1781
        %v1846 = vcombine.low %v1782, %v1798
        %v1847 = vcombine.high %v1782, %v1798
        %v1849 = vunpack.c.l.s4 1983009808
        %v1850 = vunpack.c.0.s8 %v1849
        %v1851 = vlaneseq
        %v1852 = vshrl.u32 %v1851, 7
        %v1853 = vsub.s32 %v1850, %v1852
        %v1854 = vrot.slane %v1846, %v1853
        %v1856 = vunpack.c.l.s4 1983009808
        %v1857 = vunpack.c.0.s8 %v1856
        %v1858 = vlaneseq
        %v1859 = vshrl.u32 %v1858, 7
        %v1860 = vsub.s32 %v1857, %v1859
        %v1861 = vrot.slane %v1847, %v1860
        %v1862 = vcombine.low %v1790, %v1806
        %v1863 = vcombine.high %v1790, %v1806
        %v1865 = vunpack.c.l.s4 1983009808
        %v1866 = vunpack.c.0.s8 %v1865
        %v1867 = vlaneseq
        %v1868 = vshrl.u32 %v1867, 7
        %v1869 = vsub.s32 %v1866, %v1868
        %v1870 = vrot.slane %v1862, %v1869
        %v1872 = vunpack.c.l.s4 1983009808
        %v1873 = vunpack.c.0.s8 %v1872
        %v1874 = vlaneseq
        %v1875 = vshrl.u32 %v1874, 7
        %v1876 = vsub.s32 %v1873, %v1875
        %v1877 = vrot.slane %v1863, %v1876
        %v1878 = vcombine.low %v1814, %v1830
        %v1879 = vcombine.high %v1814, %v1830
        %v1881 = vunpack.c.l.s4 1983009808
        %v1882 = vunpack.c.0.s8 %v1881
        %v1883 = vlaneseq
        %v1884 = vshrl.u32 %v1883, 7
        %v1885 = vsub.s32 %v1882, %v1884
        %v1886 = vrot.slane %v1878, %v1885
        %v1888 = vunpack.c.l.s4 1983009808
        %v1889 = vunpack.c.0.s8 %v1888
        %v1890 = vlaneseq
        %v1891 = vshrl.u32 %v1890, 7
        %v1892 = vsub.s32 %v1889, %v1891
        %v1893 = vrot.slane %v1879, %v1892
        %v1894 = vcombine.low %v1822, %v1838
        %v1895 = vcombine.high %v1822, %v1838
        %v1897 = vunpack.c.l.s4 1983009808
        %v1898 = vunpack.c.0.s8 %v1897
        %v1899 = vlaneseq
        %v1900 = vshrl.u32 %v1899, 7
        %v1901 = vsub.s32 %v1898, %v1900
        %v1902 = vrot.slane %v1894, %v1901
        %v1904 = vunpack.c.l.s4 1983009808
        %v1905 = vunpack.c.0.s8 %v1904
        %v1906 = vlaneseq
        %v1907 = vshrl.u32 %v1906, 7
        %v1908 = vsub.s32 %v1905, %v1907
        %v1909 = vrot.slane %v1895, %v1908
        %v1910 = vcombine.low %v1854, %v1870
        %v1911 = vcombine.high %v1854, %v1870
        %v1913 = vunpack.c.l.s4 1934713408
        %v1914 = vunpack.c.0.s8 %v1913
        %v1915 = vlaneseq
        %v1916 = vshrl.u32 %v1915, 7
        %v1917 = vsub.s32 %v1914, %v1916
        %v1918 = vrot.slane %v1910, %v1917
        %v1920 = vunpack.c.l.s4 1934713408
        %v1921 = vunpack.c.0.s8 %v1920
        %v1922 = vlaneseq
        %v1923 = vshrl.u32 %v1922, 7
        %v1924 = vsub.s32 %v1921, %v1923
        %v1925 = vrot.slane %v1911, %v1924
        %v1926 = vcombine.low %v1861, %v1877
        %v1927 = vcombine.high %v1861, %v1877
        %v1929 = vunpack.c.l.s4 1934713408
        %v1930 = vunpack.c.0.s8 %v1929
        %v1931 = vlaneseq
        %v1932 = vshrl.u32 %v1931, 7
        %v1933 = vsub.s32 %v1930, %v1932
        %v1934 = vrot.slane %v1926, %v1933
        %v1936 = vunpack.c.l.s4 1934713408
        %v1937 = vunpack.c.0.s8 %v1936
        %v1938 = vlaneseq
        %v1939 = vshrl.u32 %v1938, 7
        %v1940 = vsub.s32 %v1937, %v1939
        %v1941 = vrot.slane %v1927, %v1940
        %v1942 = vcombine.low %v1886, %v1902
        %v1943 = vcombine.high %v1886, %v1902
        %v1945 = vunpack.c.l.s4 1934713408
        %v1946 = vunpack.c.0.s8 %v1945
        %v1947 = vlaneseq
        %v1948 = vshrl.u32 %v1947, 7
        %v1949 = vsub.s32 %v1946, %v1948
        %v1950 = vrot.slane %v1942, %v1949
        %v1952 = vunpack.c.l.s4 1934713408
        %v1953 = vunpack.c.0.s8 %v1952
        %v1954 = vlaneseq
        %v1955 = vshrl.u32 %v1954, 7
        %v1956 = vsub.s32 %v1953, %v1955
        %v1957 = vrot.slane %v1943, %v1956
        %v1958 = vcombine.low %v1893, %v1909
        %v1959 = vcombine.high %v1893, %v1909
        %v1961 = vunpack.c.l.s4 1934713408
        %v1962 = vunpack.c.0.s8 %v1961
        %v1963 = vlaneseq
        %v1964 = vshrl.u32 %v1963, 7
        %v1965 = vsub.s32 %v1962, %v1964
        %v1966 = vrot.slane %v1958, %v1965
        %v1968 = vunpack.c.l.s4 1934713408
        %v1969 = vunpack.c.0.s8 %v1968
        %v1970 = vlaneseq
        %v1971 = vshrl.u32 %v1970, 7
        %v1972 = vsub.s32 %v1969, %v1971
        %v1973 = vrot.slane %v1959, %v1972
        %v1974 = vcombine.low %v1918, %v1950
        %v1975 = vcombine.high %v1918, %v1950
        %v1976 = vcombine.low %v1925, %v1957
        %v1977 = vcombine.high %v1925, %v1957
        %v1978 = vcombine.low %v1934, %v1966
        %v1979 = vcombine.high %v1934, %v1966
        %v1980 = vcombine.low %v1941, %v1973
        %v1981 = vcombine.high %v1941, %v1973
        %v1982 = vcombine.low %v1783, %v1799
        %v1983 = vcombine.high %v1783, %v1799
        %v1985 = vunpack.c.l.s4 1983009808
        %v1986 = vunpack.c.0.s8 %v1985
        %v1987 = vlaneseq
        %v1988 = vshrl.u32 %v1987, 7
        %v1989 = vsub.s32 %v1986, %v1988
        %v1990 = vrot.slane %v1982, %v1989
        %v1992 = vunpack.c.l.s4 1983009808
        %v1993 = vunpack.c.0.s8 %v1992
        %v1994 = vlaneseq
        %v1995 = vshrl.u32 %v1994, 7
        %v1996 = vsub.s32 %v1993, %v1995
        %v1997 = vrot.slane %v1983, %v1996
        %v1998 = vcombine.low %v1791, %v1807
        %v1999 = vcombine.high %v1791, %v1807
        %v2001 = vunpack.c.l.s4 1983009808
        %v2002 = vunpack.c.0.s8 %v2001
        %v2003 = vlaneseq
        %v2004 = vshrl.u32 %v2003, 7
        %v2005 = vsub.s32 %v2002, %v2004
        %v2006 = vrot.slane %v1998, %v2005
        %v2008 = vunpack.c.l.s4 1983009808
        %v2009 = vunpack.c.0.s8 %v2008
        %v2010 = vlaneseq
        %v2011 = vshrl.u32 %v2010, 7
        %v2012 = vsub.s32 %v2009, %v2011
        %v2013 = vrot.slane %v1999, %v2012
        %v2014 = vcombine.low %v1815, %v1831
        %v2015 = vcombine.high %v1815, %v1831
        %v2017 = vunpack.c.l.s4 1983009808
        %v2018 = vunpack.c.0.s8 %v2017
        %v2019 = vlaneseq
        %v2020 = vshrl.u32 %v2019, 7
        %v2021 = vsub.s32 %v2018, %v2020
        %v2022 = vrot.slane %v2014, %v2021
        %v2024 = vunpack.c.l.s4 1983009808
        %v2025 = vunpack.c.0.s8 %v2024
        %v2026 = vlaneseq
        %v2027 = vshrl.u32 %v2026, 7
        %v2028 = vsub.s32 %v2025, %v2027
        %v2029 = vrot.slane %v2015, %v2028
        %v2030 = vcombine.low %v1823, %v1839
        %v2031 = vcombine.high %v1823, %v1839
        %v2033 = vunpack.c.l.s4 1983009808
        %v2034 = vunpack.c.0.s8 %v2033
        %v2035 = vlaneseq
        %v2036 = vshrl.u32 %v2035, 7
        %v2037 = vsub.s32 %v2034, %v2036
        %v2038 = vrot.slane %v2030, %v2037
        %v2040 = vunpack.c.l.s4 1983009808
        %v2041 = vunpack.c.0.s8 %v2040
        %v2042 = vlaneseq
        %v2043 = vshrl.u32 %v2042, 7
        %v2044 = vsub.s32 %v2041, %v2043
        %v2045 = vrot.slane %v2031, %v2044
        %v2046 = vcombine.low %v1990, %v2006
        %v2047 = vcombine.high %v1990, %v2006
        %v2049 = vunpack.c.l.s4 1934713408
        %v2050 = vunpack.c.0.s8 %v2049
        %v2051 = vlaneseq
        %v2052 = vshrl.u32 %v2051, 7
        %v2053 = vsub.s32 %v2050, %v2052
        %v2054 = vrot.slane %v2046, %v2053
        %v2056 = vunpack.c.l.s4 1934713408
        %v2057 = vunpack.c.0.s8 %v2056
        %v2058 = vlaneseq
        %v2059 = vshrl.u32 %v2058, 7
        %v2060 = vsub.s32 %v2057, %v2059
        %v2061 = vrot.slane %v2047, %v2060
        %v2062 = vcombine.low %v1997, %v2013
        %v2063 = vcombine.high %v1997, %v2013
        %v2065 = vunpack.c.l.s4 1934713408
        %v2066 = vunpack.c.0.s8 %v2065
        %v2067 = vlaneseq
        %v2068 = vshrl.u32 %v2067, 7
        %v2069 = vsub.s32 %v2066, %v2068
        %v2070 = vrot.slane %v2062, %v2069
        %v2072 = vunpack.c.l.s4 1934713408
        %v2073 = vunpack.c.0.s8 %v2072
        %v2074 = vlaneseq
        %v2075 = vshrl.u32 %v2074, 7
        %v2076 = vsub.s32 %v2073, %v2075
        %v2077 = vrot.slane %v2063, %v2076
        %v2078 = vcombine.low %v2022, %v2038
        %v2079 = vcombine.high %v2022, %v2038
        %v2081 = vunpack.c.l.s4 1934713408
        %v2082 = vunpack.c.0.s8 %v2081
        %v2083 = vlaneseq
        %v2084 = vshrl.u32 %v2083, 7
        %v2085 = vsub.s32 %v2082, %v2084
        %v2086 = vrot.slane %v2078, %v2085
        %v2088 = vunpack.c.l.s4 1934713408
        %v2089 = vunpack.c.0.s8 %v2088
        %v2090 = vlaneseq
        %v2091 = vshrl.u32 %v2090, 7
        %v2092 = vsub.s32 %v2089, %v2091
        %v2093 = vrot.slane %v2079, %v2092
        %v2094 = vcombine.low %v2029, %v2045
        %v2095 = vcombine.high %v2029, %v2045
        %v2097 = vunpack.c.l.s4 1934713408
        %v2098 = vunpack.c.0.s8 %v2097
        %v2099 = vlaneseq
        %v2100 = vshrl.u32 %v2099, 7
        %v2101 = vsub.s32 %v2098, %v2100
        %v2102 = vrot.slane %v2094, %v2101
        %v2104 = vunpack.c.l.s4 1934713408
        %v2105 = vunpack.c.0.s8 %v2104
        %v2106 = vlaneseq
        %v2107 = vshrl.u32 %v2106, 7
        %v2108 = vsub.s32 %v2105, %v2107
        %v2109 = vrot.slane %v2095, %v2108
        %v2110 = vcombine.low %v2054, %v2086
        %v2111 = vcombine.high %v2054, %v2086
        %v2112 = vcombine.low %v2061, %v2093
        %v2113 = vcombine.high %v2061, %v2093
        %v2114 = vcombine.low %v2070, %v2102
        %v2115 = vcombine.high %v2070, %v2102
        %v2116 = vcombine.low %v2077, %v2109
        %v2117 = vcombine.high %v2077, %v2109
        %v2118 = vcombine.low %v1784, %v1800
        %v2119 = vcombine.high %v1784, %v1800
        %v2121 = vunpack.c.l.s4 1983009808
        %v2122 = vunpack.c.0.s8 %v2121
        %v2123 = vlaneseq
        %v2124 = vshrl.u32 %v2123, 7
        %v2125 = vsub.s32 %v2122, %v2124
        %v2126 = vrot.slane %v2118, %v2125
        %v2128 = vunpack.c.l.s4 1983009808
        %v2129 = vunpack.c.0.s8 %v2128
        %v2130 = vlaneseq
        %v2131 = vshrl.u32 %v2130, 7
        %v2132 = vsub.s32 %v2129, %v2131
        %v2133 = vrot.slane %v2119, %v2132
        %v2134 = vcombine.low %v1792, %v1808
        %v2135 = vcombine.high %v1792, %v1808
        %v2137 = vunpack.c.l.s4 1983009808
        %v2138 = vunpack.c.0.s8 %v2137
        %v2139 = vlaneseq
        %v2140 = vshrl.u32 %v2139, 7
        %v2141 = vsub.s32 %v2138, %v2140
        %v2142 = vrot.slane %v2134, %v2141
        %v2144 = vunpack.c.l.s4 1983009808
        %v2145 = vunpack.c.0.s8 %v2144
        %v2146 = vlaneseq
        %v2147 = vshrl.u32 %v2146, 7
        %v2148 = vsub.s32 %v2145, %v2147
        %v2149 = vrot.slane %v2135, %v2148
        %v2150 = vcombine.low %v1816, %v1832
        %v2151 = vcombine.high %v1816, %v1832
        %v2153 = vunpack.c.l.s4 1983009808
        %v2154 = vunpack.c.0.s8 %v2153
        %v2155 = vlaneseq
        %v2156 = vshrl.u32 %v2155, 7
        %v2157 = vsub.s32 %v2154, %v2156
        %v2158 = vrot.slane %v2150, %v2157
        %v2160 = vunpack.c.l.s4 1983009808
        %v2161 = vunpack.c.0.s8 %v2160
        %v2162 = vlaneseq
        %v2163 = vshrl.u32 %v2162, 7
        %v2164 = vsub.s32 %v2161, %v2163
        %v2165 = vrot.slane %v2151, %v2164
        %v2166 = vcombine.low %v1824, %v1840
        %v2167 = vcombine.high %v1824, %v1840
        %v2169 = vunpack.c.l.s4 1983009808
        %v2170 = vunpack.c.0.s8 %v2169
        %v2171 = vlaneseq
        %v2172 = vshrl.u32 %v2171, 7
        %v2173 = vsub.s32 %v2170, %v2172
        %v2174 = vrot.slane %v2166, %v2173
        %v2176 = vunpack.c.l.s4 1983009808
        %v2177 = vunpack.c.0.s8 %v2176
        %v2178 = vlaneseq
        %v2179 = vshrl.u32 %v2178, 7
        %v2180 = vsub.s32 %v2177, %v2179
        %v2181 = vrot.slane %v2167, %v2180
        %v2182 = vcombine.low %v2126, %v2142
        %v2183 = vcombine.high %v2126, %v2142
        %v2185 = vunpack.c.l.s4 1934713408
        %v2186 = vunpack.c.0.s8 %v2185
        %v2187 = vlaneseq
        %v2188 = vshrl.u32 %v2187, 7
        %v2189 = vsub.s32 %v2186, %v2188
        %v2190 = vrot.slane %v2182, %v2189
        %v2192 = vunpack.c.l.s4 1934713408
        %v2193 = vunpack.c.0.s8 %v2192
        %v2194 = vlaneseq
        %v2195 = vshrl.u32 %v2194, 7
        %v2196 = vsub.s32 %v2193, %v2195
        %v2197 = vrot.slane %v2183, %v2196
        %v2198 = vcombine.low %v2133, %v2149
        %v2199 = vcombine.high %v2133, %v2149
        %v2201 = vunpack.c.l.s4 1934713408
        %v2202 = vunpack.c.0.s8 %v2201
        %v2203 = vlaneseq
        %v2204 = vshrl.u32 %v2203, 7
        %v2205 = vsub.s32 %v2202, %v2204
        %v2206 = vrot.slane %v2198, %v2205
        %v2208 = vunpack.c.l.s4 1934713408
        %v2209 = vunpack.c.0.s8 %v2208
        %v2210 = vlaneseq
        %v2211 = vshrl.u32 %v2210, 7
        %v2212 = vsub.s32 %v2209, %v2211
        %v2213 = vrot.slane %v2199, %v2212
        %v2214 = vcombine.low %v2158, %v2174
        %v2215 = vcombine.high %v2158, %v2174
        %v2217 = vunpack.c.l.s4 1934713408
        %v2218 = vunpack.c.0.s8 %v2217
        %v2219 = vlaneseq
        %v2220 = vshrl.u32 %v2219, 7
        %v2221 = vsub.s32 %v2218, %v2220
        %v2222 = vrot.slane %v2214, %v2221
        %v2224 = vunpack.c.l.s4 1934713408
        %v2225 = vunpack.c.0.s8 %v2224
        %v2226 = vlaneseq
        %v2227 = vshrl.u32 %v2226, 7
        %v2228 = vsub.s32 %v2225, %v2227
        %v2229 = vrot.slane %v2215, %v2228
        %v2230 = vcombine.low %v2165, %v2181
        %v2231 = vcombine.high %v2165, %v2181
        %v2233 = vunpack.c.l.s4 1934713408
        %v2234 = vunpack.c.0.s8 %v2233
        %v2235 = vlaneseq
        %v2236 = vshrl.u32 %v2235, 7
        %v2237 = vsub.s32 %v2234, %v2236
        %v2238 = vrot.slane %v2230, %v2237
        %v2240 = vunpack.c.l.s4 1934713408
        %v2241 = vunpack.c.0.s8 %v2240
        %v2242 = vlaneseq
        %v2243 = vshrl.u32 %v2242, 7
        %v2244 = vsub.s32 %v2241, %v2243
        %v2245 = vrot.slane %v2231, %v2244
        %v2246 = vcombine.low %v2190, %v2222
        %v2247 = vcombine.high %v2190, %v2222
        %v2248 = vcombine.low %v2197, %v2229
        %v2249 = vcombine.high %v2197, %v2229
        %v2250 = vcombine.low %v2206, %v2238
        %v2251 = vcombine.high %v2206, %v2238
        %v2252 = vcombine.low %v2213, %v2245
        %v2253 = vcombine.high %v2213, %v2245
        %v2254 = vcombine.low %v1785, %v1801
        %v2255 = vcombine.high %v1785, %v1801
        %v2257 = vunpack.c.l.s4 1983009808
        %v2258 = vunpack.c.0.s8 %v2257
        %v2259 = vlaneseq
        %v2260 = vshrl.u32 %v2259, 7
        %v2261 = vsub.s32 %v2258, %v2260
        %v2262 = vrot.slane %v2254, %v2261
        %v2264 = vunpack.c.l.s4 1983009808
        %v2265 = vunpack.c.0.s8 %v2264
        %v2266 = vlaneseq
        %v2267 = vshrl.u32 %v2266, 7
        %v2268 = vsub.s32 %v2265, %v2267
        %v2269 = vrot.slane %v2255, %v2268
        %v2270 = vcombine.low %v1793, %v1809
        %v2271 = vcombine.high %v1793, %v1809
        %v2273 = vunpack.c.l.s4 1983009808
        %v2274 = vunpack.c.0.s8 %v2273
        %v2275 = vlaneseq
        %v2276 = vshrl.u32 %v2275, 7
        %v2277 = vsub.s32 %v2274, %v2276
        %v2278 = vrot.slane %v2270, %v2277
        %v2280 = vunpack.c.l.s4 1983009808
        %v2281 = vunpack.c.0.s8 %v2280
        %v2282 = vlaneseq
        %v2283 = vshrl.u32 %v2282, 7
        %v2284 = vsub.s32 %v2281, %v2283
        %v2285 = vrot.slane %v2271, %v2284
        %v2286 = vcombine.low %v1817, %v1833
        %v2287 = vcombine.high %v1817, %v1833
        %v2289 = vunpack.c.l.s4 1983009808
        %v2290 = vunpack.c.0.s8 %v2289
        %v2291 = vlaneseq
        %v2292 = vshrl.u32 %v2291, 7
        %v2293 = vsub.s32 %v2290, %v2292
        %v2294 = vrot.slane %v2286, %v2293
        %v2296 = vunpack.c.l.s4 1983009808
        %v2297 = vunpack.c.0.s8 %v2296
        %v2298 = vlaneseq
        %v2299 = vshrl.u32 %v2298, 7
        %v2300 = vsub.s32 %v2297, %v2299
        %v2301 = vrot.slane %v2287, %v2300
        %v2302 = vcombine.low %v1825, %v1841
        %v2303 = vcombine.high %v1825, %v1841
        %v2305 = vunpack.c.l.s4 1983009808
        %v2306 = vunpack.c.0.s8 %v2305
        %v2307 = vlaneseq
        %v2308 = vshrl.u32 %v2307, 7
        %v2309 = vsub.s32 %v2306, %v2308
        %v2310 = vrot.slane %v2302, %v2309
        %v2312 = vunpack.c.l.s4 1983009808
        %v2313 = vunpack.c.0.s8 %v2312
        %v2314 = vlaneseq
        %v2315 = vshrl.u32 %v2314, 7
        %v2316 = vsub.s32 %v2313, %v2315
        %v2317 = vrot.slane %v2303, %v2316
        %v2318 = vcombine.low %v2262, %v2278
        %v2319 = vcombine.high %v2262, %v2278
        %v2321 = vunpack.c.l.s4 1934713408
        %v2322 = vunpack.c.0.s8 %v2321
        %v2323 = vlaneseq
        %v2324 = vshrl.u32 %v2323, 7
        %v2325 = vsub.s32 %v2322, %v2324
        %v2326 = vrot.slane %v2318, %v2325
        %v2328 = vunpack.c.l.s4 1934713408
        %v2329 = vunpack.c.0.s8 %v2328
        %v2330 = vlaneseq
        %v2331 = vshrl.u32 %v2330, 7
        %v2332 = vsub.s32 %v2329, %v2331
        %v2333 = vrot.slane %v2319, %v2332
        %v2334 = vcombine.low %v2269, %v2285
        %v2335 = vcombine.high %v2269, %v2285
        %v2337 = vunpack.c.l.s4 1934713408
        %v2338 = vunpack.c.0.s8 %v2337
        %v2339 = vlaneseq
        %v2340 = vshrl.u32 %v2339, 7
        %v2341 = vsub.s32 %v2338, %v2340
        %v2342 = vrot.slane %v2334, %v2341
        %v2344 = vunpack.c.l.s4 1934713408
        %v2345 = vunpack.c.0.s8 %v2344
        %v2346 = vlaneseq
        %v2347 = vshrl.u32 %v2346, 7
        %v2348 = vsub.s32 %v2345, %v2347
        %v2349 = vrot.slane %v2335, %v2348
        %v2350 = vcombine.low %v2294, %v2310
        %v2351 = vcombine.high %v2294, %v2310
        %v2353 = vunpack.c.l.s4 1934713408
        %v2354 = vunpack.c.0.s8 %v2353
        %v2355 = vlaneseq
        %v2356 = vshrl.u32 %v2355, 7
        %v2357 = vsub.s32 %v2354, %v2356
        %v2358 = vrot.slane %v2350, %v2357
        %v2360 = vunpack.c.l.s4 1934713408
        %v2361 = vunpack.c.0.s8 %v2360
        %v2362 = vlaneseq
        %v2363 = vshrl.u32 %v2362, 7
        %v2364 = vsub.s32 %v2361, %v2363
        %v2365 = vrot.slane %v2351, %v2364
        %v2366 = vcombine.low %v2301, %v2317
        %v2367 = vcombine.high %v2301, %v2317
        %v2369 = vunpack.c.l.s4 1934713408
        %v2370 = vunpack.c.0.s8 %v2369
        %v2371 = vlaneseq
        %v2372 = vshrl.u32 %v2371, 7
        %v2373 = vsub.s32 %v2370, %v2372
        %v2374 = vrot.slane %v2366, %v2373
        %v2376 = vunpack.c.l.s4 1934713408
        %v2377 = vunpack.c.0.s8 %v2376
        %v2378 = vlaneseq
        %v2379 = vshrl.u32 %v2378, 7
        %v2380 = vsub.s32 %v2377, %v2379
        %v2381 = vrot.slane %v2367, %v2380
        %v2382 = vcombine.low %v2326, %v2358
        %v2383 = vcombine.high %v2326, %v2358
        %v2384 = vcombine.low %v2333, %v2365
        %v2385 = vcombine.high %v2333, %v2365
        %v2386 = vcombine.low %v2342, %v2374
        %v2387 = vcombine.high %v2342, %v2374
        %v2388 = vcombine.low %v2349, %v2381
        %v2389 = vcombine.high %v2349, %v2381
        %v2390 = vcombine.low %v1786, %v1802
        %v2391 = vcombine.high %v1786, %v1802
        %v2393 = vunpack.c.l.s4 1983009808
        %v2394 = vunpack.c.0.s8 %v2393
        %v2395 = vlaneseq
        %v2396 = vshrl.u32 %v2395, 7
        %v2397 = vsub.s32 %v2394, %v2396
        %v2398 = vrot.slane %v2390, %v2397
        %v2400 = vunpack.c.l.s4 1983009808
        %v2401 = vunpack.c.0.s8 %v2400
        %v2402 = vlaneseq
        %v2403 = vshrl.u32 %v2402, 7
        %v2404 = vsub.s32 %v2401, %v2403
        %v2405 = vrot.slane %v2391, %v2404
        %v2406 = vcombine.low %v1794, %v1810
        %v2407 = vcombine.high %v1794, %v1810
        %v2409 = vunpack.c.l.s4 1983009808
        %v2410 = vunpack.c.0.s8 %v2409
        %v2411 = vlaneseq
        %v2412 = vshrl.u32 %v2411, 7
        %v2413 = vsub.s32 %v2410, %v2412
        %v2414 = vrot.slane %v2406, %v2413
        %v2416 = vunpack.c.l.s4 1983009808
        %v2417 = vunpack.c.0.s8 %v2416
        %v2418 = vlaneseq
        %v2419 = vshrl.u32 %v2418, 7
        %v2420 = vsub.s32 %v2417, %v2419
        %v2421 = vrot.slane %v2407, %v2420
        %v2422 = vcombine.low %v1818, %v1834
        %v2423 = vcombine.high %v1818, %v1834
        %v2425 = vunpack.c.l.s4 1983009808
        %v2426 = vunpack.c.0.s8 %v2425
        %v2427 = vlaneseq
        %v2428 = vshrl.u32 %v2427, 7
        %v2429 = vsub.s32 %v2426, %v2428
        %v2430 = vrot.slane %v2422, %v2429
        %v2432 = vunpack.c.l.s4 1983009808
        %v2433 = vunpack.c.0.s8 %v2432
        %v2434 = vlaneseq
        %v2435 = vshrl.u32 %v2434, 7
        %v2436 = vsub.s32 %v2433, %v2435
        %v2437 = vrot.slane %v2423, %v2436
        %v2438 = vcombine.low %v1826, %v1842
        %v2439 = vcombine.high %v1826, %v1842
        %v2441 = vunpack.c.l.s4 1983009808
        %v2442 = vunpack.c.0.s8 %v2441
        %v2443 = vlaneseq
        %v2444 = vshrl.u32 %v2443, 7
        %v2445 = vsub.s32 %v2442, %v2444
        %v2446 = vrot.slane %v2438, %v2445
        %v2448 = vunpack.c.l.s4 1983009808
        %v2449 = vunpack.c.0.s8 %v2448
        %v2450 = vlaneseq
        %v2451 = vshrl.u32 %v2450, 7
        %v2452 = vsub.s32 %v2449, %v2451
        %v2453 = vrot.slane %v2439, %v2452
        %v2454 = vcombine.low %v2398, %v2414
        %v2455 = vcombine.high %v2398, %v2414
        %v2457 = vunpack.c.l.s4 1934713408
        %v2458 = vunpack.c.0.s8 %v2457
        %v2459 = vlaneseq
        %v2460 = vshrl.u32 %v2459, 7
        %v2461 = vsub.s32 %v2458, %v2460
        %v2462 = vrot.slane %v2454, %v2461
        %v2464 = vunpack.c.l.s4 1934713408
        %v2465 = vunpack.c.0.s8 %v2464
        %v2466 = vlaneseq
        %v2467 = vshrl.u32 %v2466, 7
        %v2468 = vsub.s32 %v2465, %v2467
        %v2469 = vrot.slane %v2455, %v2468
        %v2470 = vcombine.low %v2405, %v2421
        %v2471 = vcombine.high %v2405, %v2421
        %v2473 = vunpack.c.l.s4 1934713408
        %v2474 = vunpack.c.0.s8 %v2473
        %v2475 = vlaneseq
        %v2476 = vshrl.u32 %v2475, 7
        %v2477 = vsub.s32 %v2474, %v2476
        %v2478 = vrot.slane %v2470, %v2477
        %v2480 = vunpack.c.l.s4 1934713408
        %v2481 = vunpack.c.0.s8 %v2480
        %v2482 = vlaneseq
        %v2483 = vshrl.u32 %v2482, 7
        %v2484 = vsub.s32 %v2481, %v2483
        %v2485 = vrot.slane %v2471, %v2484
        %v2486 = vcombine.low %v2430, %v2446
        %v2487 = vcombine.high %v2430, %v2446
        %v2489 = vunpack.c.l.s4 1934713408
        %v2490 = vunpack.c.0.s8 %v2489
        %v2491 = vlaneseq
        %v2492 = vshrl.u32 %v2491, 7
        %v2493 = vsub.s32 %v2490, %v2492
        %v2494 = vrot.slane %v2486, %v2493
        %v2496 = vunpack.c.l.s4 1934713408
        %v2497 = vunpack.c.0.s8 %v2496
        %v2498 = vlaneseq
        %v2499 = vshrl.u32 %v2498, 7
        %v2500 = vsub.s32 %v2497, %v2499
        %v2501 = vrot.slane %v2487, %v2500
        %v2502 = vcombine.low %v2437, %v2453
        %v2503 = vcombine.high %v2437, %v2453
        %v2505 = vunpack.c.l.s4 1934713408
        %v2506 = vunpack.c.0.s8 %v2505
        %v2507 = vlaneseq
        %v2508 = vshrl.u32 %v2507, 7
        %v2509 = vsub.s32 %v2506, %v2508
        %v2510 = vrot.slane %v2502, %v2509
        %v2512 = vunpack.c.l.s4 1934713408
        %v2513 = vunpack.c.0.s8 %v2512
        %v2514 = vlaneseq
        %v2515 = vshrl.u32 %v2514, 7
        %v2516 = vsub.s32 %v2513, %v2515
        %v2517 = vrot.slane %v2503, %v2516
        %v2518 = vcombine.low %v2462, %v2494
        %v2519 = vcombine.high %v2462, %v2494
        %v2520 = vcombine.low %v2469, %v2501
        %v2521 = vcombine.high %v2469, %v2501
        %v2522 = vcombine.low %v2478, %v2510
        %v2523 = vcombine.high %v2478, %v2510
        %v2524 = vcombine.low %v2485, %v2517
        %v2525 = vcombine.high %v2485, %v2517
        %v2526 = vcombine.low %v1787, %v1803
        %v2527 = vcombine.high %v1787, %v1803
        %v2529 = vunpack.c.l.s4 1983009808
        %v2530 = vunpack.c.0.s8 %v2529
        %v2531 = vlaneseq
        %v2532 = vshrl.u32 %v2531, 7
        %v2533 = vsub.s32 %v2530, %v2532
        %v2534 = vrot.slane %v2526, %v2533
        %v2536 = vunpack.c.l.s4 1983009808
        %v2537 = vunpack.c.0.s8 %v2536
        %v2538 = vlaneseq
        %v2539 = vshrl.u32 %v2538, 7
        %v2540 = vsub.s32 %v2537, %v2539
        %v2541 = vrot.slane %v2527, %v2540
        %v2542 = vcombine.low %v1795, %v1811
        %v2543 = vcombine.high %v1795, %v1811
        %v2545 = vunpack.c.l.s4 1983009808
        %v2546 = vunpack.c.0.s8 %v2545
        %v2547 = vlaneseq
        %v2548 = vshrl.u32 %v2547, 7
        %v2549 = vsub.s32 %v2546, %v2548
        %v2550 = vrot.slane %v2542, %v2549
        %v2552 = vunpack.c.l.s4 1983009808
        %v2553 = vunpack.c.0.s8 %v2552
        %v2554 = vlaneseq
        %v2555 = vshrl.u32 %v2554, 7
        %v2556 = vsub.s32 %v2553, %v2555
        %v2557 = vrot.slane %v2543, %v2556
        %v2558 = vcombine.low %v1819, %v1835
        %v2559 = vcombine.high %v1819, %v1835
        %v2561 = vunpack.c.l.s4 1983009808
        %v2562 = vunpack.c.0.s8 %v2561
        %v2563 = vlaneseq
        %v2564 = vshrl.u32 %v2563, 7
        %v2565 = vsub.s32 %v2562, %v2564
        %v2566 = vrot.slane %v2558, %v2565
        %v2568 = vunpack.c.l.s4 1983009808
        %v2569 = vunpack.c.0.s8 %v2568
        %v2570 = vlaneseq
        %v2571 = vshrl.u32 %v2570, 7
        %v2572 = vsub.s32 %v2569, %v2571
        %v2573 = vrot.slane %v2559, %v2572
        %v2574 = vcombine.low %v1827, %v1843
        %v2575 = vcombine.high %v1827, %v1843
        %v2577 = vunpack.c.l.s4 1983009808
        %v2578 = vunpack.c.0.s8 %v2577
        %v2579 = vlaneseq
        %v2580 = vshrl.u32 %v2579, 7
        %v2581 = vsub.s32 %v2578, %v2580
        %v2582 = vrot.slane %v2574, %v2581
        %v2584 = vunpack.c.l.s4 1983009808
        %v2585 = vunpack.c.0.s8 %v2584
        %v2586 = vlaneseq
        %v2587 = vshrl.u32 %v2586, 7
        %v2588 = vsub.s32 %v2585, %v2587
        %v2589 = vrot.slane %v2575, %v2588
        %v2590 = vcombine.low %v2534, %v2550
        %v2591 = vcombine.high %v2534, %v2550
        %v2593 = vunpack.c.l.s4 1934713408
        %v2594 = vunpack.c.0.s8 %v2593
        %v2595 = vlaneseq
        %v2596 = vshrl.u32 %v2595, 7
        %v2597 = vsub.s32 %v2594, %v2596
        %v2598 = vrot.slane %v2590, %v2597
        %v2600 = vunpack.c.l.s4 1934713408
        %v2601 = vunpack.c.0.s8 %v2600
        %v2602 = vlaneseq
        %v2603 = vshrl.u32 %v2602, 7
        %v2604 = vsub.s32 %v2601, %v2603
        %v2605 = vrot.slane %v2591, %v2604
        %v2606 = vcombine.low %v2541, %v2557
        %v2607 = vcombine.high %v2541, %v2557
        %v2609 = vunpack.c.l.s4 1934713408
        %v2610 = vunpack.c.0.s8 %v2609
        %v2611 = vlaneseq
        %v2612 = vshrl.u32 %v2611, 7
        %v2613 = vsub.s32 %v2610, %v2612
        %v2614 = vrot.slane %v2606, %v2613
        %v2616 = vunpack.c.l.s4 1934713408
        %v2617 = vunpack.c.0.s8 %v2616
        %v2618 = vlaneseq
        %v2619 = vshrl.u32 %v2618, 7
        %v2620 = vsub.s32 %v2617, %v2619
        %v2621 = vrot.slane %v2607, %v2620
        %v2622 = vcombine.low %v2566, %v2582
        %v2623 = vcombine.high %v2566, %v2582
        %v2625 = vunpack.c.l.s4 1934713408
        %v2626 = vunpack.c.0.s8 %v2625
        %v2627 = vlaneseq
        %v2628 = vshrl.u32 %v2627, 7
        %v2629 = vsub.s32 %v2626, %v2628
        %v2630 = vrot.slane %v2622, %v2629
        %v2632 = vunpack.c.l.s4 1934713408
        %v2633 = vunpack.c.0.s8 %v2632
        %v2634 = vlaneseq
        %v2635 = vshrl.u32 %v2634, 7
        %v2636 = vsub.s32 %v2633, %v2635
        %v2637 = vrot.slane %v2623, %v2636
        %v2638 = vcombine.low %v2573, %v2589
        %v2639 = vcombine.high %v2573, %v2589
        %v2641 = vunpack.c.l.s4 1934713408
        %v2642 = vunpack.c.0.s8 %v2641
        %v2643 = vlaneseq
        %v2644 = vshrl.u32 %v2643, 7
        %v2645 = vsub.s32 %v2642, %v2644
        %v2646 = vrot.slane %v2638, %v2645
        %v2648 = vunpack.c.l.s4 1934713408
        %v2649 = vunpack.c.0.s8 %v2648
        %v2650 = vlaneseq
        %v2651 = vshrl.u32 %v2650, 7
        %v2652 = vsub.s32 %v2649, %v2651
        %v2653 = vrot.slane %v2639, %v2652
        %v2654 = vcombine.low %v2598, %v2630
        %v2655 = vcombine.high %v2598, %v2630
        %v2656 = vcombine.low %v2605, %v2637
        %v2657 = vcombine.high %v2605, %v2637
        %v2658 = vcombine.low %v2614, %v2646
        %v2659 = vcombine.high %v2614, %v2646
        %v2660 = vcombine.low %v2621, %v2653
        %v2661 = vcombine.high %v2621, %v2653
        %v2662 = vcombine.low %v1788, %v1804
        %v2663 = vcombine.high %v1788, %v1804
        %v2665 = vunpack.c.l.s4 1983009808
        %v2666 = vunpack.c.0.s8 %v2665
        %v2667 = vlaneseq
        %v2668 = vshrl.u32 %v2667, 7
        %v2669 = vsub.s32 %v2666, %v2668
        %v2670 = vrot.slane %v2662, %v2669
        %v2672 = vunpack.c.l.s4 1983009808
        %v2673 = vunpack.c.0.s8 %v2672
        %v2674 = vlaneseq
        %v2675 = vshrl.u32 %v2674, 7
        %v2676 = vsub.s32 %v2673, %v2675
        %v2677 = vrot.slane %v2663, %v2676
        %v2678 = vcombine.low %v1796, %v1812
        %v2679 = vcombine.high %v1796, %v1812
        %v2681 = vunpack.c.l.s4 1983009808
        %v2682 = vunpack.c.0.s8 %v2681
        %v2683 = vlaneseq
        %v2684 = vshrl.u32 %v2683, 7
        %v2685 = vsub.s32 %v2682, %v2684
        %v2686 = vrot.slane %v2678, %v2685
        %v2688 = vunpack.c.l.s4 1983009808
        %v2689 = vunpack.c.0.s8 %v2688
        %v2690 = vlaneseq
        %v2691 = vshrl.u32 %v2690, 7
        %v2692 = vsub.s32 %v2689, %v2691
        %v2693 = vrot.slane %v2679, %v2692
        %v2694 = vcombine.low %v1820, %v1836
        %v2695 = vcombine.high %v1820, %v1836
        %v2697 = vunpack.c.l.s4 1983009808
        %v2698 = vunpack.c.0.s8 %v2697
        %v2699 = vlaneseq
        %v2700 = vshrl.u32 %v2699, 7
        %v2701 = vsub.s32 %v2698, %v2700
        %v2702 = vrot.slane %v2694, %v2701
        %v2704 = vunpack.c.l.s4 1983009808
        %v2705 = vunpack.c.0.s8 %v2704
        %v2706 = vlaneseq
        %v2707 = vshrl.u32 %v2706, 7
        %v2708 = vsub.s32 %v2705, %v2707
        %v2709 = vrot.slane %v2695, %v2708
        %v2710 = vcombine.low %v1828, %v1844
        %v2711 = vcombine.high %v1828, %v1844
        %v2713 = vunpack.c.l.s4 1983009808
        %v2714 = vunpack.c.0.s8 %v2713
        %v2715 = vlaneseq
        %v2716 = vshrl.u32 %v2715, 7
        %v2717 = vsub.s32 %v2714, %v2716
        %v2718 = vrot.slane %v2710, %v2717
        %v2720 = vunpack.c.l.s4 1983009808
        %v2721 = vunpack.c.0.s8 %v2720
        %v2722 = vlaneseq
        %v2723 = vshrl.u32 %v2722, 7
        %v2724 = vsub.s32 %v2721, %v2723
        %v2725 = vrot.slane %v2711, %v2724
        %v2726 = vcombine.low %v2670, %v2686
        %v2727 = vcombine.high %v2670, %v2686
        %v2729 = vunpack.c.l.s4 1934713408
        %v2730 = vunpack.c.0.s8 %v2729
        %v2731 = vlaneseq
        %v2732 = vshrl.u32 %v2731, 7
        %v2733 = vsub.s32 %v2730, %v2732
        %v2734 = vrot.slane %v2726, %v2733
        %v2736 = vunpack.c.l.s4 1934713408
        %v2737 = vunpack.c.0.s8 %v2736
        %v2738 = vlaneseq
        %v2739 = vshrl.u32 %v2738, 7
        %v2740 = vsub.s32 %v2737, %v2739
        %v2741 = vrot.slane %v2727, %v2740
        %v2742 = vcombine.low %v2677, %v2693
        %v2743 = vcombine.high %v2677, %v2693
        %v2745 = vunpack.c.l.s4 1934713408
        %v2746 = vunpack.c.0.s8 %v2745
        %v2747 = vlaneseq
        %v2748 = vshrl.u32 %v2747, 7
        %v2749 = vsub.s32 %v2746, %v2748
        %v2750 = vrot.slane %v2742, %v2749
        %v2752 = vunpack.c.l.s4 1934713408
        %v2753 = vunpack.c.0.s8 %v2752
        %v2754 = vlaneseq
        %v2755 = vshrl.u32 %v2754, 7
        %v2756 = vsub.s32 %v2753, %v2755
        %v2757 = vrot.slane %v2743, %v2756
        %v2758 = vcombine.low %v2702, %v2718
        %v2759 = vcombine.high %v2702, %v2718
        %v2761 = vunpack.c.l.s4 1934713408
        %v2762 = vunpack.c.0.s8 %v2761
        %v2763 = vlaneseq
        %v2764 = vshrl.u32 %v2763, 7
        %v2765 = vsub.s32 %v2762, %v2764
        %v2766 = vrot.slane %v2758, %v2765
        %v2768 = vunpack.c.l.s4 1934713408
        %v2769 = vunpack.c.0.s8 %v2768
        %v2770 = vlaneseq
        %v2771 = vshrl.u32 %v2770, 7
        %v2772 = vsub.s32 %v2769, %v2771
        %v2773 = vrot.slane %v2759, %v2772
        %v2774 = vcombine.low %v2709, %v2725
        %v2775 = vcombine.high %v2709, %v2725
        %v2777 = vunpack.c.l.s4 1934713408
        %v2778 = vunpack.c.0.s8 %v2777
        %v2779 = vlaneseq
        %v2780 = vshrl.u32 %v2779, 7
        %v2781 = vsub.s32 %v2778, %v2780
        %v2782 = vrot.slane %v2774, %v2781
        %v2784 = vunpack.c.l.s4 1934713408
        %v2785 = vunpack.c.0.s8 %v2784
        %v2786 = vlaneseq
        %v2787 = vshrl.u32 %v2786, 7
        %v2788 = vsub.s32 %v2785, %v2787
        %v2789 = vrot.slane %v2775, %v2788
        %v2790 = vcombine.low %v2734, %v2766
        %v2791 = vcombine.high %v2734, %v2766
        %v2792 = vcombine.low %v2741, %v2773
        %v2793 = vcombine.high %v2741, %v2773
        %v2794 = vcombine.low %v2750, %v2782
        %v2795 = vcombine.high %v2750, %v2782
        %v2796 = vcombine.low %v2757, %v2789
        %v2797 = vcombine.high %v2757, %v2789
        %v2798 = vcombine.low %v1789, %v1805
        %v2799 = vcombine.high %v1789, %v1805
        %v2801 = vunpack.c.l.s4 1983009808
        %v2802 = vunpack.c.0.s8 %v2801
        %v2803 = vlaneseq
        %v2804 = vshrl.u32 %v2803, 7
        %v2805 = vsub.s32 %v2802, %v2804
        %v2806 = vrot.slane %v2798, %v2805
        %v2808 = vunpack.c.l.s4 1983009808
        %v2809 = vunpack.c.0.s8 %v2808
        %v2810 = vlaneseq
        %v2811 = vshrl.u32 %v2810, 7
        %v2812 = vsub.s32 %v2809, %v2811
        %v2813 = vrot.slane %v2799, %v2812
        %v2814 = vcombine.low %v1797, %v1813
        %v2815 = vcombine.high %v1797, %v1813
        %v2817 = vunpack.c.l.s4 1983009808
        %v2818 = vunpack.c.0.s8 %v2817
        %v2819 = vlaneseq
        %v2820 = vshrl.u32 %v2819, 7
        %v2821 = vsub.s32 %v2818, %v2820
        %v2822 = vrot.slane %v2814, %v2821
        %v2824 = vunpack.c.l.s4 1983009808
        %v2825 = vunpack.c.0.s8 %v2824
        %v2826 = vlaneseq
        %v2827 = vshrl.u32 %v2826, 7
        %v2828 = vsub.s32 %v2825, %v2827
        %v2829 = vrot.slane %v2815, %v2828
        %v2830 = vcombine.low %v1821, %v1837
        %v2831 = vcombine.high %v1821, %v1837
        %v2833 = vunpack.c.l.s4 1983009808
        %v2834 = vunpack.c.0.s8 %v2833
        %v2835 = vlaneseq
        %v2836 = vshrl.u32 %v2835, 7
        %v2837 = vsub.s32 %v2834, %v2836
        %v2838 = vrot.slane %v2830, %v2837
        %v2840 = vunpack.c.l.s4 1983009808
        %v2841 = vunpack.c.0.s8 %v2840
        %v2842 = vlaneseq
        %v2843 = vshrl.u32 %v2842, 7
        %v2844 = vsub.s32 %v2841, %v2843
        %v2845 = vrot.slane %v2831, %v2844
        %v2846 = vcombine.low %v1829, %v1845
        %v2847 = vcombine.high %v1829, %v1845
        %v2849 = vunpack.c.l.s4 1983009808
        %v2850 = vunpack.c.0.s8 %v2849
        %v2851 = vlaneseq
        %v2852 = vshrl.u32 %v2851, 7
        %v2853 = vsub.s32 %v2850, %v2852
        %v2854 = vrot.slane %v2846, %v2853
        %v2856 = vunpack.c.l.s4 1983009808
        %v2857 = vunpack.c.0.s8 %v2856
        %v2858 = vlaneseq
        %v2859 = vshrl.u32 %v2858, 7
        %v2860 = vsub.s32 %v2857, %v2859
        %v2861 = vrot.slane %v2847, %v2860
        %v2862 = vcombine.low %v2806, %v2822
        %v2863 = vcombine.high %v2806, %v2822
        %v2865 = vunpack.c.l.s4 1934713408
        %v2866 = vunpack.c.0.s8 %v2865
        %v2867 = vlaneseq
        %v2868 = vshrl.u32 %v2867, 7
        %v2869 = vsub.s32 %v2866, %v2868
        %v2870 = vrot.slane %v2862, %v2869
        %v2872 = vunpack.c.l.s4 1934713408
        %v2873 = vunpack.c.0.s8 %v2872
        %v2874 = vlaneseq
        %v2875 = vshrl.u32 %v2874, 7
        %v2876 = vsub.s32 %v2873, %v2875
        %v2877 = vrot.slane %v2863, %v2876
        %v2878 = vcombine.low %v2813, %v2829
        %v2879 = vcombine.high %v2813, %v2829
        %v2881 = vunpack.c.l.s4 1934713408
        %v2882 = vunpack.c.0.s8 %v2881
        %v2883 = vlaneseq
        %v2884 = vshrl.u32 %v2883, 7
        %v2885 = vsub.s32 %v2882, %v2884
        %v2886 = vrot.slane %v2878, %v2885
        %v2888 = vunpack.c.l.s4 1934713408
        %v2889 = vunpack.c.0.s8 %v2888
        %v2890 = vlaneseq
        %v2891 = vshrl.u32 %v2890, 7
        %v2892 = vsub.s32 %v2889, %v2891
        %v2893 = vrot.slane %v2879, %v2892
        %v2894 = vcombine.low %v2838, %v2854
        %v2895 = vcombine.high %v2838, %v2854
        %v2897 = vunpack.c.l.s4 1934713408
        %v2898 = vunpack.c.0.s8 %v2897
        %v2899 = vlaneseq
        %v2900 = vshrl.u32 %v2899, 7
        %v2901 = vsub.s32 %v2898, %v2900
        %v2902 = vrot.slane %v2894, %v2901
        %v2904 = vunpack.c.l.s4 1934713408
        %v2905 = vunpack.c.0.s8 %v2904
        %v2906 = vlaneseq
        %v2907 = vshrl.u32 %v2906, 7
        %v2908 = vsub.s32 %v2905, %v2907
        %v2909 = vrot.slane %v2895, %v2908
        %v2910 = vcombine.low %v2845, %v2861
        %v2911 = vcombine.high %v2845, %v2861
        %v2913 = vunpack.c.l.s4 1934713408
        %v2914 = vunpack.c.0.s8 %v2913
        %v2915 = vlaneseq
        %v2916 = vshrl.u32 %v2915, 7
        %v2917 = vsub.s32 %v2914, %v2916
        %v2918 = vrot.slane %v2910, %v2917
        %v2920 = vunpack.c.l.s4 1934713408
        %v2921 = vunpack.c.0.s8 %v2920
        %v2922 = vlaneseq
        %v2923 = vshrl.u32 %v2922, 7
        %v2924 = vsub.s32 %v2921, %v2923
        %v2925 = vrot.slane %v2911, %v2924
        %v2926 = vcombine.low %v2870, %v2902
        %v2927 = vcombine.high %v2870, %v2902
        %v2928 = vcombine.low %v2877, %v2909
        %v2929 = vcombine.high %v2877, %v2909
        %v2930 = vcombine.low %v2886, %v2918
        %v2931 = vcombine.high %v2886, %v2918
        %v2932 = vcombine.low %v2893, %v2925
        %v2933 = vcombine.high %v2893, %v2925
        %2935 = vrot.lane.b32.xlu0 %v1975, 64
        %v2936 = vpop.permute.xlu0 %2935
        %2939 = vrot.lane.b32.xlu0 %v1977, 64
        %v2940 = vpop.permute.xlu0 %2939
        %2943 = vrot.lane.b32.xlu0 %v1979, 64
        %v2944 = vpop.permute.xlu0 %2943
        %2947 = vrot.lane.b32.xlu0 %v1981, 64
        %v2948 = vpop.permute.xlu0 %2947
        %2951 = vrot.lane.b32.xlu0 %v2111, 64
        %v2952 = vpop.permute.xlu0 %2951
        %2955 = vrot.lane.b32.xlu0 %v2113, 64
        %v2956 = vpop.permute.xlu0 %2955
        %2959 = vrot.lane.b32.xlu0 %v2115, 64
        %v2960 = vpop.permute.xlu0 %2959
        %2963 = vrot.lane.b32.xlu0 %v2117, 64
        %v2964 = vpop.permute.xlu0 %2963
        %2967 = vrot.lane.b32.xlu0 %v2247, 64
        %v2968 = vpop.permute.xlu0 %2967
        %2971 = vrot.lane.b32.xlu0 %v2249, 64
        %v2972 = vpop.permute.xlu0 %2971
        %2975 = vrot.lane.b32.xlu0 %v2251, 64
        %v2976 = vpop.permute.xlu0 %2975
        %2979 = vrot.lane.b32.xlu0 %v2253, 64
        %v2980 = vpop.permute.xlu0 %2979
        %2983 = vrot.lane.b32.xlu0 %v2383, 64
        %v2984 = vpop.permute.xlu0 %2983
        %2987 = vrot.lane.b32.xlu0 %v2385, 64
        %v2988 = vpop.permute.xlu0 %2987
        %2991 = vrot.lane.b32.xlu0 %v2387, 64
        %v2992 = vpop.permute.xlu0 %2991
        %2995 = vrot.lane.b32.xlu0 %v2389, 64
        %v2996 = vpop.permute.xlu0 %2995
        %2999 = vrot.lane.b32.xlu0 %v2519, 64
        %v3000 = vpop.permute.xlu0 %2999
        %3003 = vrot.lane.b32.xlu0 %v2521, 64
        %v3004 = vpop.permute.xlu0 %3003
        %3007 = vrot.lane.b32.xlu0 %v2523, 64
        %v3008 = vpop.permute.xlu0 %3007
        %3011 = vrot.lane.b32.xlu0 %v2525, 64
        %v3012 = vpop.permute.xlu0 %3011
        %3015 = vrot.lane.b32.xlu0 %v2655, 64
        %v3016 = vpop.permute.xlu0 %3015
        %3019 = vrot.lane.b32.xlu0 %v2657, 64
        %v3020 = vpop.permute.xlu0 %3019
        %3023 = vrot.lane.b32.xlu0 %v2659, 64
        %v3024 = vpop.permute.xlu0 %3023
        %3027 = vrot.lane.b32.xlu0 %v2661, 64
        %v3028 = vpop.permute.xlu0 %3027
        %3031 = vrot.lane.b32.xlu0 %v2791, 64
        %v3032 = vpop.permute.xlu0 %3031
        %3035 = vrot.lane.b32.xlu0 %v2793, 64
        %v3036 = vpop.permute.xlu0 %3035
        %3039 = vrot.lane.b32.xlu0 %v2795, 64
        %v3040 = vpop.permute.xlu0 %3039
        %3043 = vrot.lane.b32.xlu0 %v2797, 64
        %v3044 = vpop.permute.xlu0 %3043
        %3047 = vrot.lane.b32.xlu0 %v2927, 64
        %v3048 = vpop.permute.xlu0 %3047
        %3051 = vrot.lane.b32.xlu0 %v2929, 64
        %v3052 = vpop.permute.xlu0 %3051
        %3055 = vrot.lane.b32.xlu0 %v2931, 64
        %v3056 = vpop.permute.xlu0 %3055
        %3059 = vrot.lane.b32.xlu0 %v2933, 64
        %v3060 = vpop.permute.xlu0 %3059
        %vm3062 = vcmask 523264
        %v3063 = vsel %vm3062, %v1974, %v2936
        %v3064 = vsel %vm3062, %v1976, %v2940
        %v3065 = vsel %vm3062, %v1978, %v2944
        %v3066 = vsel %vm3062, %v1980, %v2948
        %v3067 = vsel %vm3062, %v2110, %v2952
        %v3068 = vsel %vm3062, %v2112, %v2956
        %v3069 = vsel %vm3062, %v2114, %v2960
        %v3070 = vsel %vm3062, %v2116, %v2964
        %v3071 = vsel %vm3062, %v2246, %v2968
        %v3072 = vsel %vm3062, %v2248, %v2972
        %v3073 = vsel %vm3062, %v2250, %v2976
        %v3074 = vsel %vm3062, %v2252, %v2980
        %v3075 = vsel %vm3062, %v2382, %v2984
        %v3076 = vsel %vm3062, %v2384, %v2988
        %v3077 = vsel %vm3062, %v2386, %v2992
        %v3078 = vsel %vm3062, %v2388, %v2996
        %v3079 = vsel %vm3062, %v2518, %v3000
        %v3080 = vsel %vm3062, %v2520, %v3004
        %v3081 = vsel %vm3062, %v2522, %v3008
        %v3082 = vsel %vm3062, %v2524, %v3012
        %v3083 = vsel %vm3062, %v2654, %v3016
        %v3084 = vsel %vm3062, %v2656, %v3020
        %v3085 = vsel %vm3062, %v2658, %v3024
        %v3086 = vsel %vm3062, %v2660, %v3028
        %v3087 = vsel %vm3062, %v2790, %v3032
        %v3088 = vsel %vm3062, %v2792, %v3036
        %v3089 = vsel %vm3062, %v2794, %v3040
        %v3090 = vsel %vm3062, %v2796, %v3044
        %v3091 = vsel %vm3062, %v2926, %v3048
        %v3092 = vsel %vm3062, %v2928, %v3052
        %v3093 = vsel %vm3062, %v2930, %v3056
        %v3094 = vsel %vm3062, %v2932, %v3060
        %vm3095 = vcmask 64512
        %v3097 = vsel %vm3095, %v653, 0
        %v3100 = vsel %vm3095, %v654, 0
        %3102 = vmatprep.subr.mxu0 %v3064
        %3103 = vmatpush1.msra.mxu0 %v3063
        %3104 = vmatprep.subr.mxu0 0.0
        %3105 = vmatpush1.msra.mxu0 0.0
        %3106 = vmatprep.subr.mxu0 0.0
        %3107 = vmatpush1.msra.mxu0 0.0
        %3108 = vmatprep.subr.mxu0 0.0
        %3109 = vmatpush1.msra.mxu0 0.0
        %3110 = vmatprep.subr.mxu0 0.0
        %3111 = vmatpush1.msra.mxu0 0.0
        %3112 = vmatprep.subr.mxu0 0.0
        %3113 = vmatpush1.msra.mxu0 0.0
        %3114 = vmatprep.subr.mxu0 0.0
        %3115 = vmatpush1.msra.mxu0 0.0
        %3116 = vmatprep.subr.mxu0 0.0
        %3117 = vmatpush1.msra.mxu0 0.0
        %3118 = vmatprep.subr.mxu0 0.0
        %3119 = vmatpush1.msra.mxu0 0.0
        %3120 = vmatprep.subr.mxu0 0.0
        %3121 = vmatpush1.msra.mxu0 0.0
        %3122 = vmatprep.subr.mxu0 0.0
        %3123 = vmatpush1.msra.mxu0 0.0
        %3124 = vmatprep.subr.mxu0 0.0
        %3125 = vmatpush1.msra.mxu0 0.0
        %3126 = vmatprep.subr.mxu0 0.0
        %3127 = vmatpush1.msra.mxu0 0.0
        %3128 = vmatprep.subr.mxu0 0.0
        %3129 = vmatpush1.msra.mxu0 0.0
        %3130 = vmatprep.subr.mxu0 0.0
        %3131 = vmatpush1.msra.mxu0 0.0
        %3132 = vmatprep.subr.mxu0 0.0
        %3133 = vmatpush1.msra.mxu0 0.0
        %3134 = vmatprep.subr.mxu0 0.0
        %3135 = vmatpush1.msra.mxu0 0.0
        %3136 = vmatprep.subr.mxu0 0.0
        %3137 = vmatpush1.msra.mxu0 0.0
        %3138 = vmatprep.subr.mxu0 0.0
        %3139 = vmatpush1.msra.mxu0 0.0
        %3140 = vmatprep.subr.mxu0 0.0
        %3141 = vmatpush1.msra.mxu0 0.0
        %3142 = vmatprep.subr.mxu0 0.0
        %3143 = vmatpush1.msra.mxu0 0.0
        %3144 = vmatprep.subr.mxu0 0.0
        %3145 = vmatpush1.msra.mxu0 0.0
        %3146 = vmatprep.subr.mxu0 0.0
        %3147 = vmatpush1.msra.mxu0 0.0
        %3148 = vmatprep.subr.mxu0 0.0
        %3149 = vmatpush1.msra.mxu0 0.0
        %3150 = vmatprep.subr.mxu0 0.0
        %3151 = vmatpush1.msra.mxu0 0.0
        %3152 = vmatprep.subr.mxu0 0.0
        %3153 = vmatpush1.msra.mxu0 0.0
        %3154 = vmatprep.subr.mxu0 0.0
        %3155 = vmatpush1.msra.mxu0 0.0
        %3156 = vmatprep.subr.mxu0 0.0
        %3157 = vmatpush1.msra.mxu0 0.0
        %3158 = vmatprep.subr.mxu0 0.0
        %3159 = vmatpush1.msra.mxu0 0.0
        %3160 = vmatprep.subr.mxu0 0.0
        %3161 = vmatpush1.msra.mxu0 0.0
        %3162 = vmatprep.subr.mxu0 0.0
        %3163 = vmatpush1.msra.mxu0 0.0
        %3164 = vmatprep.subr.mxu0 0.0
        %3165 = vmatpush1.msra.mxu0 0.0
        %3166 = vmatprep.mubr.f32.mxu0 0.0
        %3167 = vmatmul.mubr.f32.gmra.mrb[0].mxu0 %v3097
        %v3168 = vpop.f32.mrb[0].mxu0
        %v3169 = vadd.f32 0.0, %v3168
        %v3170 = vpop.f32.mrb[0].mxu0
        %v3171 = vadd.f32 0.0, %v3170
        %3172 = vmatprep.mubr.f32.mxu0 0.0
        %3173 = vmatmul.mubr.f32.gmra.mrb[0].mxu0 %v3100
        %v3174 = vpop.f32.mrb[0].mxu0
        %v3175 = vadd.f32 0.0, %v3174
        %v3176 = vpop.f32.mrb[0].mxu0
        %v3177 = vadd.f32 0.0, %v3176
        %3178 = vdwg.mxu0
        %3179 = vmatprep.subr.mxu0 %v3066
        %3180 = vmatpush1.msra.mxu0 %v3065
        %3181 = vmatprep.subr.mxu0 0.0
        %3182 = vmatpush1.msra.mxu0 0.0
        %3183 = vmatprep.subr.mxu0 0.0
        %3184 = vmatpush1.msra.mxu0 0.0
        %3185 = vmatprep.subr.mxu0 0.0
        %3186 = vmatpush1.msra.mxu0 0.0
        %3187 = vmatprep.subr.mxu0 0.0
        %3188 = vmatpush1.msra.mxu0 0.0
        %3189 = vmatprep.subr.mxu0 0.0
        %3190 = vmatpush1.msra.mxu0 0.0
        %3191 = vmatprep.subr.mxu0 0.0
        %3192 = vmatpush1.msra.mxu0 0.0
        %3193 = vmatprep.subr.mxu0 0.0
        %3194 = vmatpush1.msra.mxu0 0.0
        %3195 = vmatprep.subr.mxu0 0.0
        %3196 = vmatpush1.msra.mxu0 0.0
        %3197 = vmatprep.subr.mxu0 0.0
        %3198 = vmatpush1.msra.mxu0 0.0
        %3199 = vmatprep.subr.mxu0 0.0
        %3200 = vmatpush1.msra.mxu0 0.0
        %3201 = vmatprep.subr.mxu0 0.0
        %3202 = vmatpush1.msra.mxu0 0.0
        %3203 = vmatprep.subr.mxu0 0.0
        %3204 = vmatpush1.msra.mxu0 0.0
        %3205 = vmatprep.subr.mxu0 0.0
        %3206 = vmatpush1.msra.mxu0 0.0
        %3207 = vmatprep.subr.mxu0 0.0
        %3208 = vmatpush1.msra.mxu0 0.0
        %3209 = vmatprep.subr.mxu0 0.0
        %3210 = vmatpush1.msra.mxu0 0.0
        %3211 = vmatprep.subr.mxu0 0.0
        %3212 = vmatpush1.msra.mxu0 0.0
        %3213 = vmatprep.subr.mxu0 0.0
        %3214 = vmatpush1.msra.mxu0 0.0
        %3215 = vmatprep.subr.mxu0 0.0
        %3216 = vmatpush1.msra.mxu0 0.0
        %3217 = vmatprep.subr.mxu0 0.0
        %3218 = vmatpush1.msra.mxu0 0.0
        %3219 = vmatprep.subr.mxu0 0.0
        %3220 = vmatpush1.msra.mxu0 0.0
        %3221 = vmatprep.subr.mxu0 0.0
        %3222 = vmatpush1.msra.mxu0 0.0
        %3223 = vmatprep.subr.mxu0 0.0
        %3224 = vmatpush1.msra.mxu0 0.0
        %3225 = vmatprep.subr.mxu0 0.0
        %3226 = vmatpush1.msra.mxu0 0.0
        %3227 = vmatprep.subr.mxu0 0.0
        %3228 = vmatpush1.msra.mxu0 0.0
        %3229 = vmatprep.subr.mxu0 0.0
        %3230 = vmatpush1.msra.mxu0 0.0
        %3231 = vmatprep.subr.mxu0 0.0
        %3232 = vmatpush1.msra.mxu0 0.0
        %3233 = vmatprep.subr.mxu0 0.0
        %3234 = vmatpush1.msra.mxu0 0.0
        %3235 = vmatprep.subr.mxu0 0.0
        %3236 = vmatpush1.msra.mxu0 0.0
        %3237 = vmatprep.subr.mxu0 0.0
        %3238 = vmatpush1.msra.mxu0 0.0
        %3239 = vmatprep.subr.mxu0 0.0
        %3240 = vmatpush1.msra.mxu0 0.0
        %3241 = vmatprep.subr.mxu0 0.0
        %3242 = vmatpush1.msra.mxu0 0.0
        %3243 = vmatprep.mubr.f32.mxu0 0.0
        %3244 = vmatmul.mubr.f32.gmra.mrb[0].mxu0 %v3097
        %v3245 = vpop.f32.mrb[0].mxu0
        %v3246 = vadd.f32 0.0, %v3245
        %v3247 = vpop.f32.mrb[0].mxu0
        %v3248 = vadd.f32 0.0, %v3247
        %3249 = vmatprep.mubr.f32.mxu0 0.0
        %3250 = vmatmul.mubr.f32.gmra.mrb[0].mxu0 %v3100
        %v3251 = vpop.f32.mrb[0].mxu0
        %v3252 = vadd.f32 0.0, %v3251
        %v3253 = vpop.f32.mrb[0].mxu0
        %v3254 = vadd.f32 0.0, %v3253
        %3255 = vdwg.mxu0
        %3256 = vmatprep.subr.mxu0 %v3068
        %3257 = vmatpush1.msra.mxu0 %v3067
        %3258 = vmatprep.subr.mxu0 0.0
        %3259 = vmatpush1.msra.mxu0 0.0
        %3260 = vmatprep.subr.mxu0 0.0
        %3261 = vmatpush1.msra.mxu0 0.0
        %3262 = vmatprep.subr.mxu0 0.0
        %3263 = vmatpush1.msra.mxu0 0.0
        %3264 = vmatprep.subr.mxu0 0.0
        %3265 = vmatpush1.msra.mxu0 0.0
        %3266 = vmatprep.subr.mxu0 0.0
        %3267 = vmatpush1.msra.mxu0 0.0
        %3268 = vmatprep.subr.mxu0 0.0
        %3269 = vmatpush1.msra.mxu0 0.0
        %3270 = vmatprep.subr.mxu0 0.0
        %3271 = vmatpush1.msra.mxu0 0.0
        %3272 = vmatprep.subr.mxu0 0.0
        %3273 = vmatpush1.msra.mxu0 0.0
        %3274 = vmatprep.subr.mxu0 0.0
        %3275 = vmatpush1.msra.mxu0 0.0
        %3276 = vmatprep.subr.mxu0 0.0
        %3277 = vmatpush1.msra.mxu0 0.0
        %3278 = vmatprep.subr.mxu0 0.0
        %3279 = vmatpush1.msra.mxu0 0.0
        %3280 = vmatprep.subr.mxu0 0.0
        %3281 = vmatpush1.msra.mxu0 0.0
        %3282 = vmatprep.subr.mxu0 0.0
        %3283 = vmatpush1.msra.mxu0 0.0
        %3284 = vmatprep.subr.mxu0 0.0
        %3285 = vmatpush1.msra.mxu0 0.0
        %3286 = vmatprep.subr.mxu0 0.0
        %3287 = vmatpush1.msra.mxu0 0.0
        %3288 = vmatprep.subr.mxu0 0.0
        %3289 = vmatpush1.msra.mxu0 0.0
        %3290 = vmatprep.subr.mxu0 0.0
        %3291 = vmatpush1.msra.mxu0 0.0
        %3292 = vmatprep.subr.mxu0 0.0
        %3293 = vmatpush1.msra.mxu0 0.0
        %3294 = vmatprep.subr.mxu0 0.0
        %3295 = vmatpush1.msra.mxu0 0.0
        %3296 = vmatprep.subr.mxu0 0.0
        %3297 = vmatpush1.msra.mxu0 0.0
        %3298 = vmatprep.subr.mxu0 0.0
        %3299 = vmatpush1.msra.mxu0 0.0
        %3300 = vmatprep.subr.mxu0 0.0
        %3301 = vmatpush1.msra.mxu0 0.0
        %3302 = vmatprep.subr.mxu0 0.0
        %3303 = vmatpush1.msra.mxu0 0.0
        %3304 = vmatprep.subr.mxu0 0.0
        %3305 = vmatpush1.msra.mxu0 0.0
        %3306 = vmatprep.subr.mxu0 0.0
        %3307 = vmatpush1.msra.mxu0 0.0
        %3308 = vmatprep.subr.mxu0 0.0
        %3309 = vmatpush1.msra.mxu0 0.0
        %3310 = vmatprep.subr.mxu0 0.0
        %3311 = vmatpush1.msra.mxu0 0.0
        %3312 = vmatprep.subr.mxu0 0.0
        %3313 = vmatpush1.msra.mxu0 0.0
        %3314 = vmatprep.subr.mxu0 0.0
        %3315 = vmatpush1.msra.mxu0 0.0
        %3316 = vmatprep.subr.mxu0 0.0
        %3317 = vmatpush1.msra.mxu0 0.0
        %3318 = vmatprep.subr.mxu0 0.0
        %3319 = vmatpush1.msra.mxu0 0.0
        %3320 = vmatprep.mubr.f32.mxu0 0.0
        %3321 = vmatmul.mubr.f32.gmra.mrb[0].mxu0 %v3097
        %v3322 = vpop.f32.mrb[0].mxu0
        %v3323 = vadd.f32 0.0, %v3322
        %v3324 = vpop.f32.mrb[0].mxu0
        %v3325 = vadd.f32 0.0, %v3324
        %3326 = vmatprep.mubr.f32.mxu0 0.0
        %3327 = vmatmul.mubr.f32.gmra.mrb[0].mxu0 %v3100
        %v3328 = vpop.f32.mrb[0].mxu0
        %v3329 = vadd.f32 0.0, %v3328
        %v3330 = vpop.f32.mrb[0].mxu0
        %v3331 = vadd.f32 0.0, %v3330
        %3332 = vdwg.mxu0
        %3333 = vmatprep.subr.mxu0 %v3070
        %3334 = vmatpush1.msra.mxu0 %v3069
        %3335 = vmatprep.subr.mxu0 0.0
        %3336 = vmatpush1.msra.mxu0 0.0
        %3337 = vmatprep.subr.mxu0 0.0
        %3338 = vmatpush1.msra.mxu0 0.0
        %3339 = vmatprep.subr.mxu0 0.0
        %3340 = vmatpush1.msra.mxu0 0.0
        %3341 = vmatprep.subr.mxu0 0.0
        %3342 = vmatpush1.msra.mxu0 0.0
        %3343 = vmatprep.subr.mxu0 0.0
        %3344 = vmatpush1.msra.mxu0 0.0
        %3345 = vmatprep.subr.mxu0 0.0
        %3346 = vmatpush1.msra.mxu0 0.0
        %3347 = vmatprep.subr.mxu0 0.0
        %3348 = vmatpush1.msra.mxu0 0.0
        %3349 = vmatprep.subr.mxu0 0.0
        %3350 = vmatpush1.msra.mxu0 0.0
        %3351 = vmatprep.subr.mxu0 0.0
        %3352 = vmatpush1.msra.mxu0 0.0
        %3353 = vmatprep.subr.mxu0 0.0
        %3354 = vmatpush1.msra.mxu0 0.0
        %3355 = vmatprep.subr.mxu0 0.0
        %3356 = vmatpush1.msra.mxu0 0.0
        %3357 = vmatprep.subr.mxu0 0.0
        %3358 = vmatpush1.msra.mxu0 0.0
        %3359 = vmatprep.subr.mxu0 0.0
        %3360 = vmatpush1.msra.mxu0 0.0
        %3361 = vmatprep.subr.mxu0 0.0
        %3362 = vmatpush1.msra.mxu0 0.0
        %3363 = vmatprep.subr.mxu0 0.0
        %3364 = vmatpush1.msra.mxu0 0.0
        %3365 = vmatprep.subr.mxu0 0.0
        %3366 = vmatpush1.msra.mxu0 0.0
        %3367 = vmatprep.subr.mxu0 0.0
        %3368 = vmatpush1.msra.mxu0 0.0
        %3369 = vmatprep.subr.mxu0 0.0
        %3370 = vmatpush1.msra.mxu0 0.0
        %3371 = vmatprep.subr.mxu0 0.0
        %3372 = vmatpush1.msra.mxu0 0.0
        %3373 = vmatprep.subr.mxu0 0.0
        %3374 = vmatpush1.msra.mxu0 0.0
        %3375 = vmatprep.subr.mxu0 0.0
        %3376 = vmatpush1.msra.mxu0 0.0
        %3377 = vmatprep.subr.mxu0 0.0
        %3378 = vmatpush1.msra.mxu0 0.0
        %3379 = vmatprep.subr.mxu0 0.0
        %3380 = vmatpush1.msra.mxu0 0.0
        %3381 = vmatprep.subr.mxu0 0.0
        %3382 = vmatpush1.msra.mxu0 0.0
        %3383 = vmatprep.subr.mxu0 0.0
        %3384 = vmatpush1.msra.mxu0 0.0
        %3385 = vmatprep.subr.mxu0 0.0
        %3386 = vmatpush1.msra.mxu0 0.0
        %3387 = vmatprep.subr.mxu0 0.0
        %3388 = vmatpush1.msra.mxu0 0.0
        %3389 = vmatprep.subr.mxu0 0.0
        %3390 = vmatpush1.msra.mxu0 0.0
        %3391 = vmatprep.subr.mxu0 0.0
        %3392 = vmatpush1.msra.mxu0 0.0
        %3393 = vmatprep.subr.mxu0 0.0
        %3394 = vmatpush1.msra.mxu0 0.0
        %3395 = vmatprep.subr.mxu0 0.0
        %3396 = vmatpush1.msra.mxu0 0.0
        %3397 = vmatprep.mubr.f32.mxu0 0.0
        %3398 = vmatmul.mubr.f32.gmra.mrb[0].mxu0 %v3097
        %v3399 = vpop.f32.mrb[0].mxu0
        %v3400 = vadd.f32 0.0, %v3399
        %v3401 = vpop.f32.mrb[0].mxu0
        %v3402 = vadd.f32 0.0, %v3401
        %3403 = vmatprep.mubr.f32.mxu0 0.0
        %3404 = vmatmul.mubr.f32.gmra.mrb[0].mxu0 %v3100
        %v3405 = vpop.f32.mrb[0].mxu0
        %v3406 = vadd.f32 0.0, %v3405
        %v3407 = vpop.f32.mrb[0].mxu0
        %v3408 = vadd.f32 0.0, %v3407
        %3409 = vdwg.mxu0
        %3410 = vmatprep.subr.mxu0 %v3072
        %3411 = vmatpush1.msra.mxu0 %v3071
        %3412 = vmatprep.subr.mxu0 0.0
        %3413 = vmatpush1.msra.mxu0 0.0
        %3414 = vmatprep.subr.mxu0 0.0
        %3415 = vmatpush1.msra.mxu0 0.0
        %3416 = vmatprep.subr.mxu0 0.0
        %3417 = vmatpush1.msra.mxu0 0.0
        %3418 = vmatprep.subr.mxu0 0.0
        %3419 = vmatpush1.msra.mxu0 0.0
        %3420 = vmatprep.subr.mxu0 0.0
        %3421 = vmatpush1.msra.mxu0 0.0
        %3422 = vmatprep.subr.mxu0 0.0
        %3423 = vmatpush1.msra.mxu0 0.0
        %3424 = vmatprep.subr.mxu0 0.0
        %3425 = vmatpush1.msra.mxu0 0.0
        %3426 = vmatprep.subr.mxu0 0.0
        %3427 = vmatpush1.msra.mxu0 0.0
        %3428 = vmatprep.subr.mxu0 0.0
        %3429 = vmatpush1.msra.mxu0 0.0
        %3430 = vmatprep.subr.mxu0 0.0
        %3431 = vmatpush1.msra.mxu0 0.0
        %3432 = vmatprep.subr.mxu0 0.0
        %3433 = vmatpush1.msra.mxu0 0.0
        %3434 = vmatprep.subr.mxu0 0.0
        %3435 = vmatpush1.msra.mxu0 0.0
        %3436 = vmatprep.subr.mxu0 0.0
        %3437 = vmatpush1.msra.mxu0 0.0
        %3438 = vmatprep.subr.mxu0 0.0
        %3439 = vmatpush1.msra.mxu0 0.0
        %3440 = vmatprep.subr.mxu0 0.0
        %3441 = vmatpush1.msra.mxu0 0.0
        %3442 = vmatprep.subr.mxu0 0.0
        %3443 = vmatpush1.msra.mxu0 0.0
        %3444 = vmatprep.subr.mxu0 0.0
        %3445 = vmatpush1.msra.mxu0 0.0
        %3446 = vmatprep.subr.mxu0 0.0
        %3447 = vmatpush1.msra.mxu0 0.0
        %3448 = vmatprep.subr.mxu0 0.0
        %3449 = vmatpush1.msra.mxu0 0.0
        %3450 = vmatprep.subr.mxu0 0.0
        %3451 = vmatpush1.msra.mxu0 0.0
        %3452 = vmatprep.subr.mxu0 0.0
        %3453 = vmatpush1.msra.mxu0 0.0
        %3454 = vmatprep.subr.mxu0 0.0
        %3455 = vmatpush1.msra.mxu0 0.0
        %3456 = vmatprep.subr.mxu0 0.0
        %3457 = vmatpush1.msra.mxu0 0.0
        %3458 = vmatprep.subr.mxu0 0.0
        %3459 = vmatpush1.msra.mxu0 0.0
        %3460 = vmatprep.subr.mxu0 0.0
        %3461 = vmatpush1.msra.mxu0 0.0
        %3462 = vmatprep.subr.mxu0 0.0
        %3463 = vmatpush1.msra.mxu0 0.0
        %3464 = vmatprep.subr.mxu0 0.0
        %3465 = vmatpush1.msra.mxu0 0.0
        %3466 = vmatprep.subr.mxu0 0.0
        %3467 = vmatpush1.msra.mxu0 0.0
        %3468 = vmatprep.subr.mxu0 0.0
        %3469 = vmatpush1.msra.mxu0 0.0
        %3470 = vmatprep.subr.mxu0 0.0
        %3471 = vmatpush1.msra.mxu0 0.0
        %3472 = vmatprep.subr.mxu0 0.0
        %3473 = vmatpush1.msra.mxu0 0.0
        %3474 = vmatprep.mubr.f32.mxu0 0.0
        %3475 = vmatmul.mubr.f32.gmra.mrb[0].mxu0 %v3097
        %v3476 = vpop.f32.mrb[0].mxu0
        %v3477 = vadd.f32 0.0, %v3476
        %v3478 = vpop.f32.mrb[0].mxu0
        %v3479 = vadd.f32 0.0, %v3478
        %3480 = vmatprep.mubr.f32.mxu0 0.0
        %3481 = vmatmul.mubr.f32.gmra.mrb[0].mxu0 %v3100
        %v3482 = vpop.f32.mrb[0].mxu0
        %v3483 = vadd.f32 0.0, %v3482
        %v3484 = vpop.f32.mrb[0].mxu0
        %v3485 = vadd.f32 0.0, %v3484
        %3486 = vdwg.mxu0
        %3487 = vmatprep.subr.mxu0 %v3074
        %3488 = vmatpush1.msra.mxu0 %v3073
        %3489 = vmatprep.subr.mxu0 0.0
        %3490 = vmatpush1.msra.mxu0 0.0
        %3491 = vmatprep.subr.mxu0 0.0
        %3492 = vmatpush1.msra.mxu0 0.0
        %3493 = vmatprep.subr.mxu0 0.0
        %3494 = vmatpush1.msra.mxu0 0.0
        %3495 = vmatprep.subr.mxu0 0.0
        %3496 = vmatpush1.msra.mxu0 0.0
        %3497 = vmatprep.subr.mxu0 0.0
        %3498 = vmatpush1.msra.mxu0 0.0
        %3499 = vmatprep.subr.mxu0 0.0
        %3500 = vmatpush1.msra.mxu0 0.0
        %3501 = vmatprep.subr.mxu0 0.0
        %3502 = vmatpush1.msra.mxu0 0.0
        %3503 = vmatprep.subr.mxu0 0.0
        %3504 = vmatpush1.msra.mxu0 0.0
        %3505 = vmatprep.subr.mxu0 0.0
        %3506 = vmatpush1.msra.mxu0 0.0
        %3507 = vmatprep.subr.mxu0 0.0
        %3508 = vmatpush1.msra.mxu0 0.0
        %3509 = vmatprep.subr.mxu0 0.0
        %3510 = vmatpush1.msra.mxu0 0.0
        %3511 = vmatprep.subr.mxu0 0.0
        %3512 = vmatpush1.msra.mxu0 0.0
        %3513 = vmatprep.subr.mxu0 0.0
        %3514 = vmatpush1.msra.mxu0 0.0
        %3515 = vmatprep.subr.mxu0 0.0
        %3516 = vmatpush1.msra.mxu0 0.0
        %3517 = vmatprep.subr.mxu0 0.0
        %3518 = vmatpush1.msra.mxu0 0.0
        %3519 = vmatprep.subr.mxu0 0.0
        %3520 = vmatpush1.msra.mxu0 0.0
        %3521 = vmatprep.subr.mxu0 0.0
        %3522 = vmatpush1.msra.mxu0 0.0
        %3523 = vmatprep.subr.mxu0 0.0
        %3524 = vmatpush1.msra.mxu0 0.0
        %3525 = vmatprep.subr.mxu0 0.0
        %3526 = vmatpush1.msra.mxu0 0.0
        %3527 = vmatprep.subr.mxu0 0.0
        %3528 = vmatpush1.msra.mxu0 0.0
        %3529 = vmatprep.subr.mxu0 0.0
        %3530 = vmatpush1.msra.mxu0 0.0
        %3531 = vmatprep.subr.mxu0 0.0
        %3532 = vmatpush1.msra.mxu0 0.0
        %3533 = vmatprep.subr.mxu0 0.0
        %3534 = vmatpush1.msra.mxu0 0.0
        %3535 = vmatprep.subr.mxu0 0.0
        %3536 = vmatpush1.msra.mxu0 0.0
        %3537 = vmatprep.subr.mxu0 0.0
        %3538 = vmatpush1.msra.mxu0 0.0
        %3539 = vmatprep.subr.mxu0 0.0
        %3540 = vmatpush1.msra.mxu0 0.0
        %3541 = vmatprep.subr.mxu0 0.0
        %3542 = vmatpush1.msra.mxu0 0.0
        %3543 = vmatprep.subr.mxu0 0.0
        %3544 = vmatpush1.msra.mxu0 0.0
        %3545 = vmatprep.subr.mxu0 0.0
        %3546 = vmatpush1.msra.mxu0 0.0
        %3547 = vmatprep.subr.mxu0 0.0
        %3548 = vmatpush1.msra.mxu0 0.0
        %3549 = vmatprep.subr.mxu0 0.0
        %3550 = vmatpush1.msra.mxu0 0.0
        %3551 = vmatprep.mubr.f32.mxu0 0.0
        %3552 = vmatmul.mubr.f32.gmra.mrb[0].mxu0 %v3097
        %v3553 = vpop.f32.mrb[0].mxu0
        %v3554 = vadd.f32 0.0, %v3553
        %v3555 = vpop.f32.mrb[0].mxu0
        %v3556 = vadd.f32 0.0, %v3555
        %3557 = vmatprep.mubr.f32.mxu0 0.0
        %3558 = vmatmul.mubr.f32.gmra.mrb[0].mxu0 %v3100
        %v3559 = vpop.f32.mrb[0].mxu0
        %v3560 = vadd.f32 0.0, %v3559
        %v3561 = vpop.f32.mrb[0].mxu0
        %v3562 = vadd.f32 0.0, %v3561
        %3563 = vdwg.mxu0
        %3564 = vmatprep.subr.mxu0 %v3076
        %3565 = vmatpush1.msra.mxu0 %v3075
        %3566 = vmatprep.subr.mxu0 0.0
        %3567 = vmatpush1.msra.mxu0 0.0
        %3568 = vmatprep.subr.mxu0 0.0
        %3569 = vmatpush1.msra.mxu0 0.0
        %3570 = vmatprep.subr.mxu0 0.0
        %3571 = vmatpush1.msra.mxu0 0.0
        %3572 = vmatprep.subr.mxu0 0.0
        %3573 = vmatpush1.msra.mxu0 0.0
        %3574 = vmatprep.subr.mxu0 0.0
        %3575 = vmatpush1.msra.mxu0 0.0
        %3576 = vmatprep.subr.mxu0 0.0
        %3577 = vmatpush1.msra.mxu0 0.0
        %3578 = vmatprep.subr.mxu0 0.0
        %3579 = vmatpush1.msra.mxu0 0.0
        %3580 = vmatprep.subr.mxu0 0.0
        %3581 = vmatpush1.msra.mxu0 0.0
        %3582 = vmatprep.subr.mxu0 0.0
        %3583 = vmatpush1.msra.mxu0 0.0
        %3584 = vmatprep.subr.mxu0 0.0
        %3585 = vmatpush1.msra.mxu0 0.0
        %3586 = vmatprep.subr.mxu0 0.0
        %3587 = vmatpush1.msra.mxu0 0.0
        %3588 = vmatprep.subr.mxu0 0.0
        %3589 = vmatpush1.msra.mxu0 0.0
        %3590 = vmatprep.subr.mxu0 0.0
        %3591 = vmatpush1.msra.mxu0 0.0
        %3592 = vmatprep.subr.mxu0 0.0
        %3593 = vmatpush1.msra.mxu0 0.0
        %3594 = vmatprep.subr.mxu0 0.0
        %3595 = vmatpush1.msra.mxu0 0.0
        %3596 = vmatprep.subr.mxu0 0.0
        %3597 = vmatpush1.msra.mxu0 0.0
        %3598 = vmatprep.subr.mxu0 0.0
        %3599 = vmatpush1.msra.mxu0 0.0
        %3600 = vmatprep.subr.mxu0 0.0
        %3601 = vmatpush1.msra.mxu0 0.0
        %3602 = vmatprep.subr.mxu0 0.0
        %3603 = vmatpush1.msra.mxu0 0.0
        %3604 = vmatprep.subr.mxu0 0.0
        %3605 = vmatpush1.msra.mxu0 0.0
        %3606 = vmatprep.subr.mxu0 0.0
        %3607 = vmatpush1.msra.mxu0 0.0
        %3608 = vmatprep.subr.mxu0 0.0
        %3609 = vmatpush1.msra.mxu0 0.0
        %3610 = vmatprep.subr.mxu0 0.0
        %3611 = vmatpush1.msra.mxu0 0.0
        %3612 = vmatprep.subr.mxu0 0.0
        %3613 = vmatpush1.msra.mxu0 0.0
        %3614 = vmatprep.subr.mxu0 0.0
        %3615 = vmatpush1.msra.mxu0 0.0
        %3616 = vmatprep.subr.mxu0 0.0
        %3617 = vmatpush1.msra.mxu0 0.0
        %3618 = vmatprep.subr.mxu0 0.0
        %3619 = vmatpush1.msra.mxu0 0.0
        %3620 = vmatprep.subr.mxu0 0.0
        %3621 = vmatpush1.msra.mxu0 0.0
        %3622 = vmatprep.subr.mxu0 0.0
        %3623 = vmatpush1.msra.mxu0 0.0
        %3624 = vmatprep.subr.mxu0 0.0
        %3625 = vmatpush1.msra.mxu0 0.0
        %3626 = vmatprep.subr.mxu0 0.0
        %3627 = vmatpush1.msra.mxu0 0.0
        %3628 = vmatprep.mubr.f32.mxu0 0.0
        %3629 = vmatmul.mubr.f32.gmra.mrb[0].mxu0 %v3097
        %v3630 = vpop.f32.mrb[0].mxu0
        %v3631 = vadd.f32 0.0, %v3630
        %v3632 = vpop.f32.mrb[0].mxu0
        %v3633 = vadd.f32 0.0, %v3632
        %3634 = vmatprep.mubr.f32.mxu0 0.0
        %3635 = vmatmul.mubr.f32.gmra.mrb[0].mxu0 %v3100
        %v3636 = vpop.f32.mrb[0].mxu0
        %v3637 = vadd.f32 0.0, %v3636
        %v3638 = vpop.f32.mrb[0].mxu0
        %v3639 = vadd.f32 0.0, %v3638
        %3640 = vdwg.mxu0
        %3641 = vmatprep.subr.mxu0 %v3078
        %3642 = vmatpush1.msra.mxu0 %v3077
        %3643 = vmatprep.subr.mxu0 0.0
        %3644 = vmatpush1.msra.mxu0 0.0
        %3645 = vmatprep.subr.mxu0 0.0
        %3646 = vmatpush1.msra.mxu0 0.0
        %3647 = vmatprep.subr.mxu0 0.0
        %3648 = vmatpush1.msra.mxu0 0.0
        %3649 = vmatprep.subr.mxu0 0.0
        %3650 = vmatpush1.msra.mxu0 0.0
        %3651 = vmatprep.subr.mxu0 0.0
        %3652 = vmatpush1.msra.mxu0 0.0
        %3653 = vmatprep.subr.mxu0 0.0
        %3654 = vmatpush1.msra.mxu0 0.0
        %3655 = vmatprep.subr.mxu0 0.0
        %3656 = vmatpush1.msra.mxu0 0.0
        %3657 = vmatprep.subr.mxu0 0.0
        %3658 = vmatpush1.msra.mxu0 0.0
        %3659 = vmatprep.subr.mxu0 0.0
        %3660 = vmatpush1.msra.mxu0 0.0
        %3661 = vmatprep.subr.mxu0 0.0
        %3662 = vmatpush1.msra.mxu0 0.0
        %3663 = vmatprep.subr.mxu0 0.0
        %3664 = vmatpush1.msra.mxu0 0.0
        %3665 = vmatprep.subr.mxu0 0.0
        %3666 = vmatpush1.msra.mxu0 0.0
        %3667 = vmatprep.subr.mxu0 0.0
        %3668 = vmatpush1.msra.mxu0 0.0
        %3669 = vmatprep.subr.mxu0 0.0
        %3670 = vmatpush1.msra.mxu0 0.0
        %3671 = vmatprep.subr.mxu0 0.0
        %3672 = vmatpush1.msra.mxu0 0.0
        %3673 = vmatprep.subr.mxu0 0.0
        %3674 = vmatpush1.msra.mxu0 0.0
        %3675 = vmatprep.subr.mxu0 0.0
        %3676 = vmatpush1.msra.mxu0 0.0
        %3677 = vmatprep.subr.mxu0 0.0
        %3678 = vmatpush1.msra.mxu0 0.0
        %3679 = vmatprep.subr.mxu0 0.0
        %3680 = vmatpush1.msra.mxu0 0.0
        %3681 = vmatprep.subr.mxu0 0.0
        %3682 = vmatpush1.msra.mxu0 0.0
        %3683 = vmatprep.subr.mxu0 0.0
        %3684 = vmatpush1.msra.mxu0 0.0
        %3685 = vmatprep.subr.mxu0 0.0
        %3686 = vmatpush1.msra.mxu0 0.0
        %3687 = vmatprep.subr.mxu0 0.0
        %3688 = vmatpush1.msra.mxu0 0.0
        %3689 = vmatprep.subr.mxu0 0.0
        %3690 = vmatpush1.msra.mxu0 0.0
        %3691 = vmatprep.subr.mxu0 0.0
        %3692 = vmatpush1.msra.mxu0 0.0
        %3693 = vmatprep.subr.mxu0 0.0
        %3694 = vmatpush1.msra.mxu0 0.0
        %3695 = vmatprep.subr.mxu0 0.0
        %3696 = vmatpush1.msra.mxu0 0.0
        %3697 = vmatprep.subr.mxu0 0.0
        %3698 = vmatpush1.msra.mxu0 0.0
        %3699 = vmatprep.subr.mxu0 0.0
        %3700 = vmatpush1.msra.mxu0 0.0
        %3701 = vmatprep.subr.mxu0 0.0
        %3702 = vmatpush1.msra.mxu0 0.0
        %3703 = vmatprep.subr.mxu0 0.0
        %3704 = vmatpush1.msra.mxu0 0.0
        %3705 = vmatprep.mubr.f32.mxu0 0.0
        %3706 = vmatmul.mubr.f32.gmra.mrb[0].mxu0 %v3097
        %v3707 = vpop.f32.mrb[0].mxu0
        %v3708 = vadd.f32 0.0, %v3707
        %v3709 = vpop.f32.mrb[0].mxu0
        %v3710 = vadd.f32 0.0, %v3709
        %3711 = vmatprep.mubr.f32.mxu0 0.0
        %3712 = vmatmul.mubr.f32.gmra.mrb[0].mxu0 %v3100
        %v3713 = vpop.f32.mrb[0].mxu0
        %v3714 = vadd.f32 0.0, %v3713
        %v3715 = vpop.f32.mrb[0].mxu0
        %v3716 = vadd.f32 0.0, %v3715
        %3717 = vdwg.mxu0
        %3718 = vmatprep.subr.mxu0 %v3080
        %3719 = vmatpush1.msra.mxu0 %v3079
        %3720 = vmatprep.subr.mxu0 0.0
        %3721 = vmatpush1.msra.mxu0 0.0
        %3722 = vmatprep.subr.mxu0 0.0
        %3723 = vmatpush1.msra.mxu0 0.0
        %3724 = vmatprep.subr.mxu0 0.0
        %3725 = vmatpush1.msra.mxu0 0.0
        %3726 = vmatprep.subr.mxu0 0.0
        %3727 = vmatpush1.msra.mxu0 0.0
        %3728 = vmatprep.subr.mxu0 0.0
        %3729 = vmatpush1.msra.mxu0 0.0
        %3730 = vmatprep.subr.mxu0 0.0
        %3731 = vmatpush1.msra.mxu0 0.0
        %3732 = vmatprep.subr.mxu0 0.0
        %3733 = vmatpush1.msra.mxu0 0.0
        %3734 = vmatprep.subr.mxu0 0.0
        %3735 = vmatpush1.msra.mxu0 0.0
        %3736 = vmatprep.subr.mxu0 0.0
        %3737 = vmatpush1.msra.mxu0 0.0
        %3738 = vmatprep.subr.mxu0 0.0
        %3739 = vmatpush1.msra.mxu0 0.0
        %3740 = vmatprep.subr.mxu0 0.0
        %3741 = vmatpush1.msra.mxu0 0.0
        %3742 = vmatprep.subr.mxu0 0.0
        %3743 = vmatpush1.msra.mxu0 0.0
        %3744 = vmatprep.subr.mxu0 0.0
        %3745 = vmatpush1.msra.mxu0 0.0
        %3746 = vmatprep.subr.mxu0 0.0
        %3747 = vmatpush1.msra.mxu0 0.0
        %3748 = vmatprep.subr.mxu0 0.0
        %3749 = vmatpush1.msra.mxu0 0.0
        %3750 = vmatprep.subr.mxu0 0.0
        %3751 = vmatpush1.msra.mxu0 0.0
        %3752 = vmatprep.subr.mxu0 0.0
        %3753 = vmatpush1.msra.mxu0 0.0
        %3754 = vmatprep.subr.mxu0 0.0
        %3755 = vmatpush1.msra.mxu0 0.0
        %3756 = vmatprep.subr.mxu0 0.0
        %3757 = vmatpush1.msra.mxu0 0.0
        %3758 = vmatprep.subr.mxu0 0.0
        %3759 = vmatpush1.msra.mxu0 0.0
        %3760 = vmatprep.subr.mxu0 0.0
        %3761 = vmatpush1.msra.mxu0 0.0
        %3762 = vmatprep.subr.mxu0 0.0
        %3763 = vmatpush1.msra.mxu0 0.0
        %3764 = vmatprep.subr.mxu0 0.0
        %3765 = vmatpush1.msra.mxu0 0.0
        %3766 = vmatprep.subr.mxu0 0.0
        %3767 = vmatpush1.msra.mxu0 0.0
        %3768 = vmatprep.subr.mxu0 0.0
        %3769 = vmatpush1.msra.mxu0 0.0
        %3770 = vmatprep.subr.mxu0 0.0
        %3771 = vmatpush1.msra.mxu0 0.0
        %3772 = vmatprep.subr.mxu0 0.0
        %3773 = vmatpush1.msra.mxu0 0.0
        %3774 = vmatprep.subr.mxu0 0.0
        %3775 = vmatpush1.msra.mxu0 0.0
        %3776 = vmatprep.subr.mxu0 0.0
        %3777 = vmatpush1.msra.mxu0 0.0
        %3778 = vmatprep.subr.mxu0 0.0
        %3779 = vmatpush1.msra.mxu0 0.0
        %3780 = vmatprep.subr.mxu0 0.0
        %3781 = vmatpush1.msra.mxu0 0.0
        %3782 = vmatprep.mubr.f32.mxu0 0.0
        %3783 = vmatmul.mubr.f32.gmra.mrb[0].mxu0 %v3097
        %v3784 = vpop.f32.mrb[0].mxu0
        %v3785 = vadd.f32 0.0, %v3784
        %v3786 = vpop.f32.mrb[0].mxu0
        %v3787 = vadd.f32 0.0, %v3786
        %3788 = vmatprep.mubr.f32.mxu0 0.0
        %3789 = vmatmul.mubr.f32.gmra.mrb[0].mxu0 %v3100
        %v3790 = vpop.f32.mrb[0].mxu0
        %v3791 = vadd.f32 0.0, %v3790
        %v3792 = vpop.f32.mrb[0].mxu0
        %v3793 = vadd.f32 0.0, %v3792
        %3794 = vdwg.mxu0
        %3795 = vmatprep.subr.mxu0 %v3082
        %3796 = vmatpush1.msra.mxu0 %v3081
        %3797 = vmatprep.subr.mxu0 0.0
        %3798 = vmatpush1.msra.mxu0 0.0
        %3799 = vmatprep.subr.mxu0 0.0
        %3800 = vmatpush1.msra.mxu0 0.0
        %3801 = vmatprep.subr.mxu0 0.0
        %3802 = vmatpush1.msra.mxu0 0.0
        %3803 = vmatprep.subr.mxu0 0.0
        %3804 = vmatpush1.msra.mxu0 0.0
        %3805 = vmatprep.subr.mxu0 0.0
        %3806 = vmatpush1.msra.mxu0 0.0
        %3807 = vmatprep.subr.mxu0 0.0
        %3808 = vmatpush1.msra.mxu0 0.0
        %3809 = vmatprep.subr.mxu0 0.0
        %3810 = vmatpush1.msra.mxu0 0.0
        %3811 = vmatprep.subr.mxu0 0.0
        %3812 = vmatpush1.msra.mxu0 0.0
        %3813 = vmatprep.subr.mxu0 0.0
        %3814 = vmatpush1.msra.mxu0 0.0
        %3815 = vmatprep.subr.mxu0 0.0
        %3816 = vmatpush1.msra.mxu0 0.0
        %3817 = vmatprep.subr.mxu0 0.0
        %3818 = vmatpush1.msra.mxu0 0.0
        %3819 = vmatprep.subr.mxu0 0.0
        %3820 = vmatpush1.msra.mxu0 0.0
        %3821 = vmatprep.subr.mxu0 0.0
        %3822 = vmatpush1.msra.mxu0 0.0
        %3823 = vmatprep.subr.mxu0 0.0
        %3824 = vmatpush1.msra.mxu0 0.0
        %3825 = vmatprep.subr.mxu0 0.0
        %3826 = vmatpush1.msra.mxu0 0.0
        %3827 = vmatprep.subr.mxu0 0.0
        %3828 = vmatpush1.msra.mxu0 0.0
        %3829 = vmatprep.subr.mxu0 0.0
        %3830 = vmatpush1.msra.mxu0 0.0
        %3831 = vmatprep.subr.mxu0 0.0
        %3832 = vmatpush1.msra.mxu0 0.0
        %3833 = vmatprep.subr.mxu0 0.0
        %3834 = vmatpush1.msra.mxu0 0.0
        %3835 = vmatprep.subr.mxu0 0.0
        %3836 = vmatpush1.msra.mxu0 0.0
        %3837 = vmatprep.subr.mxu0 0.0
        %3838 = vmatpush1.msra.mxu0 0.0
        %3839 = vmatprep.subr.mxu0 0.0
        %3840 = vmatpush1.msra.mxu0 0.0
        %3841 = vmatprep.subr.mxu0 0.0
        %3842 = vmatpush1.msra.mxu0 0.0
        %3843 = vmatprep.subr.mxu0 0.0
        %3844 = vmatpush1.msra.mxu0 0.0
        %3845 = vmatprep.subr.mxu0 0.0
        %3846 = vmatpush1.msra.mxu0 0.0
        %3847 = vmatprep.subr.mxu0 0.0
        %3848 = vmatpush1.msra.mxu0 0.0
        %3849 = vmatprep.subr.mxu0 0.0
        %3850 = vmatpush1.msra.mxu0 0.0
        %3851 = vmatprep.subr.mxu0 0.0
        %3852 = vmatpush1.msra.mxu0 0.0
        %3853 = vmatprep.subr.mxu0 0.0
        %3854 = vmatpush1.msra.mxu0 0.0
        %3855 = vmatprep.subr.mxu0 0.0
        %3856 = vmatpush1.msra.mxu0 0.0
        %3857 = vmatprep.subr.mxu0 0.0
        %3858 = vmatpush1.msra.mxu0 0.0
        %3859 = vmatprep.mubr.f32.mxu0 0.0
        %3860 = vmatmul.mubr.f32.gmra.mrb[0].mxu0 %v3097
        %v3861 = vpop.f32.mrb[0].mxu0
        %v3862 = vadd.f32 0.0, %v3861
        %v3863 = vpop.f32.mrb[0].mxu0
        %v3864 = vadd.f32 0.0, %v3863
        %3865 = vmatprep.mubr.f32.mxu0 0.0
        %3866 = vmatmul.mubr.f32.gmra.mrb[0].mxu0 %v3100
        %v3867 = vpop.f32.mrb[0].mxu0
        %v3868 = vadd.f32 0.0, %v3867
        %v3869 = vpop.f32.mrb[0].mxu0
        %v3870 = vadd.f32 0.0, %v3869
        %3871 = vdwg.mxu0
        %3872 = vmatprep.subr.mxu0 %v3084
        %3873 = vmatpush1.msra.mxu0 %v3083
        %3874 = vmatprep.subr.mxu0 0.0
        %3875 = vmatpush1.msra.mxu0 0.0
        %3876 = vmatprep.subr.mxu0 0.0
        %3877 = vmatpush1.msra.mxu0 0.0
        %3878 = vmatprep.subr.mxu0 0.0
        %3879 = vmatpush1.msra.mxu0 0.0
        %3880 = vmatprep.subr.mxu0 0.0
        %3881 = vmatpush1.msra.mxu0 0.0
        %3882 = vmatprep.subr.mxu0 0.0
        %3883 = vmatpush1.msra.mxu0 0.0
        %3884 = vmatprep.subr.mxu0 0.0
        %3885 = vmatpush1.msra.mxu0 0.0
        %3886 = vmatprep.subr.mxu0 0.0
        %3887 = vmatpush1.msra.mxu0 0.0
        %3888 = vmatprep.subr.mxu0 0.0
        %3889 = vmatpush1.msra.mxu0 0.0
        %3890 = vmatprep.subr.mxu0 0.0
        %3891 = vmatpush1.msra.mxu0 0.0
        %3892 = vmatprep.subr.mxu0 0.0
        %3893 = vmatpush1.msra.mxu0 0.0
        %3894 = vmatprep.subr.mxu0 0.0
        %3895 = vmatpush1.msra.mxu0 0.0
        %3896 = vmatprep.subr.mxu0 0.0
        %3897 = vmatpush1.msra.mxu0 0.0
        %3898 = vmatprep.subr.mxu0 0.0
        %3899 = vmatpush1.msra.mxu0 0.0
        %3900 = vmatprep.subr.mxu0 0.0
        %3901 = vmatpush1.msra.mxu0 0.0
        %3902 = vmatprep.subr.mxu0 0.0
        %3903 = vmatpush1.msra.mxu0 0.0
        %3904 = vmatprep.subr.mxu0 0.0
        %3905 = vmatpush1.msra.mxu0 0.0
        %3906 = vmatprep.subr.mxu0 0.0
        %3907 = vmatpush1.msra.mxu0 0.0
        %3908 = vmatprep.subr.mxu0 0.0
        %3909 = vmatpush1.msra.mxu0 0.0
        %3910 = vmatprep.subr.mxu0 0.0
        %3911 = vmatpush1.msra.mxu0 0.0
        %3912 = vmatprep.subr.mxu0 0.0
        %3913 = vmatpush1.msra.mxu0 0.0
        %3914 = vmatprep.subr.mxu0 0.0
        %3915 = vmatpush1.msra.mxu0 0.0
        %3916 = vmatprep.subr.mxu0 0.0
        %3917 = vmatpush1.msra.mxu0 0.0
        %3918 = vmatprep.subr.mxu0 0.0
        %3919 = vmatpush1.msra.mxu0 0.0
        %3920 = vmatprep.subr.mxu0 0.0
        %3921 = vmatpush1.msra.mxu0 0.0
        %3922 = vmatprep.subr.mxu0 0.0
        %3923 = vmatpush1.msra.mxu0 0.0
        %3924 = vmatprep.subr.mxu0 0.0
        %3925 = vmatpush1.msra.mxu0 0.0
        %3926 = vmatprep.subr.mxu0 0.0
        %3927 = vmatpush1.msra.mxu0 0.0
        %3928 = vmatprep.subr.mxu0 0.0
        %3929 = vmatpush1.msra.mxu0 0.0
        %3930 = vmatprep.subr.mxu0 0.0
        %3931 = vmatpush1.msra.mxu0 0.0
        %3932 = vmatprep.subr.mxu0 0.0
        %3933 = vmatpush1.msra.mxu0 0.0
        %3934 = vmatprep.subr.mxu0 0.0
        %3935 = vmatpush1.msra.mxu0 0.0
        %3936 = vmatprep.mubr.f32.mxu0 0.0
        %3937 = vmatmul.mubr.f32.gmra.mrb[0].mxu0 %v3097
        %v3938 = vpop.f32.mrb[0].mxu0
        %v3939 = vadd.f32 0.0, %v3938
        %v3940 = vpop.f32.mrb[0].mxu0
        %v3941 = vadd.f32 0.0, %v3940
        %3942 = vmatprep.mubr.f32.mxu0 0.0
        %3943 = vmatmul.mubr.f32.gmra.mrb[0].mxu0 %v3100
        %v3944 = vpop.f32.mrb[0].mxu0
        %v3945 = vadd.f32 0.0, %v3944
        %v3946 = vpop.f32.mrb[0].mxu0
        %v3947 = vadd.f32 0.0, %v3946
        %3948 = vdwg.mxu0
        %3949 = vmatprep.subr.mxu0 %v3086
        %3950 = vmatpush1.msra.mxu0 %v3085
        %3951 = vmatprep.subr.mxu0 0.0
        %3952 = vmatpush1.msra.mxu0 0.0
        %3953 = vmatprep.subr.mxu0 0.0
        %3954 = vmatpush1.msra.mxu0 0.0
        %3955 = vmatprep.subr.mxu0 0.0
        %3956 = vmatpush1.msra.mxu0 0.0
        %3957 = vmatprep.subr.mxu0 0.0
        %3958 = vmatpush1.msra.mxu0 0.0
        %3959 = vmatprep.subr.mxu0 0.0
        %3960 = vmatpush1.msra.mxu0 0.0
        %3961 = vmatprep.subr.mxu0 0.0
        %3962 = vmatpush1.msra.mxu0 0.0
        %3963 = vmatprep.subr.mxu0 0.0
        %3964 = vmatpush1.msra.mxu0 0.0
        %3965 = vmatprep.subr.mxu0 0.0
        %3966 = vmatpush1.msra.mxu0 0.0
        %3967 = vmatprep.subr.mxu0 0.0
        %3968 = vmatpush1.msra.mxu0 0.0
        %3969 = vmatprep.subr.mxu0 0.0
        %3970 = vmatpush1.msra.mxu0 0.0
        %3971 = vmatprep.subr.mxu0 0.0
        %3972 = vmatpush1.msra.mxu0 0.0
        %3973 = vmatprep.subr.mxu0 0.0
        %3974 = vmatpush1.msra.mxu0 0.0
        %3975 = vmatprep.subr.mxu0 0.0
        %3976 = vmatpush1.msra.mxu0 0.0
        %3977 = vmatprep.subr.mxu0 0.0
        %3978 = vmatpush1.msra.mxu0 0.0
        %3979 = vmatprep.subr.mxu0 0.0
        %3980 = vmatpush1.msra.mxu0 0.0
        %3981 = vmatprep.subr.mxu0 0.0
        %3982 = vmatpush1.msra.mxu0 0.0
        %3983 = vmatprep.subr.mxu0 0.0
        %3984 = vmatpush1.msra.mxu0 0.0
        %3985 = vmatprep.subr.mxu0 0.0
        %3986 = vmatpush1.msra.mxu0 0.0
        %3987 = vmatprep.subr.mxu0 0.0
        %3988 = vmatpush1.msra.mxu0 0.0
        %3989 = vmatprep.subr.mxu0 0.0
        %3990 = vmatpush1.msra.mxu0 0.0
        %3991 = vmatprep.subr.mxu0 0.0
        %3992 = vmatpush1.msra.mxu0 0.0
        %3993 = vmatprep.subr.mxu0 0.0
        %3994 = vmatpush1.msra.mxu0 0.0
        %3995 = vmatprep.subr.mxu0 0.0
        %3996 = vmatpush1.msra.mxu0 0.0
        %3997 = vmatprep.subr.mxu0 0.0
        %3998 = vmatpush1.msra.mxu0 0.0
        %3999 = vmatprep.subr.mxu0 0.0
        %4000 = vmatpush1.msra.mxu0 0.0
        %4001 = vmatprep.subr.mxu0 0.0
        %4002 = vmatpush1.msra.mxu0 0.0
        %4003 = vmatprep.subr.mxu0 0.0
        %4004 = vmatpush1.msra.mxu0 0.0
        %4005 = vmatprep.subr.mxu0 0.0
        %4006 = vmatpush1.msra.mxu0 0.0
        %4007 = vmatprep.subr.mxu0 0.0
        %4008 = vmatpush1.msra.mxu0 0.0
        %4009 = vmatprep.subr.mxu0 0.0
        %4010 = vmatpush1.msra.mxu0 0.0
        %4011 = vmatprep.subr.mxu0 0.0
        %4012 = vmatpush1.msra.mxu0 0.0
        %4013 = vmatprep.mubr.f32.mxu0 0.0
        %4014 = vmatmul.mubr.f32.gmra.mrb[0].mxu0 %v3097
        %v4015 = vpop.f32.mrb[0].mxu0
        %v4016 = vadd.f32 0.0, %v4015
        %v4017 = vpop.f32.mrb[0].mxu0
        %v4018 = vadd.f32 0.0, %v4017
        %4019 = vmatprep.mubr.f32.mxu0 0.0
        %4020 = vmatmul.mubr.f32.gmra.mrb[0].mxu0 %v3100
        %v4021 = vpop.f32.mrb[0].mxu0
        %v4022 = vadd.f32 0.0, %v4021
        %v4023 = vpop.f32.mrb[0].mxu0
        %v4024 = vadd.f32 0.0, %v4023
        %4025 = vdwg.mxu0
        %4026 = vmatprep.subr.mxu0 %v3088
        %4027 = vmatpush1.msra.mxu0 %v3087
        %4028 = vmatprep.subr.mxu0 0.0
        %4029 = vmatpush1.msra.mxu0 0.0
        %4030 = vmatprep.subr.mxu0 0.0
        %4031 = vmatpush1.msra.mxu0 0.0
        %4032 = vmatprep.subr.mxu0 0.0
        %4033 = vmatpush1.msra.mxu0 0.0
        %4034 = vmatprep.subr.mxu0 0.0
        %4035 = vmatpush1.msra.mxu0 0.0
        %4036 = vmatprep.subr.mxu0 0.0
        %4037 = vmatpush1.msra.mxu0 0.0
        %4038 = vmatprep.subr.mxu0 0.0
        %4039 = vmatpush1.msra.mxu0 0.0
        %4040 = vmatprep.subr.mxu0 0.0
        %4041 = vmatpush1.msra.mxu0 0.0
        %4042 = vmatprep.subr.mxu0 0.0
        %4043 = vmatpush1.msra.mxu0 0.0
        %4044 = vmatprep.subr.mxu0 0.0
        %4045 = vmatpush1.msra.mxu0 0.0
        %4046 = vmatprep.subr.mxu0 0.0
        %4047 = vmatpush1.msra.mxu0 0.0
        %4048 = vmatprep.subr.mxu0 0.0
        %4049 = vmatpush1.msra.mxu0 0.0
        %4050 = vmatprep.subr.mxu0 0.0
        %4051 = vmatpush1.msra.mxu0 0.0
        %4052 = vmatprep.subr.mxu0 0.0
        %4053 = vmatpush1.msra.mxu0 0.0
        %4054 = vmatprep.subr.mxu0 0.0
        %4055 = vmatpush1.msra.mxu0 0.0
        %4056 = vmatprep.subr.mxu0 0.0
        %4057 = vmatpush1.msra.mxu0 0.0
        %4058 = vmatprep.subr.mxu0 0.0
        %4059 = vmatpush1.msra.mxu0 0.0
        %4060 = vmatprep.subr.mxu0 0.0
        %4061 = vmatpush1.msra.mxu0 0.0
        %4062 = vmatprep.subr.mxu0 0.0
        %4063 = vmatpush1.msra.mxu0 0.0
        %4064 = vmatprep.subr.mxu0 0.0
        %4065 = vmatpush1.msra.mxu0 0.0
        %4066 = vmatprep.subr.mxu0 0.0
        %4067 = vmatpush1.msra.mxu0 0.0
        %4068 = vmatprep.subr.mxu0 0.0
        %4069 = vmatpush1.msra.mxu0 0.0
        %4070 = vmatprep.subr.mxu0 0.0
        %4071 = vmatpush1.msra.mxu0 0.0
        %4072 = vmatprep.subr.mxu0 0.0
        %4073 = vmatpush1.msra.mxu0 0.0
        %4074 = vmatprep.subr.mxu0 0.0
        %4075 = vmatpush1.msra.mxu0 0.0
        %4076 = vmatprep.subr.mxu0 0.0
        %4077 = vmatpush1.msra.mxu0 0.0
        %4078 = vmatprep.subr.mxu0 0.0
        %4079 = vmatpush1.msra.mxu0 0.0
        %4080 = vmatprep.subr.mxu0 0.0
        %4081 = vmatpush1.msra.mxu0 0.0
        %4082 = vmatprep.subr.mxu0 0.0
        %4083 = vmatpush1.msra.mxu0 0.0
        %4084 = vmatprep.subr.mxu0 0.0
        %4085 = vmatpush1.msra.mxu0 0.0
        %4086 = vmatprep.subr.mxu0 0.0
        %4087 = vmatpush1.msra.mxu0 0.0
        %4088 = vmatprep.subr.mxu0 0.0
        %4089 = vmatpush1.msra.mxu0 0.0
        %4090 = vmatprep.mubr.f32.mxu0 0.0
        %4091 = vmatmul.mubr.f32.gmra.mrb[0].mxu0 %v3097
        %v4092 = vpop.f32.mrb[0].mxu0
        %v4093 = vadd.f32 0.0, %v4092
        %v4094 = vpop.f32.mrb[0].mxu0
        %v4095 = vadd.f32 0.0, %v4094
        %4096 = vmatprep.mubr.f32.mxu0 0.0
        %4097 = vmatmul.mubr.f32.gmra.mrb[0].mxu0 %v3100
        %v4098 = vpop.f32.mrb[0].mxu0
        %v4099 = vadd.f32 0.0, %v4098
        %v4100 = vpop.f32.mrb[0].mxu0
        %v4101 = vadd.f32 0.0, %v4100
        %4102 = vdwg.mxu0
        %4103 = vmatprep.subr.mxu0 %v3090
        %4104 = vmatpush1.msra.mxu0 %v3089
        %4105 = vmatprep.subr.mxu0 0.0
        %4106 = vmatpush1.msra.mxu0 0.0
        %4107 = vmatprep.subr.mxu0 0.0
        %4108 = vmatpush1.msra.mxu0 0.0
        %4109 = vmatprep.subr.mxu0 0.0
        %4110 = vmatpush1.msra.mxu0 0.0
        %4111 = vmatprep.subr.mxu0 0.0
        %4112 = vmatpush1.msra.mxu0 0.0
        %4113 = vmatprep.subr.mxu0 0.0
        %4114 = vmatpush1.msra.mxu0 0.0
        %4115 = vmatprep.subr.mxu0 0.0
        %4116 = vmatpush1.msra.mxu0 0.0
        %4117 = vmatprep.subr.mxu0 0.0
        %4118 = vmatpush1.msra.mxu0 0.0
        %4119 = vmatprep.subr.mxu0 0.0
        %4120 = vmatpush1.msra.mxu0 0.0
        %4121 = vmatprep.subr.mxu0 0.0
        %4122 = vmatpush1.msra.mxu0 0.0
        %4123 = vmatprep.subr.mxu0 0.0
        %4124 = vmatpush1.msra.mxu0 0.0
        %4125 = vmatprep.subr.mxu0 0.0
        %4126 = vmatpush1.msra.mxu0 0.0
        %4127 = vmatprep.subr.mxu0 0.0
        %4128 = vmatpush1.msra.mxu0 0.0
        %4129 = vmatprep.subr.mxu0 0.0
        %4130 = vmatpush1.msra.mxu0 0.0
        %4131 = vmatprep.subr.mxu0 0.0
        %4132 = vmatpush1.msra.mxu0 0.0
        %4133 = vmatprep.subr.mxu0 0.0
        %4134 = vmatpush1.msra.mxu0 0.0
        %4135 = vmatprep.subr.mxu0 0.0
        %4136 = vmatpush1.msra.mxu0 0.0
        %4137 = vmatprep.subr.mxu0 0.0
        %4138 = vmatpush1.msra.mxu0 0.0
        %4139 = vmatprep.subr.mxu0 0.0
        %4140 = vmatpush1.msra.mxu0 0.0
        %4141 = vmatprep.subr.mxu0 0.0
        %4142 = vmatpush1.msra.mxu0 0.0
        %4143 = vmatprep.subr.mxu0 0.0
        %4144 = vmatpush1.msra.mxu0 0.0
        %4145 = vmatprep.subr.mxu0 0.0
        %4146 = vmatpush1.msra.mxu0 0.0
        %4147 = vmatprep.subr.mxu0 0.0
        %4148 = vmatpush1.msra.mxu0 0.0
        %4149 = vmatprep.subr.mxu0 0.0
        %4150 = vmatpush1.msra.mxu0 0.0
        %4151 = vmatprep.subr.mxu0 0.0
        %4152 = vmatpush1.msra.mxu0 0.0
        %4153 = vmatprep.subr.mxu0 0.0
        %4154 = vmatpush1.msra.mxu0 0.0
        %4155 = vmatprep.subr.mxu0 0.0
        %4156 = vmatpush1.msra.mxu0 0.0
        %4157 = vmatprep.subr.mxu0 0.0
        %4158 = vmatpush1.msra.mxu0 0.0
        %4159 = vmatprep.subr.mxu0 0.0
        %4160 = vmatpush1.msra.mxu0 0.0
        %4161 = vmatprep.subr.mxu0 0.0
        %4162 = vmatpush1.msra.mxu0 0.0
        %4163 = vmatprep.subr.mxu0 0.0
        %4164 = vmatpush1.msra.mxu0 0.0
        %4165 = vmatprep.subr.mxu0 0.0
        %4166 = vmatpush1.msra.mxu0 0.0
        %4167 = vmatprep.mubr.f32.mxu0 0.0
        %4168 = vmatmul.mubr.f32.gmra.mrb[0].mxu0 %v3097
        %v4169 = vpop.f32.mrb[0].mxu0
        %v4170 = vadd.f32 0.0, %v4169
        %v4171 = vpop.f32.mrb[0].mxu0
        %v4172 = vadd.f32 0.0, %v4171
        %4173 = vmatprep.mubr.f32.mxu0 0.0
        %4174 = vmatmul.mubr.f32.gmra.mrb[0].mxu0 %v3100
        %v4175 = vpop.f32.mrb[0].mxu0
        %v4176 = vadd.f32 0.0, %v4175
        %v4177 = vpop.f32.mrb[0].mxu0
        %v4178 = vadd.f32 0.0, %v4177
        %4179 = vdwg.mxu0
        %4180 = vmatprep.subr.mxu0 %v3092
        %4181 = vmatpush1.msra.mxu0 %v3091
        %4182 = vmatprep.subr.mxu0 0.0
        %4183 = vmatpush1.msra.mxu0 0.0
        %4184 = vmatprep.subr.mxu0 0.0
        %4185 = vmatpush1.msra.mxu0 0.0
        %4186 = vmatprep.subr.mxu0 0.0
        %4187 = vmatpush1.msra.mxu0 0.0
        %4188 = vmatprep.subr.mxu0 0.0
        %4189 = vmatpush1.msra.mxu0 0.0
        %4190 = vmatprep.subr.mxu0 0.0
        %4191 = vmatpush1.msra.mxu0 0.0
        %4192 = vmatprep.subr.mxu0 0.0
        %4193 = vmatpush1.msra.mxu0 0.0
        %4194 = vmatprep.subr.mxu0 0.0
        %4195 = vmatpush1.msra.mxu0 0.0
        %4196 = vmatprep.subr.mxu0 0.0
        %4197 = vmatpush1.msra.mxu0 0.0
        %4198 = vmatprep.subr.mxu0 0.0
        %4199 = vmatpush1.msra.mxu0 0.0
        %4200 = vmatprep.subr.mxu0 0.0
        %4201 = vmatpush1.msra.mxu0 0.0
        %4202 = vmatprep.subr.mxu0 0.0
        %4203 = vmatpush1.msra.mxu0 0.0
        %4204 = vmatprep.subr.mxu0 0.0
        %4205 = vmatpush1.msra.mxu0 0.0
        %4206 = vmatprep.subr.mxu0 0.0
        %4207 = vmatpush1.msra.mxu0 0.0
        %4208 = vmatprep.subr.mxu0 0.0
        %4209 = vmatpush1.msra.mxu0 0.0
        %4210 = vmatprep.subr.mxu0 0.0
        %4211 = vmatpush1.msra.mxu0 0.0
        %4212 = vmatprep.subr.mxu0 0.0
        %4213 = vmatpush1.msra.mxu0 0.0
        %4214 = vmatprep.subr.mxu0 0.0
        %4215 = vmatpush1.msra.mxu0 0.0
        %4216 = vmatprep.subr.mxu0 0.0
        %4217 = vmatpush1.msra.mxu0 0.0
        %4218 = vmatprep.subr.mxu0 0.0
        %4219 = vmatpush1.msra.mxu0 0.0
        %4220 = vmatprep.subr.mxu0 0.0
        %4221 = vmatpush1.msra.mxu0 0.0
        %4222 = vmatprep.subr.mxu0 0.0
        %4223 = vmatpush1.msra.mxu0 0.0
        %4224 = vmatprep.subr.mxu0 0.0
        %4225 = vmatpush1.msra.mxu0 0.0
        %4226 = vmatprep.subr.mxu0 0.0
        %4227 = vmatpush1.msra.mxu0 0.0
        %4228 = vmatprep.subr.mxu0 0.0
        %4229 = vmatpush1.msra.mxu0 0.0
        %4230 = vmatprep.subr.mxu0 0.0
        %4231 = vmatpush1.msra.mxu0 0.0
        %4232 = vmatprep.subr.mxu0 0.0
        %4233 = vmatpush1.msra.mxu0 0.0
        %4234 = vmatprep.subr.mxu0 0.0
        %4235 = vmatpush1.msra.mxu0 0.0
        %4236 = vmatprep.subr.mxu0 0.0
        %4237 = vmatpush1.msra.mxu0 0.0
        %4238 = vmatprep.subr.mxu0 0.0
        %4239 = vmatpush1.msra.mxu0 0.0
        %4240 = vmatprep.subr.mxu0 0.0
        %4241 = vmatpush1.msra.mxu0 0.0
        %4242 = vmatprep.subr.mxu0 0.0
        %4243 = vmatpush1.msra.mxu0 0.0
        %4244 = vmatprep.mubr.f32.mxu0 0.0
        %4245 = vmatmul.mubr.f32.gmra.mrb[0].mxu0 %v3097
        %v4246 = vpop.f32.mrb[0].mxu0
        %v4247 = vadd.f32 0.0, %v4246
        %v4248 = vpop.f32.mrb[0].mxu0
        %v4249 = vadd.f32 0.0, %v4248
        %4250 = vmatprep.mubr.f32.mxu0 0.0
        %4251 = vmatmul.mubr.f32.gmra.mrb[0].mxu0 %v3100
        %v4252 = vpop.f32.mrb[0].mxu0
        %v4253 = vadd.f32 0.0, %v4252
        %v4254 = vpop.f32.mrb[0].mxu0
        %v4255 = vadd.f32 0.0, %v4254
        %4256 = vdwg.mxu0
        %4257 = vmatprep.subr.mxu0 %v3094
        %4258 = vmatpush1.msra.mxu0 %v3093
        %4259 = vmatprep.subr.mxu0 0.0
        %4260 = vmatpush1.msra.mxu0 0.0
        %4261 = vmatprep.subr.mxu0 0.0
        %4262 = vmatpush1.msra.mxu0 0.0
        %4263 = vmatprep.subr.mxu0 0.0
        %4264 = vmatpush1.msra.mxu0 0.0
        %4265 = vmatprep.subr.mxu0 0.0
        %4266 = vmatpush1.msra.mxu0 0.0
        %4267 = vmatprep.subr.mxu0 0.0
        %4268 = vmatpush1.msra.mxu0 0.0
        %4269 = vmatprep.subr.mxu0 0.0
        %4270 = vmatpush1.msra.mxu0 0.0
        %4271 = vmatprep.subr.mxu0 0.0
        %4272 = vmatpush1.msra.mxu0 0.0
        %4273 = vmatprep.subr.mxu0 0.0
        %4274 = vmatpush1.msra.mxu0 0.0
        %4275 = vmatprep.subr.mxu0 0.0
        %4276 = vmatpush1.msra.mxu0 0.0
        %4277 = vmatprep.subr.mxu0 0.0
        %4278 = vmatpush1.msra.mxu0 0.0
        %4279 = vmatprep.subr.mxu0 0.0
        %4280 = vmatpush1.msra.mxu0 0.0
        %4281 = vmatprep.subr.mxu0 0.0
        %4282 = vmatpush1.msra.mxu0 0.0
        %4283 = vmatprep.subr.mxu0 0.0
        %4284 = vmatpush1.msra.mxu0 0.0
        %4285 = vmatprep.subr.mxu0 0.0
        %4286 = vmatpush1.msra.mxu0 0.0
        %4287 = vmatprep.subr.mxu0 0.0
        %4288 = vmatpush1.msra.mxu0 0.0
        %4289 = vmatprep.subr.mxu0 0.0
        %4290 = vmatpush1.msra.mxu0 0.0
        %4291 = vmatprep.subr.mxu0 0.0
        %4292 = vmatpush1.msra.mxu0 0.0
        %4293 = vmatprep.subr.mxu0 0.0
        %4294 = vmatpush1.msra.mxu0 0.0
        %4295 = vmatprep.subr.mxu0 0.0
        %4296 = vmatpush1.msra.mxu0 0.0
        %4297 = vmatprep.subr.mxu0 0.0
        %4298 = vmatpush1.msra.mxu0 0.0
        %4299 = vmatprep.subr.mxu0 0.0
        %4300 = vmatpush1.msra.mxu0 0.0
        %4301 = vmatprep.subr.mxu0 0.0
        %4302 = vmatpush1.msra.mxu0 0.0
        %4303 = vmatprep.subr.mxu0 0.0
        %4304 = vmatpush1.msra.mxu0 0.0
        %4305 = vmatprep.subr.mxu0 0.0
        %4306 = vmatpush1.msra.mxu0 0.0
        %4307 = vmatprep.subr.mxu0 0.0
        %4308 = vmatpush1.msra.mxu0 0.0
        %4309 = vmatprep.subr.mxu0 0.0
        %4310 = vmatpush1.msra.mxu0 0.0
        %4311 = vmatprep.subr.mxu0 0.0
        %4312 = vmatpush1.msra.mxu0 0.0
        %4313 = vmatprep.subr.mxu0 0.0
        %4314 = vmatpush1.msra.mxu0 0.0
        %4315 = vmatprep.subr.mxu0 0.0
        %4316 = vmatpush1.msra.mxu0 0.0
        %4317 = vmatprep.subr.mxu0 0.0
        %4318 = vmatpush1.msra.mxu0 0.0
        %4319 = vmatprep.subr.mxu0 0.0
        %4320 = vmatpush1.msra.mxu0 0.0
        %4321 = vmatprep.mubr.f32.mxu0 0.0
        %4322 = vmatmul.mubr.f32.gmra.mrb[0].mxu0 %v3097
        %v4323 = vpop.f32.mrb[0].mxu0
        %v4324 = vadd.f32 0.0, %v4323
        %v4325 = vpop.f32.mrb[0].mxu0
        %v4326 = vadd.f32 0.0, %v4325
        %4327 = vmatprep.mubr.f32.mxu0 0.0
        %4328 = vmatmul.mubr.f32.gmra.mrb[0].mxu0 %v3100
        %v4329 = vpop.f32.mrb[0].mxu0
        %v4330 = vadd.f32 0.0, %v4329
        %v4331 = vpop.f32.mrb[0].mxu0
        %v4332 = vadd.f32 0.0, %v4331
        %4333 = vdwg.mxu0
        %4336 = vrot.lane.b32.xlu0 %v3169, 64
        %v4337 = vpop.permute.xlu0 %4336
        %4338 = vrot.lane.b32.xlu0 %v3175, 64
        %v4339 = vpop.permute.xlu0 %4338
        %4344 = vrot.lane.b32.xlu0 %v3171, 64
        %v4345 = vpop.permute.xlu0 %4344
        %4346 = vrot.lane.b32.xlu0 %v3177, 64
        %v4347 = vpop.permute.xlu0 %4346
        %4352 = vrot.lane.b32.xlu0 %v3246, 64
        %v4353 = vpop.permute.xlu0 %4352
        %4354 = vrot.lane.b32.xlu0 %v3252, 64
        %v4355 = vpop.permute.xlu0 %4354
        %4360 = vrot.lane.b32.xlu0 %v3248, 64
        %v4361 = vpop.permute.xlu0 %4360
        %4362 = vrot.lane.b32.xlu0 %v3254, 64
        %v4363 = vpop.permute.xlu0 %4362
        %4368 = vrot.lane.b32.xlu0 %v3323, 64
        %v4369 = vpop.permute.xlu0 %4368
        %4370 = vrot.lane.b32.xlu0 %v3329, 64
        %v4371 = vpop.permute.xlu0 %4370
        %4376 = vrot.lane.b32.xlu0 %v3325, 64
        %v4377 = vpop.permute.xlu0 %4376
        %4378 = vrot.lane.b32.xlu0 %v3331, 64
        %v4379 = vpop.permute.xlu0 %4378
        %4384 = vrot.lane.b32.xlu0 %v3400, 64
        %v4385 = vpop.permute.xlu0 %4384
        %4386 = vrot.lane.b32.xlu0 %v3406, 64
        %v4387 = vpop.permute.xlu0 %4386
        %4392 = vrot.lane.b32.xlu0 %v3402, 64
        %v4393 = vpop.permute.xlu0 %4392
        %4394 = vrot.lane.b32.xlu0 %v3408, 64
        %v4395 = vpop.permute.xlu0 %4394
        %4400 = vrot.lane.b32.xlu0 %v3477, 64
        %v4401 = vpop.permute.xlu0 %4400
        %4402 = vrot.lane.b32.xlu0 %v3483, 64
        %v4403 = vpop.permute.xlu0 %4402
        %4408 = vrot.lane.b32.xlu0 %v3479, 64
        %v4409 = vpop.permute.xlu0 %4408
        %4410 = vrot.lane.b32.xlu0 %v3485, 64
        %v4411 = vpop.permute.xlu0 %4410
        %4416 = vrot.lane.b32.xlu0 %v3554, 64
        %v4417 = vpop.permute.xlu0 %4416
        %4418 = vrot.lane.b32.xlu0 %v3560, 64
        %v4419 = vpop.permute.xlu0 %4418
        %4424 = vrot.lane.b32.xlu0 %v3556, 64
        %v4425 = vpop.permute.xlu0 %4424
        %4426 = vrot.lane.b32.xlu0 %v3562, 64
        %v4427 = vpop.permute.xlu0 %4426
        %4432 = vrot.lane.b32.xlu0 %v3631, 64
        %v4433 = vpop.permute.xlu0 %4432
        %4434 = vrot.lane.b32.xlu0 %v3637, 64
        %v4435 = vpop.permute.xlu0 %4434
        %4440 = vrot.lane.b32.xlu0 %v3633, 64
        %v4441 = vpop.permute.xlu0 %4440
        %4442 = vrot.lane.b32.xlu0 %v3639, 64
        %v4443 = vpop.permute.xlu0 %4442
        %4448 = vrot.lane.b32.xlu0 %v3708, 64
        %v4449 = vpop.permute.xlu0 %4448
        %4450 = vrot.lane.b32.xlu0 %v3714, 64
        %v4451 = vpop.permute.xlu0 %4450
        %4456 = vrot.lane.b32.xlu0 %v3710, 64
        %v4457 = vpop.permute.xlu0 %4456
        %4458 = vrot.lane.b32.xlu0 %v3716, 64
        %v4459 = vpop.permute.xlu0 %4458
        %4464 = vrot.lane.b32.xlu0 %v3785, 64
        %v4465 = vpop.permute.xlu0 %4464
        %4466 = vrot.lane.b32.xlu0 %v3791, 64
        %v4467 = vpop.permute.xlu0 %4466
        %4472 = vrot.lane.b32.xlu0 %v3787, 64
        %v4473 = vpop.permute.xlu0 %4472
        %4474 = vrot.lane.b32.xlu0 %v3793, 64
        %v4475 = vpop.permute.xlu0 %4474
        %4480 = vrot.lane.b32.xlu0 %v3862, 64
        %v4481 = vpop.permute.xlu0 %4480
        %4482 = vrot.lane.b32.xlu0 %v3868, 64
        %v4483 = vpop.permute.xlu0 %4482
        %4488 = vrot.lane.b32.xlu0 %v3864, 64
        %v4489 = vpop.permute.xlu0 %4488
        %4490 = vrot.lane.b32.xlu0 %v3870, 64
        %v4491 = vpop.permute.xlu0 %4490
        %4496 = vrot.lane.b32.xlu0 %v3939, 64
        %v4497 = vpop.permute.xlu0 %4496
        %4498 = vrot.lane.b32.xlu0 %v3945, 64
        %v4499 = vpop.permute.xlu0 %4498
        %4504 = vrot.lane.b32.xlu0 %v3941, 64
        %v4505 = vpop.permute.xlu0 %4504
        %4506 = vrot.lane.b32.xlu0 %v3947, 64
        %v4507 = vpop.permute.xlu0 %4506
        %4512 = vrot.lane.b32.xlu0 %v4016, 64
        %v4513 = vpop.permute.xlu0 %4512
        %4514 = vrot.lane.b32.xlu0 %v4022, 64
        %v4515 = vpop.permute.xlu0 %4514
        %4520 = vrot.lane.b32.xlu0 %v4018, 64
        %v4521 = vpop.permute.xlu0 %4520
        %4522 = vrot.lane.b32.xlu0 %v4024, 64
        %v4523 = vpop.permute.xlu0 %4522
        %4528 = vrot.lane.b32.xlu0 %v4093, 64
        %v4529 = vpop.permute.xlu0 %4528
        %4530 = vrot.lane.b32.xlu0 %v4099, 64
        %v4531 = vpop.permute.xlu0 %4530
        %4536 = vrot.lane.b32.xlu0 %v4095, 64
        %v4537 = vpop.permute.xlu0 %4536
        %4538 = vrot.lane.b32.xlu0 %v4101, 64
        %v4539 = vpop.permute.xlu0 %4538
        %4544 = vrot.lane.b32.xlu0 %v4170, 64
        %v4545 = vpop.permute.xlu0 %4544
        %4546 = vrot.lane.b32.xlu0 %v4176, 64
        %v4547 = vpop.permute.xlu0 %4546
        %4552 = vrot.lane.b32.xlu0 %v4172, 64
        %v4553 = vpop.permute.xlu0 %4552
        %4554 = vrot.lane.b32.xlu0 %v4178, 64
        %v4555 = vpop.permute.xlu0 %4554
        %4560 = vrot.lane.b32.xlu0 %v4247, 64
        %v4561 = vpop.permute.xlu0 %4560
        %4562 = vrot.lane.b32.xlu0 %v4253, 64
        %v4563 = vpop.permute.xlu0 %4562
        %4568 = vrot.lane.b32.xlu0 %v4249, 64
        %v4569 = vpop.permute.xlu0 %4568
        %4570 = vrot.lane.b32.xlu0 %v4255, 64
        %v4571 = vpop.permute.xlu0 %4570
        %4576 = vrot.lane.b32.xlu0 %v4324, 64
        %v4577 = vpop.permute.xlu0 %4576
        %4578 = vrot.lane.b32.xlu0 %v4330, 64
        %v4579 = vpop.permute.xlu0 %4578
        %4584 = vrot.lane.b32.xlu0 %v4326, 64
        %v4585 = vpop.permute.xlu0 %4584
        %4586 = vrot.lane.b32.xlu0 %v4332, 64
        %v4587 = vpop.permute.xlu0 %4586
        %v4590 = vcombine.low %v3169, %v3171
        %v4591 = vcombine.high %v3169, %v3171
        %v4593 = vunpack.c.l.s4 1983009808
        %v4594 = vunpack.c.0.s8 %v4593
        %v4595 = vlaneseq
        %v4596 = vshrl.u32 %v4595, 7
        %v4597 = vsub.s32 %v4594, %v4596
        %v4598 = vrot.slane %v4590, %v4597
        %v4600 = vunpack.c.l.s4 1983009808
        %v4601 = vunpack.c.0.s8 %v4600
        %v4602 = vlaneseq
        %v4603 = vshrl.u32 %v4602, 7
        %v4604 = vsub.s32 %v4601, %v4603
        %v4605 = vrot.slane %v4591, %v4604
        %v4606 = vcombine.low %v4337, %v4345
        %v4607 = vcombine.high %v4337, %v4345
        %v4609 = vunpack.c.l.s4 1983009808
        %v4610 = vunpack.c.0.s8 %v4609
        %v4611 = vlaneseq
        %v4612 = vshrl.u32 %v4611, 7
        %v4613 = vsub.s32 %v4610, %v4612
        %v4614 = vrot.slane %v4606, %v4613
        %v4616 = vunpack.c.l.s4 1983009808
        %v4617 = vunpack.c.0.s8 %v4616
        %v4618 = vlaneseq
        %v4619 = vshrl.u32 %v4618, 7
        %v4620 = vsub.s32 %v4617, %v4619
        %v4621 = vrot.slane %v4607, %v4620
        %v4622 = vcombine.low %v3246, %v3248
        %v4623 = vcombine.high %v3246, %v3248
        %v4625 = vunpack.c.l.s4 1983009808
        %v4626 = vunpack.c.0.s8 %v4625
        %v4627 = vlaneseq
        %v4628 = vshrl.u32 %v4627, 7
        %v4629 = vsub.s32 %v4626, %v4628
        %v4630 = vrot.slane %v4622, %v4629
        %v4632 = vunpack.c.l.s4 1983009808
        %v4633 = vunpack.c.0.s8 %v4632
        %v4634 = vlaneseq
        %v4635 = vshrl.u32 %v4634, 7
        %v4636 = vsub.s32 %v4633, %v4635
        %v4637 = vrot.slane %v4623, %v4636
        %v4638 = vcombine.low %v4353, %v4361
        %v4639 = vcombine.high %v4353, %v4361
        %v4641 = vunpack.c.l.s4 1983009808
        %v4642 = vunpack.c.0.s8 %v4641
        %v4643 = vlaneseq
        %v4644 = vshrl.u32 %v4643, 7
        %v4645 = vsub.s32 %v4642, %v4644
        %v4646 = vrot.slane %v4638, %v4645
        %v4648 = vunpack.c.l.s4 1983009808
        %v4649 = vunpack.c.0.s8 %v4648
        %v4650 = vlaneseq
        %v4651 = vshrl.u32 %v4650, 7
        %v4652 = vsub.s32 %v4649, %v4651
        %v4653 = vrot.slane %v4639, %v4652
        %v4654 = vcombine.low %v4598, %v4614
        %v4655 = vcombine.high %v4598, %v4614
        %v4657 = vunpack.c.l.s4 1934713408
        %v4658 = vunpack.c.0.s8 %v4657
        %v4659 = vlaneseq
        %v4660 = vshrl.u32 %v4659, 7
        %v4661 = vsub.s32 %v4658, %v4660
        %v4662 = vrot.slane %v4654, %v4661
        %v4664 = vunpack.c.l.s4 1934713408
        %v4665 = vunpack.c.0.s8 %v4664
        %v4666 = vlaneseq
        %v4667 = vshrl.u32 %v4666, 7
        %v4668 = vsub.s32 %v4665, %v4667
        %v4669 = vrot.slane %v4655, %v4668
        %v4670 = vcombine.low %v4605, %v4621
        %v4671 = vcombine.high %v4605, %v4621
        %v4673 = vunpack.c.l.s4 1934713408
        %v4674 = vunpack.c.0.s8 %v4673
        %v4675 = vlaneseq
        %v4676 = vshrl.u32 %v4675, 7
        %v4677 = vsub.s32 %v4674, %v4676
        %v4678 = vrot.slane %v4670, %v4677
        %v4680 = vunpack.c.l.s4 1934713408
        %v4681 = vunpack.c.0.s8 %v4680
        %v4682 = vlaneseq
        %v4683 = vshrl.u32 %v4682, 7
        %v4684 = vsub.s32 %v4681, %v4683
        %v4685 = vrot.slane %v4671, %v4684
        %v4686 = vcombine.low %v4630, %v4646
        %v4687 = vcombine.high %v4630, %v4646
        %v4689 = vunpack.c.l.s4 1934713408
        %v4690 = vunpack.c.0.s8 %v4689
        %v4691 = vlaneseq
        %v4692 = vshrl.u32 %v4691, 7
        %v4693 = vsub.s32 %v4690, %v4692
        %v4694 = vrot.slane %v4686, %v4693
        %v4696 = vunpack.c.l.s4 1934713408
        %v4697 = vunpack.c.0.s8 %v4696
        %v4698 = vlaneseq
        %v4699 = vshrl.u32 %v4698, 7
        %v4700 = vsub.s32 %v4697, %v4699
        %v4701 = vrot.slane %v4687, %v4700
        %v4702 = vcombine.low %v4637, %v4653
        %v4703 = vcombine.high %v4637, %v4653
        %v4705 = vunpack.c.l.s4 1934713408
        %v4706 = vunpack.c.0.s8 %v4705
        %v4707 = vlaneseq
        %v4708 = vshrl.u32 %v4707, 7
        %v4709 = vsub.s32 %v4706, %v4708
        %v4710 = vrot.slane %v4702, %v4709
        %v4712 = vunpack.c.l.s4 1934713408
        %v4713 = vunpack.c.0.s8 %v4712
        %v4714 = vlaneseq
        %v4715 = vshrl.u32 %v4714, 7
        %v4716 = vsub.s32 %v4713, %v4715
        %v4717 = vrot.slane %v4703, %v4716
        %v4718 = vcombine.low %v4662, %v4694
        %v4719 = vcombine.high %v4662, %v4694
        %v4720 = vcombine.low %v4669, %v4701
        %v4721 = vcombine.high %v4669, %v4701
        %v4722 = vcombine.low %v4678, %v4710
        %v4723 = vcombine.high %v4678, %v4710
        %v4724 = vcombine.low %v4685, %v4717
        %v4725 = vcombine.high %v4685, %v4717
        %v4726 = vcombine.low %v3323, %v3325
        %v4727 = vcombine.high %v3323, %v3325
        %v4729 = vunpack.c.l.s4 1983009808
        %v4730 = vunpack.c.0.s8 %v4729
        %v4731 = vlaneseq
        %v4732 = vshrl.u32 %v4731, 7
        %v4733 = vsub.s32 %v4730, %v4732
        %v4734 = vrot.slane %v4726, %v4733
        %v4736 = vunpack.c.l.s4 1983009808
        %v4737 = vunpack.c.0.s8 %v4736
        %v4738 = vlaneseq
        %v4739 = vshrl.u32 %v4738, 7
        %v4740 = vsub.s32 %v4737, %v4739
        %v4741 = vrot.slane %v4727, %v4740
        %v4742 = vcombine.low %v4369, %v4377
        %v4743 = vcombine.high %v4369, %v4377
        %v4745 = vunpack.c.l.s4 1983009808
        %v4746 = vunpack.c.0.s8 %v4745
        %v4747 = vlaneseq
        %v4748 = vshrl.u32 %v4747, 7
        %v4749 = vsub.s32 %v4746, %v4748
        %v4750 = vrot.slane %v4742, %v4749
        %v4752 = vunpack.c.l.s4 1983009808
        %v4753 = vunpack.c.0.s8 %v4752
        %v4754 = vlaneseq
        %v4755 = vshrl.u32 %v4754, 7
        %v4756 = vsub.s32 %v4753, %v4755
        %v4757 = vrot.slane %v4743, %v4756
        %v4758 = vcombine.low %v3400, %v3402
        %v4759 = vcombine.high %v3400, %v3402
        %v4761 = vunpack.c.l.s4 1983009808
        %v4762 = vunpack.c.0.s8 %v4761
        %v4763 = vlaneseq
        %v4764 = vshrl.u32 %v4763, 7
        %v4765 = vsub.s32 %v4762, %v4764
        %v4766 = vrot.slane %v4758, %v4765
        %v4768 = vunpack.c.l.s4 1983009808
        %v4769 = vunpack.c.0.s8 %v4768
        %v4770 = vlaneseq
        %v4771 = vshrl.u32 %v4770, 7
        %v4772 = vsub.s32 %v4769, %v4771
        %v4773 = vrot.slane %v4759, %v4772
        %v4774 = vcombine.low %v4385, %v4393
        %v4775 = vcombine.high %v4385, %v4393
        %v4777 = vunpack.c.l.s4 1983009808
        %v4778 = vunpack.c.0.s8 %v4777
        %v4779 = vlaneseq
        %v4780 = vshrl.u32 %v4779, 7
        %v4781 = vsub.s32 %v4778, %v4780
        %v4782 = vrot.slane %v4774, %v4781
        %v4784 = vunpack.c.l.s4 1983009808
        %v4785 = vunpack.c.0.s8 %v4784
        %v4786 = vlaneseq
        %v4787 = vshrl.u32 %v4786, 7
        %v4788 = vsub.s32 %v4785, %v4787
        %v4789 = vrot.slane %v4775, %v4788
        %v4790 = vcombine.low %v4734, %v4750
        %v4791 = vcombine.high %v4734, %v4750
        %v4793 = vunpack.c.l.s4 1934713408
        %v4794 = vunpack.c.0.s8 %v4793
        %v4795 = vlaneseq
        %v4796 = vshrl.u32 %v4795, 7
        %v4797 = vsub.s32 %v4794, %v4796
        %v4798 = vrot.slane %v4790, %v4797
        %v4800 = vunpack.c.l.s4 1934713408
        %v4801 = vunpack.c.0.s8 %v4800
        %v4802 = vlaneseq
        %v4803 = vshrl.u32 %v4802, 7
        %v4804 = vsub.s32 %v4801, %v4803
        %v4805 = vrot.slane %v4791, %v4804
        %v4806 = vcombine.low %v4741, %v4757
        %v4807 = vcombine.high %v4741, %v4757
        %v4809 = vunpack.c.l.s4 1934713408
        %v4810 = vunpack.c.0.s8 %v4809
        %v4811 = vlaneseq
        %v4812 = vshrl.u32 %v4811, 7
        %v4813 = vsub.s32 %v4810, %v4812
        %v4814 = vrot.slane %v4806, %v4813
        %v4816 = vunpack.c.l.s4 1934713408
        %v4817 = vunpack.c.0.s8 %v4816
        %v4818 = vlaneseq
        %v4819 = vshrl.u32 %v4818, 7
        %v4820 = vsub.s32 %v4817, %v4819
        %v4821 = vrot.slane %v4807, %v4820
        %v4822 = vcombine.low %v4766, %v4782
        %v4823 = vcombine.high %v4766, %v4782
        %v4825 = vunpack.c.l.s4 1934713408
        %v4826 = vunpack.c.0.s8 %v4825
        %v4827 = vlaneseq
        %v4828 = vshrl.u32 %v4827, 7
        %v4829 = vsub.s32 %v4826, %v4828
        %v4830 = vrot.slane %v4822, %v4829
        %v4832 = vunpack.c.l.s4 1934713408
        %v4833 = vunpack.c.0.s8 %v4832
        %v4834 = vlaneseq
        %v4835 = vshrl.u32 %v4834, 7
        %v4836 = vsub.s32 %v4833, %v4835
        %v4837 = vrot.slane %v4823, %v4836
        %v4838 = vcombine.low %v4773, %v4789
        %v4839 = vcombine.high %v4773, %v4789
        %v4841 = vunpack.c.l.s4 1934713408
        %v4842 = vunpack.c.0.s8 %v4841
        %v4843 = vlaneseq
        %v4844 = vshrl.u32 %v4843, 7
        %v4845 = vsub.s32 %v4842, %v4844
        %v4846 = vrot.slane %v4838, %v4845
        %v4848 = vunpack.c.l.s4 1934713408
        %v4849 = vunpack.c.0.s8 %v4848
        %v4850 = vlaneseq
        %v4851 = vshrl.u32 %v4850, 7
        %v4852 = vsub.s32 %v4849, %v4851
        %v4853 = vrot.slane %v4839, %v4852
        %v4854 = vcombine.low %v4798, %v4830
        %v4855 = vcombine.high %v4798, %v4830
        %v4856 = vcombine.low %v4805, %v4837
        %v4857 = vcombine.high %v4805, %v4837
        %v4858 = vcombine.low %v4814, %v4846
        %v4859 = vcombine.high %v4814, %v4846
        %v4860 = vcombine.low %v4821, %v4853
        %v4861 = vcombine.high %v4821, %v4853
        %v4862 = vcombine.low %v3477, %v3479
        %v4863 = vcombine.high %v3477, %v3479
        %v4865 = vunpack.c.l.s4 1983009808
        %v4866 = vunpack.c.0.s8 %v4865
        %v4867 = vlaneseq
        %v4868 = vshrl.u32 %v4867, 7
        %v4869 = vsub.s32 %v4866, %v4868
        %v4870 = vrot.slane %v4862, %v4869
        %v4872 = vunpack.c.l.s4 1983009808
        %v4873 = vunpack.c.0.s8 %v4872
        %v4874 = vlaneseq
        %v4875 = vshrl.u32 %v4874, 7
        %v4876 = vsub.s32 %v4873, %v4875
        %v4877 = vrot.slane %v4863, %v4876
        %v4878 = vcombine.low %v4401, %v4409
        %v4879 = vcombine.high %v4401, %v4409
        %v4881 = vunpack.c.l.s4 1983009808
        %v4882 = vunpack.c.0.s8 %v4881
        %v4883 = vlaneseq
        %v4884 = vshrl.u32 %v4883, 7
        %v4885 = vsub.s32 %v4882, %v4884
        %v4886 = vrot.slane %v4878, %v4885
        %v4888 = vunpack.c.l.s4 1983009808
        %v4889 = vunpack.c.0.s8 %v4888
        %v4890 = vlaneseq
        %v4891 = vshrl.u32 %v4890, 7
        %v4892 = vsub.s32 %v4889, %v4891
        %v4893 = vrot.slane %v4879, %v4892
        %v4894 = vcombine.low %v3554, %v3556
        %v4895 = vcombine.high %v3554, %v3556
        %v4897 = vunpack.c.l.s4 1983009808
        %v4898 = vunpack.c.0.s8 %v4897
        %v4899 = vlaneseq
        %v4900 = vshrl.u32 %v4899, 7
        %v4901 = vsub.s32 %v4898, %v4900
        %v4902 = vrot.slane %v4894, %v4901
        %v4904 = vunpack.c.l.s4 1983009808
        %v4905 = vunpack.c.0.s8 %v4904
        %v4906 = vlaneseq
        %v4907 = vshrl.u32 %v4906, 7
        %v4908 = vsub.s32 %v4905, %v4907
        %v4909 = vrot.slane %v4895, %v4908
        %v4910 = vcombine.low %v4417, %v4425
        %v4911 = vcombine.high %v4417, %v4425
        %v4913 = vunpack.c.l.s4 1983009808
        %v4914 = vunpack.c.0.s8 %v4913
        %v4915 = vlaneseq
        %v4916 = vshrl.u32 %v4915, 7
        %v4917 = vsub.s32 %v4914, %v4916
        %v4918 = vrot.slane %v4910, %v4917
        %v4920 = vunpack.c.l.s4 1983009808
        %v4921 = vunpack.c.0.s8 %v4920
        %v4922 = vlaneseq
        %v4923 = vshrl.u32 %v4922, 7
        %v4924 = vsub.s32 %v4921, %v4923
        %v4925 = vrot.slane %v4911, %v4924
        %v4926 = vcombine.low %v4870, %v4886
        %v4927 = vcombine.high %v4870, %v4886
        %v4929 = vunpack.c.l.s4 1934713408
        %v4930 = vunpack.c.0.s8 %v4929
        %v4931 = vlaneseq
        %v4932 = vshrl.u32 %v4931, 7
        %v4933 = vsub.s32 %v4930, %v4932
        %v4934 = vrot.slane %v4926, %v4933
        %v4936 = vunpack.c.l.s4 1934713408
        %v4937 = vunpack.c.0.s8 %v4936
        %v4938 = vlaneseq
        %v4939 = vshrl.u32 %v4938, 7
        %v4940 = vsub.s32 %v4937, %v4939
        %v4941 = vrot.slane %v4927, %v4940
        %v4942 = vcombine.low %v4877, %v4893
        %v4943 = vcombine.high %v4877, %v4893
        %v4945 = vunpack.c.l.s4 1934713408
        %v4946 = vunpack.c.0.s8 %v4945
        %v4947 = vlaneseq
        %v4948 = vshrl.u32 %v4947, 7
        %v4949 = vsub.s32 %v4946, %v4948
        %v4950 = vrot.slane %v4942, %v4949
        %v4952 = vunpack.c.l.s4 1934713408
        %v4953 = vunpack.c.0.s8 %v4952
        %v4954 = vlaneseq
        %v4955 = vshrl.u32 %v4954, 7
        %v4956 = vsub.s32 %v4953, %v4955
        %v4957 = vrot.slane %v4943, %v4956
        %v4958 = vcombine.low %v4902, %v4918
        %v4959 = vcombine.high %v4902, %v4918
        %v4961 = vunpack.c.l.s4 1934713408
        %v4962 = vunpack.c.0.s8 %v4961
        %v4963 = vlaneseq
        %v4964 = vshrl.u32 %v4963, 7
        %v4965 = vsub.s32 %v4962, %v4964
        %v4966 = vrot.slane %v4958, %v4965
        %v4968 = vunpack.c.l.s4 1934713408
        %v4969 = vunpack.c.0.s8 %v4968
        %v4970 = vlaneseq
        %v4971 = vshrl.u32 %v4970, 7
        %v4972 = vsub.s32 %v4969, %v4971
        %v4973 = vrot.slane %v4959, %v4972
        %v4974 = vcombine.low %v4909, %v4925
        %v4975 = vcombine.high %v4909, %v4925
        %v4977 = vunpack.c.l.s4 1934713408
        %v4978 = vunpack.c.0.s8 %v4977
        %v4979 = vlaneseq
        %v4980 = vshrl.u32 %v4979, 7
        %v4981 = vsub.s32 %v4978, %v4980
        %v4982 = vrot.slane %v4974, %v4981
        %v4984 = vunpack.c.l.s4 1934713408
        %v4985 = vunpack.c.0.s8 %v4984
        %v4986 = vlaneseq
        %v4987 = vshrl.u32 %v4986, 7
        %v4988 = vsub.s32 %v4985, %v4987
        %v4989 = vrot.slane %v4975, %v4988
        %v4990 = vcombine.low %v4934, %v4966
        %v4991 = vcombine.high %v4934, %v4966
        %v4992 = vcombine.low %v4941, %v4973
        %v4993 = vcombine.high %v4941, %v4973
        %v4994 = vcombine.low %v4950, %v4982
        %v4995 = vcombine.high %v4950, %v4982
        %v4996 = vcombine.low %v4957, %v4989
        %v4997 = vcombine.high %v4957, %v4989
        %v4998 = vcombine.low %v3631, %v3633
        %v4999 = vcombine.high %v3631, %v3633
        %v5001 = vunpack.c.l.s4 1983009808
        %v5002 = vunpack.c.0.s8 %v5001
        %v5003 = vlaneseq
        %v5004 = vshrl.u32 %v5003, 7
        %v5005 = vsub.s32 %v5002, %v5004
        %v5006 = vrot.slane %v4998, %v5005
        %v5008 = vunpack.c.l.s4 1983009808
        %v5009 = vunpack.c.0.s8 %v5008
        %v5010 = vlaneseq
        %v5011 = vshrl.u32 %v5010, 7
        %v5012 = vsub.s32 %v5009, %v5011
        %v5013 = vrot.slane %v4999, %v5012
        %v5014 = vcombine.low %v4433, %v4441
        %v5015 = vcombine.high %v4433, %v4441
        %v5017 = vunpack.c.l.s4 1983009808
        %v5018 = vunpack.c.0.s8 %v5017
        %v5019 = vlaneseq
        %v5020 = vshrl.u32 %v5019, 7
        %v5021 = vsub.s32 %v5018, %v5020
        %v5022 = vrot.slane %v5014, %v5021
        %v5024 = vunpack.c.l.s4 1983009808
        %v5025 = vunpack.c.0.s8 %v5024
        %v5026 = vlaneseq
        %v5027 = vshrl.u32 %v5026, 7
        %v5028 = vsub.s32 %v5025, %v5027
        %v5029 = vrot.slane %v5015, %v5028
        %v5030 = vcombine.low %v3708, %v3710
        %v5031 = vcombine.high %v3708, %v3710
        %v5033 = vunpack.c.l.s4 1983009808
        %v5034 = vunpack.c.0.s8 %v5033
        %v5035 = vlaneseq
        %v5036 = vshrl.u32 %v5035, 7
        %v5037 = vsub.s32 %v5034, %v5036
        %v5038 = vrot.slane %v5030, %v5037
        %v5040 = vunpack.c.l.s4 1983009808
        %v5041 = vunpack.c.0.s8 %v5040
        %v5042 = vlaneseq
        %v5043 = vshrl.u32 %v5042, 7
        %v5044 = vsub.s32 %v5041, %v5043
        %v5045 = vrot.slane %v5031, %v5044
        %v5046 = vcombine.low %v4449, %v4457
        %v5047 = vcombine.high %v4449, %v4457
        %v5049 = vunpack.c.l.s4 1983009808
        %v5050 = vunpack.c.0.s8 %v5049
        %v5051 = vlaneseq
        %v5052 = vshrl.u32 %v5051, 7
        %v5053 = vsub.s32 %v5050, %v5052
        %v5054 = vrot.slane %v5046, %v5053
        %v5056 = vunpack.c.l.s4 1983009808
        %v5057 = vunpack.c.0.s8 %v5056
        %v5058 = vlaneseq
        %v5059 = vshrl.u32 %v5058, 7
        %v5060 = vsub.s32 %v5057, %v5059
        %v5061 = vrot.slane %v5047, %v5060
        %v5062 = vcombine.low %v5006, %v5022
        %v5063 = vcombine.high %v5006, %v5022
        %v5065 = vunpack.c.l.s4 1934713408
        %v5066 = vunpack.c.0.s8 %v5065
        %v5067 = vlaneseq
        %v5068 = vshrl.u32 %v5067, 7
        %v5069 = vsub.s32 %v5066, %v5068
        %v5070 = vrot.slane %v5062, %v5069
        %v5072 = vunpack.c.l.s4 1934713408
        %v5073 = vunpack.c.0.s8 %v5072
        %v5074 = vlaneseq
        %v5075 = vshrl.u32 %v5074, 7
        %v5076 = vsub.s32 %v5073, %v5075
        %v5077 = vrot.slane %v5063, %v5076
        %v5078 = vcombine.low %v5013, %v5029
        %v5079 = vcombine.high %v5013, %v5029
        %v5081 = vunpack.c.l.s4 1934713408
        %v5082 = vunpack.c.0.s8 %v5081
        %v5083 = vlaneseq
        %v5084 = vshrl.u32 %v5083, 7
        %v5085 = vsub.s32 %v5082, %v5084
        %v5086 = vrot.slane %v5078, %v5085
        %v5088 = vunpack.c.l.s4 1934713408
        %v5089 = vunpack.c.0.s8 %v5088
        %v5090 = vlaneseq
        %v5091 = vshrl.u32 %v5090, 7
        %v5092 = vsub.s32 %v5089, %v5091
        %v5093 = vrot.slane %v5079, %v5092
        %v5094 = vcombine.low %v5038, %v5054
        %v5095 = vcombine.high %v5038, %v5054
        %v5097 = vunpack.c.l.s4 1934713408
        %v5098 = vunpack.c.0.s8 %v5097
        %v5099 = vlaneseq
        %v5100 = vshrl.u32 %v5099, 7
        %v5101 = vsub.s32 %v5098, %v5100
        %v5102 = vrot.slane %v5094, %v5101
        %v5104 = vunpack.c.l.s4 1934713408
        %v5105 = vunpack.c.0.s8 %v5104
        %v5106 = vlaneseq
        %v5107 = vshrl.u32 %v5106, 7
        %v5108 = vsub.s32 %v5105, %v5107
        %v5109 = vrot.slane %v5095, %v5108
        %v5110 = vcombine.low %v5045, %v5061
        %v5111 = vcombine.high %v5045, %v5061
        %v5113 = vunpack.c.l.s4 1934713408
        %v5114 = vunpack.c.0.s8 %v5113
        %v5115 = vlaneseq
        %v5116 = vshrl.u32 %v5115, 7
        %v5117 = vsub.s32 %v5114, %v5116
        %v5118 = vrot.slane %v5110, %v5117
        %v5120 = vunpack.c.l.s4 1934713408
        %v5121 = vunpack.c.0.s8 %v5120
        %v5122 = vlaneseq
        %v5123 = vshrl.u32 %v5122, 7
        %v5124 = vsub.s32 %v5121, %v5123
        %v5125 = vrot.slane %v5111, %v5124
        %v5126 = vcombine.low %v5070, %v5102
        %v5127 = vcombine.high %v5070, %v5102
        %v5128 = vcombine.low %v5077, %v5109
        %v5129 = vcombine.high %v5077, %v5109
        %v5130 = vcombine.low %v5086, %v5118
        %v5131 = vcombine.high %v5086, %v5118
        %v5132 = vcombine.low %v5093, %v5125
        %v5133 = vcombine.high %v5093, %v5125
        %v5134 = vcombine.low %v3785, %v3787
        %v5135 = vcombine.high %v3785, %v3787
        %v5137 = vunpack.c.l.s4 1983009808
        %v5138 = vunpack.c.0.s8 %v5137
        %v5139 = vlaneseq
        %v5140 = vshrl.u32 %v5139, 7
        %v5141 = vsub.s32 %v5138, %v5140
        %v5142 = vrot.slane %v5134, %v5141
        %v5144 = vunpack.c.l.s4 1983009808
        %v5145 = vunpack.c.0.s8 %v5144
        %v5146 = vlaneseq
        %v5147 = vshrl.u32 %v5146, 7
        %v5148 = vsub.s32 %v5145, %v5147
        %v5149 = vrot.slane %v5135, %v5148
        %v5150 = vcombine.low %v4465, %v4473
        %v5151 = vcombine.high %v4465, %v4473
        %v5153 = vunpack.c.l.s4 1983009808
        %v5154 = vunpack.c.0.s8 %v5153
        %v5155 = vlaneseq
        %v5156 = vshrl.u32 %v5155, 7
        %v5157 = vsub.s32 %v5154, %v5156
        %v5158 = vrot.slane %v5150, %v5157
        %v5160 = vunpack.c.l.s4 1983009808
        %v5161 = vunpack.c.0.s8 %v5160
        %v5162 = vlaneseq
        %v5163 = vshrl.u32 %v5162, 7
        %v5164 = vsub.s32 %v5161, %v5163
        %v5165 = vrot.slane %v5151, %v5164
        %v5166 = vcombine.low %v3862, %v3864
        %v5167 = vcombine.high %v3862, %v3864
        %v5169 = vunpack.c.l.s4 1983009808
        %v5170 = vunpack.c.0.s8 %v5169
        %v5171 = vlaneseq
        %v5172 = vshrl.u32 %v5171, 7
        %v5173 = vsub.s32 %v5170, %v5172
        %v5174 = vrot.slane %v5166, %v5173
        %v5176 = vunpack.c.l.s4 1983009808
        %v5177 = vunpack.c.0.s8 %v5176
        %v5178 = vlaneseq
        %v5179 = vshrl.u32 %v5178, 7
        %v5180 = vsub.s32 %v5177, %v5179
        %v5181 = vrot.slane %v5167, %v5180
        %v5182 = vcombine.low %v4481, %v4489
        %v5183 = vcombine.high %v4481, %v4489
        %v5185 = vunpack.c.l.s4 1983009808
        %v5186 = vunpack.c.0.s8 %v5185
        %v5187 = vlaneseq
        %v5188 = vshrl.u32 %v5187, 7
        %v5189 = vsub.s32 %v5186, %v5188
        %v5190 = vrot.slane %v5182, %v5189
        %v5192 = vunpack.c.l.s4 1983009808
        %v5193 = vunpack.c.0.s8 %v5192
        %v5194 = vlaneseq
        %v5195 = vshrl.u32 %v5194, 7
        %v5196 = vsub.s32 %v5193, %v5195
        %v5197 = vrot.slane %v5183, %v5196
        %v5198 = vcombine.low %v5142, %v5158
        %v5199 = vcombine.high %v5142, %v5158
        %v5201 = vunpack.c.l.s4 1934713408
        %v5202 = vunpack.c.0.s8 %v5201
        %v5203 = vlaneseq
        %v5204 = vshrl.u32 %v5203, 7
        %v5205 = vsub.s32 %v5202, %v5204
        %v5206 = vrot.slane %v5198, %v5205
        %v5208 = vunpack.c.l.s4 1934713408
        %v5209 = vunpack.c.0.s8 %v5208
        %v5210 = vlaneseq
        %v5211 = vshrl.u32 %v5210, 7
        %v5212 = vsub.s32 %v5209, %v5211
        %v5213 = vrot.slane %v5199, %v5212
        %v5214 = vcombine.low %v5149, %v5165
        %v5215 = vcombine.high %v5149, %v5165
        %v5217 = vunpack.c.l.s4 1934713408
        %v5218 = vunpack.c.0.s8 %v5217
        %v5219 = vlaneseq
        %v5220 = vshrl.u32 %v5219, 7
        %v5221 = vsub.s32 %v5218, %v5220
        %v5222 = vrot.slane %v5214, %v5221
        %v5224 = vunpack.c.l.s4 1934713408
        %v5225 = vunpack.c.0.s8 %v5224
        %v5226 = vlaneseq
        %v5227 = vshrl.u32 %v5226, 7
        %v5228 = vsub.s32 %v5225, %v5227
        %v5229 = vrot.slane %v5215, %v5228
        %v5230 = vcombine.low %v5174, %v5190
        %v5231 = vcombine.high %v5174, %v5190
        %v5233 = vunpack.c.l.s4 1934713408
        %v5234 = vunpack.c.0.s8 %v5233
        %v5235 = vlaneseq
        %v5236 = vshrl.u32 %v5235, 7
        %v5237 = vsub.s32 %v5234, %v5236
        %v5238 = vrot.slane %v5230, %v5237
        %v5240 = vunpack.c.l.s4 1934713408
        %v5241 = vunpack.c.0.s8 %v5240
        %v5242 = vlaneseq
        %v5243 = vshrl.u32 %v5242, 7
        %v5244 = vsub.s32 %v5241, %v5243
        %v5245 = vrot.slane %v5231, %v5244
        %v5246 = vcombine.low %v5181, %v5197
        %v5247 = vcombine.high %v5181, %v5197
        %v5249 = vunpack.c.l.s4 1934713408
        %v5250 = vunpack.c.0.s8 %v5249
        %v5251 = vlaneseq
        %v5252 = vshrl.u32 %v5251, 7
        %v5253 = vsub.s32 %v5250, %v5252
        %v5254 = vrot.slane %v5246, %v5253
        %v5256 = vunpack.c.l.s4 1934713408
        %v5257 = vunpack.c.0.s8 %v5256
        %v5258 = vlaneseq
        %v5259 = vshrl.u32 %v5258, 7
        %v5260 = vsub.s32 %v5257, %v5259
        %v5261 = vrot.slane %v5247, %v5260
        %v5262 = vcombine.low %v5206, %v5238
        %v5263 = vcombine.high %v5206, %v5238
        %v5264 = vcombine.low %v5213, %v5245
        %v5265 = vcombine.high %v5213, %v5245
        %v5266 = vcombine.low %v5222, %v5254
        %v5267 = vcombine.high %v5222, %v5254
        %v5268 = vcombine.low %v5229, %v5261
        %v5269 = vcombine.high %v5229, %v5261
        %v5270 = vcombine.low %v3939, %v3941
        %v5271 = vcombine.high %v3939, %v3941
        %v5273 = vunpack.c.l.s4 1983009808
        %v5274 = vunpack.c.0.s8 %v5273
        %v5275 = vlaneseq
        %v5276 = vshrl.u32 %v5275, 7
        %v5277 = vsub.s32 %v5274, %v5276
        %v5278 = vrot.slane %v5270, %v5277
        %v5280 = vunpack.c.l.s4 1983009808
        %v5281 = vunpack.c.0.s8 %v5280
        %v5282 = vlaneseq
        %v5283 = vshrl.u32 %v5282, 7
        %v5284 = vsub.s32 %v5281, %v5283
        %v5285 = vrot.slane %v5271, %v5284
        %v5286 = vcombine.low %v4497, %v4505
        %v5287 = vcombine.high %v4497, %v4505
        %v5289 = vunpack.c.l.s4 1983009808
        %v5290 = vunpack.c.0.s8 %v5289
        %v5291 = vlaneseq
        %v5292 = vshrl.u32 %v5291, 7
        %v5293 = vsub.s32 %v5290, %v5292
        %v5294 = vrot.slane %v5286, %v5293
        %v5296 = vunpack.c.l.s4 1983009808
        %v5297 = vunpack.c.0.s8 %v5296
        %v5298 = vlaneseq
        %v5299 = vshrl.u32 %v5298, 7
        %v5300 = vsub.s32 %v5297, %v5299
        %v5301 = vrot.slane %v5287, %v5300
        %v5302 = vcombine.low %v4016, %v4018
        %v5303 = vcombine.high %v4016, %v4018
        %v5305 = vunpack.c.l.s4 1983009808
        %v5306 = vunpack.c.0.s8 %v5305
        %v5307 = vlaneseq
        %v5308 = vshrl.u32 %v5307, 7
        %v5309 = vsub.s32 %v5306, %v5308
        %v5310 = vrot.slane %v5302, %v5309
        %v5312 = vunpack.c.l.s4 1983009808
        %v5313 = vunpack.c.0.s8 %v5312
        %v5314 = vlaneseq
        %v5315 = vshrl.u32 %v5314, 7
        %v5316 = vsub.s32 %v5313, %v5315
        %v5317 = vrot.slane %v5303, %v5316
        %v5318 = vcombine.low %v4513, %v4521
        %v5319 = vcombine.high %v4513, %v4521
        %v5321 = vunpack.c.l.s4 1983009808
        %v5322 = vunpack.c.0.s8 %v5321
        %v5323 = vlaneseq
        %v5324 = vshrl.u32 %v5323, 7
        %v5325 = vsub.s32 %v5322, %v5324
        %v5326 = vrot.slane %v5318, %v5325
        %v5328 = vunpack.c.l.s4 1983009808
        %v5329 = vunpack.c.0.s8 %v5328
        %v5330 = vlaneseq
        %v5331 = vshrl.u32 %v5330, 7
        %v5332 = vsub.s32 %v5329, %v5331
        %v5333 = vrot.slane %v5319, %v5332
        %v5334 = vcombine.low %v5278, %v5294
        %v5335 = vcombine.high %v5278, %v5294
        %v5337 = vunpack.c.l.s4 1934713408
        %v5338 = vunpack.c.0.s8 %v5337
        %v5339 = vlaneseq
        %v5340 = vshrl.u32 %v5339, 7
        %v5341 = vsub.s32 %v5338, %v5340
        %v5342 = vrot.slane %v5334, %v5341
        %v5344 = vunpack.c.l.s4 1934713408
        %v5345 = vunpack.c.0.s8 %v5344
        %v5346 = vlaneseq
        %v5347 = vshrl.u32 %v5346, 7
        %v5348 = vsub.s32 %v5345, %v5347
        %v5349 = vrot.slane %v5335, %v5348
        %v5350 = vcombine.low %v5285, %v5301
        %v5351 = vcombine.high %v5285, %v5301
        %v5353 = vunpack.c.l.s4 1934713408
        %v5354 = vunpack.c.0.s8 %v5353
        %v5355 = vlaneseq
        %v5356 = vshrl.u32 %v5355, 7
        %v5357 = vsub.s32 %v5354, %v5356
        %v5358 = vrot.slane %v5350, %v5357
        %v5360 = vunpack.c.l.s4 1934713408
        %v5361 = vunpack.c.0.s8 %v5360
        %v5362 = vlaneseq
        %v5363 = vshrl.u32 %v5362, 7
        %v5364 = vsub.s32 %v5361, %v5363
        %v5365 = vrot.slane %v5351, %v5364
        %v5366 = vcombine.low %v5310, %v5326
        %v5367 = vcombine.high %v5310, %v5326
        %v5369 = vunpack.c.l.s4 1934713408
        %v5370 = vunpack.c.0.s8 %v5369
        %v5371 = vlaneseq
        %v5372 = vshrl.u32 %v5371, 7
        %v5373 = vsub.s32 %v5370, %v5372
        %v5374 = vrot.slane %v5366, %v5373
        %v5376 = vunpack.c.l.s4 1934713408
        %v5377 = vunpack.c.0.s8 %v5376
        %v5378 = vlaneseq
        %v5379 = vshrl.u32 %v5378, 7
        %v5380 = vsub.s32 %v5377, %v5379
        %v5381 = vrot.slane %v5367, %v5380
        %v5382 = vcombine.low %v5317, %v5333
        %v5383 = vcombine.high %v5317, %v5333
        %v5385 = vunpack.c.l.s4 1934713408
        %v5386 = vunpack.c.0.s8 %v5385
        %v5387 = vlaneseq
        %v5388 = vshrl.u32 %v5387, 7
        %v5389 = vsub.s32 %v5386, %v5388
        %v5390 = vrot.slane %v5382, %v5389
        %v5392 = vunpack.c.l.s4 1934713408
        %v5393 = vunpack.c.0.s8 %v5392
        %v5394 = vlaneseq
        %v5395 = vshrl.u32 %v5394, 7
        %v5396 = vsub.s32 %v5393, %v5395
        %v5397 = vrot.slane %v5383, %v5396
        %v5398 = vcombine.low %v5342, %v5374
        %v5399 = vcombine.high %v5342, %v5374
        %v5400 = vcombine.low %v5349, %v5381
        %v5401 = vcombine.high %v5349, %v5381
        %v5402 = vcombine.low %v5358, %v5390
        %v5403 = vcombine.high %v5358, %v5390
        %v5404 = vcombine.low %v5365, %v5397
        %v5405 = vcombine.high %v5365, %v5397
        %v5406 = vcombine.low %v4093, %v4095
        %v5407 = vcombine.high %v4093, %v4095
        %v5409 = vunpack.c.l.s4 1983009808
        %v5410 = vunpack.c.0.s8 %v5409
        %v5411 = vlaneseq
        %v5412 = vshrl.u32 %v5411, 7
        %v5413 = vsub.s32 %v5410, %v5412
        %v5414 = vrot.slane %v5406, %v5413
        %v5416 = vunpack.c.l.s4 1983009808
        %v5417 = vunpack.c.0.s8 %v5416
        %v5418 = vlaneseq
        %v5419 = vshrl.u32 %v5418, 7
        %v5420 = vsub.s32 %v5417, %v5419
        %v5421 = vrot.slane %v5407, %v5420
        %v5422 = vcombine.low %v4529, %v4537
        %v5423 = vcombine.high %v4529, %v4537
        %v5425 = vunpack.c.l.s4 1983009808
        %v5426 = vunpack.c.0.s8 %v5425
        %v5427 = vlaneseq
        %v5428 = vshrl.u32 %v5427, 7
        %v5429 = vsub.s32 %v5426, %v5428
        %v5430 = vrot.slane %v5422, %v5429
        %v5432 = vunpack.c.l.s4 1983009808
        %v5433 = vunpack.c.0.s8 %v5432
        %v5434 = vlaneseq
        %v5435 = vshrl.u32 %v5434, 7
        %v5436 = vsub.s32 %v5433, %v5435
        %v5437 = vrot.slane %v5423, %v5436
        %v5438 = vcombine.low %v4170, %v4172
        %v5439 = vcombine.high %v4170, %v4172
        %v5441 = vunpack.c.l.s4 1983009808
        %v5442 = vunpack.c.0.s8 %v5441
        %v5443 = vlaneseq
        %v5444 = vshrl.u32 %v5443, 7
        %v5445 = vsub.s32 %v5442, %v5444
        %v5446 = vrot.slane %v5438, %v5445
        %v5448 = vunpack.c.l.s4 1983009808
        %v5449 = vunpack.c.0.s8 %v5448
        %v5450 = vlaneseq
        %v5451 = vshrl.u32 %v5450, 7
        %v5452 = vsub.s32 %v5449, %v5451
        %v5453 = vrot.slane %v5439, %v5452
        %v5454 = vcombine.low %v4545, %v4553
        %v5455 = vcombine.high %v4545, %v4553
        %v5457 = vunpack.c.l.s4 1983009808
        %v5458 = vunpack.c.0.s8 %v5457
        %v5459 = vlaneseq
        %v5460 = vshrl.u32 %v5459, 7
        %v5461 = vsub.s32 %v5458, %v5460
        %v5462 = vrot.slane %v5454, %v5461
        %v5464 = vunpack.c.l.s4 1983009808
        %v5465 = vunpack.c.0.s8 %v5464
        %v5466 = vlaneseq
        %v5467 = vshrl.u32 %v5466, 7
        %v5468 = vsub.s32 %v5465, %v5467
        %v5469 = vrot.slane %v5455, %v5468
        %v5470 = vcombine.low %v5414, %v5430
        %v5471 = vcombine.high %v5414, %v5430
        %v5473 = vunpack.c.l.s4 1934713408
        %v5474 = vunpack.c.0.s8 %v5473
        %v5475 = vlaneseq
        %v5476 = vshrl.u32 %v5475, 7
        %v5477 = vsub.s32 %v5474, %v5476
        %v5478 = vrot.slane %v5470, %v5477
        %v5480 = vunpack.c.l.s4 1934713408
        %v5481 = vunpack.c.0.s8 %v5480
        %v5482 = vlaneseq
        %v5483 = vshrl.u32 %v5482, 7
        %v5484 = vsub.s32 %v5481, %v5483
        %v5485 = vrot.slane %v5471, %v5484
        %v5486 = vcombine.low %v5421, %v5437
        %v5487 = vcombine.high %v5421, %v5437
        %v5489 = vunpack.c.l.s4 1934713408
        %v5490 = vunpack.c.0.s8 %v5489
        %v5491 = vlaneseq
        %v5492 = vshrl.u32 %v5491, 7
        %v5493 = vsub.s32 %v5490, %v5492
        %v5494 = vrot.slane %v5486, %v5493
        %v5496 = vunpack.c.l.s4 1934713408
        %v5497 = vunpack.c.0.s8 %v5496
        %v5498 = vlaneseq
        %v5499 = vshrl.u32 %v5498, 7
        %v5500 = vsub.s32 %v5497, %v5499
        %v5501 = vrot.slane %v5487, %v5500
        %v5502 = vcombine.low %v5446, %v5462
        %v5503 = vcombine.high %v5446, %v5462
        %v5505 = vunpack.c.l.s4 1934713408
        %v5506 = vunpack.c.0.s8 %v5505
        %v5507 = vlaneseq
        %v5508 = vshrl.u32 %v5507, 7
        %v5509 = vsub.s32 %v5506, %v5508
        %v5510 = vrot.slane %v5502, %v5509
        %v5512 = vunpack.c.l.s4 1934713408
        %v5513 = vunpack.c.0.s8 %v5512
        %v5514 = vlaneseq
        %v5515 = vshrl.u32 %v5514, 7
        %v5516 = vsub.s32 %v5513, %v5515
        %v5517 = vrot.slane %v5503, %v5516
        %v5518 = vcombine.low %v5453, %v5469
        %v5519 = vcombine.high %v5453, %v5469
        %v5521 = vunpack.c.l.s4 1934713408
        %v5522 = vunpack.c.0.s8 %v5521
        %v5523 = vlaneseq
        %v5524 = vshrl.u32 %v5523, 7
        %v5525 = vsub.s32 %v5522, %v5524
        %v5526 = vrot.slane %v5518, %v5525
        %v5528 = vunpack.c.l.s4 1934713408
        %v5529 = vunpack.c.0.s8 %v5528
        %v5530 = vlaneseq
        %v5531 = vshrl.u32 %v5530, 7
        %v5532 = vsub.s32 %v5529, %v5531
        %v5533 = vrot.slane %v5519, %v5532
        %v5534 = vcombine.low %v5478, %v5510
        %v5535 = vcombine.high %v5478, %v5510
        %v5536 = vcombine.low %v5485, %v5517
        %v5537 = vcombine.high %v5485, %v5517
        %v5538 = vcombine.low %v5494, %v5526
        %v5539 = vcombine.high %v5494, %v5526
        %v5540 = vcombine.low %v5501, %v5533
        %v5541 = vcombine.high %v5501, %v5533
        %v5542 = vcombine.low %v4247, %v4249
        %v5543 = vcombine.high %v4247, %v4249
        %v5545 = vunpack.c.l.s4 1983009808
        %v5546 = vunpack.c.0.s8 %v5545
        %v5547 = vlaneseq
        %v5548 = vshrl.u32 %v5547, 7
        %v5549 = vsub.s32 %v5546, %v5548
        %v5550 = vrot.slane %v5542, %v5549
        %v5552 = vunpack.c.l.s4 1983009808
        %v5553 = vunpack.c.0.s8 %v5552
        %v5554 = vlaneseq
        %v5555 = vshrl.u32 %v5554, 7
        %v5556 = vsub.s32 %v5553, %v5555
        %v5557 = vrot.slane %v5543, %v5556
        %v5558 = vcombine.low %v4561, %v4569
        %v5559 = vcombine.high %v4561, %v4569
        %v5561 = vunpack.c.l.s4 1983009808
        %v5562 = vunpack.c.0.s8 %v5561
        %v5563 = vlaneseq
        %v5564 = vshrl.u32 %v5563, 7
        %v5565 = vsub.s32 %v5562, %v5564
        %v5566 = vrot.slane %v5558, %v5565
        %v5568 = vunpack.c.l.s4 1983009808
        %v5569 = vunpack.c.0.s8 %v5568
        %v5570 = vlaneseq
        %v5571 = vshrl.u32 %v5570, 7
        %v5572 = vsub.s32 %v5569, %v5571
        %v5573 = vrot.slane %v5559, %v5572
        %v5574 = vcombine.low %v4324, %v4326
        %v5575 = vcombine.high %v4324, %v4326
        %v5577 = vunpack.c.l.s4 1983009808
        %v5578 = vunpack.c.0.s8 %v5577
        %v5579 = vlaneseq
        %v5580 = vshrl.u32 %v5579, 7
        %v5581 = vsub.s32 %v5578, %v5580
        %v5582 = vrot.slane %v5574, %v5581
        %v5584 = vunpack.c.l.s4 1983009808
        %v5585 = vunpack.c.0.s8 %v5584
        %v5586 = vlaneseq
        %v5587 = vshrl.u32 %v5586, 7
        %v5588 = vsub.s32 %v5585, %v5587
        %v5589 = vrot.slane %v5575, %v5588
        %v5590 = vcombine.low %v4577, %v4585
        %v5591 = vcombine.high %v4577, %v4585
        %v5593 = vunpack.c.l.s4 1983009808
        %v5594 = vunpack.c.0.s8 %v5593
        %v5595 = vlaneseq
        %v5596 = vshrl.u32 %v5595, 7
        %v5597 = vsub.s32 %v5594, %v5596
        %v5598 = vrot.slane %v5590, %v5597
        %v5600 = vunpack.c.l.s4 1983009808
        %v5601 = vunpack.c.0.s8 %v5600
        %v5602 = vlaneseq
        %v5603 = vshrl.u32 %v5602, 7
        %v5604 = vsub.s32 %v5601, %v5603
        %v5605 = vrot.slane %v5591, %v5604
        %v5606 = vcombine.low %v5550, %v5566
        %v5607 = vcombine.high %v5550, %v5566
        %v5609 = vunpack.c.l.s4 1934713408
        %v5610 = vunpack.c.0.s8 %v5609
        %v5611 = vlaneseq
        %v5612 = vshrl.u32 %v5611, 7
        %v5613 = vsub.s32 %v5610, %v5612
        %v5614 = vrot.slane %v5606, %v5613
        %v5616 = vunpack.c.l.s4 1934713408
        %v5617 = vunpack.c.0.s8 %v5616
        %v5618 = vlaneseq
        %v5619 = vshrl.u32 %v5618, 7
        %v5620 = vsub.s32 %v5617, %v5619
        %v5621 = vrot.slane %v5607, %v5620
        %v5622 = vcombine.low %v5557, %v5573
        %v5623 = vcombine.high %v5557, %v5573
        %v5625 = vunpack.c.l.s4 1934713408
        %v5626 = vunpack.c.0.s8 %v5625
        %v5627 = vlaneseq
        %v5628 = vshrl.u32 %v5627, 7
        %v5629 = vsub.s32 %v5626, %v5628
        %v5630 = vrot.slane %v5622, %v5629
        %v5632 = vunpack.c.l.s4 1934713408
        %v5633 = vunpack.c.0.s8 %v5632
        %v5634 = vlaneseq
        %v5635 = vshrl.u32 %v5634, 7
        %v5636 = vsub.s32 %v5633, %v5635
        %v5637 = vrot.slane %v5623, %v5636
        %v5638 = vcombine.low %v5582, %v5598
        %v5639 = vcombine.high %v5582, %v5598
        %v5641 = vunpack.c.l.s4 1934713408
        %v5642 = vunpack.c.0.s8 %v5641
        %v5643 = vlaneseq
        %v5644 = vshrl.u32 %v5643, 7
        %v5645 = vsub.s32 %v5642, %v5644
        %v5646 = vrot.slane %v5638, %v5645
        %v5648 = vunpack.c.l.s4 1934713408
        %v5649 = vunpack.c.0.s8 %v5648
        %v5650 = vlaneseq
        %v5651 = vshrl.u32 %v5650, 7
        %v5652 = vsub.s32 %v5649, %v5651
        %v5653 = vrot.slane %v5639, %v5652
        %v5654 = vcombine.low %v5589, %v5605
        %v5655 = vcombine.high %v5589, %v5605
        %v5657 = vunpack.c.l.s4 1934713408
        %v5658 = vunpack.c.0.s8 %v5657
        %v5659 = vlaneseq
        %v5660 = vshrl.u32 %v5659, 7
        %v5661 = vsub.s32 %v5658, %v5660
        %v5662 = vrot.slane %v5654, %v5661
        %v5664 = vunpack.c.l.s4 1934713408
        %v5665 = vunpack.c.0.s8 %v5664
        %v5666 = vlaneseq
        %v5667 = vshrl.u32 %v5666, 7
        %v5668 = vsub.s32 %v5665, %v5667
        %v5669 = vrot.slane %v5655, %v5668
        %v5670 = vcombine.low %v5614, %v5646
        %v5671 = vcombine.high %v5614, %v5646
        %v5672 = vcombine.low %v5621, %v5653
        %v5673 = vcombine.high %v5621, %v5653
        %v5674 = vcombine.low %v5630, %v5662
        %v5675 = vcombine.high %v5630, %v5662
        %v5676 = vcombine.low %v5637, %v5669
        %v5677 = vcombine.high %v5637, %v5669
        %v5678 = vcombine.low %v3175, %v3177
        %v5679 = vcombine.high %v3175, %v3177
        %v5681 = vunpack.c.l.s4 1983009808
        %v5682 = vunpack.c.0.s8 %v5681
        %v5683 = vlaneseq
        %v5684 = vshrl.u32 %v5683, 7
        %v5685 = vsub.s32 %v5682, %v5684
        %v5686 = vrot.slane %v5678, %v5685
        %v5688 = vunpack.c.l.s4 1983009808
        %v5689 = vunpack.c.0.s8 %v5688
        %v5690 = vlaneseq
        %v5691 = vshrl.u32 %v5690, 7
        %v5692 = vsub.s32 %v5689, %v5691
        %v5693 = vrot.slane %v5679, %v5692
        %v5694 = vcombine.low %v4339, %v4347
        %v5695 = vcombine.high %v4339, %v4347
        %v5697 = vunpack.c.l.s4 1983009808
        %v5698 = vunpack.c.0.s8 %v5697
        %v5699 = vlaneseq
        %v5700 = vshrl.u32 %v5699, 7
        %v5701 = vsub.s32 %v5698, %v5700
        %v5702 = vrot.slane %v5694, %v5701
        %v5704 = vunpack.c.l.s4 1983009808
        %v5705 = vunpack.c.0.s8 %v5704
        %v5706 = vlaneseq
        %v5707 = vshrl.u32 %v5706, 7
        %v5708 = vsub.s32 %v5705, %v5707
        %v5709 = vrot.slane %v5695, %v5708
        %v5710 = vcombine.low %v3252, %v3254
        %v5711 = vcombine.high %v3252, %v3254
        %v5713 = vunpack.c.l.s4 1983009808
        %v5714 = vunpack.c.0.s8 %v5713
        %v5715 = vlaneseq
        %v5716 = vshrl.u32 %v5715, 7
        %v5717 = vsub.s32 %v5714, %v5716
        %v5718 = vrot.slane %v5710, %v5717
        %v5720 = vunpack.c.l.s4 1983009808
        %v5721 = vunpack.c.0.s8 %v5720
        %v5722 = vlaneseq
        %v5723 = vshrl.u32 %v5722, 7
        %v5724 = vsub.s32 %v5721, %v5723
        %v5725 = vrot.slane %v5711, %v5724
        %v5726 = vcombine.low %v4355, %v4363
        %v5727 = vcombine.high %v4355, %v4363
        %v5729 = vunpack.c.l.s4 1983009808
        %v5730 = vunpack.c.0.s8 %v5729
        %v5731 = vlaneseq
        %v5732 = vshrl.u32 %v5731, 7
        %v5733 = vsub.s32 %v5730, %v5732
        %v5734 = vrot.slane %v5726, %v5733
        %v5736 = vunpack.c.l.s4 1983009808
        %v5737 = vunpack.c.0.s8 %v5736
        %v5738 = vlaneseq
        %v5739 = vshrl.u32 %v5738, 7
        %v5740 = vsub.s32 %v5737, %v5739
        %v5741 = vrot.slane %v5727, %v5740
        %v5742 = vcombine.low %v5686, %v5702
        %v5743 = vcombine.high %v5686, %v5702
        %v5745 = vunpack.c.l.s4 1934713408
        %v5746 = vunpack.c.0.s8 %v5745
        %v5747 = vlaneseq
        %v5748 = vshrl.u32 %v5747, 7
        %v5749 = vsub.s32 %v5746, %v5748
        %v5750 = vrot.slane %v5742, %v5749
        %v5752 = vunpack.c.l.s4 1934713408
        %v5753 = vunpack.c.0.s8 %v5752
        %v5754 = vlaneseq
        %v5755 = vshrl.u32 %v5754, 7
        %v5756 = vsub.s32 %v5753, %v5755
        %v5757 = vrot.slane %v5743, %v5756
        %v5758 = vcombine.low %v5693, %v5709
        %v5759 = vcombine.high %v5693, %v5709
        %v5761 = vunpack.c.l.s4 1934713408
        %v5762 = vunpack.c.0.s8 %v5761
        %v5763 = vlaneseq
        %v5764 = vshrl.u32 %v5763, 7
        %v5765 = vsub.s32 %v5762, %v5764
        %v5766 = vrot.slane %v5758, %v5765
        %v5768 = vunpack.c.l.s4 1934713408
        %v5769 = vunpack.c.0.s8 %v5768
        %v5770 = vlaneseq
        %v5771 = vshrl.u32 %v5770, 7
        %v5772 = vsub.s32 %v5769, %v5771
        %v5773 = vrot.slane %v5759, %v5772
        %v5774 = vcombine.low %v5718, %v5734
        %v5775 = vcombine.high %v5718, %v5734
        %v5777 = vunpack.c.l.s4 1934713408
        %v5778 = vunpack.c.0.s8 %v5777
        %v5779 = vlaneseq
        %v5780 = vshrl.u32 %v5779, 7
        %v5781 = vsub.s32 %v5778, %v5780
        %v5782 = vrot.slane %v5774, %v5781
        %v5784 = vunpack.c.l.s4 1934713408
        %v5785 = vunpack.c.0.s8 %v5784
        %v5786 = vlaneseq
        %v5787 = vshrl.u32 %v5786, 7
        %v5788 = vsub.s32 %v5785, %v5787
        %v5789 = vrot.slane %v5775, %v5788
        %v5790 = vcombine.low %v5725, %v5741
        %v5791 = vcombine.high %v5725, %v5741
        %v5793 = vunpack.c.l.s4 1934713408
        %v5794 = vunpack.c.0.s8 %v5793
        %v5795 = vlaneseq
        %v5796 = vshrl.u32 %v5795, 7
        %v5797 = vsub.s32 %v5794, %v5796
        %v5798 = vrot.slane %v5790, %v5797
        %v5800 = vunpack.c.l.s4 1934713408
        %v5801 = vunpack.c.0.s8 %v5800
        %v5802 = vlaneseq
        %v5803 = vshrl.u32 %v5802, 7
        %v5804 = vsub.s32 %v5801, %v5803
        %v5805 = vrot.slane %v5791, %v5804
        %v5806 = vcombine.low %v5750, %v5782
        %v5807 = vcombine.high %v5750, %v5782
        %v5808 = vcombine.low %v5757, %v5789
        %v5809 = vcombine.high %v5757, %v5789
        %v5810 = vcombine.low %v5766, %v5798
        %v5811 = vcombine.high %v5766, %v5798
        %v5812 = vcombine.low %v5773, %v5805
        %v5813 = vcombine.high %v5773, %v5805
        %v5814 = vcombine.low %v3329, %v3331
        %v5815 = vcombine.high %v3329, %v3331
        %v5817 = vunpack.c.l.s4 1983009808
        %v5818 = vunpack.c.0.s8 %v5817
        %v5819 = vlaneseq
        %v5820 = vshrl.u32 %v5819, 7
        %v5821 = vsub.s32 %v5818, %v5820
        %v5822 = vrot.slane %v5814, %v5821
        %v5824 = vunpack.c.l.s4 1983009808
        %v5825 = vunpack.c.0.s8 %v5824
        %v5826 = vlaneseq
        %v5827 = vshrl.u32 %v5826, 7
        %v5828 = vsub.s32 %v5825, %v5827
        %v5829 = vrot.slane %v5815, %v5828
        %v5830 = vcombine.low %v4371, %v4379
        %v5831 = vcombine.high %v4371, %v4379
        %v5833 = vunpack.c.l.s4 1983009808
        %v5834 = vunpack.c.0.s8 %v5833
        %v5835 = vlaneseq
        %v5836 = vshrl.u32 %v5835, 7
        %v5837 = vsub.s32 %v5834, %v5836
        %v5838 = vrot.slane %v5830, %v5837
        %v5840 = vunpack.c.l.s4 1983009808
        %v5841 = vunpack.c.0.s8 %v5840
        %v5842 = vlaneseq
        %v5843 = vshrl.u32 %v5842, 7
        %v5844 = vsub.s32 %v5841, %v5843
        %v5845 = vrot.slane %v5831, %v5844
        %v5846 = vcombine.low %v3406, %v3408
        %v5847 = vcombine.high %v3406, %v3408
        %v5849 = vunpack.c.l.s4 1983009808
        %v5850 = vunpack.c.0.s8 %v5849
        %v5851 = vlaneseq
        %v5852 = vshrl.u32 %v5851, 7
        %v5853 = vsub.s32 %v5850, %v5852
        %v5854 = vrot.slane %v5846, %v5853
        %v5856 = vunpack.c.l.s4 1983009808
        %v5857 = vunpack.c.0.s8 %v5856
        %v5858 = vlaneseq
        %v5859 = vshrl.u32 %v5858, 7
        %v5860 = vsub.s32 %v5857, %v5859
        %v5861 = vrot.slane %v5847, %v5860
        %v5862 = vcombine.low %v4387, %v4395
        %v5863 = vcombine.high %v4387, %v4395
        %v5865 = vunpack.c.l.s4 1983009808
        %v5866 = vunpack.c.0.s8 %v5865
        %v5867 = vlaneseq
        %v5868 = vshrl.u32 %v5867, 7
        %v5869 = vsub.s32 %v5866, %v5868
        %v5870 = vrot.slane %v5862, %v5869
        %v5872 = vunpack.c.l.s4 1983009808
        %v5873 = vunpack.c.0.s8 %v5872
        %v5874 = vlaneseq
        %v5875 = vshrl.u32 %v5874, 7
        %v5876 = vsub.s32 %v5873, %v5875
        %v5877 = vrot.slane %v5863, %v5876
        %v5878 = vcombine.low %v5822, %v5838
        %v5879 = vcombine.high %v5822, %v5838
        %v5881 = vunpack.c.l.s4 1934713408
        %v5882 = vunpack.c.0.s8 %v5881
        %v5883 = vlaneseq
        %v5884 = vshrl.u32 %v5883, 7
        %v5885 = vsub.s32 %v5882, %v5884
        %v5886 = vrot.slane %v5878, %v5885
        %v5888 = vunpack.c.l.s4 1934713408
        %v5889 = vunpack.c.0.s8 %v5888
        %v5890 = vlaneseq
        %v5891 = vshrl.u32 %v5890, 7
        %v5892 = vsub.s32 %v5889, %v5891
        %v5893 = vrot.slane %v5879, %v5892
        %v5894 = vcombine.low %v5829, %v5845
        %v5895 = vcombine.high %v5829, %v5845
        %v5897 = vunpack.c.l.s4 1934713408
        %v5898 = vunpack.c.0.s8 %v5897
        %v5899 = vlaneseq
        %v5900 = vshrl.u32 %v5899, 7
        %v5901 = vsub.s32 %v5898, %v5900
        %v5902 = vrot.slane %v5894, %v5901
        %v5904 = vunpack.c.l.s4 1934713408
        %v5905 = vunpack.c.0.s8 %v5904
        %v5906 = vlaneseq
        %v5907 = vshrl.u32 %v5906, 7
        %v5908 = vsub.s32 %v5905, %v5907
        %v5909 = vrot.slane %v5895, %v5908
        %v5910 = vcombine.low %v5854, %v5870
        %v5911 = vcombine.high %v5854, %v5870
        %v5913 = vunpack.c.l.s4 1934713408
        %v5914 = vunpack.c.0.s8 %v5913
        %v5915 = vlaneseq
        %v5916 = vshrl.u32 %v5915, 7
        %v5917 = vsub.s32 %v5914, %v5916
        %v5918 = vrot.slane %v5910, %v5917
        %v5920 = vunpack.c.l.s4 1934713408
        %v5921 = vunpack.c.0.s8 %v5920
        %v5922 = vlaneseq
        %v5923 = vshrl.u32 %v5922, 7
        %v5924 = vsub.s32 %v5921, %v5923
        %v5925 = vrot.slane %v5911, %v5924
        %v5926 = vcombine.low %v5861, %v5877
        %v5927 = vcombine.high %v5861, %v5877
        %v5929 = vunpack.c.l.s4 1934713408
        %v5930 = vunpack.c.0.s8 %v5929
        %v5931 = vlaneseq
        %v5932 = vshrl.u32 %v5931, 7
        %v5933 = vsub.s32 %v5930, %v5932
        %v5934 = vrot.slane %v5926, %v5933
        %v5936 = vunpack.c.l.s4 1934713408
        %v5937 = vunpack.c.0.s8 %v5936
        %v5938 = vlaneseq
        %v5939 = vshrl.u32 %v5938, 7
        %v5940 = vsub.s32 %v5937, %v5939
        %v5941 = vrot.slane %v5927, %v5940
        %v5942 = vcombine.low %v5886, %v5918
        %v5943 = vcombine.high %v5886, %v5918
        %v5944 = vcombine.low %v5893, %v5925
        %v5945 = vcombine.high %v5893, %v5925
        %v5946 = vcombine.low %v5902, %v5934
        %v5947 = vcombine.high %v5902, %v5934
        %v5948 = vcombine.low %v5909, %v5941
        %v5949 = vcombine.high %v5909, %v5941
        %v5950 = vcombine.low %v3483, %v3485
        %v5951 = vcombine.high %v3483, %v3485
        %v5953 = vunpack.c.l.s4 1983009808
        %v5954 = vunpack.c.0.s8 %v5953
        %v5955 = vlaneseq
        %v5956 = vshrl.u32 %v5955, 7
        %v5957 = vsub.s32 %v5954, %v5956
        %v5958 = vrot.slane %v5950, %v5957
        %v5960 = vunpack.c.l.s4 1983009808
        %v5961 = vunpack.c.0.s8 %v5960
        %v5962 = vlaneseq
        %v5963 = vshrl.u32 %v5962, 7
        %v5964 = vsub.s32 %v5961, %v5963
        %v5965 = vrot.slane %v5951, %v5964
        %v5966 = vcombine.low %v4403, %v4411
        %v5967 = vcombine.high %v4403, %v4411
        %v5969 = vunpack.c.l.s4 1983009808
        %v5970 = vunpack.c.0.s8 %v5969
        %v5971 = vlaneseq
        %v5972 = vshrl.u32 %v5971, 7
        %v5973 = vsub.s32 %v5970, %v5972
        %v5974 = vrot.slane %v5966, %v5973
        %v5976 = vunpack.c.l.s4 1983009808
        %v5977 = vunpack.c.0.s8 %v5976
        %v5978 = vlaneseq
        %v5979 = vshrl.u32 %v5978, 7
        %v5980 = vsub.s32 %v5977, %v5979
        %v5981 = vrot.slane %v5967, %v5980
        %v5982 = vcombine.low %v3560, %v3562
        %v5983 = vcombine.high %v3560, %v3562
        %v5985 = vunpack.c.l.s4 1983009808
        %v5986 = vunpack.c.0.s8 %v5985
        %v5987 = vlaneseq
        %v5988 = vshrl.u32 %v5987, 7
        %v5989 = vsub.s32 %v5986, %v5988
        %v5990 = vrot.slane %v5982, %v5989
        %v5992 = vunpack.c.l.s4 1983009808
        %v5993 = vunpack.c.0.s8 %v5992
        %v5994 = vlaneseq
        %v5995 = vshrl.u32 %v5994, 7
        %v5996 = vsub.s32 %v5993, %v5995
        %v5997 = vrot.slane %v5983, %v5996
        %v5998 = vcombine.low %v4419, %v4427
        %v5999 = vcombine.high %v4419, %v4427
        %v6001 = vunpack.c.l.s4 1983009808
        %v6002 = vunpack.c.0.s8 %v6001
        %v6003 = vlaneseq
        %v6004 = vshrl.u32 %v6003, 7
        %v6005 = vsub.s32 %v6002, %v6004
        %v6006 = vrot.slane %v5998, %v6005
        %v6008 = vunpack.c.l.s4 1983009808
        %v6009 = vunpack.c.0.s8 %v6008
        %v6010 = vlaneseq
        %v6011 = vshrl.u32 %v6010, 7
        %v6012 = vsub.s32 %v6009, %v6011
        %v6013 = vrot.slane %v5999, %v6012
        %v6014 = vcombine.low %v5958, %v5974
        %v6015 = vcombine.high %v5958, %v5974
        %v6017 = vunpack.c.l.s4 1934713408
        %v6018 = vunpack.c.0.s8 %v6017
        %v6019 = vlaneseq
        %v6020 = vshrl.u32 %v6019, 7
        %v6021 = vsub.s32 %v6018, %v6020
        %v6022 = vrot.slane %v6014, %v6021
        %v6024 = vunpack.c.l.s4 1934713408
        %v6025 = vunpack.c.0.s8 %v6024
        %v6026 = vlaneseq
        %v6027 = vshrl.u32 %v6026, 7
        %v6028 = vsub.s32 %v6025, %v6027
        %v6029 = vrot.slane %v6015, %v6028
        %v6030 = vcombine.low %v5965, %v5981
        %v6031 = vcombine.high %v5965, %v5981
        %v6033 = vunpack.c.l.s4 1934713408
        %v6034 = vunpack.c.0.s8 %v6033
        %v6035 = vlaneseq
        %v6036 = vshrl.u32 %v6035, 7
        %v6037 = vsub.s32 %v6034, %v6036
        %v6038 = vrot.slane %v6030, %v6037
        %v6040 = vunpack.c.l.s4 1934713408
        %v6041 = vunpack.c.0.s8 %v6040
        %v6042 = vlaneseq
        %v6043 = vshrl.u32 %v6042, 7
        %v6044 = vsub.s32 %v6041, %v6043
        %v6045 = vrot.slane %v6031, %v6044
        %v6046 = vcombine.low %v5990, %v6006
        %v6047 = vcombine.high %v5990, %v6006
        %v6049 = vunpack.c.l.s4 1934713408
        %v6050 = vunpack.c.0.s8 %v6049
        %v6051 = vlaneseq
        %v6052 = vshrl.u32 %v6051, 7
        %v6053 = vsub.s32 %v6050, %v6052
        %v6054 = vrot.slane %v6046, %v6053
        %v6056 = vunpack.c.l.s4 1934713408
        %v6057 = vunpack.c.0.s8 %v6056
        %v6058 = vlaneseq
        %v6059 = vshrl.u32 %v6058, 7
        %v6060 = vsub.s32 %v6057, %v6059
        %v6061 = vrot.slane %v6047, %v6060
        %v6062 = vcombine.low %v5997, %v6013
        %v6063 = vcombine.high %v5997, %v6013
        %v6065 = vunpack.c.l.s4 1934713408
        %v6066 = vunpack.c.0.s8 %v6065
        %v6067 = vlaneseq
        %v6068 = vshrl.u32 %v6067, 7
        %v6069 = vsub.s32 %v6066, %v6068
        %v6070 = vrot.slane %v6062, %v6069
        %v6072 = vunpack.c.l.s4 1934713408
        %v6073 = vunpack.c.0.s8 %v6072
        %v6074 = vlaneseq
        %v6075 = vshrl.u32 %v6074, 7
        %v6076 = vsub.s32 %v6073, %v6075
        %v6077 = vrot.slane %v6063, %v6076
        %v6078 = vcombine.low %v6022, %v6054
        %v6079 = vcombine.high %v6022, %v6054
        %v6080 = vcombine.low %v6029, %v6061
        %v6081 = vcombine.high %v6029, %v6061
        %v6082 = vcombine.low %v6038, %v6070
        %v6083 = vcombine.high %v6038, %v6070
        %v6084 = vcombine.low %v6045, %v6077
        %v6085 = vcombine.high %v6045, %v6077
        %v6086 = vcombine.low %v3637, %v3639
        %v6087 = vcombine.high %v3637, %v3639
        %v6089 = vunpack.c.l.s4 1983009808
        %v6090 = vunpack.c.0.s8 %v6089
        %v6091 = vlaneseq
        %v6092 = vshrl.u32 %v6091, 7
        %v6093 = vsub.s32 %v6090, %v6092
        %v6094 = vrot.slane %v6086, %v6093
        %v6096 = vunpack.c.l.s4 1983009808
        %v6097 = vunpack.c.0.s8 %v6096
        %v6098 = vlaneseq
        %v6099 = vshrl.u32 %v6098, 7
        %v6100 = vsub.s32 %v6097, %v6099
        %v6101 = vrot.slane %v6087, %v6100
        %v6102 = vcombine.low %v4435, %v4443
        %v6103 = vcombine.high %v4435, %v4443
        %v6105 = vunpack.c.l.s4 1983009808
        %v6106 = vunpack.c.0.s8 %v6105
        %v6107 = vlaneseq
        %v6108 = vshrl.u32 %v6107, 7
        %v6109 = vsub.s32 %v6106, %v6108
        %v6110 = vrot.slane %v6102, %v6109
        %v6112 = vunpack.c.l.s4 1983009808
        %v6113 = vunpack.c.0.s8 %v6112
        %v6114 = vlaneseq
        %v6115 = vshrl.u32 %v6114, 7
        %v6116 = vsub.s32 %v6113, %v6115
        %v6117 = vrot.slane %v6103, %v6116
        %v6118 = vcombine.low %v3714, %v3716
        %v6119 = vcombine.high %v3714, %v3716
        %v6121 = vunpack.c.l.s4 1983009808
        %v6122 = vunpack.c.0.s8 %v6121
        %v6123 = vlaneseq
        %v6124 = vshrl.u32 %v6123, 7
        %v6125 = vsub.s32 %v6122, %v6124
        %v6126 = vrot.slane %v6118, %v6125
        %v6128 = vunpack.c.l.s4 1983009808
        %v6129 = vunpack.c.0.s8 %v6128
        %v6130 = vlaneseq
        %v6131 = vshrl.u32 %v6130, 7
        %v6132 = vsub.s32 %v6129, %v6131
        %v6133 = vrot.slane %v6119, %v6132
        %v6134 = vcombine.low %v4451, %v4459
        %v6135 = vcombine.high %v4451, %v4459
        %v6137 = vunpack.c.l.s4 1983009808
        %v6138 = vunpack.c.0.s8 %v6137
        %v6139 = vlaneseq
        %v6140 = vshrl.u32 %v6139, 7
        %v6141 = vsub.s32 %v6138, %v6140
        %v6142 = vrot.slane %v6134, %v6141
        %v6144 = vunpack.c.l.s4 1983009808
        %v6145 = vunpack.c.0.s8 %v6144
        %v6146 = vlaneseq
        %v6147 = vshrl.u32 %v6146, 7
        %v6148 = vsub.s32 %v6145, %v6147
        %v6149 = vrot.slane %v6135, %v6148
        %v6150 = vcombine.low %v6094, %v6110
        %v6151 = vcombine.high %v6094, %v6110
        %v6153 = vunpack.c.l.s4 1934713408
        %v6154 = vunpack.c.0.s8 %v6153
        %v6155 = vlaneseq
        %v6156 = vshrl.u32 %v6155, 7
        %v6157 = vsub.s32 %v6154, %v6156
        %v6158 = vrot.slane %v6150, %v6157
        %v6160 = vunpack.c.l.s4 1934713408
        %v6161 = vunpack.c.0.s8 %v6160
        %v6162 = vlaneseq
        %v6163 = vshrl.u32 %v6162, 7
        %v6164 = vsub.s32 %v6161, %v6163
        %v6165 = vrot.slane %v6151, %v6164
        %v6166 = vcombine.low %v6101, %v6117
        %v6167 = vcombine.high %v6101, %v6117
        %v6169 = vunpack.c.l.s4 1934713408
        %v6170 = vunpack.c.0.s8 %v6169
        %v6171 = vlaneseq
        %v6172 = vshrl.u32 %v6171, 7
        %v6173 = vsub.s32 %v6170, %v6172
        %v6174 = vrot.slane %v6166, %v6173
        %v6176 = vunpack.c.l.s4 1934713408
        %v6177 = vunpack.c.0.s8 %v6176
        %v6178 = vlaneseq
        %v6179 = vshrl.u32 %v6178, 7
        %v6180 = vsub.s32 %v6177, %v6179
        %v6181 = vrot.slane %v6167, %v6180
        %v6182 = vcombine.low %v6126, %v6142
        %v6183 = vcombine.high %v6126, %v6142
        %v6185 = vunpack.c.l.s4 1934713408
        %v6186 = vunpack.c.0.s8 %v6185
        %v6187 = vlaneseq
        %v6188 = vshrl.u32 %v6187, 7
        %v6189 = vsub.s32 %v6186, %v6188
        %v6190 = vrot.slane %v6182, %v6189
        %v6192 = vunpack.c.l.s4 1934713408
        %v6193 = vunpack.c.0.s8 %v6192
        %v6194 = vlaneseq
        %v6195 = vshrl.u32 %v6194, 7
        %v6196 = vsub.s32 %v6193, %v6195
        %v6197 = vrot.slane %v6183, %v6196
        %v6198 = vcombine.low %v6133, %v6149
        %v6199 = vcombine.high %v6133, %v6149
        %v6201 = vunpack.c.l.s4 1934713408
        %v6202 = vunpack.c.0.s8 %v6201
        %v6203 = vlaneseq
        %v6204 = vshrl.u32 %v6203, 7
        %v6205 = vsub.s32 %v6202, %v6204
        %v6206 = vrot.slane %v6198, %v6205
        %v6208 = vunpack.c.l.s4 1934713408
        %v6209 = vunpack.c.0.s8 %v6208
        %v6210 = vlaneseq
        %v6211 = vshrl.u32 %v6210, 7
        %v6212 = vsub.s32 %v6209, %v6211
        %v6213 = vrot.slane %v6199, %v6212
        %v6214 = vcombine.low %v6158, %v6190
        %v6215 = vcombine.high %v6158, %v6190
        %v6216 = vcombine.low %v6165, %v6197
        %v6217 = vcombine.high %v6165, %v6197
        %v6218 = vcombine.low %v6174, %v6206
        %v6219 = vcombine.high %v6174, %v6206
        %v6220 = vcombine.low %v6181, %v6213
        %v6221 = vcombine.high %v6181, %v6213
        %v6222 = vcombine.low %v3791, %v3793
        %v6223 = vcombine.high %v3791, %v3793
        %v6225 = vunpack.c.l.s4 1983009808
        %v6226 = vunpack.c.0.s8 %v6225
        %v6227 = vlaneseq
        %v6228 = vshrl.u32 %v6227, 7
        %v6229 = vsub.s32 %v6226, %v6228
        %v6230 = vrot.slane %v6222, %v6229
        %v6232 = vunpack.c.l.s4 1983009808
        %v6233 = vunpack.c.0.s8 %v6232
        %v6234 = vlaneseq
        %v6235 = vshrl.u32 %v6234, 7
        %v6236 = vsub.s32 %v6233, %v6235
        %v6237 = vrot.slane %v6223, %v6236
        %v6238 = vcombine.low %v4467, %v4475
        %v6239 = vcombine.high %v4467, %v4475
        %v6241 = vunpack.c.l.s4 1983009808
        %v6242 = vunpack.c.0.s8 %v6241
        %v6243 = vlaneseq
        %v6244 = vshrl.u32 %v6243, 7
        %v6245 = vsub.s32 %v6242, %v6244
        %v6246 = vrot.slane %v6238, %v6245
        %v6248 = vunpack.c.l.s4 1983009808
        %v6249 = vunpack.c.0.s8 %v6248
        %v6250 = vlaneseq
        %v6251 = vshrl.u32 %v6250, 7
        %v6252 = vsub.s32 %v6249, %v6251
        %v6253 = vrot.slane %v6239, %v6252
        %v6254 = vcombine.low %v3868, %v3870
        %v6255 = vcombine.high %v3868, %v3870
        %v6257 = vunpack.c.l.s4 1983009808
        %v6258 = vunpack.c.0.s8 %v6257
        %v6259 = vlaneseq
        %v6260 = vshrl.u32 %v6259, 7
        %v6261 = vsub.s32 %v6258, %v6260
        %v6262 = vrot.slane %v6254, %v6261
        %v6264 = vunpack.c.l.s4 1983009808
        %v6265 = vunpack.c.0.s8 %v6264
        %v6266 = vlaneseq
        %v6267 = vshrl.u32 %v6266, 7
        %v6268 = vsub.s32 %v6265, %v6267
        %v6269 = vrot.slane %v6255, %v6268
        %v6270 = vcombine.low %v4483, %v4491
        %v6271 = vcombine.high %v4483, %v4491
        %v6273 = vunpack.c.l.s4 1983009808
        %v6274 = vunpack.c.0.s8 %v6273
        %v6275 = vlaneseq
        %v6276 = vshrl.u32 %v6275, 7
        %v6277 = vsub.s32 %v6274, %v6276
        %v6278 = vrot.slane %v6270, %v6277
        %v6280 = vunpack.c.l.s4 1983009808
        %v6281 = vunpack.c.0.s8 %v6280
        %v6282 = vlaneseq
        %v6283 = vshrl.u32 %v6282, 7
        %v6284 = vsub.s32 %v6281, %v6283
        %v6285 = vrot.slane %v6271, %v6284
        %v6286 = vcombine.low %v6230, %v6246
        %v6287 = vcombine.high %v6230, %v6246
        %v6289 = vunpack.c.l.s4 1934713408
        %v6290 = vunpack.c.0.s8 %v6289
        %v6291 = vlaneseq
        %v6292 = vshrl.u32 %v6291, 7
        %v6293 = vsub.s32 %v6290, %v6292
        %v6294 = vrot.slane %v6286, %v6293
        %v6296 = vunpack.c.l.s4 1934713408
        %v6297 = vunpack.c.0.s8 %v6296
        %v6298 = vlaneseq
        %v6299 = vshrl.u32 %v6298, 7
        %v6300 = vsub.s32 %v6297, %v6299
        %v6301 = vrot.slane %v6287, %v6300
        %v6302 = vcombine.low %v6237, %v6253
        %v6303 = vcombine.high %v6237, %v6253
        %v6305 = vunpack.c.l.s4 1934713408
        %v6306 = vunpack.c.0.s8 %v6305
        %v6307 = vlaneseq
        %v6308 = vshrl.u32 %v6307, 7
        %v6309 = vsub.s32 %v6306, %v6308
        %v6310 = vrot.slane %v6302, %v6309
        %v6312 = vunpack.c.l.s4 1934713408
        %v6313 = vunpack.c.0.s8 %v6312
        %v6314 = vlaneseq
        %v6315 = vshrl.u32 %v6314, 7
        %v6316 = vsub.s32 %v6313, %v6315
        %v6317 = vrot.slane %v6303, %v6316
        %v6318 = vcombine.low %v6262, %v6278
        %v6319 = vcombine.high %v6262, %v6278
        %v6321 = vunpack.c.l.s4 1934713408
        %v6322 = vunpack.c.0.s8 %v6321
        %v6323 = vlaneseq
        %v6324 = vshrl.u32 %v6323, 7
        %v6325 = vsub.s32 %v6322, %v6324
        %v6326 = vrot.slane %v6318, %v6325
        %v6328 = vunpack.c.l.s4 1934713408
        %v6329 = vunpack.c.0.s8 %v6328
        %v6330 = vlaneseq
        %v6331 = vshrl.u32 %v6330, 7
        %v6332 = vsub.s32 %v6329, %v6331
        %v6333 = vrot.slane %v6319, %v6332
        %v6334 = vcombine.low %v6269, %v6285
        %v6335 = vcombine.high %v6269, %v6285
        %v6337 = vunpack.c.l.s4 1934713408
        %v6338 = vunpack.c.0.s8 %v6337
        %v6339 = vlaneseq
        %v6340 = vshrl.u32 %v6339, 7
        %v6341 = vsub.s32 %v6338, %v6340
        %v6342 = vrot.slane %v6334, %v6341
        %v6344 = vunpack.c.l.s4 1934713408
        %v6345 = vunpack.c.0.s8 %v6344
        %v6346 = vlaneseq
        %v6347 = vshrl.u32 %v6346, 7
        %v6348 = vsub.s32 %v6345, %v6347
        %v6349 = vrot.slane %v6335, %v6348
        %v6350 = vcombine.low %v6294, %v6326
        %v6351 = vcombine.high %v6294, %v6326
        %v6352 = vcombine.low %v6301, %v6333
        %v6353 = vcombine.high %v6301, %v6333
        %v6354 = vcombine.low %v6310, %v6342
        %v6355 = vcombine.high %v6310, %v6342
        %v6356 = vcombine.low %v6317, %v6349
        %v6357 = vcombine.high %v6317, %v6349
        %v6358 = vcombine.low %v3945, %v3947
        %v6359 = vcombine.high %v3945, %v3947
        %v6361 = vunpack.c.l.s4 1983009808
        %v6362 = vunpack.c.0.s8 %v6361
        %v6363 = vlaneseq
        %v6364 = vshrl.u32 %v6363, 7
        %v6365 = vsub.s32 %v6362, %v6364
        %v6366 = vrot.slane %v6358, %v6365
        %v6368 = vunpack.c.l.s4 1983009808
        %v6369 = vunpack.c.0.s8 %v6368
        %v6370 = vlaneseq
        %v6371 = vshrl.u32 %v6370, 7
        %v6372 = vsub.s32 %v6369, %v6371
        %v6373 = vrot.slane %v6359, %v6372
        %v6374 = vcombine.low %v4499, %v4507
        %v6375 = vcombine.high %v4499, %v4507
        %v6377 = vunpack.c.l.s4 1983009808
        %v6378 = vunpack.c.0.s8 %v6377
        %v6379 = vlaneseq
        %v6380 = vshrl.u32 %v6379, 7
        %v6381 = vsub.s32 %v6378, %v6380
        %v6382 = vrot.slane %v6374, %v6381
        %v6384 = vunpack.c.l.s4 1983009808
        %v6385 = vunpack.c.0.s8 %v6384
        %v6386 = vlaneseq
        %v6387 = vshrl.u32 %v6386, 7
        %v6388 = vsub.s32 %v6385, %v6387
        %v6389 = vrot.slane %v6375, %v6388
        %v6390 = vcombine.low %v4022, %v4024
        %v6391 = vcombine.high %v4022, %v4024
        %v6393 = vunpack.c.l.s4 1983009808
        %v6394 = vunpack.c.0.s8 %v6393
        %v6395 = vlaneseq
        %v6396 = vshrl.u32 %v6395, 7
        %v6397 = vsub.s32 %v6394, %v6396
        %v6398 = vrot.slane %v6390, %v6397
        %v6400 = vunpack.c.l.s4 1983009808
        %v6401 = vunpack.c.0.s8 %v6400
        %v6402 = vlaneseq
        %v6403 = vshrl.u32 %v6402, 7
        %v6404 = vsub.s32 %v6401, %v6403
        %v6405 = vrot.slane %v6391, %v6404
        %v6406 = vcombine.low %v4515, %v4523
        %v6407 = vcombine.high %v4515, %v4523
        %v6409 = vunpack.c.l.s4 1983009808
        %v6410 = vunpack.c.0.s8 %v6409
        %v6411 = vlaneseq
        %v6412 = vshrl.u32 %v6411, 7
        %v6413 = vsub.s32 %v6410, %v6412
        %v6414 = vrot.slane %v6406, %v6413
        %v6416 = vunpack.c.l.s4 1983009808
        %v6417 = vunpack.c.0.s8 %v6416
        %v6418 = vlaneseq
        %v6419 = vshrl.u32 %v6418, 7
        %v6420 = vsub.s32 %v6417, %v6419
        %v6421 = vrot.slane %v6407, %v6420
        %v6422 = vcombine.low %v6366, %v6382
        %v6423 = vcombine.high %v6366, %v6382
        %v6425 = vunpack.c.l.s4 1934713408
        %v6426 = vunpack.c.0.s8 %v6425
        %v6427 = vlaneseq
        %v6428 = vshrl.u32 %v6427, 7
        %v6429 = vsub.s32 %v6426, %v6428
        %v6430 = vrot.slane %v6422, %v6429
        %v6432 = vunpack.c.l.s4 1934713408
        %v6433 = vunpack.c.0.s8 %v6432
        %v6434 = vlaneseq
        %v6435 = vshrl.u32 %v6434, 7
        %v6436 = vsub.s32 %v6433, %v6435
        %v6437 = vrot.slane %v6423, %v6436
        %v6438 = vcombine.low %v6373, %v6389
        %v6439 = vcombine.high %v6373, %v6389
        %v6441 = vunpack.c.l.s4 1934713408
        %v6442 = vunpack.c.0.s8 %v6441
        %v6443 = vlaneseq
        %v6444 = vshrl.u32 %v6443, 7
        %v6445 = vsub.s32 %v6442, %v6444
        %v6446 = vrot.slane %v6438, %v6445
        %v6448 = vunpack.c.l.s4 1934713408
        %v6449 = vunpack.c.0.s8 %v6448
        %v6450 = vlaneseq
        %v6451 = vshrl.u32 %v6450, 7
        %v6452 = vsub.s32 %v6449, %v6451
        %v6453 = vrot.slane %v6439, %v6452
        %v6454 = vcombine.low %v6398, %v6414
        %v6455 = vcombine.high %v6398, %v6414
        %v6457 = vunpack.c.l.s4 1934713408
        %v6458 = vunpack.c.0.s8 %v6457
        %v6459 = vlaneseq
        %v6460 = vshrl.u32 %v6459, 7
        %v6461 = vsub.s32 %v6458, %v6460
        %v6462 = vrot.slane %v6454, %v6461
        %v6464 = vunpack.c.l.s4 1934713408
        %v6465 = vunpack.c.0.s8 %v6464
        %v6466 = vlaneseq
        %v6467 = vshrl.u32 %v6466, 7
        %v6468 = vsub.s32 %v6465, %v6467
        %v6469 = vrot.slane %v6455, %v6468
        %v6470 = vcombine.low %v6405, %v6421
        %v6471 = vcombine.high %v6405, %v6421
        %v6473 = vunpack.c.l.s4 1934713408
        %v6474 = vunpack.c.0.s8 %v6473
        %v6475 = vlaneseq
        %v6476 = vshrl.u32 %v6475, 7
        %v6477 = vsub.s32 %v6474, %v6476
        %v6478 = vrot.slane %v6470, %v6477
        %v6480 = vunpack.c.l.s4 1934713408
        %v6481 = vunpack.c.0.s8 %v6480
        %v6482 = vlaneseq
        %v6483 = vshrl.u32 %v6482, 7
        %v6484 = vsub.s32 %v6481, %v6483
        %v6485 = vrot.slane %v6471, %v6484
        %v6486 = vcombine.low %v6430, %v6462
        %v6487 = vcombine.high %v6430, %v6462
        %v6488 = vcombine.low %v6437, %v6469
        %v6489 = vcombine.high %v6437, %v6469
        %v6490 = vcombine.low %v6446, %v6478
        %v6491 = vcombine.high %v6446, %v6478
        %v6492 = vcombine.low %v6453, %v6485
        %v6493 = vcombine.high %v6453, %v6485
        %v6494 = vcombine.low %v4099, %v4101
        %v6495 = vcombine.high %v4099, %v4101
        %v6497 = vunpack.c.l.s4 1983009808
        %v6498 = vunpack.c.0.s8 %v6497
        %v6499 = vlaneseq
        %v6500 = vshrl.u32 %v6499, 7
        %v6501 = vsub.s32 %v6498, %v6500
        %v6502 = vrot.slane %v6494, %v6501
        %v6504 = vunpack.c.l.s4 1983009808
        %v6505 = vunpack.c.0.s8 %v6504
        %v6506 = vlaneseq
        %v6507 = vshrl.u32 %v6506, 7
        %v6508 = vsub.s32 %v6505, %v6507
        %v6509 = vrot.slane %v6495, %v6508
        %v6510 = vcombine.low %v4531, %v4539
        %v6511 = vcombine.high %v4531, %v4539
        %v6513 = vunpack.c.l.s4 1983009808
        %v6514 = vunpack.c.0.s8 %v6513
        %v6515 = vlaneseq
        %v6516 = vshrl.u32 %v6515, 7
        %v6517 = vsub.s32 %v6514, %v6516
        %v6518 = vrot.slane %v6510, %v6517
        %v6520 = vunpack.c.l.s4 1983009808
        %v6521 = vunpack.c.0.s8 %v6520
        %v6522 = vlaneseq
        %v6523 = vshrl.u32 %v6522, 7
        %v6524 = vsub.s32 %v6521, %v6523
        %v6525 = vrot.slane %v6511, %v6524
        %v6526 = vcombine.low %v4176, %v4178
        %v6527 = vcombine.high %v4176, %v4178
        %v6529 = vunpack.c.l.s4 1983009808
        %v6530 = vunpack.c.0.s8 %v6529
        %v6531 = vlaneseq
        %v6532 = vshrl.u32 %v6531, 7
        %v6533 = vsub.s32 %v6530, %v6532
        %v6534 = vrot.slane %v6526, %v6533
        %v6536 = vunpack.c.l.s4 1983009808
        %v6537 = vunpack.c.0.s8 %v6536
        %v6538 = vlaneseq
        %v6539 = vshrl.u32 %v6538, 7
        %v6540 = vsub.s32 %v6537, %v6539
        %v6541 = vrot.slane %v6527, %v6540
        %v6542 = vcombine.low %v4547, %v4555
        %v6543 = vcombine.high %v4547, %v4555
        %v6545 = vunpack.c.l.s4 1983009808
        %v6546 = vunpack.c.0.s8 %v6545
        %v6547 = vlaneseq
        %v6548 = vshrl.u32 %v6547, 7
        %v6549 = vsub.s32 %v6546, %v6548
        %v6550 = vrot.slane %v6542, %v6549
        %v6552 = vunpack.c.l.s4 1983009808
        %v6553 = vunpack.c.0.s8 %v6552
        %v6554 = vlaneseq
        %v6555 = vshrl.u32 %v6554, 7
        %v6556 = vsub.s32 %v6553, %v6555
        %v6557 = vrot.slane %v6543, %v6556
        %v6558 = vcombine.low %v6502, %v6518
        %v6559 = vcombine.high %v6502, %v6518
        %v6561 = vunpack.c.l.s4 1934713408
        %v6562 = vunpack.c.0.s8 %v6561
        %v6563 = vlaneseq
        %v6564 = vshrl.u32 %v6563, 7
        %v6565 = vsub.s32 %v6562, %v6564
        %v6566 = vrot.slane %v6558, %v6565
        %v6568 = vunpack.c.l.s4 1934713408
        %v6569 = vunpack.c.0.s8 %v6568
        %v6570 = vlaneseq
        %v6571 = vshrl.u32 %v6570, 7
        %v6572 = vsub.s32 %v6569, %v6571
        %v6573 = vrot.slane %v6559, %v6572
        %v6574 = vcombine.low %v6509, %v6525
        %v6575 = vcombine.high %v6509, %v6525
        %v6577 = vunpack.c.l.s4 1934713408
        %v6578 = vunpack.c.0.s8 %v6577
        %v6579 = vlaneseq
        %v6580 = vshrl.u32 %v6579, 7
        %v6581 = vsub.s32 %v6578, %v6580
        %v6582 = vrot.slane %v6574, %v6581
        %v6584 = vunpack.c.l.s4 1934713408
        %v6585 = vunpack.c.0.s8 %v6584
        %v6586 = vlaneseq
        %v6587 = vshrl.u32 %v6586, 7
        %v6588 = vsub.s32 %v6585, %v6587
        %v6589 = vrot.slane %v6575, %v6588
        %v6590 = vcombine.low %v6534, %v6550
        %v6591 = vcombine.high %v6534, %v6550
        %v6593 = vunpack.c.l.s4 1934713408
        %v6594 = vunpack.c.0.s8 %v6593
        %v6595 = vlaneseq
        %v6596 = vshrl.u32 %v6595, 7
        %v6597 = vsub.s32 %v6594, %v6596
        %v6598 = vrot.slane %v6590, %v6597
        %v6600 = vunpack.c.l.s4 1934713408
        %v6601 = vunpack.c.0.s8 %v6600
        %v6602 = vlaneseq
        %v6603 = vshrl.u32 %v6602, 7
        %v6604 = vsub.s32 %v6601, %v6603
        %v6605 = vrot.slane %v6591, %v6604
        %v6606 = vcombine.low %v6541, %v6557
        %v6607 = vcombine.high %v6541, %v6557
        %v6609 = vunpack.c.l.s4 1934713408
        %v6610 = vunpack.c.0.s8 %v6609
        %v6611 = vlaneseq
        %v6612 = vshrl.u32 %v6611, 7
        %v6613 = vsub.s32 %v6610, %v6612
        %v6614 = vrot.slane %v6606, %v6613
        %v6616 = vunpack.c.l.s4 1934713408
        %v6617 = vunpack.c.0.s8 %v6616
        %v6618 = vlaneseq
        %v6619 = vshrl.u32 %v6618, 7
        %v6620 = vsub.s32 %v6617, %v6619
        %v6621 = vrot.slane %v6607, %v6620
        %v6622 = vcombine.low %v6566, %v6598
        %v6623 = vcombine.high %v6566, %v6598
        %v6624 = vcombine.low %v6573, %v6605
        %v6625 = vcombine.high %v6573, %v6605
        %v6626 = vcombine.low %v6582, %v6614
        %v6627 = vcombine.high %v6582, %v6614
        %v6628 = vcombine.low %v6589, %v6621
        %v6629 = vcombine.high %v6589, %v6621
        %v6630 = vcombine.low %v4253, %v4255
        %v6631 = vcombine.high %v4253, %v4255
        %v6633 = vunpack.c.l.s4 1983009808
        %v6634 = vunpack.c.0.s8 %v6633
        %v6635 = vlaneseq
        %v6636 = vshrl.u32 %v6635, 7
        %v6637 = vsub.s32 %v6634, %v6636
        %v6638 = vrot.slane %v6630, %v6637
        %v6640 = vunpack.c.l.s4 1983009808
        %v6641 = vunpack.c.0.s8 %v6640
        %v6642 = vlaneseq
        %v6643 = vshrl.u32 %v6642, 7
        %v6644 = vsub.s32 %v6641, %v6643
        %v6645 = vrot.slane %v6631, %v6644
        %v6646 = vcombine.low %v4563, %v4571
        %v6647 = vcombine.high %v4563, %v4571
        %v6649 = vunpack.c.l.s4 1983009808
        %v6650 = vunpack.c.0.s8 %v6649
        %v6651 = vlaneseq
        %v6652 = vshrl.u32 %v6651, 7
        %v6653 = vsub.s32 %v6650, %v6652
        %v6654 = vrot.slane %v6646, %v6653
        %v6656 = vunpack.c.l.s4 1983009808
        %v6657 = vunpack.c.0.s8 %v6656
        %v6658 = vlaneseq
        %v6659 = vshrl.u32 %v6658, 7
        %v6660 = vsub.s32 %v6657, %v6659
        %v6661 = vrot.slane %v6647, %v6660
        %v6662 = vcombine.low %v4330, %v4332
        %v6663 = vcombine.high %v4330, %v4332
        %v6665 = vunpack.c.l.s4 1983009808
        %v6666 = vunpack.c.0.s8 %v6665
        %v6667 = vlaneseq
        %v6668 = vshrl.u32 %v6667, 7
        %v6669 = vsub.s32 %v6666, %v6668
        %v6670 = vrot.slane %v6662, %v6669
        %v6672 = vunpack.c.l.s4 1983009808
        %v6673 = vunpack.c.0.s8 %v6672
        %v6674 = vlaneseq
        %v6675 = vshrl.u32 %v6674, 7
        %v6676 = vsub.s32 %v6673, %v6675
        %v6677 = vrot.slane %v6663, %v6676
        %v6678 = vcombine.low %v4579, %v4587
        %v6679 = vcombine.high %v4579, %v4587
        %v6681 = vunpack.c.l.s4 1983009808
        %v6682 = vunpack.c.0.s8 %v6681
        %v6683 = vlaneseq
        %v6684 = vshrl.u32 %v6683, 7
        %v6685 = vsub.s32 %v6682, %v6684
        %v6686 = vrot.slane %v6678, %v6685
        %v6688 = vunpack.c.l.s4 1983009808
        %v6689 = vunpack.c.0.s8 %v6688
        %v6690 = vlaneseq
        %v6691 = vshrl.u32 %v6690, 7
        %v6692 = vsub.s32 %v6689, %v6691
        %v6693 = vrot.slane %v6679, %v6692
        %v6694 = vcombine.low %v6638, %v6654
        %v6695 = vcombine.high %v6638, %v6654
        %v6697 = vunpack.c.l.s4 1934713408
        %v6698 = vunpack.c.0.s8 %v6697
        %v6699 = vlaneseq
        %v6700 = vshrl.u32 %v6699, 7
        %v6701 = vsub.s32 %v6698, %v6700
        %v6702 = vrot.slane %v6694, %v6701
        %v6704 = vunpack.c.l.s4 1934713408
        %v6705 = vunpack.c.0.s8 %v6704
        %v6706 = vlaneseq
        %v6707 = vshrl.u32 %v6706, 7
        %v6708 = vsub.s32 %v6705, %v6707
        %v6709 = vrot.slane %v6695, %v6708
        %v6710 = vcombine.low %v6645, %v6661
        %v6711 = vcombine.high %v6645, %v6661
        %v6713 = vunpack.c.l.s4 1934713408
        %v6714 = vunpack.c.0.s8 %v6713
        %v6715 = vlaneseq
        %v6716 = vshrl.u32 %v6715, 7
        %v6717 = vsub.s32 %v6714, %v6716
        %v6718 = vrot.slane %v6710, %v6717
        %v6720 = vunpack.c.l.s4 1934713408
        %v6721 = vunpack.c.0.s8 %v6720
        %v6722 = vlaneseq
        %v6723 = vshrl.u32 %v6722, 7
        %v6724 = vsub.s32 %v6721, %v6723
        %v6725 = vrot.slane %v6711, %v6724
        %v6726 = vcombine.low %v6670, %v6686
        %v6727 = vcombine.high %v6670, %v6686
        %v6729 = vunpack.c.l.s4 1934713408
        %v6730 = vunpack.c.0.s8 %v6729
        %v6731 = vlaneseq
        %v6732 = vshrl.u32 %v6731, 7
        %v6733 = vsub.s32 %v6730, %v6732
        %v6734 = vrot.slane %v6726, %v6733
        %v6736 = vunpack.c.l.s4 1934713408
        %v6737 = vunpack.c.0.s8 %v6736
        %v6738 = vlaneseq
        %v6739 = vshrl.u32 %v6738, 7
        %v6740 = vsub.s32 %v6737, %v6739
        %v6741 = vrot.slane %v6727, %v6740
        %v6742 = vcombine.low %v6677, %v6693
        %v6743 = vcombine.high %v6677, %v6693
        %v6745 = vunpack.c.l.s4 1934713408
        %v6746 = vunpack.c.0.s8 %v6745
        %v6747 = vlaneseq
        %v6748 = vshrl.u32 %v6747, 7
        %v6749 = vsub.s32 %v6746, %v6748
        %v6750 = vrot.slane %v6742, %v6749
        %v6752 = vunpack.c.l.s4 1934713408
        %v6753 = vunpack.c.0.s8 %v6752
        %v6754 = vlaneseq
        %v6755 = vshrl.u32 %v6754, 7
        %v6756 = vsub.s32 %v6753, %v6755
        %v6757 = vrot.slane %v6743, %v6756
        %v6758 = vcombine.low %v6702, %v6734
        %v6759 = vcombine.high %v6702, %v6734
        %v6760 = vcombine.low %v6709, %v6741
        %v6761 = vcombine.high %v6709, %v6741
        %v6762 = vcombine.low %v6718, %v6750
        %v6763 = vcombine.high %v6718, %v6750
        %v6764 = vcombine.low %v6725, %v6757
        %v6765 = vcombine.high %v6725, %v6757
        %v6766 = vadd.f32 %v4718, %v641
        %v6767 = vadd.f32 %v4854, %v642
        %v6768 = vadd.f32 %v4990, %v643
        %v6769 = vadd.f32 %v5126, %v644
        %v6770 = vadd.f32 %v5262, %v645
        %v6771 = vadd.f32 %v5398, %v646
        %v6772 = vadd.f32 %v5534, %v647
        %v6773 = vadd.f32 %v5670, %v648
        %v6774 = vadd.f32 %v4719, %v641
        %v6775 = vadd.f32 %v4855, %v642
        %v6776 = vadd.f32 %v4991, %v643
        %v6777 = vadd.f32 %v5127, %v644
        %v6778 = vadd.f32 %v5263, %v645
        %v6779 = vadd.f32 %v5399, %v646
        %v6780 = vadd.f32 %v5535, %v647
        %v6781 = vadd.f32 %v5671, %v648
        %v6782 = vadd.f32 %v4720, %v641
        %v6783 = vadd.f32 %v4856, %v642
        %v6784 = vadd.f32 %v4992, %v643
        %v6785 = vadd.f32 %v5128, %v644
        %v6786 = vadd.f32 %v5264, %v645
        %v6787 = vadd.f32 %v5400, %v646
        %v6788 = vadd.f32 %v5536, %v647
        %v6789 = vadd.f32 %v5672, %v648
        %v6790 = vadd.f32 %v4721, %v641
        %v6791 = vadd.f32 %v4857, %v642
        %v6792 = vadd.f32 %v4993, %v643
        %v6793 = vadd.f32 %v5129, %v644
        %v6794 = vadd.f32 %v5265, %v645
        %v6795 = vadd.f32 %v5401, %v646
        %v6796 = vadd.f32 %v5537, %v647
        %v6797 = vadd.f32 %v5673, %v648
        %v6798 = vadd.f32 %v4722, %v641
        %v6799 = vadd.f32 %v4858, %v642
        %v6800 = vadd.f32 %v4994, %v643
        %v6801 = vadd.f32 %v5130, %v644
        %v6802 = vadd.f32 %v5266, %v645
        %v6803 = vadd.f32 %v5402, %v646
        %v6804 = vadd.f32 %v5538, %v647
        %v6805 = vadd.f32 %v5674, %v648
        %v6806 = vadd.f32 %v4723, %v641
        %v6807 = vadd.f32 %v4859, %v642
        %v6808 = vadd.f32 %v4995, %v643
        %v6809 = vadd.f32 %v5131, %v644
        %v6810 = vadd.f32 %v5267, %v645
        %v6811 = vadd.f32 %v5403, %v646
        %v6812 = vadd.f32 %v5539, %v647
        %v6813 = vadd.f32 %v5675, %v648
        %v6814 = vadd.f32 %v4724, %v641
        %v6815 = vadd.f32 %v4860, %v642
        %v6816 = vadd.f32 %v4996, %v643
        %v6817 = vadd.f32 %v5132, %v644
        %v6818 = vadd.f32 %v5268, %v645
        %v6819 = vadd.f32 %v5404, %v646
        %v6820 = vadd.f32 %v5540, %v647
        %v6821 = vadd.f32 %v5676, %v648
        %v6822 = vadd.f32 %v4725, %v641
        %v6823 = vadd.f32 %v4861, %v642
        %v6824 = vadd.f32 %v4997, %v643
        %v6825 = vadd.f32 %v5133, %v644
        %v6826 = vadd.f32 %v5269, %v645
        %v6827 = vadd.f32 %v5405, %v646
        %v6828 = vadd.f32 %v5541, %v647
        %v6829 = vadd.f32 %v5677, %v648
        %v6830 = vadd.f32 %v5806, %v641
        %v6831 = vadd.f32 %v5942, %v642
        %v6832 = vadd.f32 %v6078, %v643
        %v6833 = vadd.f32 %v6214, %v644
        %v6834 = vadd.f32 %v6350, %v645
        %v6835 = vadd.f32 %v6486, %v646
        %v6836 = vadd.f32 %v6622, %v647
        %v6837 = vadd.f32 %v6758, %v648
        %v6838 = vadd.f32 %v5807, %v641
        %v6839 = vadd.f32 %v5943, %v642
        %v6840 = vadd.f32 %v6079, %v643
        %v6841 = vadd.f32 %v6215, %v644
        %v6842 = vadd.f32 %v6351, %v645
        %v6843 = vadd.f32 %v6487, %v646
        %v6844 = vadd.f32 %v6623, %v647
        %v6845 = vadd.f32 %v6759, %v648
        %v6846 = vadd.f32 %v5808, %v641
        %v6847 = vadd.f32 %v5944, %v642
        %v6848 = vadd.f32 %v6080, %v643
        %v6849 = vadd.f32 %v6216, %v644
        %v6850 = vadd.f32 %v6352, %v645
        %v6851 = vadd.f32 %v6488, %v646
        %v6852 = vadd.f32 %v6624, %v647
        %v6853 = vadd.f32 %v6760, %v648
        %v6854 = vadd.f32 %v5809, %v641
        %v6855 = vadd.f32 %v5945, %v642
        %v6856 = vadd.f32 %v6081, %v643
        %v6857 = vadd.f32 %v6217, %v644
        %v6858 = vadd.f32 %v6353, %v645
        %v6859 = vadd.f32 %v6489, %v646
        %v6860 = vadd.f32 %v6625, %v647
        %v6861 = vadd.f32 %v6761, %v648
        %v6862 = vadd.f32 %v5810, %v641
        %v6863 = vadd.f32 %v5946, %v642
        %v6864 = vadd.f32 %v6082, %v643
        %v6865 = vadd.f32 %v6218, %v644
        %v6866 = vadd.f32 %v6354, %v645
        %v6867 = vadd.f32 %v6490, %v646
        %v6868 = vadd.f32 %v6626, %v647
        %v6869 = vadd.f32 %v6762, %v648
        %v6870 = vadd.f32 %v5811, %v641
        %v6871 = vadd.f32 %v5947, %v642
        %v6872 = vadd.f32 %v6083, %v643
        %v6873 = vadd.f32 %v6219, %v644
        %v6874 = vadd.f32 %v6355, %v645
        %v6875 = vadd.f32 %v6491, %v646
        %v6876 = vadd.f32 %v6627, %v647
        %v6877 = vadd.f32 %v6763, %v648
        %v6878 = vadd.f32 %v5812, %v641
        %v6879 = vadd.f32 %v5948, %v642
        %v6880 = vadd.f32 %v6084, %v643
        %v6881 = vadd.f32 %v6220, %v644
        %v6882 = vadd.f32 %v6356, %v645
        %v6883 = vadd.f32 %v6492, %v646
        %v6884 = vadd.f32 %v6628, %v647
        %v6885 = vadd.f32 %v6764, %v648
        %v6886 = vadd.f32 %v5813, %v641
        %v6887 = vadd.f32 %v5949, %v642
        %v6888 = vadd.f32 %v6085, %v643
        %v6889 = vadd.f32 %v6221, %v644
        %v6890 = vadd.f32 %v6357, %v645
        %v6891 = vadd.f32 %v6493, %v646
        %v6892 = vadd.f32 %v6629, %v647
        %v6893 = vadd.f32 %v6765, %v648
        %v6896 = vcombine.high %v655, %v655
        %v6898 = vunpack.c.l.s4 1966171168
        %v6899 = vunpack.c.0.s8 %v6898
        %v6900 = vlaneseq
        %v6901 = vshrl.u32 %v6900, 7
        %v6902 = vsub.s32 %v6899, %v6901
        %v6903 = vrot.slane %v655, %v6902
        %v6905 = vunpack.c.l.s4 1966171168
        %v6906 = vunpack.c.0.s8 %v6905
        %v6907 = vlaneseq
        %v6908 = vshrl.u32 %v6907, 7
        %v6909 = vsub.s32 %v6906, %v6908
        %v6910 = vrot.slane %v6896, %v6909
        %v6911 = vcombine.high %v6903, %v6903
        %v6912 = vcombine.high %v6910, %v6910
        %v6914 = vunpack.c.l.s4 1966171168
        %v6915 = vunpack.c.0.s8 %v6914
        %v6916 = vlaneseq
        %v6917 = vshrl.u32 %v6916, 7
        %v6918 = vsub.s32 %v6915, %v6917
        %v6919 = vrot.slane %v6903, %v6918
        %v6921 = vunpack.c.l.s4 1966171168
        %v6922 = vunpack.c.0.s8 %v6921
        %v6923 = vlaneseq
        %v6924 = vshrl.u32 %v6923, 7
        %v6925 = vsub.s32 %v6922, %v6924
        %v6926 = vrot.slane %v6910, %v6925
        %v6928 = vunpack.c.l.s4 1966171168
        %v6929 = vunpack.c.0.s8 %v6928
        %v6930 = vlaneseq
        %v6931 = vshrl.u32 %v6930, 7
        %v6932 = vsub.s32 %v6929, %v6931
        %v6933 = vrot.slane %v6911, %v6932
        %v6935 = vunpack.c.l.s4 1966171168
        %v6936 = vunpack.c.0.s8 %v6935
        %v6937 = vlaneseq
        %v6938 = vshrl.u32 %v6937, 7
        %v6939 = vsub.s32 %v6936, %v6938
        %v6940 = vrot.slane %v6912, %v6939
        %v6941 = vcombine.high %v6919, %v6919
        %v6942 = vcombine.high %v6926, %v6926
        %v6943 = vcombine.high %v6933, %v6933
        %v6944 = vcombine.high %v6940, %v6940
        %v6945 = vcombine.high %v656, %v656
        %v6947 = vunpack.c.l.s4 1966171168
        %v6948 = vunpack.c.0.s8 %v6947
        %v6949 = vlaneseq
        %v6950 = vshrl.u32 %v6949, 7
        %v6951 = vsub.s32 %v6948, %v6950
        %v6952 = vrot.slane %v656, %v6951
        %v6954 = vunpack.c.l.s4 1966171168
        %v6955 = vunpack.c.0.s8 %v6954
        %v6956 = vlaneseq
        %v6957 = vshrl.u32 %v6956, 7
        %v6958 = vsub.s32 %v6955, %v6957
        %v6959 = vrot.slane %v6945, %v6958
        %v6960 = vcombine.high %v6952, %v6952
        %v6961 = vcombine.high %v6959, %v6959
        %v6963 = vunpack.c.l.s4 1966171168
        %v6964 = vunpack.c.0.s8 %v6963
        %v6965 = vlaneseq
        %v6966 = vshrl.u32 %v6965, 7
        %v6967 = vsub.s32 %v6964, %v6966
        %v6968 = vrot.slane %v6952, %v6967
        %v6970 = vunpack.c.l.s4 1966171168
        %v6971 = vunpack.c.0.s8 %v6970
        %v6972 = vlaneseq
        %v6973 = vshrl.u32 %v6972, 7
        %v6974 = vsub.s32 %v6971, %v6973
        %v6975 = vrot.slane %v6959, %v6974
        %v6977 = vunpack.c.l.s4 1966171168
        %v6978 = vunpack.c.0.s8 %v6977
        %v6979 = vlaneseq
        %v6980 = vshrl.u32 %v6979, 7
        %v6981 = vsub.s32 %v6978, %v6980
        %v6982 = vrot.slane %v6960, %v6981
        %v6984 = vunpack.c.l.s4 1966171168
        %v6985 = vunpack.c.0.s8 %v6984
        %v6986 = vlaneseq
        %v6987 = vshrl.u32 %v6986, 7
        %v6988 = vsub.s32 %v6985, %v6987
        %v6989 = vrot.slane %v6961, %v6988
        %v6990 = vcombine.high %v6968, %v6968
        %v6991 = vcombine.high %v6975, %v6975
        %v6992 = vcombine.high %v6982, %v6982
        %v6993 = vcombine.high %v6989, %v6989
        %v6994 = vlaneseq
        %v6995 = vshrl.u32 %v6994, 7
        %v6996 = vsub.s32 0, %v6995
        %v6997 = vrot.slane %v6919, %v6996
        %v6998 = vlaneseq
        %v6999 = vshrl.u32 %v6998, 7
        %v7000 = vsub.s32 0, %v6999
        %v7001 = vrot.slane %v6933, %v7000
        %v7002 = vlaneseq
        %v7003 = vshrl.u32 %v7002, 7
        %v7004 = vsub.s32 0, %v7003
        %v7005 = vrot.slane %v6941, %v7004
        %v7006 = vlaneseq
        %v7007 = vshrl.u32 %v7006, 7
        %v7008 = vsub.s32 0, %v7007
        %v7009 = vrot.slane %v6943, %v7008
        %v7010 = vlaneseq
        %v7011 = vshrl.u32 %v7010, 7
        %v7012 = vsub.s32 0, %v7011
        %v7013 = vrot.slane %v6926, %v7012
        %v7014 = vlaneseq
        %v7015 = vshrl.u32 %v7014, 7
        %v7016 = vsub.s32 0, %v7015
        %v7017 = vrot.slane %v6940, %v7016
        %v7018 = vlaneseq
        %v7019 = vshrl.u32 %v7018, 7
        %v7020 = vsub.s32 0, %v7019
        %v7021 = vrot.slane %v6942, %v7020
        %v7022 = vlaneseq
        %v7023 = vshrl.u32 %v7022, 7
        %v7024 = vsub.s32 0, %v7023
        %v7025 = vrot.slane %v6944, %v7024
        %v7026 = vlaneseq
        %v7027 = vshrl.u32 %v7026, 7
        %v7028 = vsub.s32 0, %v7027
        %v7029 = vrot.slane %v6968, %v7028
        %v7030 = vlaneseq
        %v7031 = vshrl.u32 %v7030, 7
        %v7032 = vsub.s32 0, %v7031
        %v7033 = vrot.slane %v6982, %v7032
        %v7034 = vlaneseq
        %v7035 = vshrl.u32 %v7034, 7
        %v7036 = vsub.s32 0, %v7035
        %v7037 = vrot.slane %v6990, %v7036
        %v7038 = vlaneseq
        %v7039 = vshrl.u32 %v7038, 7
        %v7040 = vsub.s32 0, %v7039
        %v7041 = vrot.slane %v6992, %v7040
        %v7042 = vlaneseq
        %v7043 = vshrl.u32 %v7042, 7
        %v7044 = vsub.s32 0, %v7043
        %v7045 = vrot.slane %v6975, %v7044
        %v7046 = vlaneseq
        %v7047 = vshrl.u32 %v7046, 7
        %v7048 = vsub.s32 0, %v7047
        %v7049 = vrot.slane %v6989, %v7048
        %v7050 = vlaneseq
        %v7051 = vshrl.u32 %v7050, 7
        %v7052 = vsub.s32 0, %v7051
        %v7053 = vrot.slane %v6991, %v7052
        %v7054 = vlaneseq
        %v7055 = vshrl.u32 %v7054, 7
        %v7056 = vsub.s32 0, %v7055
        %v7057 = vrot.slane %v6993, %v7056
        %7058 = vset.pattern.permute.xlu0 0
        %7059 = vperm.xlu0 %7058, %v6997
        %v7060 = vpop.permute.xlu0 %7059
        %7062 = vset.pattern.permute.xlu0 0
        %7063 = vperm.xlu0 %7062, %v7001
        %v7064 = vpop.permute.xlu0 %7063
        %7066 = vset.pattern.permute.xlu0 0
        %7067 = vperm.xlu0 %7066, %v7005
        %v7068 = vpop.permute.xlu0 %7067
        %7070 = vset.pattern.permute.xlu0 0
        %7071 = vperm.xlu0 %7070, %v7009
        %v7072 = vpop.permute.xlu0 %7071
        %7074 = vset.pattern.permute.xlu0 0
        %7075 = vperm.xlu0 %7074, %v7013
        %v7076 = vpop.permute.xlu0 %7075
        %7078 = vset.pattern.permute.xlu0 0
        %7079 = vperm.xlu0 %7078, %v7017
        %v7080 = vpop.permute.xlu0 %7079
        %7082 = vset.pattern.permute.xlu0 0
        %7083 = vperm.xlu0 %7082, %v7021
        %v7084 = vpop.permute.xlu0 %7083
        %7086 = vset.pattern.permute.xlu0 0
        %7087 = vperm.xlu0 %7086, %v7025
        %v7088 = vpop.permute.xlu0 %7087
        %7090 = vset.pattern.permute.xlu0 0
        %7091 = vperm.xlu0 %7090, %v7029
        %v7092 = vpop.permute.xlu0 %7091
        %7094 = vset.pattern.permute.xlu0 0
        %7095 = vperm.xlu0 %7094, %v7033
        %v7096 = vpop.permute.xlu0 %7095
        %7098 = vset.pattern.permute.xlu0 0
        %7099 = vperm.xlu0 %7098, %v7037
        %v7100 = vpop.permute.xlu0 %7099
        %7102 = vset.pattern.permute.xlu0 0
        %7103 = vperm.xlu0 %7102, %v7041
        %v7104 = vpop.permute.xlu0 %7103
        %7106 = vset.pattern.permute.xlu0 0
        %7107 = vperm.xlu0 %7106, %v7045
        %v7108 = vpop.permute.xlu0 %7107
        %7110 = vset.pattern.permute.xlu0 0
        %7111 = vperm.xlu0 %7110, %v7049
        %v7112 = vpop.permute.xlu0 %7111
        %7114 = vset.pattern.permute.xlu0 0
        %7115 = vperm.xlu0 %7114, %v7053
        %v7116 = vpop.permute.xlu0 %7115
        %7118 = vset.pattern.permute.xlu0 0
        %7119 = vperm.xlu0 %7118, %v7057
        %v7120 = vpop.permute.xlu0 %7119
        %v7122 = vadd.f32 %v6766, %v7060
        %v7123 = vadd.f32 %v6767, %v7060
        %v7124 = vadd.f32 %v6768, %v7060
        %v7125 = vadd.f32 %v6769, %v7060
        %v7126 = vadd.f32 %v6770, %v7060
        %v7127 = vadd.f32 %v6771, %v7060
        %v7128 = vadd.f32 %v6772, %v7060
        %v7129 = vadd.f32 %v6773, %v7060
        %v7130 = vadd.f32 %v6774, %v7064
        %v7131 = vadd.f32 %v6775, %v7064
        %v7132 = vadd.f32 %v6776, %v7064
        %v7133 = vadd.f32 %v6777, %v7064
        %v7134 = vadd.f32 %v6778, %v7064
        %v7135 = vadd.f32 %v6779, %v7064
        %v7136 = vadd.f32 %v6780, %v7064
        %v7137 = vadd.f32 %v6781, %v7064
        %v7138 = vadd.f32 %v6782, %v7068
        %v7139 = vadd.f32 %v6783, %v7068
        %v7140 = vadd.f32 %v6784, %v7068
        %v7141 = vadd.f32 %v6785, %v7068
        %v7142 = vadd.f32 %v6786, %v7068
        %v7143 = vadd.f32 %v6787, %v7068
        %v7144 = vadd.f32 %v6788, %v7068
        %v7145 = vadd.f32 %v6789, %v7068
        %v7146 = vadd.f32 %v6790, %v7072
        %v7147 = vadd.f32 %v6791, %v7072
        %v7148 = vadd.f32 %v6792, %v7072
        %v7149 = vadd.f32 %v6793, %v7072
        %v7150 = vadd.f32 %v6794, %v7072
        %v7151 = vadd.f32 %v6795, %v7072
        %v7152 = vadd.f32 %v6796, %v7072
        %v7153 = vadd.f32 %v6797, %v7072
        %v7154 = vadd.f32 %v6798, %v7076
        %v7155 = vadd.f32 %v6799, %v7076
        %v7156 = vadd.f32 %v6800, %v7076
        %v7157 = vadd.f32 %v6801, %v7076
        %v7158 = vadd.f32 %v6802, %v7076
        %v7159 = vadd.f32 %v6803, %v7076
        %v7160 = vadd.f32 %v6804, %v7076
        %v7161 = vadd.f32 %v6805, %v7076
        %v7162 = vadd.f32 %v6806, %v7080
        %v7163 = vadd.f32 %v6807, %v7080
        %v7164 = vadd.f32 %v6808, %v7080
        %v7165 = vadd.f32 %v6809, %v7080
        %v7166 = vadd.f32 %v6810, %v7080
        %v7167 = vadd.f32 %v6811, %v7080
        %v7168 = vadd.f32 %v6812, %v7080
        %v7169 = vadd.f32 %v6813, %v7080
        %v7170 = vadd.f32 %v6814, %v7084
        %v7171 = vadd.f32 %v6815, %v7084
        %v7172 = vadd.f32 %v6816, %v7084
        %v7173 = vadd.f32 %v6817, %v7084
        %v7174 = vadd.f32 %v6818, %v7084
        %v7175 = vadd.f32 %v6819, %v7084
        %v7176 = vadd.f32 %v6820, %v7084
        %v7177 = vadd.f32 %v6821, %v7084
        %v7178 = vadd.f32 %v6822, %v7088
        %v7179 = vadd.f32 %v6823, %v7088
        %v7180 = vadd.f32 %v6824, %v7088
        %v7181 = vadd.f32 %v6825, %v7088
        %v7182 = vadd.f32 %v6826, %v7088
        %v7183 = vadd.f32 %v6827, %v7088
        %v7184 = vadd.f32 %v6828, %v7088
        %v7185 = vadd.f32 %v6829, %v7088
        %v7186 = vadd.f32 %v6830, %v7092
        %v7187 = vadd.f32 %v6831, %v7092
        %v7188 = vadd.f32 %v6832, %v7092
        %v7189 = vadd.f32 %v6833, %v7092
        %v7190 = vadd.f32 %v6834, %v7092
        %v7191 = vadd.f32 %v6835, %v7092
        %v7192 = vadd.f32 %v6836, %v7092
        %v7193 = vadd.f32 %v6837, %v7092
        %v7194 = vadd.f32 %v6838, %v7096
        %v7195 = vadd.f32 %v6839, %v7096
        %v7196 = vadd.f32 %v6840, %v7096
        %v7197 = vadd.f32 %v6841, %v7096
        %v7198 = vadd.f32 %v6842, %v7096
        %v7199 = vadd.f32 %v6843, %v7096
        %v7200 = vadd.f32 %v6844, %v7096
        %v7201 = vadd.f32 %v6845, %v7096
        %v7202 = vadd.f32 %v6846, %v7100
        %v7203 = vadd.f32 %v6847, %v7100
        %v7204 = vadd.f32 %v6848, %v7100
        %v7205 = vadd.f32 %v6849, %v7100
        %v7206 = vadd.f32 %v6850, %v7100
        %v7207 = vadd.f32 %v6851, %v7100
        %v7208 = vadd.f32 %v6852, %v7100
        %v7209 = vadd.f32 %v6853, %v7100
        %v7210 = vadd.f32 %v6854, %v7104
        %v7211 = vadd.f32 %v6855, %v7104
        %v7212 = vadd.f32 %v6856, %v7104
        %v7213 = vadd.f32 %v6857, %v7104
        %v7214 = vadd.f32 %v6858, %v7104
        %v7215 = vadd.f32 %v6859, %v7104
        %v7216 = vadd.f32 %v6860, %v7104
        %v7217 = vadd.f32 %v6861, %v7104
        %v7218 = vadd.f32 %v6862, %v7108
        %v7219 = vadd.f32 %v6863, %v7108
        %v7220 = vadd.f32 %v6864, %v7108
        %v7221 = vadd.f32 %v6865, %v7108
        %v7222 = vadd.f32 %v6866, %v7108
        %v7223 = vadd.f32 %v6867, %v7108
        %v7224 = vadd.f32 %v6868, %v7108
        %v7225 = vadd.f32 %v6869, %v7108
        %v7226 = vadd.f32 %v6870, %v7112
        %v7227 = vadd.f32 %v6871, %v7112
        %v7228 = vadd.f32 %v6872, %v7112
        %v7229 = vadd.f32 %v6873, %v7112
        %v7230 = vadd.f32 %v6874, %v7112
        %v7231 = vadd.f32 %v6875, %v7112
        %v7232 = vadd.f32 %v6876, %v7112
        %v7233 = vadd.f32 %v6877, %v7112
        %v7234 = vadd.f32 %v6878, %v7116
        %v7235 = vadd.f32 %v6879, %v7116
        %v7236 = vadd.f32 %v6880, %v7116
        %v7237 = vadd.f32 %v6881, %v7116
        %v7238 = vadd.f32 %v6882, %v7116
        %v7239 = vadd.f32 %v6883, %v7116
        %v7240 = vadd.f32 %v6884, %v7116
        %v7241 = vadd.f32 %v6885, %v7116
        %v7242 = vadd.f32 %v6886, %v7120
        %v7243 = vadd.f32 %v6887, %v7120
        %v7244 = vadd.f32 %v6888, %v7120
        %v7245 = vadd.f32 %v6889, %v7120
        %v7246 = vadd.f32 %v6890, %v7120
        %v7247 = vadd.f32 %v6891, %v7120
        %v7248 = vadd.f32 %v6892, %v7120
        %v7249 = vadd.f32 %v6893, %v7120
        %v7251 = vsel %vm3062, %v1140, 0
        %7253 = vmatprep.subr.mxu0 0.0
        %7254 = vmatpush1.msra.mxu0 %v7122
        %7255 = vmatprep.subr.mxu0 0.0
        %7256 = vmatpush1.msra.mxu0 %v7123
        %7257 = vmatprep.subr.mxu0 0.0
        %7258 = vmatpush1.msra.mxu0 %v7124
        %7259 = vmatprep.subr.mxu0 0.0
        %7260 = vmatpush1.msra.mxu0 %v7125
        %7261 = vmatprep.subr.mxu0 0.0
        %7262 = vmatpush1.msra.mxu0 %v7126
        %7263 = vmatprep.subr.mxu0 0.0
        %7264 = vmatpush1.msra.mxu0 %v7127
        %7265 = vmatprep.subr.mxu0 0.0
        %7266 = vmatpush1.msra.mxu0 %v7128
        %7267 = vmatprep.subr.mxu0 0.0
        %7268 = vmatpush1.msra.mxu0 %v7129
        %7269 = vmatprep.subr.mxu0 0.0
        %7270 = vmatpush1.msra.mxu0 0.0
        %7271 = vmatprep.subr.mxu0 0.0
        %7272 = vmatpush1.msra.mxu0 0.0
        %7273 = vmatprep.subr.mxu0 0.0
        %7274 = vmatpush1.msra.mxu0 0.0
        %7275 = vmatprep.subr.mxu0 0.0
        %7276 = vmatpush1.msra.mxu0 0.0
        %7277 = vmatprep.subr.mxu0 0.0
        %7278 = vmatpush1.msra.mxu0 0.0
        %7279 = vmatprep.subr.mxu0 0.0
        %7280 = vmatpush1.msra.mxu0 0.0
        %7281 = vmatprep.subr.mxu0 0.0
        %7282 = vmatpush1.msra.mxu0 0.0
        %7283 = vmatprep.subr.mxu0 0.0
        %7284 = vmatpush1.msra.mxu0 0.0
        %7285 = vmatprep.subr.mxu0 0.0
        %7286 = vmatpush1.msra.mxu0 0.0
        %7287 = vmatprep.subr.mxu0 0.0
        %7288 = vmatpush1.msra.mxu0 0.0
        %7289 = vmatprep.subr.mxu0 0.0
        %7290 = vmatpush1.msra.mxu0 0.0
        %7291 = vmatprep.subr.mxu0 0.0
        %7292 = vmatpush1.msra.mxu0 0.0
        %7293 = vmatprep.subr.mxu0 0.0
        %7294 = vmatpush1.msra.mxu0 0.0
        %7295 = vmatprep.subr.mxu0 0.0
        %7296 = vmatpush1.msra.mxu0 0.0
        %7297 = vmatprep.subr.mxu0 0.0
        %7298 = vmatpush1.msra.mxu0 0.0
        %7299 = vmatprep.subr.mxu0 0.0
        %7300 = vmatpush1.msra.mxu0 0.0
        %7301 = vmatprep.subr.mxu0 0.0
        %7302 = vmatpush1.msra.mxu0 0.0
        %7303 = vmatprep.subr.mxu0 0.0
        %7304 = vmatpush1.msra.mxu0 0.0
        %7305 = vmatprep.subr.mxu0 0.0
        %7306 = vmatpush1.msra.mxu0 0.0
        %7307 = vmatprep.subr.mxu0 0.0
        %7308 = vmatpush1.msra.mxu0 0.0
        %7309 = vmatprep.subr.mxu0 0.0
        %7310 = vmatpush1.msra.mxu0 0.0
        %7311 = vmatprep.subr.mxu0 0.0
        %7312 = vmatpush1.msra.mxu0 0.0
        %7313 = vmatprep.subr.mxu0 0.0
        %7314 = vmatpush1.msra.mxu0 0.0
        %7315 = vmatprep.subr.mxu0 0.0
        %7316 = vmatpush1.msra.mxu0 0.0
        %7317 = vmatprep.mubr.f32.mxu0 0.0
        %7318 = vmatmul.mubr.f32.gmra.mrb[0].mxu0 %v7251
        %v7319 = vpop.f32.mrb[0].mxu0
        %v7320 = vadd.f32 0.0, %v7319
        %v7321 = vpop.f32.mrb[0].mxu0
        %7322 = vdwg.mxu0
        %v7324 = vsel %vm3062, %v1141, 0
        %7326 = vmatprep.subr.mxu0 0.0
        %7327 = vmatpush1.msra.mxu0 %v7130
        %7328 = vmatprep.subr.mxu0 0.0
        %7329 = vmatpush1.msra.mxu0 %v7131
        %7330 = vmatprep.subr.mxu0 0.0
        %7331 = vmatpush1.msra.mxu0 %v7132
        %7332 = vmatprep.subr.mxu0 0.0
        %7333 = vmatpush1.msra.mxu0 %v7133
        %7334 = vmatprep.subr.mxu0 0.0
        %7335 = vmatpush1.msra.mxu0 %v7134
        %7336 = vmatprep.subr.mxu0 0.0
        %7337 = vmatpush1.msra.mxu0 %v7135
        %7338 = vmatprep.subr.mxu0 0.0
        %7339 = vmatpush1.msra.mxu0 %v7136
        %7340 = vmatprep.subr.mxu0 0.0
        %7341 = vmatpush1.msra.mxu0 %v7137
        %7342 = vmatprep.subr.mxu0 0.0
        %7343 = vmatpush1.msra.mxu0 0.0
        %7344 = vmatprep.subr.mxu0 0.0
        %7345 = vmatpush1.msra.mxu0 0.0
        %7346 = vmatprep.subr.mxu0 0.0
        %7347 = vmatpush1.msra.mxu0 0.0
        %7348 = vmatprep.subr.mxu0 0.0
        %7349 = vmatpush1.msra.mxu0 0.0
        %7350 = vmatprep.subr.mxu0 0.0
        %7351 = vmatpush1.msra.mxu0 0.0
        %7352 = vmatprep.subr.mxu0 0.0
        %7353 = vmatpush1.msra.mxu0 0.0
        %7354 = vmatprep.subr.mxu0 0.0
        %7355 = vmatpush1.msra.mxu0 0.0
        %7356 = vmatprep.subr.mxu0 0.0
        %7357 = vmatpush1.msra.mxu0 0.0
        %7358 = vmatprep.subr.mxu0 0.0
        %7359 = vmatpush1.msra.mxu0 0.0
        %7360 = vmatprep.subr.mxu0 0.0
        %7361 = vmatpush1.msra.mxu0 0.0
        %7362 = vmatprep.subr.mxu0 0.0
        %7363 = vmatpush1.msra.mxu0 0.0
        %7364 = vmatprep.subr.mxu0 0.0
        %7365 = vmatpush1.msra.mxu0 0.0
        %7366 = vmatprep.subr.mxu0 0.0
        %7367 = vmatpush1.msra.mxu0 0.0
        %7368 = vmatprep.subr.mxu0 0.0
        %7369 = vmatpush1.msra.mxu0 0.0
        %7370 = vmatprep.subr.mxu0 0.0
        %7371 = vmatpush1.msra.mxu0 0.0
        %7372 = vmatprep.subr.mxu0 0.0
        %7373 = vmatpush1.msra.mxu0 0.0
        %7374 = vmatprep.subr.mxu0 0.0
        %7375 = vmatpush1.msra.mxu0 0.0
        %7376 = vmatprep.subr.mxu0 0.0
        %7377 = vmatpush1.msra.mxu0 0.0
        %7378 = vmatprep.subr.mxu0 0.0
        %7379 = vmatpush1.msra.mxu0 0.0
        %7380 = vmatprep.subr.mxu0 0.0
        %7381 = vmatpush1.msra.mxu0 0.0
        %7382 = vmatprep.subr.mxu0 0.0
        %7383 = vmatpush1.msra.mxu0 0.0
        %7384 = vmatprep.subr.mxu0 0.0
        %7385 = vmatpush1.msra.mxu0 0.0
        %7386 = vmatprep.subr.mxu0 0.0
        %7387 = vmatpush1.msra.mxu0 0.0
        %7388 = vmatprep.subr.mxu0 0.0
        %7389 = vmatpush1.msra.mxu0 0.0
        %7390 = vmatprep.mubr.f32.mxu0 0.0
        %7391 = vmatmul.mubr.f32.gmra.mrb[0].mxu0 %v7324
        %v7392 = vpop.f32.mrb[0].mxu0
        %v7393 = vadd.f32 0.0, %v7392
        %v7394 = vpop.f32.mrb[0].mxu0
        %7395 = vdwg.mxu0
        %v7397 = vsel %vm3062, %v1142, 0
        %7399 = vmatprep.subr.mxu0 0.0
        %7400 = vmatpush1.msra.mxu0 %v7138
        %7401 = vmatprep.subr.mxu0 0.0
        %7402 = vmatpush1.msra.mxu0 %v7139
        %7403 = vmatprep.subr.mxu0 0.0
        %7404 = vmatpush1.msra.mxu0 %v7140
        %7405 = vmatprep.subr.mxu0 0.0
        %7406 = vmatpush1.msra.mxu0 %v7141
        %7407 = vmatprep.subr.mxu0 0.0
        %7408 = vmatpush1.msra.mxu0 %v7142
        %7409 = vmatprep.subr.mxu0 0.0
        %7410 = vmatpush1.msra.mxu0 %v7143
        %7411 = vmatprep.subr.mxu0 0.0
        %7412 = vmatpush1.msra.mxu0 %v7144
        %7413 = vmatprep.subr.mxu0 0.0
        %7414 = vmatpush1.msra.mxu0 %v7145
        %7415 = vmatprep.subr.mxu0 0.0
        %7416 = vmatpush1.msra.mxu0 0.0
        %7417 = vmatprep.subr.mxu0 0.0
        %7418 = vmatpush1.msra.mxu0 0.0
        %7419 = vmatprep.subr.mxu0 0.0
        %7420 = vmatpush1.msra.mxu0 0.0
        %7421 = vmatprep.subr.mxu0 0.0
        %7422 = vmatpush1.msra.mxu0 0.0
        %7423 = vmatprep.subr.mxu0 0.0
        %7424 = vmatpush1.msra.mxu0 0.0
        %7425 = vmatprep.subr.mxu0 0.0
        %7426 = vmatpush1.msra.mxu0 0.0
        %7427 = vmatprep.subr.mxu0 0.0
        %7428 = vmatpush1.msra.mxu0 0.0
        %7429 = vmatprep.subr.mxu0 0.0
        %7430 = vmatpush1.msra.mxu0 0.0
        %7431 = vmatprep.subr.mxu0 0.0
        %7432 = vmatpush1.msra.mxu0 0.0
        %7433 = vmatprep.subr.mxu0 0.0
        %7434 = vmatpush1.msra.mxu0 0.0
        %7435 = vmatprep.subr.mxu0 0.0
        %7436 = vmatpush1.msra.mxu0 0.0
        %7437 = vmatprep.subr.mxu0 0.0
        %7438 = vmatpush1.msra.mxu0 0.0
        %7439 = vmatprep.subr.mxu0 0.0
        %7440 = vmatpush1.msra.mxu0 0.0
        %7441 = vmatprep.subr.mxu0 0.0
        %7442 = vmatpush1.msra.mxu0 0.0
        %7443 = vmatprep.subr.mxu0 0.0
        %7444 = vmatpush1.msra.mxu0 0.0
        %7445 = vmatprep.subr.mxu0 0.0
        %7446 = vmatpush1.msra.mxu0 0.0
        %7447 = vmatprep.subr.mxu0 0.0
        %7448 = vmatpush1.msra.mxu0 0.0
        %7449 = vmatprep.subr.mxu0 0.0
        %7450 = vmatpush1.msra.mxu0 0.0
        %7451 = vmatprep.subr.mxu0 0.0
        %7452 = vmatpush1.msra.mxu0 0.0
        %7453 = vmatprep.subr.mxu0 0.0
        %7454 = vmatpush1.msra.mxu0 0.0
        %7455 = vmatprep.subr.mxu0 0.0
        %7456 = vmatpush1.msra.mxu0 0.0
        %7457 = vmatprep.subr.mxu0 0.0
        %7458 = vmatpush1.msra.mxu0 0.0
        %7459 = vmatprep.subr.mxu0 0.0
        %7460 = vmatpush1.msra.mxu0 0.0
        %7461 = vmatprep.subr.mxu0 0.0
        %7462 = vmatpush1.msra.mxu0 0.0
        %7463 = vmatprep.mubr.f32.mxu0 0.0
        %7464 = vmatmul.mubr.f32.gmra.mrb[0].mxu0 %v7397
        %v7465 = vpop.f32.mrb[0].mxu0
        %v7466 = vadd.f32 0.0, %v7465
        %v7467 = vpop.f32.mrb[0].mxu0
        %7468 = vdwg.mxu0
        %v7470 = vsel %vm3062, %v1143, 0
        %7472 = vmatprep.subr.mxu0 0.0
        %7473 = vmatpush1.msra.mxu0 %v7146
        %7474 = vmatprep.subr.mxu0 0.0
        %7475 = vmatpush1.msra.mxu0 %v7147
        %7476 = vmatprep.subr.mxu0 0.0
        %7477 = vmatpush1.msra.mxu0 %v7148
        %7478 = vmatprep.subr.mxu0 0.0
        %7479 = vmatpush1.msra.mxu0 %v7149
        %7480 = vmatprep.subr.mxu0 0.0
        %7481 = vmatpush1.msra.mxu0 %v7150
        %7482 = vmatprep.subr.mxu0 0.0
        %7483 = vmatpush1.msra.mxu0 %v7151
        %7484 = vmatprep.subr.mxu0 0.0
        %7485 = vmatpush1.msra.mxu0 %v7152
        %7486 = vmatprep.subr.mxu0 0.0
        %7487 = vmatpush1.msra.mxu0 %v7153
        %7488 = vmatprep.subr.mxu0 0.0
        %7489 = vmatpush1.msra.mxu0 0.0
        %7490 = vmatprep.subr.mxu0 0.0
        %7491 = vmatpush1.msra.mxu0 0.0
        %7492 = vmatprep.subr.mxu0 0.0
        %7493 = vmatpush1.msra.mxu0 0.0
        %7494 = vmatprep.subr.mxu0 0.0
        %7495 = vmatpush1.msra.mxu0 0.0
        %7496 = vmatprep.subr.mxu0 0.0
        %7497 = vmatpush1.msra.mxu0 0.0
        %7498 = vmatprep.subr.mxu0 0.0
        %7499 = vmatpush1.msra.mxu0 0.0
        %7500 = vmatprep.subr.mxu0 0.0
        %7501 = vmatpush1.msra.mxu0 0.0
        %7502 = vmatprep.subr.mxu0 0.0
        %7503 = vmatpush1.msra.mxu0 0.0
        %7504 = vmatprep.subr.mxu0 0.0
        %7505 = vmatpush1.msra.mxu0 0.0
        %7506 = vmatprep.subr.mxu0 0.0
        %7507 = vmatpush1.msra.mxu0 0.0
        %7508 = vmatprep.subr.mxu0 0.0
        %7509 = vmatpush1.msra.mxu0 0.0
        %7510 = vmatprep.subr.mxu0 0.0
        %7511 = vmatpush1.msra.mxu0 0.0
        %7512 = vmatprep.subr.mxu0 0.0
        %7513 = vmatpush1.msra.mxu0 0.0
        %7514 = vmatprep.subr.mxu0 0.0
        %7515 = vmatpush1.msra.mxu0 0.0
        %7516 = vmatprep.subr.mxu0 0.0
        %7517 = vmatpush1.msra.mxu0 0.0
        %7518 = vmatprep.subr.mxu0 0.0
        %7519 = vmatpush1.msra.mxu0 0.0
        %7520 = vmatprep.subr.mxu0 0.0
        %7521 = vmatpush1.msra.mxu0 0.0
        %7522 = vmatprep.subr.mxu0 0.0
        %7523 = vmatpush1.msra.mxu0 0.0
        %7524 = vmatprep.subr.mxu0 0.0
        %7525 = vmatpush1.msra.mxu0 0.0
        %7526 = vmatprep.subr.mxu0 0.0
        %7527 = vmatpush1.msra.mxu0 0.0
        %7528 = vmatprep.subr.mxu0 0.0
        %7529 = vmatpush1.msra.mxu0 0.0
        %7530 = vmatprep.subr.mxu0 0.0
        %7531 = vmatpush1.msra.mxu0 0.0
        %7532 = vmatprep.subr.mxu0 0.0
        %7533 = vmatpush1.msra.mxu0 0.0
        %7534 = vmatprep.subr.mxu0 0.0
        %7535 = vmatpush1.msra.mxu0 0.0
        %7536 = vmatprep.mubr.f32.mxu0 0.0
        %7537 = vmatmul.mubr.f32.gmra.mrb[0].mxu0 %v7470
        %v7538 = vpop.f32.mrb[0].mxu0
        %v7539 = vadd.f32 0.0, %v7538
        %v7540 = vpop.f32.mrb[0].mxu0
        %7541 = vdwg.mxu0
        %v7543 = vsel %vm3062, %v1144, 0
        %7545 = vmatprep.subr.mxu0 0.0
        %7546 = vmatpush1.msra.mxu0 %v7154
        %7547 = vmatprep.subr.mxu0 0.0
        %7548 = vmatpush1.msra.mxu0 %v7155
        %7549 = vmatprep.subr.mxu0 0.0
        %7550 = vmatpush1.msra.mxu0 %v7156
        %7551 = vmatprep.subr.mxu0 0.0
        %7552 = vmatpush1.msra.mxu0 %v7157
        %7553 = vmatprep.subr.mxu0 0.0
        %7554 = vmatpush1.msra.mxu0 %v7158
        %7555 = vmatprep.subr.mxu0 0.0
        %7556 = vmatpush1.msra.mxu0 %v7159
        %7557 = vmatprep.subr.mxu0 0.0
        %7558 = vmatpush1.msra.mxu0 %v7160
        %7559 = vmatprep.subr.mxu0 0.0
        %7560 = vmatpush1.msra.mxu0 %v7161
        %7561 = vmatprep.subr.mxu0 0.0
        %7562 = vmatpush1.msra.mxu0 0.0
        %7563 = vmatprep.subr.mxu0 0.0
        %7564 = vmatpush1.msra.mxu0 0.0
        %7565 = vmatprep.subr.mxu0 0.0
        %7566 = vmatpush1.msra.mxu0 0.0
        %7567 = vmatprep.subr.mxu0 0.0
        %7568 = vmatpush1.msra.mxu0 0.0
        %7569 = vmatprep.subr.mxu0 0.0
        %7570 = vmatpush1.msra.mxu0 0.0
        %7571 = vmatprep.subr.mxu0 0.0
        %7572 = vmatpush1.msra.mxu0 0.0
        %7573 = vmatprep.subr.mxu0 0.0
        %7574 = vmatpush1.msra.mxu0 0.0
        %7575 = vmatprep.subr.mxu0 0.0
        %7576 = vmatpush1.msra.mxu0 0.0
        %7577 = vmatprep.subr.mxu0 0.0
        %7578 = vmatpush1.msra.mxu0 0.0
        %7579 = vmatprep.subr.mxu0 0.0
        %7580 = vmatpush1.msra.mxu0 0.0
        %7581 = vmatprep.subr.mxu0 0.0
        %7582 = vmatpush1.msra.mxu0 0.0
        %7583 = vmatprep.subr.mxu0 0.0
        %7584 = vmatpush1.msra.mxu0 0.0
        %7585 = vmatprep.subr.mxu0 0.0
        %7586 = vmatpush1.msra.mxu0 0.0
        %7587 = vmatprep.subr.mxu0 0.0
        %7588 = vmatpush1.msra.mxu0 0.0
        %7589 = vmatprep.subr.mxu0 0.0
        %7590 = vmatpush1.msra.mxu0 0.0
        %7591 = vmatprep.subr.mxu0 0.0
        %7592 = vmatpush1.msra.mxu0 0.0
        %7593 = vmatprep.subr.mxu0 0.0
        %7594 = vmatpush1.msra.mxu0 0.0
        %7595 = vmatprep.subr.mxu0 0.0
        %7596 = vmatpush1.msra.mxu0 0.0
        %7597 = vmatprep.subr.mxu0 0.0
        %7598 = vmatpush1.msra.mxu0 0.0
        %7599 = vmatprep.subr.mxu0 0.0
        %7600 = vmatpush1.msra.mxu0 0.0
        %7601 = vmatprep.subr.mxu0 0.0
        %7602 = vmatpush1.msra.mxu0 0.0
        %7603 = vmatprep.subr.mxu0 0.0
        %7604 = vmatpush1.msra.mxu0 0.0
        %7605 = vmatprep.subr.mxu0 0.0
        %7606 = vmatpush1.msra.mxu0 0.0
        %7607 = vmatprep.subr.mxu0 0.0
        %7608 = vmatpush1.msra.mxu0 0.0
        %7609 = vmatprep.mubr.f32.mxu0 0.0
        %7610 = vmatmul.mubr.f32.gmra.mrb[0].mxu0 %v7543
        %v7611 = vpop.f32.mrb[0].mxu0
        %v7612 = vadd.f32 0.0, %v7611
        %v7613 = vpop.f32.mrb[0].mxu0
        %7614 = vdwg.mxu0
        %v7616 = vsel %vm3062, %v1145, 0
        %7618 = vmatprep.subr.mxu0 0.0
        %7619 = vmatpush1.msra.mxu0 %v7162
        %7620 = vmatprep.subr.mxu0 0.0
        %7621 = vmatpush1.msra.mxu0 %v7163
        %7622 = vmatprep.subr.mxu0 0.0
        %7623 = vmatpush1.msra.mxu0 %v7164
        %7624 = vmatprep.subr.mxu0 0.0
        %7625 = vmatpush1.msra.mxu0 %v7165
        %7626 = vmatprep.subr.mxu0 0.0
        %7627 = vmatpush1.msra.mxu0 %v7166
        %7628 = vmatprep.subr.mxu0 0.0
        %7629 = vmatpush1.msra.mxu0 %v7167
        %7630 = vmatprep.subr.mxu0 0.0
        %7631 = vmatpush1.msra.mxu0 %v7168
        %7632 = vmatprep.subr.mxu0 0.0
        %7633 = vmatpush1.msra.mxu0 %v7169
        %7634 = vmatprep.subr.mxu0 0.0
        %7635 = vmatpush1.msra.mxu0 0.0
        %7636 = vmatprep.subr.mxu0 0.0
        %7637 = vmatpush1.msra.mxu0 0.0
        %7638 = vmatprep.subr.mxu0 0.0
        %7639 = vmatpush1.msra.mxu0 0.0
        %7640 = vmatprep.subr.mxu0 0.0
        %7641 = vmatpush1.msra.mxu0 0.0
        %7642 = vmatprep.subr.mxu0 0.0
        %7643 = vmatpush1.msra.mxu0 0.0
        %7644 = vmatprep.subr.mxu0 0.0
        %7645 = vmatpush1.msra.mxu0 0.0
        %7646 = vmatprep.subr.mxu0 0.0
        %7647 = vmatpush1.msra.mxu0 0.0
        %7648 = vmatprep.subr.mxu0 0.0
        %7649 = vmatpush1.msra.mxu0 0.0
        %7650 = vmatprep.subr.mxu0 0.0
        %7651 = vmatpush1.msra.mxu0 0.0
        %7652 = vmatprep.subr.mxu0 0.0
        %7653 = vmatpush1.msra.mxu0 0.0
        %7654 = vmatprep.subr.mxu0 0.0
        %7655 = vmatpush1.msra.mxu0 0.0
        %7656 = vmatprep.subr.mxu0 0.0
        %7657 = vmatpush1.msra.mxu0 0.0
        %7658 = vmatprep.subr.mxu0 0.0
        %7659 = vmatpush1.msra.mxu0 0.0
        %7660 = vmatprep.subr.mxu0 0.0
        %7661 = vmatpush1.msra.mxu0 0.0
        %7662 = vmatprep.subr.mxu0 0.0
        %7663 = vmatpush1.msra.mxu0 0.0
        %7664 = vmatprep.subr.mxu0 0.0
        %7665 = vmatpush1.msra.mxu0 0.0
        %7666 = vmatprep.subr.mxu0 0.0
        %7667 = vmatpush1.msra.mxu0 0.0
        %7668 = vmatprep.subr.mxu0 0.0
        %7669 = vmatpush1.msra.mxu0 0.0
        %7670 = vmatprep.subr.mxu0 0.0
        %7671 = vmatpush1.msra.mxu0 0.0
        %7672 = vmatprep.subr.mxu0 0.0
        %7673 = vmatpush1.msra.mxu0 0.0
        %7674 = vmatprep.subr.mxu0 0.0
        %7675 = vmatpush1.msra.mxu0 0.0
        %7676 = vmatprep.subr.mxu0 0.0
        %7677 = vmatpush1.msra.mxu0 0.0
        %7678 = vmatprep.subr.mxu0 0.0
        %7679 = vmatpush1.msra.mxu0 0.0
        %7680 = vmatprep.subr.mxu0 0.0
        %7681 = vmatpush1.msra.mxu0 0.0
        %7682 = vmatprep.mubr.f32.mxu0 0.0
        %7683 = vmatmul.mubr.f32.gmra.mrb[0].mxu0 %v7616
        %v7684 = vpop.f32.mrb[0].mxu0
        %v7685 = vadd.f32 0.0, %v7684
        %v7686 = vpop.f32.mrb[0].mxu0
        %7687 = vdwg.mxu0
        %v7689 = vsel %vm3062, %v1146, 0
        %7691 = vmatprep.subr.mxu0 0.0
        %7692 = vmatpush1.msra.mxu0 %v7170
        %7693 = vmatprep.subr.mxu0 0.0
        %7694 = vmatpush1.msra.mxu0 %v7171
        %7695 = vmatprep.subr.mxu0 0.0
        %7696 = vmatpush1.msra.mxu0 %v7172
        %7697 = vmatprep.subr.mxu0 0.0
        %7698 = vmatpush1.msra.mxu0 %v7173
        %7699 = vmatprep.subr.mxu0 0.0
        %7700 = vmatpush1.msra.mxu0 %v7174
        %7701 = vmatprep.subr.mxu0 0.0
        %7702 = vmatpush1.msra.mxu0 %v7175
        %7703 = vmatprep.subr.mxu0 0.0
        %7704 = vmatpush1.msra.mxu0 %v7176
        %7705 = vmatprep.subr.mxu0 0.0
        %7706 = vmatpush1.msra.mxu0 %v7177
        %7707 = vmatprep.subr.mxu0 0.0
        %7708 = vmatpush1.msra.mxu0 0.0
        %7709 = vmatprep.subr.mxu0 0.0
        %7710 = vmatpush1.msra.mxu0 0.0
        %7711 = vmatprep.subr.mxu0 0.0
        %7712 = vmatpush1.msra.mxu0 0.0
        %7713 = vmatprep.subr.mxu0 0.0
        %7714 = vmatpush1.msra.mxu0 0.0
        %7715 = vmatprep.subr.mxu0 0.0
        %7716 = vmatpush1.msra.mxu0 0.0
        %7717 = vmatprep.subr.mxu0 0.0
        %7718 = vmatpush1.msra.mxu0 0.0
        %7719 = vmatprep.subr.mxu0 0.0
        %7720 = vmatpush1.msra.mxu0 0.0
        %7721 = vmatprep.subr.mxu0 0.0
        %7722 = vmatpush1.msra.mxu0 0.0
        %7723 = vmatprep.subr.mxu0 0.0
        %7724 = vmatpush1.msra.mxu0 0.0
        %7725 = vmatprep.subr.mxu0 0.0
        %7726 = vmatpush1.msra.mxu0 0.0
        %7727 = vmatprep.subr.mxu0 0.0
        %7728 = vmatpush1.msra.mxu0 0.0
        %7729 = vmatprep.subr.mxu0 0.0
        %7730 = vmatpush1.msra.mxu0 0.0
        %7731 = vmatprep.subr.mxu0 0.0
        %7732 = vmatpush1.msra.mxu0 0.0
        %7733 = vmatprep.subr.mxu0 0.0
        %7734 = vmatpush1.msra.mxu0 0.0
        %7735 = vmatprep.subr.mxu0 0.0
        %7736 = vmatpush1.msra.mxu0 0.0
        %7737 = vmatprep.subr.mxu0 0.0
        %7738 = vmatpush1.msra.mxu0 0.0
        %7739 = vmatprep.subr.mxu0 0.0
        %7740 = vmatpush1.msra.mxu0 0.0
        %7741 = vmatprep.subr.mxu0 0.0
        %7742 = vmatpush1.msra.mxu0 0.0
        %7743 = vmatprep.subr.mxu0 0.0
        %7744 = vmatpush1.msra.mxu0 0.0
        %7745 = vmatprep.subr.mxu0 0.0
        %7746 = vmatpush1.msra.mxu0 0.0
        %7747 = vmatprep.subr.mxu0 0.0
        %7748 = vmatpush1.msra.mxu0 0.0
        %7749 = vmatprep.subr.mxu0 0.0
        %7750 = vmatpush1.msra.mxu0 0.0
        %7751 = vmatprep.subr.mxu0 0.0
        %7752 = vmatpush1.msra.mxu0 0.0
        %7753 = vmatprep.subr.mxu0 0.0
        %7754 = vmatpush1.msra.mxu0 0.0
        %7755 = vmatprep.mubr.f32.mxu0 0.0
        %7756 = vmatmul.mubr.f32.gmra.mrb[0].mxu0 %v7689
        %v7757 = vpop.f32.mrb[0].mxu0
        %v7758 = vadd.f32 0.0, %v7757
        %v7759 = vpop.f32.mrb[0].mxu0
        %7760 = vdwg.mxu0
        %v7762 = vsel %vm3062, %v1147, 0
        %7764 = vmatprep.subr.mxu0 0.0
        %7765 = vmatpush1.msra.mxu0 %v7178
        %7766 = vmatprep.subr.mxu0 0.0
        %7767 = vmatpush1.msra.mxu0 %v7179
        %7768 = vmatprep.subr.mxu0 0.0
        %7769 = vmatpush1.msra.mxu0 %v7180
        %7770 = vmatprep.subr.mxu0 0.0
        %7771 = vmatpush1.msra.mxu0 %v7181
        %7772 = vmatprep.subr.mxu0 0.0
        %7773 = vmatpush1.msra.mxu0 %v7182
        %7774 = vmatprep.subr.mxu0 0.0
        %7775 = vmatpush1.msra.mxu0 %v7183
        %7776 = vmatprep.subr.mxu0 0.0
        %7777 = vmatpush1.msra.mxu0 %v7184
        %7778 = vmatprep.subr.mxu0 0.0
        %7779 = vmatpush1.msra.mxu0 %v7185
        %7780 = vmatprep.subr.mxu0 0.0
        %7781 = vmatpush1.msra.mxu0 0.0
        %7782 = vmatprep.subr.mxu0 0.0
        %7783 = vmatpush1.msra.mxu0 0.0
        %7784 = vmatprep.subr.mxu0 0.0
        %7785 = vmatpush1.msra.mxu0 0.0
        %7786 = vmatprep.subr.mxu0 0.0
        %7787 = vmatpush1.msra.mxu0 0.0
        %7788 = vmatprep.subr.mxu0 0.0
        %7789 = vmatpush1.msra.mxu0 0.0
        %7790 = vmatprep.subr.mxu0 0.0
        %7791 = vmatpush1.msra.mxu0 0.0
        %7792 = vmatprep.subr.mxu0 0.0
        %7793 = vmatpush1.msra.mxu0 0.0
        %7794 = vmatprep.subr.mxu0 0.0
        %7795 = vmatpush1.msra.mxu0 0.0
        %7796 = vmatprep.subr.mxu0 0.0
        %7797 = vmatpush1.msra.mxu0 0.0
        %7798 = vmatprep.subr.mxu0 0.0
        %7799 = vmatpush1.msra.mxu0 0.0
        %7800 = vmatprep.subr.mxu0 0.0
        %7801 = vmatpush1.msra.mxu0 0.0
        %7802 = vmatprep.subr.mxu0 0.0
        %7803 = vmatpush1.msra.mxu0 0.0
        %7804 = vmatprep.subr.mxu0 0.0
        %7805 = vmatpush1.msra.mxu0 0.0
        %7806 = vmatprep.subr.mxu0 0.0
        %7807 = vmatpush1.msra.mxu0 0.0
        %7808 = vmatprep.subr.mxu0 0.0
        %7809 = vmatpush1.msra.mxu0 0.0
        %7810 = vmatprep.subr.mxu0 0.0
        %7811 = vmatpush1.msra.mxu0 0.0
        %7812 = vmatprep.subr.mxu0 0.0
        %7813 = vmatpush1.msra.mxu0 0.0
        %7814 = vmatprep.subr.mxu0 0.0
        %7815 = vmatpush1.msra.mxu0 0.0
        %7816 = vmatprep.subr.mxu0 0.0
        %7817 = vmatpush1.msra.mxu0 0.0
        %7818 = vmatprep.subr.mxu0 0.0
        %7819 = vmatpush1.msra.mxu0 0.0
        %7820 = vmatprep.subr.mxu0 0.0
        %7821 = vmatpush1.msra.mxu0 0.0
        %7822 = vmatprep.subr.mxu0 0.0
        %7823 = vmatpush1.msra.mxu0 0.0
        %7824 = vmatprep.subr.mxu0 0.0
        %7825 = vmatpush1.msra.mxu0 0.0
        %7826 = vmatprep.subr.mxu0 0.0
        %7827 = vmatpush1.msra.mxu0 0.0
        %7828 = vmatprep.mubr.f32.mxu0 0.0
        %7829 = vmatmul.mubr.f32.gmra.mrb[0].mxu0 %v7762
        %v7830 = vpop.f32.mrb[0].mxu0
        %v7831 = vadd.f32 0.0, %v7830
        %v7832 = vpop.f32.mrb[0].mxu0
        %7833 = vdwg.mxu0
        %v7835 = vsel %vm3062, %v1276, 0
        %7837 = vmatprep.subr.mxu0 0.0
        %7838 = vmatpush1.msra.mxu0 %v7186
        %7839 = vmatprep.subr.mxu0 0.0
        %7840 = vmatpush1.msra.mxu0 %v7187
        %7841 = vmatprep.subr.mxu0 0.0
        %7842 = vmatpush1.msra.mxu0 %v7188
        %7843 = vmatprep.subr.mxu0 0.0
        %7844 = vmatpush1.msra.mxu0 %v7189
        %7845 = vmatprep.subr.mxu0 0.0
        %7846 = vmatpush1.msra.mxu0 %v7190
        %7847 = vmatprep.subr.mxu0 0.0
        %7848 = vmatpush1.msra.mxu0 %v7191
        %7849 = vmatprep.subr.mxu0 0.0
        %7850 = vmatpush1.msra.mxu0 %v7192
        %7851 = vmatprep.subr.mxu0 0.0
        %7852 = vmatpush1.msra.mxu0 %v7193
        %7853 = vmatprep.subr.mxu0 0.0
        %7854 = vmatpush1.msra.mxu0 0.0
        %7855 = vmatprep.subr.mxu0 0.0
        %7856 = vmatpush1.msra.mxu0 0.0
        %7857 = vmatprep.subr.mxu0 0.0
        %7858 = vmatpush1.msra.mxu0 0.0
        %7859 = vmatprep.subr.mxu0 0.0
        %7860 = vmatpush1.msra.mxu0 0.0
        %7861 = vmatprep.subr.mxu0 0.0
        %7862 = vmatpush1.msra.mxu0 0.0
        %7863 = vmatprep.subr.mxu0 0.0
        %7864 = vmatpush1.msra.mxu0 0.0
        %7865 = vmatprep.subr.mxu0 0.0
        %7866 = vmatpush1.msra.mxu0 0.0
        %7867 = vmatprep.subr.mxu0 0.0
        %7868 = vmatpush1.msra.mxu0 0.0
        %7869 = vmatprep.subr.mxu0 0.0
        %7870 = vmatpush1.msra.mxu0 0.0
        %7871 = vmatprep.subr.mxu0 0.0
        %7872 = vmatpush1.msra.mxu0 0.0
        %7873 = vmatprep.subr.mxu0 0.0
        %7874 = vmatpush1.msra.mxu0 0.0
        %7875 = vmatprep.subr.mxu0 0.0
        %7876 = vmatpush1.msra.mxu0 0.0
        %7877 = vmatprep.subr.mxu0 0.0
        %7878 = vmatpush1.msra.mxu0 0.0
        %7879 = vmatprep.subr.mxu0 0.0
        %7880 = vmatpush1.msra.mxu0 0.0
        %7881 = vmatprep.subr.mxu0 0.0
        %7882 = vmatpush1.msra.mxu0 0.0
        %7883 = vmatprep.subr.mxu0 0.0
        %7884 = vmatpush1.msra.mxu0 0.0
        %7885 = vmatprep.subr.mxu0 0.0
        %7886 = vmatpush1.msra.mxu0 0.0
        %7887 = vmatprep.subr.mxu0 0.0
        %7888 = vmatpush1.msra.mxu0 0.0
        %7889 = vmatprep.subr.mxu0 0.0
        %7890 = vmatpush1.msra.mxu0 0.0
        %7891 = vmatprep.subr.mxu0 0.0
        %7892 = vmatpush1.msra.mxu0 0.0
        %7893 = vmatprep.subr.mxu0 0.0
        %7894 = vmatpush1.msra.mxu0 0.0
        %7895 = vmatprep.subr.mxu0 0.0
        %7896 = vmatpush1.msra.mxu0 0.0
        %7897 = vmatprep.subr.mxu0 0.0
        %7898 = vmatpush1.msra.mxu0 0.0
        %7899 = vmatprep.subr.mxu0 0.0
        %7900 = vmatpush1.msra.mxu0 0.0
        %7901 = vmatprep.mubr.f32.mxu0 0.0
        %7902 = vmatmul.mubr.f32.gmra.mrb[0].mxu0 %v7835
        %v7903 = vpop.f32.mrb[0].mxu0
        %v7904 = vadd.f32 0.0, %v7903
        %v7905 = vpop.f32.mrb[0].mxu0
        %7906 = vdwg.mxu0
        %v7908 = vsel %vm3062, %v1277, 0
        %7910 = vmatprep.subr.mxu0 0.0
        %7911 = vmatpush1.msra.mxu0 %v7194
        %7912 = vmatprep.subr.mxu0 0.0
        %7913 = vmatpush1.msra.mxu0 %v7195
        %7914 = vmatprep.subr.mxu0 0.0
        %7915 = vmatpush1.msra.mxu0 %v7196
        %7916 = vmatprep.subr.mxu0 0.0
        %7917 = vmatpush1.msra.mxu0 %v7197
        %7918 = vmatprep.subr.mxu0 0.0
        %7919 = vmatpush1.msra.mxu0 %v7198
        %7920 = vmatprep.subr.mxu0 0.0
        %7921 = vmatpush1.msra.mxu0 %v7199
        %7922 = vmatprep.subr.mxu0 0.0
        %7923 = vmatpush1.msra.mxu0 %v7200
        %7924 = vmatprep.subr.mxu0 0.0
        %7925 = vmatpush1.msra.mxu0 %v7201
        %7926 = vmatprep.subr.mxu0 0.0
        %7927 = vmatpush1.msra.mxu0 0.0
        %7928 = vmatprep.subr.mxu0 0.0
        %7929 = vmatpush1.msra.mxu0 0.0
        %7930 = vmatprep.subr.mxu0 0.0
        %7931 = vmatpush1.msra.mxu0 0.0
        %7932 = vmatprep.subr.mxu0 0.0
        %7933 = vmatpush1.msra.mxu0 0.0
        %7934 = vmatprep.subr.mxu0 0.0
        %7935 = vmatpush1.msra.mxu0 0.0
        %7936 = vmatprep.subr.mxu0 0.0
        %7937 = vmatpush1.msra.mxu0 0.0
        %7938 = vmatprep.subr.mxu0 0.0
        %7939 = vmatpush1.msra.mxu0 0.0
        %7940 = vmatprep.subr.mxu0 0.0
        %7941 = vmatpush1.msra.mxu0 0.0
        %7942 = vmatprep.subr.mxu0 0.0
        %7943 = vmatpush1.msra.mxu0 0.0
        %7944 = vmatprep.subr.mxu0 0.0
        %7945 = vmatpush1.msra.mxu0 0.0
        %7946 = vmatprep.subr.mxu0 0.0
        %7947 = vmatpush1.msra.mxu0 0.0
        %7948 = vmatprep.subr.mxu0 0.0
        %7949 = vmatpush1.msra.mxu0 0.0
        %7950 = vmatprep.subr.mxu0 0.0
        %7951 = vmatpush1.msra.mxu0 0.0
        %7952 = vmatprep.subr.mxu0 0.0
        %7953 = vmatpush1.msra.mxu0 0.0
        %7954 = vmatprep.subr.mxu0 0.0
        %7955 = vmatpush1.msra.mxu0 0.0
        %7956 = vmatprep.subr.mxu0 0.0
        %7957 = vmatpush1.msra.mxu0 0.0
        %7958 = vmatprep.subr.mxu0 0.0
        %7959 = vmatpush1.msra.mxu0 0.0
        %7960 = vmatprep.subr.mxu0 0.0
        %7961 = vmatpush1.msra.mxu0 0.0
        %7962 = vmatprep.subr.mxu0 0.0
        %7963 = vmatpush1.msra.mxu0 0.0
        %7964 = vmatprep.subr.mxu0 0.0
        %7965 = vmatpush1.msra.mxu0 0.0
        %7966 = vmatprep.subr.mxu0 0.0
        %7967 = vmatpush1.msra.mxu0 0.0
        %7968 = vmatprep.subr.mxu0 0.0
        %7969 = vmatpush1.msra.mxu0 0.0
        %7970 = vmatprep.subr.mxu0 0.0
        %7971 = vmatpush1.msra.mxu0 0.0
        %7972 = vmatprep.subr.mxu0 0.0
        %7973 = vmatpush1.msra.mxu0 0.0
        %7974 = vmatprep.mubr.f32.mxu0 0.0
        %7975 = vmatmul.mubr.f32.gmra.mrb[0].mxu0 %v7908
        %v7976 = vpop.f32.mrb[0].mxu0
        %v7977 = vadd.f32 0.0, %v7976
        %v7978 = vpop.f32.mrb[0].mxu0
        %7979 = vdwg.mxu0
        %v7981 = vsel %vm3062, %v1278, 0
        %7983 = vmatprep.subr.mxu0 0.0
        %7984 = vmatpush1.msra.mxu0 %v7202
        %7985 = vmatprep.subr.mxu0 0.0
        %7986 = vmatpush1.msra.mxu0 %v7203
        %7987 = vmatprep.subr.mxu0 0.0
        %7988 = vmatpush1.msra.mxu0 %v7204
        %7989 = vmatprep.subr.mxu0 0.0
        %7990 = vmatpush1.msra.mxu0 %v7205
        %7991 = vmatprep.subr.mxu0 0.0
        %7992 = vmatpush1.msra.mxu0 %v7206
        %7993 = vmatprep.subr.mxu0 0.0
        %7994 = vmatpush1.msra.mxu0 %v7207
        %7995 = vmatprep.subr.mxu0 0.0
        %7996 = vmatpush1.msra.mxu0 %v7208
        %7997 = vmatprep.subr.mxu0 0.0
        %7998 = vmatpush1.msra.mxu0 %v7209
        %7999 = vmatprep.subr.mxu0 0.0
        %8000 = vmatpush1.msra.mxu0 0.0
        %8001 = vmatprep.subr.mxu0 0.0
        %8002 = vmatpush1.msra.mxu0 0.0
        %8003 = vmatprep.subr.mxu0 0.0
        %8004 = vmatpush1.msra.mxu0 0.0
        %8005 = vmatprep.subr.mxu0 0.0
        %8006 = vmatpush1.msra.mxu0 0.0
        %8007 = vmatprep.subr.mxu0 0.0
        %8008 = vmatpush1.msra.mxu0 0.0
        %8009 = vmatprep.subr.mxu0 0.0
        %8010 = vmatpush1.msra.mxu0 0.0
        %8011 = vmatprep.subr.mxu0 0.0
        %8012 = vmatpush1.msra.mxu0 0.0
        %8013 = vmatprep.subr.mxu0 0.0
        %8014 = vmatpush1.msra.mxu0 0.0
        %8015 = vmatprep.subr.mxu0 0.0
        %8016 = vmatpush1.msra.mxu0 0.0
        %8017 = vmatprep.subr.mxu0 0.0
        %8018 = vmatpush1.msra.mxu0 0.0
        %8019 = vmatprep.subr.mxu0 0.0
        %8020 = vmatpush1.msra.mxu0 0.0
        %8021 = vmatprep.subr.mxu0 0.0
        %8022 = vmatpush1.msra.mxu0 0.0
        %8023 = vmatprep.subr.mxu0 0.0
        %8024 = vmatpush1.msra.mxu0 0.0
        %8025 = vmatprep.subr.mxu0 0.0
        %8026 = vmatpush1.msra.mxu0 0.0
        %8027 = vmatprep.subr.mxu0 0.0
        %8028 = vmatpush1.msra.mxu0 0.0
        %8029 = vmatprep.subr.mxu0 0.0
        %8030 = vmatpush1.msra.mxu0 0.0
        %8031 = vmatprep.subr.mxu0 0.0
        %8032 = vmatpush1.msra.mxu0 0.0
        %8033 = vmatprep.subr.mxu0 0.0
        %8034 = vmatpush1.msra.mxu0 0.0
        %8035 = vmatprep.subr.mxu0 0.0
        %8036 = vmatpush1.msra.mxu0 0.0
        %8037 = vmatprep.subr.mxu0 0.0
        %8038 = vmatpush1.msra.mxu0 0.0
        %8039 = vmatprep.subr.mxu0 0.0
        %8040 = vmatpush1.msra.mxu0 0.0
        %8041 = vmatprep.subr.mxu0 0.0
        %8042 = vmatpush1.msra.mxu0 0.0
        %8043 = vmatprep.subr.mxu0 0.0
        %8044 = vmatpush1.msra.mxu0 0.0
        %8045 = vmatprep.subr.mxu0 0.0
        %8046 = vmatpush1.msra.mxu0 0.0
        %8047 = vmatprep.mubr.f32.mxu0 0.0
        %8048 = vmatmul.mubr.f32.gmra.mrb[0].mxu0 %v7981
        %v8049 = vpop.f32.mrb[0].mxu0
        %v8050 = vadd.f32 0.0, %v8049
        %v8051 = vpop.f32.mrb[0].mxu0
        %8052 = vdwg.mxu0
        %v8054 = vsel %vm3062, %v1279, 0
        %8056 = vmatprep.subr.mxu0 0.0
        %8057 = vmatpush1.msra.mxu0 %v7210
        %8058 = vmatprep.subr.mxu0 0.0
        %8059 = vmatpush1.msra.mxu0 %v7211
        %8060 = vmatprep.subr.mxu0 0.0
        %8061 = vmatpush1.msra.mxu0 %v7212
        %8062 = vmatprep.subr.mxu0 0.0
        %8063 = vmatpush1.msra.mxu0 %v7213
        %8064 = vmatprep.subr.mxu0 0.0
        %8065 = vmatpush1.msra.mxu0 %v7214
        %8066 = vmatprep.subr.mxu0 0.0
        %8067 = vmatpush1.msra.mxu0 %v7215
        %8068 = vmatprep.subr.mxu0 0.0
        %8069 = vmatpush1.msra.mxu0 %v7216
        %8070 = vmatprep.subr.mxu0 0.0
        %8071 = vmatpush1.msra.mxu0 %v7217
        %8072 = vmatprep.subr.mxu0 0.0
        %8073 = vmatpush1.msra.mxu0 0.0
        %8074 = vmatprep.subr.mxu0 0.0
        %8075 = vmatpush1.msra.mxu0 0.0
        %8076 = vmatprep.subr.mxu0 0.0
        %8077 = vmatpush1.msra.mxu0 0.0
        %8078 = vmatprep.subr.mxu0 0.0
        %8079 = vmatpush1.msra.mxu0 0.0
        %8080 = vmatprep.subr.mxu0 0.0
        %8081 = vmatpush1.msra.mxu0 0.0
        %8082 = vmatprep.subr.mxu0 0.0
        %8083 = vmatpush1.msra.mxu0 0.0
        %8084 = vmatprep.subr.mxu0 0.0
        %8085 = vmatpush1.msra.mxu0 0.0
        %8086 = vmatprep.subr.mxu0 0.0
        %8087 = vmatpush1.msra.mxu0 0.0
        %8088 = vmatprep.subr.mxu0 0.0
        %8089 = vmatpush1.msra.mxu0 0.0
        %8090 = vmatprep.subr.mxu0 0.0
        %8091 = vmatpush1.msra.mxu0 0.0
        %8092 = vmatprep.subr.mxu0 0.0
        %8093 = vmatpush1.msra.mxu0 0.0
        %8094 = vmatprep.subr.mxu0 0.0
        %8095 = vmatpush1.msra.mxu0 0.0
        %8096 = vmatprep.subr.mxu0 0.0
        %8097 = vmatpush1.msra.mxu0 0.0
        %8098 = vmatprep.subr.mxu0 0.0
        %8099 = vmatpush1.msra.mxu0 0.0
        %8100 = vmatprep.subr.mxu0 0.0
        %8101 = vmatpush1.msra.mxu0 0.0
        %8102 = vmatprep.subr.mxu0 0.0
        %8103 = vmatpush1.msra.mxu0 0.0
        %8104 = vmatprep.subr.mxu0 0.0
        %8105 = vmatpush1.msra.mxu0 0.0
        %8106 = vmatprep.subr.mxu0 0.0
        %8107 = vmatpush1.msra.mxu0 0.0
        %8108 = vmatprep.subr.mxu0 0.0
        %8109 = vmatpush1.msra.mxu0 0.0
        %8110 = vmatprep.subr.mxu0 0.0
        %8111 = vmatpush1.msra.mxu0 0.0
        %8112 = vmatprep.subr.mxu0 0.0
        %8113 = vmatpush1.msra.mxu0 0.0
        %8114 = vmatprep.subr.mxu0 0.0
        %8115 = vmatpush1.msra.mxu0 0.0
        %8116 = vmatprep.subr.mxu0 0.0
        %8117 = vmatpush1.msra.mxu0 0.0
        %8118 = vmatprep.subr.mxu0 0.0
        %8119 = vmatpush1.msra.mxu0 0.0
        %8120 = vmatprep.mubr.f32.mxu0 0.0
        %8121 = vmatmul.mubr.f32.gmra.mrb[0].mxu0 %v8054
        %v8122 = vpop.f32.mrb[0].mxu0
        %v8123 = vadd.f32 0.0, %v8122
        %v8124 = vpop.f32.mrb[0].mxu0
        %8125 = vdwg.mxu0
        %v8127 = vsel %vm3062, %v1280, 0
        %8129 = vmatprep.subr.mxu0 0.0
        %8130 = vmatpush1.msra.mxu0 %v7218
        %8131 = vmatprep.subr.mxu0 0.0
        %8132 = vmatpush1.msra.mxu0 %v7219
        %8133 = vmatprep.subr.mxu0 0.0
        %8134 = vmatpush1.msra.mxu0 %v7220
        %8135 = vmatprep.subr.mxu0 0.0
        %8136 = vmatpush1.msra.mxu0 %v7221
        %8137 = vmatprep.subr.mxu0 0.0
        %8138 = vmatpush1.msra.mxu0 %v7222
        %8139 = vmatprep.subr.mxu0 0.0
        %8140 = vmatpush1.msra.mxu0 %v7223
        %8141 = vmatprep.subr.mxu0 0.0
        %8142 = vmatpush1.msra.mxu0 %v7224
        %8143 = vmatprep.subr.mxu0 0.0
        %8144 = vmatpush1.msra.mxu0 %v7225
        %8145 = vmatprep.subr.mxu0 0.0
        %8146 = vmatpush1.msra.mxu0 0.0
        %8147 = vmatprep.subr.mxu0 0.0
        %8148 = vmatpush1.msra.mxu0 0.0
        %8149 = vmatprep.subr.mxu0 0.0
        %8150 = vmatpush1.msra.mxu0 0.0
        %8151 = vmatprep.subr.mxu0 0.0
        %8152 = vmatpush1.msra.mxu0 0.0
        %8153 = vmatprep.subr.mxu0 0.0
        %8154 = vmatpush1.msra.mxu0 0.0
        %8155 = vmatprep.subr.mxu0 0.0
        %8156 = vmatpush1.msra.mxu0 0.0
        %8157 = vmatprep.subr.mxu0 0.0
        %8158 = vmatpush1.msra.mxu0 0.0
        %8159 = vmatprep.subr.mxu0 0.0
        %8160 = vmatpush1.msra.mxu0 0.0
        %8161 = vmatprep.subr.mxu0 0.0
        %8162 = vmatpush1.msra.mxu0 0.0
        %8163 = vmatprep.subr.mxu0 0.0
        %8164 = vmatpush1.msra.mxu0 0.0
        %8165 = vmatprep.subr.mxu0 0.0
        %8166 = vmatpush1.msra.mxu0 0.0
        %8167 = vmatprep.subr.mxu0 0.0
        %8168 = vmatpush1.msra.mxu0 0.0
        %8169 = vmatprep.subr.mxu0 0.0
        %8170 = vmatpush1.msra.mxu0 0.0
        %8171 = vmatprep.subr.mxu0 0.0
        %8172 = vmatpush1.msra.mxu0 0.0
        %8173 = vmatprep.subr.mxu0 0.0
        %8174 = vmatpush1.msra.mxu0 0.0
        %8175 = vmatprep.subr.mxu0 0.0
        %8176 = vmatpush1.msra.mxu0 0.0
        %8177 = vmatprep.subr.mxu0 0.0
        %8178 = vmatpush1.msra.mxu0 0.0
        %8179 = vmatprep.subr.mxu0 0.0
        %8180 = vmatpush1.msra.mxu0 0.0
        %8181 = vmatprep.subr.mxu0 0.0
        %8182 = vmatpush1.msra.mxu0 0.0
        %8183 = vmatprep.subr.mxu0 0.0
        %8184 = vmatpush1.msra.mxu0 0.0
        %8185 = vmatprep.subr.mxu0 0.0
        %8186 = vmatpush1.msra.mxu0 0.0
        %8187 = vmatprep.subr.mxu0 0.0
        %8188 = vmatpush1.msra.mxu0 0.0
        %8189 = vmatprep.subr.mxu0 0.0
        %8190 = vmatpush1.msra.mxu0 0.0
        %8191 = vmatprep.subr.mxu0 0.0
        %8192 = vmatpush1.msra.mxu0 0.0
        %8193 = vmatprep.mubr.f32.mxu0 0.0
        %8194 = vmatmul.mubr.f32.gmra.mrb[0].mxu0 %v8127
        %v8195 = vpop.f32.mrb[0].mxu0
        %v8196 = vadd.f32 0.0, %v8195
        %v8197 = vpop.f32.mrb[0].mxu0
        %8198 = vdwg.mxu0
        %v8200 = vsel %vm3062, %v1281, 0
        %8202 = vmatprep.subr.mxu0 0.0
        %8203 = vmatpush1.msra.mxu0 %v7226
        %8204 = vmatprep.subr.mxu0 0.0
        %8205 = vmatpush1.msra.mxu0 %v7227
        %8206 = vmatprep.subr.mxu0 0.0
        %8207 = vmatpush1.msra.mxu0 %v7228
        %8208 = vmatprep.subr.mxu0 0.0
        %8209 = vmatpush1.msra.mxu0 %v7229
        %8210 = vmatprep.subr.mxu0 0.0
        %8211 = vmatpush1.msra.mxu0 %v7230
        %8212 = vmatprep.subr.mxu0 0.0
        %8213 = vmatpush1.msra.mxu0 %v7231
        %8214 = vmatprep.subr.mxu0 0.0
        %8215 = vmatpush1.msra.mxu0 %v7232
        %8216 = vmatprep.subr.mxu0 0.0
        %8217 = vmatpush1.msra.mxu0 %v7233
        %8218 = vmatprep.subr.mxu0 0.0
        %8219 = vmatpush1.msra.mxu0 0.0
        %8220 = vmatprep.subr.mxu0 0.0
        %8221 = vmatpush1.msra.mxu0 0.0
        %8222 = vmatprep.subr.mxu0 0.0
        %8223 = vmatpush1.msra.mxu0 0.0
        %8224 = vmatprep.subr.mxu0 0.0
        %8225 = vmatpush1.msra.mxu0 0.0
        %8226 = vmatprep.subr.mxu0 0.0
        %8227 = vmatpush1.msra.mxu0 0.0
        %8228 = vmatprep.subr.mxu0 0.0
        %8229 = vmatpush1.msra.mxu0 0.0
        %8230 = vmatprep.subr.mxu0 0.0
        %8231 = vmatpush1.msra.mxu0 0.0
        %8232 = vmatprep.subr.mxu0 0.0
        %8233 = vmatpush1.msra.mxu0 0.0
        %8234 = vmatprep.subr.mxu0 0.0
        %8235 = vmatpush1.msra.mxu0 0.0
        %8236 = vmatprep.subr.mxu0 0.0
        %8237 = vmatpush1.msra.mxu0 0.0
        %8238 = vmatprep.subr.mxu0 0.0
        %8239 = vmatpush1.msra.mxu0 0.0
        %8240 = vmatprep.subr.mxu0 0.0
        %8241 = vmatpush1.msra.mxu0 0.0
        %8242 = vmatprep.subr.mxu0 0.0
        %8243 = vmatpush1.msra.mxu0 0.0
        %8244 = vmatprep.subr.mxu0 0.0
        %8245 = vmatpush1.msra.mxu0 0.0
        %8246 = vmatprep.subr.mxu0 0.0
        %8247 = vmatpush1.msra.mxu0 0.0
        %8248 = vmatprep.subr.mxu0 0.0
        %8249 = vmatpush1.msra.mxu0 0.0
        %8250 = vmatprep.subr.mxu0 0.0
        %8251 = vmatpush1.msra.mxu0 0.0
        %8252 = vmatprep.subr.mxu0 0.0
        %8253 = vmatpush1.msra.mxu0 0.0
        %8254 = vmatprep.subr.mxu0 0.0
        %8255 = vmatpush1.msra.mxu0 0.0
        %8256 = vmatprep.subr.mxu0 0.0
        %8257 = vmatpush1.msra.mxu0 0.0
        %8258 = vmatprep.subr.mxu0 0.0
        %8259 = vmatpush1.msra.mxu0 0.0
        %8260 = vmatprep.subr.mxu0 0.0
        %8261 = vmatpush1.msra.mxu0 0.0
        %8262 = vmatprep.subr.mxu0 0.0
        %8263 = vmatpush1.msra.mxu0 0.0
        %8264 = vmatprep.subr.mxu0 0.0
        %8265 = vmatpush1.msra.mxu0 0.0
        %8266 = vmatprep.mubr.f32.mxu0 0.0
        %8267 = vmatmul.mubr.f32.gmra.mrb[0].mxu0 %v8200
        %v8268 = vpop.f32.mrb[0].mxu0
        %v8269 = vadd.f32 0.0, %v8268
        %v8270 = vpop.f32.mrb[0].mxu0
        %8271 = vdwg.mxu0
        %v8273 = vsel %vm3062, %v1282, 0
        %8275 = vmatprep.subr.mxu0 0.0
        %8276 = vmatpush1.msra.mxu0 %v7234
        %8277 = vmatprep.subr.mxu0 0.0
        %8278 = vmatpush1.msra.mxu0 %v7235
        %8279 = vmatprep.subr.mxu0 0.0
        %8280 = vmatpush1.msra.mxu0 %v7236
        %8281 = vmatprep.subr.mxu0 0.0
        %8282 = vmatpush1.msra.mxu0 %v7237
        %8283 = vmatprep.subr.mxu0 0.0
        %8284 = vmatpush1.msra.mxu0 %v7238
        %8285 = vmatprep.subr.mxu0 0.0
        %8286 = vmatpush1.msra.mxu0 %v7239
        %8287 = vmatprep.subr.mxu0 0.0
        %8288 = vmatpush1.msra.mxu0 %v7240
        %8289 = vmatprep.subr.mxu0 0.0
        %8290 = vmatpush1.msra.mxu0 %v7241
        %8291 = vmatprep.subr.mxu0 0.0
        %8292 = vmatpush1.msra.mxu0 0.0
        %8293 = vmatprep.subr.mxu0 0.0
        %8294 = vmatpush1.msra.mxu0 0.0
        %8295 = vmatprep.subr.mxu0 0.0
        %8296 = vmatpush1.msra.mxu0 0.0
        %8297 = vmatprep.subr.mxu0 0.0
        %8298 = vmatpush1.msra.mxu0 0.0
        %8299 = vmatprep.subr.mxu0 0.0
        %8300 = vmatpush1.msra.mxu0 0.0
        %8301 = vmatprep.subr.mxu0 0.0
        %8302 = vmatpush1.msra.mxu0 0.0
        %8303 = vmatprep.subr.mxu0 0.0
        %8304 = vmatpush1.msra.mxu0 0.0
        %8305 = vmatprep.subr.mxu0 0.0
        %8306 = vmatpush1.msra.mxu0 0.0
        %8307 = vmatprep.subr.mxu0 0.0
        %8308 = vmatpush1.msra.mxu0 0.0
        %8309 = vmatprep.subr.mxu0 0.0
        %8310 = vmatpush1.msra.mxu0 0.0
        %8311 = vmatprep.subr.mxu0 0.0
        %8312 = vmatpush1.msra.mxu0 0.0
        %8313 = vmatprep.subr.mxu0 0.0
        %8314 = vmatpush1.msra.mxu0 0.0
        %8315 = vmatprep.subr.mxu0 0.0
        %8316 = vmatpush1.msra.mxu0 0.0
        %8317 = vmatprep.subr.mxu0 0.0
        %8318 = vmatpush1.msra.mxu0 0.0
        %8319 = vmatprep.subr.mxu0 0.0
        %8320 = vmatpush1.msra.mxu0 0.0
        %8321 = vmatprep.subr.mxu0 0.0
        %8322 = vmatpush1.msra.mxu0 0.0
        %8323 = vmatprep.subr.mxu0 0.0
        %8324 = vmatpush1.msra.mxu0 0.0
        %8325 = vmatprep.subr.mxu0 0.0
        %8326 = vmatpush1.msra.mxu0 0.0
        %8327 = vmatprep.subr.mxu0 0.0
        %8328 = vmatpush1.msra.mxu0 0.0
        %8329 = vmatprep.subr.mxu0 0.0
        %8330 = vmatpush1.msra.mxu0 0.0
        %8331 = vmatprep.subr.mxu0 0.0
        %8332 = vmatpush1.msra.mxu0 0.0
        %8333 = vmatprep.subr.mxu0 0.0
        %8334 = vmatpush1.msra.mxu0 0.0
        %8335 = vmatprep.subr.mxu0 0.0
        %8336 = vmatpush1.msra.mxu0 0.0
        %8337 = vmatprep.subr.mxu0 0.0
        %8338 = vmatpush1.msra.mxu0 0.0
        %8339 = vmatprep.mubr.f32.mxu0 0.0
        %8340 = vmatmul.mubr.f32.gmra.mrb[0].mxu0 %v8273
        %v8341 = vpop.f32.mrb[0].mxu0
        %v8342 = vadd.f32 0.0, %v8341
        %v8343 = vpop.f32.mrb[0].mxu0
        %8344 = vdwg.mxu0
        %v8346 = vsel %vm3062, %v1283, 0
        %8348 = vmatprep.subr.mxu0 0.0
        %8349 = vmatpush1.msra.mxu0 %v7242
        %8350 = vmatprep.subr.mxu0 0.0
        %8351 = vmatpush1.msra.mxu0 %v7243
        %8352 = vmatprep.subr.mxu0 0.0
        %8353 = vmatpush1.msra.mxu0 %v7244
        %8354 = vmatprep.subr.mxu0 0.0
        %8355 = vmatpush1.msra.mxu0 %v7245
        %8356 = vmatprep.subr.mxu0 0.0
        %8357 = vmatpush1.msra.mxu0 %v7246
        %8358 = vmatprep.subr.mxu0 0.0
        %8359 = vmatpush1.msra.mxu0 %v7247
        %8360 = vmatprep.subr.mxu0 0.0
        %8361 = vmatpush1.msra.mxu0 %v7248
        %8362 = vmatprep.subr.mxu0 0.0
        %8363 = vmatpush1.msra.mxu0 %v7249
        %8364 = vmatprep.subr.mxu0 0.0
        %8365 = vmatpush1.msra.mxu0 0.0
        %8366 = vmatprep.subr.mxu0 0.0
        %8367 = vmatpush1.msra.mxu0 0.0
        %8368 = vmatprep.subr.mxu0 0.0
        %8369 = vmatpush1.msra.mxu0 0.0
        %8370 = vmatprep.subr.mxu0 0.0
        %8371 = vmatpush1.msra.mxu0 0.0
        %8372 = vmatprep.subr.mxu0 0.0
        %8373 = vmatpush1.msra.mxu0 0.0
        %8374 = vmatprep.subr.mxu0 0.0
        %8375 = vmatpush1.msra.mxu0 0.0
        %8376 = vmatprep.subr.mxu0 0.0
        %8377 = vmatpush1.msra.mxu0 0.0
        %8378 = vmatprep.subr.mxu0 0.0
        %8379 = vmatpush1.msra.mxu0 0.0
        %8380 = vmatprep.subr.mxu0 0.0
        %8381 = vmatpush1.msra.mxu0 0.0
        %8382 = vmatprep.subr.mxu0 0.0
        %8383 = vmatpush1.msra.mxu0 0.0
        %8384 = vmatprep.subr.mxu0 0.0
        %8385 = vmatpush1.msra.mxu0 0.0
        %8386 = vmatprep.subr.mxu0 0.0
        %8387 = vmatpush1.msra.mxu0 0.0
        %8388 = vmatprep.subr.mxu0 0.0
        %8389 = vmatpush1.msra.mxu0 0.0
        %8390 = vmatprep.subr.mxu0 0.0
        %8391 = vmatpush1.msra.mxu0 0.0
        %8392 = vmatprep.subr.mxu0 0.0
        %8393 = vmatpush1.msra.mxu0 0.0
        %8394 = vmatprep.subr.mxu0 0.0
        %8395 = vmatpush1.msra.mxu0 0.0
        %8396 = vmatprep.subr.mxu0 0.0
        %8397 = vmatpush1.msra.mxu0 0.0
        %8398 = vmatprep.subr.mxu0 0.0
        %8399 = vmatpush1.msra.mxu0 0.0
        %8400 = vmatprep.subr.mxu0 0.0
        %8401 = vmatpush1.msra.mxu0 0.0
        %8402 = vmatprep.subr.mxu0 0.0
        %8403 = vmatpush1.msra.mxu0 0.0
        %8404 = vmatprep.subr.mxu0 0.0
        %8405 = vmatpush1.msra.mxu0 0.0
        %8406 = vmatprep.subr.mxu0 0.0
        %8407 = vmatpush1.msra.mxu0 0.0
        %8408 = vmatprep.subr.mxu0 0.0
        %8409 = vmatpush1.msra.mxu0 0.0
        %8410 = vmatprep.subr.mxu0 0.0
        %8411 = vmatpush1.msra.mxu0 0.0
        %8412 = vmatprep.mubr.f32.mxu0 0.0
        %8413 = vmatmul.mubr.f32.gmra.mrb[0].mxu0 %v8346
        %v8414 = vpop.f32.mrb[0].mxu0
        %v8415 = vadd.f32 0.0, %v8414
        %v8416 = vpop.f32.mrb[0].mxu0
        %8417 = vdwg.mxu0
        %v8418 = vsel %vm3062, %v7320, -inf
        %v8419 = vrot.slane %v8418, 4
        %v8420 = vmax.f32 %v8418, %v8419
        %v8421 = vrot.slane %v8420, 2
        %v8422 = vmax.f32 %v8420, %v8421
        %v8423 = vrot.slane %v8422, 1
        %v8424 = vmax.f32 %v8422, %v8423
        %v8425 = vsel %vm3062, %v7393, -inf
        %v8426 = vrot.slane %v8425, 4
        %v8427 = vmax.f32 %v8425, %v8426
        %v8428 = vrot.slane %v8427, 2
        %v8429 = vmax.f32 %v8427, %v8428
        %v8430 = vrot.slane %v8429, 1
        %v8431 = vmax.f32 %v8429, %v8430
        %v8432 = vsel %vm3062, %v7466, -inf
        %v8433 = vrot.slane %v8432, 4
        %v8434 = vmax.f32 %v8432, %v8433
        %v8435 = vrot.slane %v8434, 2
        %v8436 = vmax.f32 %v8434, %v8435
        %v8437 = vrot.slane %v8436, 1
        %v8438 = vmax.f32 %v8436, %v8437
        %v8439 = vsel %vm3062, %v7539, -inf
        %v8440 = vrot.slane %v8439, 4
        %v8441 = vmax.f32 %v8439, %v8440
        %v8442 = vrot.slane %v8441, 2
        %v8443 = vmax.f32 %v8441, %v8442
        %v8444 = vrot.slane %v8443, 1
        %v8445 = vmax.f32 %v8443, %v8444
        %v8446 = vsel %vm3062, %v7612, -inf
        %v8447 = vrot.slane %v8446, 4
        %v8448 = vmax.f32 %v8446, %v8447
        %v8449 = vrot.slane %v8448, 2
        %v8450 = vmax.f32 %v8448, %v8449
        %v8451 = vrot.slane %v8450, 1
        %v8452 = vmax.f32 %v8450, %v8451
        %v8453 = vsel %vm3062, %v7685, -inf
        %v8454 = vrot.slane %v8453, 4
        %v8455 = vmax.f32 %v8453, %v8454
        %v8456 = vrot.slane %v8455, 2
        %v8457 = vmax.f32 %v8455, %v8456
        %v8458 = vrot.slane %v8457, 1
        %v8459 = vmax.f32 %v8457, %v8458
        %v8460 = vsel %vm3062, %v7758, -inf
        %v8461 = vrot.slane %v8460, 4
        %v8462 = vmax.f32 %v8460, %v8461
        %v8463 = vrot.slane %v8462, 2
        %v8464 = vmax.f32 %v8462, %v8463
        %v8465 = vrot.slane %v8464, 1
        %v8466 = vmax.f32 %v8464, %v8465
        %v8467 = vsel %vm3062, %v7831, -inf
        %v8468 = vrot.slane %v8467, 4
        %v8469 = vmax.f32 %v8467, %v8468
        %v8470 = vrot.slane %v8469, 2
        %v8471 = vmax.f32 %v8469, %v8470
        %v8472 = vrot.slane %v8471, 1
        %v8473 = vmax.f32 %v8471, %v8472
        %v8474 = vsel %vm3062, %v7904, -inf
        %v8475 = vrot.slane %v8474, 4
        %v8476 = vmax.f32 %v8474, %v8475
        %v8477 = vrot.slane %v8476, 2
        %v8478 = vmax.f32 %v8476, %v8477
        %v8479 = vrot.slane %v8478, 1
        %v8480 = vmax.f32 %v8478, %v8479
        %v8481 = vsel %vm3062, %v7977, -inf
        %v8482 = vrot.slane %v8481, 4
        %v8483 = vmax.f32 %v8481, %v8482
        %v8484 = vrot.slane %v8483, 2
        %v8485 = vmax.f32 %v8483, %v8484
        %v8486 = vrot.slane %v8485, 1
        %v8487 = vmax.f32 %v8485, %v8486
        %v8488 = vsel %vm3062, %v8050, -inf
        %v8489 = vrot.slane %v8488, 4
        %v8490 = vmax.f32 %v8488, %v8489
        %v8491 = vrot.slane %v8490, 2
        %v8492 = vmax.f32 %v8490, %v8491
        %v8493 = vrot.slane %v8492, 1
        %v8494 = vmax.f32 %v8492, %v8493
        %v8495 = vsel %vm3062, %v8123, -inf
        %v8496 = vrot.slane %v8495, 4
        %v8497 = vmax.f32 %v8495, %v8496
        %v8498 = vrot.slane %v8497, 2
        %v8499 = vmax.f32 %v8497, %v8498
        %v8500 = vrot.slane %v8499, 1
        %v8501 = vmax.f32 %v8499, %v8500
        %v8502 = vsel %vm3062, %v8196, -inf
        %v8503 = vrot.slane %v8502, 4
        %v8504 = vmax.f32 %v8502, %v8503
        %v8505 = vrot.slane %v8504, 2
        %v8506 = vmax.f32 %v8504, %v8505
        %v8507 = vrot.slane %v8506, 1
        %v8508 = vmax.f32 %v8506, %v8507
        %v8509 = vsel %vm3062, %v8269, -inf
        %v8510 = vrot.slane %v8509, 4
        %v8511 = vmax.f32 %v8509, %v8510
        %v8512 = vrot.slane %v8511, 2
        %v8513 = vmax.f32 %v8511, %v8512
        %v8514 = vrot.slane %v8513, 1
        %v8515 = vmax.f32 %v8513, %v8514
        %v8516 = vsel %vm3062, %v8342, -inf
        %v8517 = vrot.slane %v8516, 4
        %v8518 = vmax.f32 %v8516, %v8517
        %v8519 = vrot.slane %v8518, 2
        %v8520 = vmax.f32 %v8518, %v8519
        %v8521 = vrot.slane %v8520, 1
        %v8522 = vmax.f32 %v8520, %v8521
        %v8523 = vsel %vm3062, %v8415, -inf
        %v8524 = vrot.slane %v8523, 4
        %v8525 = vmax.f32 %v8523, %v8524
        %v8526 = vrot.slane %v8525, 2
        %v8527 = vmax.f32 %v8525, %v8526
        %v8528 = vrot.slane %v8527, 1
        %v8529 = vmax.f32 %v8527, %v8528
        %vm8546 = vcmask 1041409
        %v8547 = vsel %vm8546, %v8431, %v8424
        %vm8548 = vcmask 1042434
        %v8549 = vsel %vm8548, %v8438, %v8547
        %vm8550 = vcmask 1043459
        %v8551 = vsel %vm8550, %v8445, %v8549
        %vm8552 = vcmask 1044484
        %v8553 = vsel %vm8552, %v8452, %v8551
        %vm8554 = vcmask 1045509
        %v8555 = vsel %vm8554, %v8459, %v8553
        %vm8556 = vcmask 1046534
        %v8557 = vsel %vm8556, %v8466, %v8555
        %vm8558 = vcmask 1047559
        %v8559 = vsel %vm8558, %v8473, %v8557
        %v8560 = vsel %vm8546, %v8487, %v8480
        %v8561 = vsel %vm8548, %v8494, %v8560
        %v8562 = vsel %vm8550, %v8501, %v8561
        %v8563 = vsel %vm8552, %v8508, %v8562
        %v8564 = vsel %vm8554, %v8515, %v8563
        %v8565 = vsel %vm8556, %v8522, %v8564
        %v8566 = vsel %vm8558, %v8529, %v8565
        %8569 = vst.msk [vmem:[%s637] sm:$0xff] %vm3062, %v8559
        %8570 = vst.msk [vmem:[%s637 + $0x8] sm:$0xff] %vm3062, %v8566
        %v8571 = vcombine.low %v7320, %v7466
        %v8572 = vcombine.high %v7320, %v7466
        %v8574 = vunpack.c.l.s4 1983009808
        %v8575 = vunpack.c.0.s8 %v8574
        %v8576 = vlaneseq
        %v8577 = vshrl.u32 %v8576, 7
        %v8578 = vsub.s32 %v8575, %v8577
        %v8579 = vrot.slane %v8571, %v8578
        %v8581 = vunpack.c.l.s4 1983009808
        %v8582 = vunpack.c.0.s8 %v8581
        %v8583 = vlaneseq
        %v8584 = vshrl.u32 %v8583, 7
        %v8585 = vsub.s32 %v8582, %v8584
        %v8586 = vrot.slane %v8572, %v8585
        %v8587 = vcombine.low %v7393, %v7539
        %v8588 = vcombine.high %v7393, %v7539
        %v8590 = vunpack.c.l.s4 1983009808
        %v8591 = vunpack.c.0.s8 %v8590
        %v8592 = vlaneseq
        %v8593 = vshrl.u32 %v8592, 7
        %v8594 = vsub.s32 %v8591, %v8593
        %v8595 = vrot.slane %v8587, %v8594
        %v8597 = vunpack.c.l.s4 1983009808
        %v8598 = vunpack.c.0.s8 %v8597
        %v8599 = vlaneseq
        %v8600 = vshrl.u32 %v8599, 7
        %v8601 = vsub.s32 %v8598, %v8600
        %v8602 = vrot.slane %v8588, %v8601
        %v8603 = vcombine.low %v7612, %v7758
        %v8604 = vcombine.high %v7612, %v7758
        %v8606 = vunpack.c.l.s4 1983009808
        %v8607 = vunpack.c.0.s8 %v8606
        %v8608 = vlaneseq
        %v8609 = vshrl.u32 %v8608, 7
        %v8610 = vsub.s32 %v8607, %v8609
        %v8611 = vrot.slane %v8603, %v8610
        %v8613 = vunpack.c.l.s4 1983009808
        %v8614 = vunpack.c.0.s8 %v8613
        %v8615 = vlaneseq
        %v8616 = vshrl.u32 %v8615, 7
        %v8617 = vsub.s32 %v8614, %v8616
        %v8618 = vrot.slane %v8604, %v8617
        %v8619 = vcombine.low %v7685, %v7831
        %v8620 = vcombine.high %v7685, %v7831
        %v8622 = vunpack.c.l.s4 1983009808
        %v8623 = vunpack.c.0.s8 %v8622
        %v8624 = vlaneseq
        %v8625 = vshrl.u32 %v8624, 7
        %v8626 = vsub.s32 %v8623, %v8625
        %v8627 = vrot.slane %v8619, %v8626
        %v8629 = vunpack.c.l.s4 1983009808
        %v8630 = vunpack.c.0.s8 %v8629
        %v8631 = vlaneseq
        %v8632 = vshrl.u32 %v8631, 7
        %v8633 = vsub.s32 %v8630, %v8632
        %v8634 = vrot.slane %v8620, %v8633
        %v8635 = vcombine.low %v8579, %v8595
        %v8636 = vcombine.high %v8579, %v8595
        %v8638 = vunpack.c.l.s4 1934713408
        %v8639 = vunpack.c.0.s8 %v8638
        %v8640 = vlaneseq
        %v8641 = vshrl.u32 %v8640, 7
        %v8642 = vsub.s32 %v8639, %v8641
        %v8643 = vrot.slane %v8635, %v8642
        %v8645 = vunpack.c.l.s4 1934713408
        %v8646 = vunpack.c.0.s8 %v8645
        %v8647 = vlaneseq
        %v8648 = vshrl.u32 %v8647, 7
        %v8649 = vsub.s32 %v8646, %v8648
        %v8650 = vrot.slane %v8636, %v8649
        %v8651 = vcombine.low %v8586, %v8602
        %v8652 = vcombine.high %v8586, %v8602
        %v8654 = vunpack.c.l.s4 1934713408
        %v8655 = vunpack.c.0.s8 %v8654
        %v8656 = vlaneseq
        %v8657 = vshrl.u32 %v8656, 7
        %v8658 = vsub.s32 %v8655, %v8657
        %v8659 = vrot.slane %v8651, %v8658
        %v8661 = vunpack.c.l.s4 1934713408
        %v8662 = vunpack.c.0.s8 %v8661
        %v8663 = vlaneseq
        %v8664 = vshrl.u32 %v8663, 7
        %v8665 = vsub.s32 %v8662, %v8664
        %v8666 = vrot.slane %v8652, %v8665
        %v8667 = vcombine.low %v8611, %v8627
        %v8668 = vcombine.high %v8611, %v8627
        %v8670 = vunpack.c.l.s4 1934713408
        %v8671 = vunpack.c.0.s8 %v8670
        %v8672 = vlaneseq
        %v8673 = vshrl.u32 %v8672, 7
        %v8674 = vsub.s32 %v8671, %v8673
        %v8675 = vrot.slane %v8667, %v8674
        %v8677 = vunpack.c.l.s4 1934713408
        %v8678 = vunpack.c.0.s8 %v8677
        %v8679 = vlaneseq
        %v8680 = vshrl.u32 %v8679, 7
        %v8681 = vsub.s32 %v8678, %v8680
        %v8682 = vrot.slane %v8668, %v8681
        %v8683 = vcombine.low %v8618, %v8634
        %v8684 = vcombine.high %v8618, %v8634
        %v8686 = vunpack.c.l.s4 1934713408
        %v8687 = vunpack.c.0.s8 %v8686
        %v8688 = vlaneseq
        %v8689 = vshrl.u32 %v8688, 7
        %v8690 = vsub.s32 %v8687, %v8689
        %v8691 = vrot.slane %v8683, %v8690
        %v8693 = vunpack.c.l.s4 1934713408
        %v8694 = vunpack.c.0.s8 %v8693
        %v8695 = vlaneseq
        %v8696 = vshrl.u32 %v8695, 7
        %v8697 = vsub.s32 %v8694, %v8696
        %v8698 = vrot.slane %v8684, %v8697
        %v8699 = vcombine.low %v8643, %v8675
        %v8700 = vcombine.high %v8643, %v8675
        %v8701 = vcombine.low %v8650, %v8682
        %v8702 = vcombine.high %v8650, %v8682
        %v8703 = vcombine.low %v8659, %v8691
        %v8704 = vcombine.high %v8659, %v8691
        %v8705 = vcombine.low %v8666, %v8698
        %v8706 = vcombine.high %v8666, %v8698
        %v8707 = vcombine.low %v7904, %v8050
        %v8708 = vcombine.high %v7904, %v8050
        %v8710 = vunpack.c.l.s4 1983009808
        %v8711 = vunpack.c.0.s8 %v8710
        %v8712 = vlaneseq
        %v8713 = vshrl.u32 %v8712, 7
        %v8714 = vsub.s32 %v8711, %v8713
        %v8715 = vrot.slane %v8707, %v8714
        %v8717 = vunpack.c.l.s4 1983009808
        %v8718 = vunpack.c.0.s8 %v8717
        %v8719 = vlaneseq
        %v8720 = vshrl.u32 %v8719, 7
        %v8721 = vsub.s32 %v8718, %v8720
        %v8722 = vrot.slane %v8708, %v8721
        %v8723 = vcombine.low %v7977, %v8123
        %v8724 = vcombine.high %v7977, %v8123
        %v8726 = vunpack.c.l.s4 1983009808
        %v8727 = vunpack.c.0.s8 %v8726
        %v8728 = vlaneseq
        %v8729 = vshrl.u32 %v8728, 7
        %v8730 = vsub.s32 %v8727, %v8729
        %v8731 = vrot.slane %v8723, %v8730
        %v8733 = vunpack.c.l.s4 1983009808
        %v8734 = vunpack.c.0.s8 %v8733
        %v8735 = vlaneseq
        %v8736 = vshrl.u32 %v8735, 7
        %v8737 = vsub.s32 %v8734, %v8736
        %v8738 = vrot.slane %v8724, %v8737
        %v8739 = vcombine.low %v8196, %v8342
        %v8740 = vcombine.high %v8196, %v8342
        %v8742 = vunpack.c.l.s4 1983009808
        %v8743 = vunpack.c.0.s8 %v8742
        %v8744 = vlaneseq
        %v8745 = vshrl.u32 %v8744, 7
        %v8746 = vsub.s32 %v8743, %v8745
        %v8747 = vrot.slane %v8739, %v8746
        %v8749 = vunpack.c.l.s4 1983009808
        %v8750 = vunpack.c.0.s8 %v8749
        %v8751 = vlaneseq
        %v8752 = vshrl.u32 %v8751, 7
        %v8753 = vsub.s32 %v8750, %v8752
        %v8754 = vrot.slane %v8740, %v8753
        %v8755 = vcombine.low %v8269, %v8415
        %v8756 = vcombine.high %v8269, %v8415
        %v8758 = vunpack.c.l.s4 1983009808
        %v8759 = vunpack.c.0.s8 %v8758
        %v8760 = vlaneseq
        %v8761 = vshrl.u32 %v8760, 7
        %v8762 = vsub.s32 %v8759, %v8761
        %v8763 = vrot.slane %v8755, %v8762
        %v8765 = vunpack.c.l.s4 1983009808
        %v8766 = vunpack.c.0.s8 %v8765
        %v8767 = vlaneseq
        %v8768 = vshrl.u32 %v8767, 7
        %v8769 = vsub.s32 %v8766, %v8768
        %v8770 = vrot.slane %v8756, %v8769
        %v8771 = vcombine.low %v8715, %v8731
        %v8772 = vcombine.high %v8715, %v8731
        %v8774 = vunpack.c.l.s4 1934713408
        %v8775 = vunpack.c.0.s8 %v8774
        %v8776 = vlaneseq
        %v8777 = vshrl.u32 %v8776, 7
        %v8778 = vsub.s32 %v8775, %v8777
        %v8779 = vrot.slane %v8771, %v8778
        %v8781 = vunpack.c.l.s4 1934713408
        %v8782 = vunpack.c.0.s8 %v8781
        %v8783 = vlaneseq
        %v8784 = vshrl.u32 %v8783, 7
        %v8785 = vsub.s32 %v8782, %v8784
        %v8786 = vrot.slane %v8772, %v8785
        %v8787 = vcombine.low %v8722, %v8738
        %v8788 = vcombine.high %v8722, %v8738
        %v8790 = vunpack.c.l.s4 1934713408
        %v8791 = vunpack.c.0.s8 %v8790
        %v8792 = vlaneseq
        %v8793 = vshrl.u32 %v8792, 7
        %v8794 = vsub.s32 %v8791, %v8793
        %v8795 = vrot.slane %v8787, %v8794
        %v8797 = vunpack.c.l.s4 1934713408
        %v8798 = vunpack.c.0.s8 %v8797
        %v8799 = vlaneseq
        %v8800 = vshrl.u32 %v8799, 7
        %v8801 = vsub.s32 %v8798, %v8800
        %v8802 = vrot.slane %v8788, %v8801
        %v8803 = vcombine.low %v8747, %v8763
        %v8804 = vcombine.high %v8747, %v8763
        %v8806 = vunpack.c.l.s4 1934713408
        %v8807 = vunpack.c.0.s8 %v8806
        %v8808 = vlaneseq
        %v8809 = vshrl.u32 %v8808, 7
        %v8810 = vsub.s32 %v8807, %v8809
        %v8811 = vrot.slane %v8803, %v8810
        %v8813 = vunpack.c.l.s4 1934713408
        %v8814 = vunpack.c.0.s8 %v8813
        %v8815 = vlaneseq
        %v8816 = vshrl.u32 %v8815, 7
        %v8817 = vsub.s32 %v8814, %v8816
        %v8818 = vrot.slane %v8804, %v8817
        %v8819 = vcombine.low %v8754, %v8770
        %v8820 = vcombine.high %v8754, %v8770
        %v8822 = vunpack.c.l.s4 1934713408
        %v8823 = vunpack.c.0.s8 %v8822
        %v8824 = vlaneseq
        %v8825 = vshrl.u32 %v8824, 7
        %v8826 = vsub.s32 %v8823, %v8825
        %v8827 = vrot.slane %v8819, %v8826
        %v8829 = vunpack.c.l.s4 1934713408
        %v8830 = vunpack.c.0.s8 %v8829
        %v8831 = vlaneseq
        %v8832 = vshrl.u32 %v8831, 7
        %v8833 = vsub.s32 %v8830, %v8832
        %v8834 = vrot.slane %v8820, %v8833
        %v8835 = vcombine.low %v8779, %v8811
        %v8836 = vcombine.high %v8779, %v8811
        %v8837 = vcombine.low %v8786, %v8818
        %v8838 = vcombine.high %v8786, %v8818
        %v8839 = vcombine.low %v8795, %v8827
        %v8840 = vcombine.high %v8795, %v8827
        %v8841 = vcombine.low %v8802, %v8834
        %v8842 = vcombine.high %v8802, %v8834
        %8845 = vrot.lane.b32.xlu0 %v8700, 64
        %v8846 = vpop.permute.xlu0 %8845
        %8847 = vrot.lane.b32.xlu0 %v8836, 64
        %v8848 = vpop.permute.xlu0 %8847
        %8853 = vrot.lane.b32.xlu0 %v8702, 64
        %v8854 = vpop.permute.xlu0 %8853
        %8855 = vrot.lane.b32.xlu0 %v8838, 64
        %v8856 = vpop.permute.xlu0 %8855
        %8861 = vrot.lane.b32.xlu0 %v8704, 64
        %v8862 = vpop.permute.xlu0 %8861
        %8863 = vrot.lane.b32.xlu0 %v8840, 64
        %v8864 = vpop.permute.xlu0 %8863
        %8869 = vrot.lane.b32.xlu0 %v8706, 64
        %v8870 = vpop.permute.xlu0 %8869
        %8871 = vrot.lane.b32.xlu0 %v8842, 64
        %v8872 = vpop.permute.xlu0 %8871
        %v8875 = vsel %vm3062, %v8699, %v8846
        %v8876 = vsel %vm3062, %v8835, %v8848
        %v8877 = vsel %vm3062, %v8701, %v8854
        %v8878 = vsel %vm3062, %v8837, %v8856
        %v8879 = vsel %vm3062, %v8703, %v8862
        %v8880 = vsel %vm3062, %v8839, %v8864
        %v8881 = vsel %vm3062, %v8705, %v8870
        %v8882 = vsel %vm3062, %v8841, %v8872
        %v8883 = vpack.c.bf16 %v8876, %v8875
        %v8884 = vpack.c.bf16 %v8878, %v8877
        %v8885 = vpack.c.bf16 %v8880, %v8879
        %v8886 = vpack.c.bf16 %v8882, %v8881
        %v8891 = vunpack.c.l.b16 %v8883
        %v8892 = vunpack.c.l.b16 %v8884
        %v8893 = vunpack.c.l.b16 %v8885
        %v8894 = vunpack.c.l.b16 %v8886
        %v8895 = vunpack.c.h.b16 %v8883
        %v8896 = vunpack.c.h.b16 %v8884
        %v8897 = vunpack.c.h.b16 %v8885
        %v8898 = vunpack.c.h.b16 %v8886
        %v8899 = vpack.c.b16 %v8892, %v8891
        %v8900 = vpack.c.b16 %v8894, %v8893
        %v8901 = vpack.c.b16 %v8896, %v8895
        %v8902 = vpack.c.b16 %v8898, %v8897
        %8907 = vst [vmem:[%s630] sm:$0xff] %v8899
        %8908 = vst [vmem:[%s630 + $0x8] sm:$0xff] %v8900
        %8909 = vst [vmem:[%s630 + $0x10] sm:$0xff] %v8901
        %8910 = vst [vmem:[%s630 + $0x18] sm:$0xff] %v8902
        %s8911 = sand.u32 %s272, 1
        %s8912 = scalar_lea.sflag [#allocation4], %s8911
        %s8913 = sand.u32 %s272, 1
        %s8914 = smul.addr %s8913, 32
        %s8915 = scalar_lea.vmem [#allocation16], %s8914
        %s8916 = sand.u32 %s300, 1
        %s8917 = scalar_lea.sflag [#allocation18], %s8916
        %s8918 = sand.u32 %s300, 1
        %s8919 = smul.addr %s8918, 16
        %s8920 = scalar_lea.vmem [#allocation17], %s8919
        // Predicated region
        $region85: #{unit_gcn_pallas.2} parent=51 // pred_check
          %p8921 = pneg %p282
        $region86: #{unit_gcn_pallas.2} parent=51 // pred_check_branch
          %8923 = sbr.rel (%p8921) target = $region88
        $region87: #{unit_gcn_pallas.2} parent=51 // pred_region
          %s8925 = ssub.s32 512, 512
          %8926 = vsyncadd %s8912, %s8925
          %s8927 = smul.addr %s47, 8
          %s8928 = smul.addr %s46, 16
          %s8929 = sadd.s32 %s8927, %s8928
          %s8930 = smul.addr %s8929, 64
          %s8931 = scalar_lea.hbm %s8, %s8930
          %s8932 = sshll.u32 %s8915, 4
          %s8933 = int_to_ptr.vmem [resolvable:$true] %s8932
          %8938 = dma.vmem_to_hbm [thread:$0]  %s8933, 512, %s8931, %s8912, 256, 256, 16
        $region88: #{unit_gcn_pallas.2} parent=51 // pred_fallthru
          _
        // Predicated region
        $region89: #{unit_gcn_pallas.2} parent=51 // pred_check
          %p8939 = pneg %p310
        $region90: #{unit_gcn_pallas.2} parent=51 // pred_check_branch
          %8941 = sbr.rel (%p8939) target = $region92
        $region91: #{unit_gcn_pallas.2} parent=51 // pred_region
          %s8943 = ssub.s32 256, 256
          %8944 = vsyncadd %s8917, %s8943
          %s8945 = smul.addr %s47, 2
          %s8946 = smul.addr %s46, 4
          %s8947 = sadd.s32 %s8945, %s8946
          %s8948 = smul.addr %s8947, 128
          %s8949 = scalar_lea.hbm %s9, %s8948
          %s8950 = sshll.u32 %s8920, 4
          %s8951 = int_to_ptr.vmem [resolvable:$true] %s8950
          %8956 = dma.vmem_to_hbm [thread:$0]  %s8951, 256, %s8949, %s8917, 128, 128, 8
        $region92: #{unit_gcn_pallas.2} parent=51 // pred_fallthru
          _
      $region52: #{unit_gcn_pallas.2} parent=5 // pred_fallthru
        _
      %p8957 = scmp.le.s32.totalorder 2, %s37
      // Predicated region
      $region93: #{unit_gcn_pallas.2} parent=5 // pred_check
        %p8958 = pneg %p8957
      $region94: #{unit_gcn_pallas.2} parent=5 // pred_check_branch
        %8960 = sbr.rel (%p8958) target = $region96
      $region95: #{unit_gcn_pallas.2} parent=5 // pred_region
        %s8961 = ssub.s32 %s37, 2
        // Predicated region
        $region97: #{unit_gcn_pallas.2} parent=95 // pred_check
          %p8962 = pneg %p288
        $region98: #{unit_gcn_pallas.2} parent=95 // pred_check_branch
          %8964 = sbr.rel (%p8962) target = $region100
        $region99: #{unit_gcn_pallas.2} parent=95 // pred_region
          %s8965 = sand.u32 %s273, 1
          %s8966 = scalar_lea.sflag [#allocation4], %s8965
          %s8967 = sand.u32 %s273, 1
          %s8968 = smul.addr %s8967, 32
          %s8969 = scalar_lea.vmem [#allocation16], %s8968
          %8970 = dma.done %s8966, 512
        $region100: #{unit_gcn_pallas.2} parent=95 // pred_fallthru
          _
        // Predicated region
        $region101: #{unit_gcn_pallas.2} parent=95 // pred_check
          %p8971 = pneg %p316
        $region102: #{unit_gcn_pallas.2} parent=95 // pred_check_branch
          %8973 = sbr.rel (%p8971) target = $region104
        $region103: #{unit_gcn_pallas.2} parent=95 // pred_region
          %s8974 = sand.u32 %s301, 1
          %s8975 = scalar_lea.sflag [#allocation18], %s8974
          %s8976 = sand.u32 %s301, 1
          %s8977 = smul.addr %s8976, 16
          %s8978 = scalar_lea.vmem [#allocation17], %s8977
          %8979 = dma.done %s8975, 256
        $region104: #{unit_gcn_pallas.2} parent=95 // pred_fallthru
          _
      $region96: #{unit_gcn_pallas.2} parent=5 // pred_fallthru
        _
    $region6: #{unit_gcn_pallas.2} parent=1 // loop_footer
      %s41 = sadd.s32 1, %s37
    $region7: #{unit_gcn_pallas.2} parent=1 // loop_footer_branch
      %36 = sbr.rel target = $region3
    $region8: #{unit_gcn_pallas.2} parent=1 // loop_exit
      _
    %8980 = vsyncpa [#allocation3], 1
    %s8981 = scalar_lea.sflag [#allocation3], 1
    %8982 = vsyncpa %s8981, 1
    %8983 = vsyncpa [#allocation6], 1
    %s8984 = scalar_lea.sflag [#allocation6], 1
    %8985 = vsyncpa %s8984, 1
    %8986 = vsyncpa [#allocation9], 1
    %s8987 = scalar_lea.sflag [#allocation9], 1
    %8988 = vsyncpa %s8987, 1
    %8989 = vsyncpa [#allocation12], 1
    %s8990 = scalar_lea.sflag [#allocation12], 1
    %8991 = vsyncpa %s8990, 1
    %8992 = vsyncpa [#allocation15], 1
    %s8993 = scalar_lea.sflag [#allocation15], 1
    %8994 = vsyncpa %s8993, 1
    %8995 = vsyncpa [#allocation4], 1
    %s8996 = scalar_lea.sflag [#allocation4], 1
    %8997 = vsyncpa %s8996, 1
    %8998 = vsyncpa [#allocation18], 1
    %s8999 = scalar_lea.sflag [#allocation18], 1
    %9000 = vsyncpa %s8999, 1

</llo_original>
